<compile_context>
chip_gen: v5e
topology: v5e:2x2
jax: 0.10.0
libtpu: 0.0.40
codegen_flags: <defaults>
</compile_context>

<pallas_src>
import jax
import jax.numpy as jnp
from jax.experimental import pallas as pl
from jax.experimental.pallas import tpu as pltpu

LANE = 128


def _round_up(a, m):
    return ((a + m - 1) // m) * m


def mlp_kernel(x_ref,
               w1_ref, b1_ref,
               w2_ref, b2_ref,
               w3_ref, b3_ref,
               w4_ref, b4_ref,
               o_ref):
    # One batch tile; the whole 4-layer MLP is fused in VMEM.
    # x arrives bf16 (cast fused with padding in the wrapper); matmuls are bf16
    # on the MXU with f32 accumulation; bias + ReLU run in f32 on the VPU, then
    # activations drop straight back to bf16 for the next layer.
    h = jnp.dot(x_ref[...], w1_ref[...], preferred_element_type=jnp.float32)
    h = jnp.maximum(h + b1_ref[...], 0.0).astype(jnp.bfloat16)   # fc1+relu; do1 = id

    h = jnp.dot(h, w2_ref[...], preferred_element_type=jnp.float32)
    h = jnp.maximum(h + b2_ref[...], 0.0).astype(jnp.bfloat16)   # fc2+relu; do2 = id

    h = jnp.dot(h, w3_ref[...], preferred_element_type=jnp.float32)
    h = jnp.maximum(h + b3_ref[...], 0.0).astype(jnp.bfloat16)   # fc3+relu; do3 = id

    out = jnp.dot(h, w4_ref[...], preferred_element_type=jnp.float32) + b4_ref[...]
    o_ref[...] = out.astype(o_ref.dtype)          # lane-dense (tb, 128) store


def prepare_params(params):
    """Zero-pad every feature dim to a multiple of 128; weights -> bf16, biases f32."""
    padded = {}
    for n in range(1, 5):
        w = params[f"w{n}"]
        b = params[f"b{n}"]
        kin, kout = w.shape
        kin_p, kout_p = _round_up(kin, LANE), _round_up(kout, LANE)
        padded[f"w{n}"] = jnp.pad(
            w, ((0, kin_p - kin), (0, kout_p - kout))).astype(jnp.bfloat16)
        padded[f"b{n}"] = jnp.pad(b, ((0, 0), (0, kout_p - kout)))
    return padded


def basic_mlp_forward(x, params, *, batch_tile=None):
    """x: (B, input_size) float32.  params: unpadded f32 (in,out)/(1,out) params."""
    B, input_size = x.shape
    out_size = params["w4"].shape[1]

    pp = prepare_params(params)
    in_pad = pp["w1"].shape[0]
    hid_pad = pp["w1"].shape[1]
    out_pad = pp["w4"].shape[1]

    # ---- batch-tile selection -------------------------------------------
    B8 = _round_up(B, 8)
    if batch_tile is None:
        tb = 512                       # amortize per-grid-step overhead (~0.35 us)
        if B8 <= tb:
            # Ensure >= 2 grid steps when there is enough work, so the
            # "parallel" grid axis can shard across v7x's 2 TensorCores.
            tb = max(8, _round_up(pl.cdiv(B8, 2), 8)) if B8 > 8 else B8
    else:
        tb = min(_round_up(batch_tile, 8), B8)
    B_pad = _round_up(B8, tb)

    # Pad batch (ragged last tile) + input features (784 -> 896) and cast to
    # bf16 in one fused XLA pass: halves x HBM traffic and the x VMEM buffers.
    x_p = jnp.pad(x.astype(jnp.bfloat16),
                  ((0, B_pad - B), (0, in_pad - input_size)))

    # ---- VMEM budget (clamped so it is safe on v7x's 64 MiB physical VMEM) ---
    weight_bytes = sum(int(pp[f"w{n}"].size) * 2 + int(pp[f"b{n}"].size) * 4
                       for n in range(1, 5))
    est = (2 * tb * in_pad * 2          # x tile, double-buffered, bf16
           + 2 * tb * out_pad * 4       # out tile, double-buffered, f32
           + 3 * tb * hid_pad * 4       # live f32/bf16 intermediates
           + 2 * weight_bytes           # worst case: weights double-buffered
           + (4 << 20))                 # headroom
    vmem_limit = int(min(max(est, 32 << 20), 48 << 20))

    def make_call(resident_weights):
        def full_spec(shape):
            # Constant block index -> weights/biases stay resident in VMEM
            # across batch-tile grid steps (DMA'd once). Single-buffer them
            # when supported (the second pipeline buffer would be pure waste).
            if resident_weights:
                return pl.BlockSpec(shape, lambda i: (0,) * len(shape),
                                    pipeline_mode=pl.Buffered(1))
            return pl.BlockSpec(shape, lambda i: (0,) * len(shape))

        grid_spec = pltpu.PrefetchScalarGridSpec(
            num_scalar_prefetch=0,
            grid=(B_pad // tb,),
            in_specs=[
                pl.BlockSpec((tb, in_pad), lambda i: (i, 0)),        # x tile (bf16)
                full_spec(pp["w1"].shape), full_spec(pp["b1"].shape),
                full_spec(pp["w2"].shape), full_spec(pp["b2"].shape),
                full_spec(pp["w3"].shape), full_spec(pp["b3"].shape),
                full_spec(pp["w4"].shape), full_spec(pp["b4"].shape),
            ],
            out_specs=pl.BlockSpec((tb, out_pad), lambda i: (i, 0)),
        )
        return pl.pallas_call(
            mlp_kernel,
            out_shape=jax.ShapeDtypeStruct((B_pad, out_pad), jnp.float32),
            grid_spec=grid_spec,
            compiler_params=pltpu.CompilerParams(
                dimension_semantics=("parallel",),
                vmem_limit_bytes=vmem_limit),
        )

    args = (x_p, pp["w1"], pp["b1"], pp["w2"], pp["b2"],
            pp["w3"], pp["b3"], pp["w4"], pp["b4"])
    try:
        out_padded = make_call(resident_weights=True)(*args)
    except Exception:
        # pipeline_mode=pl.Buffered(1) not accepted on this jax/Mosaic build:
        # fall back to default double-buffered weight blocks (still correct,
        # costs ~2 MiB extra VMEM).
        out_padded = make_call(resident_weights=False)(*args)

    return out_padded[:B, :out_size]


def init_params(key, input_size=28 * 28, hidden_size=400, output_size=10):
    """Deterministic init mimicking nn.Linear shapes; stored as (in, out), f32."""
    dims = [(input_size, hidden_size),
            (hidden_size, hidden_size),
            (hidden_size, hidden_size),
            (hidden_size, output_size)]
    params = {}
    for n, (fan_in, fan_out) in enumerate(dims, start=1):
        key, kw, kb = jax.random.split(key, 3)
        bound = 1.0 / (fan_in ** 0.5)
        params[f"w{n}"] = jax.random.uniform(
            kw, (fan_in, fan_out), jnp.float32, -bound, bound)
        params[f"b{n}"] = jax.random.uniform(
            kb, (1, fan_out), jnp.float32, -bound, bound)
    return params


def reference_forward(x, params):
    """Pure-JAX reference with the same bf16-inputs / f32-accumulation numerics."""
    def dot_bf16(a, w):
        return jnp.dot(a.astype(jnp.bfloat16), w.astype(jnp.bfloat16),
                       preferred_element_type=jnp.float32)
    h = jnp.maximum(dot_bf16(x, params["w1"]) + params["b1"], 0.0)
    h = jnp.maximum(dot_bf16(h, params["w2"]) + params["b2"], 0.0)
    h = jnp.maximum(dot_bf16(h, params["w3"]) + params["b3"], 0.0)
    return dot_bf16(h, params["w4"]) + params["b4"]


if __name__ == "__main__":
    input_size, hidden_size, output_size = 28 * 28, 400, 10
    batch = 20   # not a multiple of the tile -> exercises ragged-batch padding

    key = jax.random.PRNGKey(0)
    key, kx = jax.random.split(key)
    params = init_params(key, input_size, hidden_size, output_size)

    # Input images (B, 1, 28, 28) -> flattened to (B, 784), like x.view(-1, 784).
    x_img = jax.random.normal(kx, (batch, 1, 28, 28), jnp.float32)
    x = x_img.reshape(-1, input_size)

    # Default tile selection: B=20 -> tb=16, 2 grid steps (multi-step pipeline
    # + ragged last tile exercised; also the v7x two-TC split path).
    out = basic_mlp_forward(x, params)
    out = jax.block_until_ready(out)

    ref = reference_forward(x, params)
    assert out.shape == (batch, output_size)
    assert jnp.allclose(out, ref, atol=1e-2, rtol=1e-2), "mismatch vs reference"

    print("KERNEL_OK")
</pallas_src>

<mosaic_0001>
module attributes {stable_mosaic.version = 11 : i64} {
  func.func @mlp_kernel(%arg0: i32, %arg1: memref<16x896xbf16, #tpu.memory_space<vmem>>, %arg2: memref<896x512xbf16, #tpu.memory_space<vmem>>, %arg3: memref<1x512xf32, #tpu.memory_space<vmem>>, %arg4: memref<512x512xbf16, #tpu.memory_space<vmem>>, %arg5: memref<1x512xf32, #tpu.memory_space<vmem>>, %arg6: memref<512x512xbf16, #tpu.memory_space<vmem>>, %arg7: memref<1x512xf32, #tpu.memory_space<vmem>>, %arg8: memref<512x128xbf16, #tpu.memory_space<vmem>>, %arg9: memref<1x128xf32, #tpu.memory_space<vmem>>, %arg10: memref<16x128xf32, #tpu.memory_space<vmem>>) attributes {dimension_semantics = [#tpu.dimension_semantics<parallel>], iteration_bounds = array<i64: 2>, scalar_prefetch = 0 : i64, scratch_operands = 0 : i64, tpu.core_type = #tpu.core_type<tc>, window_params = [{transform_indices = @transform_0, window_bounds = array<i64: 16, 896>}, {pipeline_mode = #tpu.pipeline_mode<synchronous>, transform_indices = @transform_1, window_bounds = array<i64: 896, 512>}, {pipeline_mode = #tpu.pipeline_mode<synchronous>, transform_indices = @transform_2, window_bounds = array<i64: 1, 512>}, {pipeline_mode = #tpu.pipeline_mode<synchronous>, transform_indices = @transform_3, window_bounds = array<i64: 512, 512>}, {pipeline_mode = #tpu.pipeline_mode<synchronous>, transform_indices = @transform_4, window_bounds = array<i64: 1, 512>}, {pipeline_mode = #tpu.pipeline_mode<synchronous>, transform_indices = @transform_5, window_bounds = array<i64: 512, 512>}, {pipeline_mode = #tpu.pipeline_mode<synchronous>, transform_indices = @transform_6, window_bounds = array<i64: 1, 512>}, {pipeline_mode = #tpu.pipeline_mode<synchronous>, transform_indices = @transform_7, window_bounds = array<i64: 512, 128>}, {pipeline_mode = #tpu.pipeline_mode<synchronous>, transform_indices = @transform_8, window_bounds = array<i64: 1, 128>}, {transform_indices = @transform_9, window_bounds = array<i64: 16, 128>}]} {
    %c0 = arith.constant 0 : index
    %c0_0 = arith.constant 0 : index
    %0 = vector.load %arg1[%c0, %c0_0] : memref<16x896xbf16, #tpu.memory_space<vmem>>, vector<16x896xbf16>
    %c0_1 = arith.constant 0 : index
    %c0_2 = arith.constant 0 : index
    %1 = vector.load %arg2[%c0_1, %c0_2] : memref<896x512xbf16, #tpu.memory_space<vmem>>, vector<896x512xbf16>
    %cst = arith.constant dense<0.000000e+00> : vector<16x512xf32>
    %2 = tpu.matmul %0, %1, %cst {dimension_numbers = #tpu.dot_dimension_numbers<[1], [0], [0], [1], [0, 0, 1, 1], [], []>} : vector<16x896xbf16>, vector<896x512xbf16>, vector<16x512xf32> -> vector<16x512xf32>
    %c0_3 = arith.constant 0 : index
    %c0_4 = arith.constant 0 : index
    %3 = vector.load %arg3[%c0_3, %c0_4] : memref<1x512xf32, #tpu.memory_space<vmem>>, vector<1x512xf32>
    %4 = vector.broadcast %3 : vector<1x512xf32> to vector<16x512xf32>
    %5 = arith.addf %2, %4 : vector<16x512xf32>
    %cst_5 = arith.constant 0.000000e+00 : f32
    %6 = vector.broadcast %cst_5 : f32 to vector<16x512xf32>
    %7 = arith.maximumf %5, %6 : vector<16x512xf32>
    %8 = arith.truncf %7 : vector<16x512xf32> to vector<16x512xbf16>
    %c0_6 = arith.constant 0 : index
    %c0_7 = arith.constant 0 : index
    %9 = vector.load %arg4[%c0_6, %c0_7] : memref<512x512xbf16, #tpu.memory_space<vmem>>, vector<512x512xbf16>
    %cst_8 = arith.constant dense<0.000000e+00> : vector<16x512xf32>
    %10 = tpu.matmul %8, %9, %cst_8 {dimension_numbers = #tpu.dot_dimension_numbers<[1], [0], [0], [1], [0, 0, 1, 1], [], []>} : vector<16x512xbf16>, vector<512x512xbf16>, vector<16x512xf32> -> vector<16x512xf32>
    %c0_9 = arith.constant 0 : index
    %c0_10 = arith.constant 0 : index
    %11 = vector.load %arg5[%c0_9, %c0_10] : memref<1x512xf32, #tpu.memory_space<vmem>>, vector<1x512xf32>
    %12 = vector.broadcast %11 : vector<1x512xf32> to vector<16x512xf32>
    %13 = arith.addf %10, %12 : vector<16x512xf32>
    %cst_11 = arith.constant 0.000000e+00 : f32
    %14 = vector.broadcast %cst_11 : f32 to vector<16x512xf32>
    %15 = arith.maximumf %13, %14 : vector<16x512xf32>
    %16 = arith.truncf %15 : vector<16x512xf32> to vector<16x512xbf16>
    %c0_12 = arith.constant 0 : index
    %c0_13 = arith.constant 0 : index
    %17 = vector.load %arg6[%c0_12, %c0_13] : memref<512x512xbf16, #tpu.memory_space<vmem>>, vector<512x512xbf16>
    %cst_14 = arith.constant dense<0.000000e+00> : vector<16x512xf32>
    %18 = tpu.matmul %16, %17, %cst_14 {dimension_numbers = #tpu.dot_dimension_numbers<[1], [0], [0], [1], [0, 0, 1, 1], [], []>} : vector<16x512xbf16>, vector<512x512xbf16>, vector<16x512xf32> -> vector<16x512xf32>
    %c0_15 = arith.constant 0 : index
    %c0_16 = arith.constant 0 : index
    %19 = vector.load %arg7[%c0_15, %c0_16] : memref<1x512xf32, #tpu.memory_space<vmem>>, vector<1x512xf32>
    %20 = vector.broadcast %19 : vector<1x512xf32> to vector<16x512xf32>
    %21 = arith.addf %18, %20 : vector<16x512xf32>
    %cst_17 = arith.constant 0.000000e+00 : f32
    %22 = vector.broadcast %cst_17 : f32 to vector<16x512xf32>
    %23 = arith.maximumf %21, %22 : vector<16x512xf32>
    %24 = arith.truncf %23 : vector<16x512xf32> to vector<16x512xbf16>
    %c0_18 = arith.constant 0 : index
    %c0_19 = arith.constant 0 : index
    %25 = vector.load %arg8[%c0_18, %c0_19] : memref<512x128xbf16, #tpu.memory_space<vmem>>, vector<512x128xbf16>
    %cst_20 = arith.constant dense<0.000000e+00> : vector<16x128xf32>
    %26 = tpu.matmul %24, %25, %cst_20 {dimension_numbers = #tpu.dot_dimension_numbers<[1], [0], [0], [1], [0, 0, 1, 1], [], []>} : vector<16x512xbf16>, vector<512x128xbf16>, vector<16x128xf32> -> vector<16x128xf32>
    %c0_21 = arith.constant 0 : index
    %c0_22 = arith.constant 0 : index
    %27 = vector.load %arg9[%c0_21, %c0_22] : memref<1x128xf32, #tpu.memory_space<vmem>>, vector<1x128xf32>
    %28 = vector.broadcast %27 : vector<1x128xf32> to vector<16x128xf32>
    %29 = arith.addf %26, %28 : vector<16x128xf32>
    %c0_23 = arith.constant 0 : index
    %c0_24 = arith.constant 0 : index
    %30 = vector.load %arg10[%c0_23, %c0_24] : memref<16x128xf32, #tpu.memory_space<vmem>>, vector<16x128xf32>
    tpu.vector_store %arg10[%c0_23, %c0_24], %29 {strides = array<i32>} : memref<16x128xf32, #tpu.memory_space<vmem>>, vector<16x128xf32>,
    return
  }
  func.func @transform_0(%arg0: i32) -> (i32, i32) {
    %c0_i32 = arith.constant 0 : i32
    %c0_i32_0 = arith.constant 0 : i32
    return %arg0, %c0_i32 : i32, i32
  }
  func.func @transform_1(%arg0: i32) -> (i32, i32) {
    %c0_i32 = arith.constant 0 : i32
    %c0_i32_0 = arith.constant 0 : i32
    %c0_i32_1 = arith.constant 0 : i32
    return %c0_i32, %c0_i32_0 : i32, i32
  }
  func.func @transform_2(%arg0: i32) -> (i32, i32) {
    %c0_i32 = arith.constant 0 : i32
    %c0_i32_0 = arith.constant 0 : i32
    %c0_i32_1 = arith.constant 0 : i32
    return %c0_i32, %c0_i32_0 : i32, i32
  }
  func.func @transform_3(%arg0: i32) -> (i32, i32) {
    %c0_i32 = arith.constant 0 : i32
    %c0_i32_0 = arith.constant 0 : i32
    %c0_i32_1 = arith.constant 0 : i32
    return %c0_i32, %c0_i32_0 : i32, i32
  }
  func.func @transform_4(%arg0: i32) -> (i32, i32) {
    %c0_i32 = arith.constant 0 : i32
    %c0_i32_0 = arith.constant 0 : i32
    %c0_i32_1 = arith.constant 0 : i32
    return %c0_i32, %c0_i32_0 : i32, i32
  }
  func.func @transform_5(%arg0: i32) -> (i32, i32) {
    %c0_i32 = arith.constant 0 : i32
    %c0_i32_0 = arith.constant 0 : i32
    %c0_i32_1 = arith.constant 0 : i32
    return %c0_i32, %c0_i32_0 : i32, i32
  }
  func.func @transform_6(%arg0: i32) -> (i32, i32) {
    %c0_i32 = arith.constant 0 : i32
    %c0_i32_0 = arith.constant 0 : i32
    %c0_i32_1 = arith.constant 0 : i32
    return %c0_i32, %c0_i32_0 : i32, i32
  }
  func.func @transform_7(%arg0: i32) -> (i32, i32) {
    %c0_i32 = arith.constant 0 : i32
    %c0_i32_0 = arith.constant 0 : i32
    %c0_i32_1 = arith.constant 0 : i32
    return %c0_i32, %c0_i32_0 : i32, i32
  }
  func.func @transform_8(%arg0: i32) -> (i32, i32) {
    %c0_i32 = arith.constant 0 : i32
    %c0_i32_0 = arith.constant 0 : i32
    %c0_i32_1 = arith.constant 0 : i32
    return %c0_i32, %c0_i32_0 : i32, i32
  }
  func.func @transform_9(%arg0: i32) -> (i32, i32) {
    %c0_i32 = arith.constant 0 : i32
    %c0_i32_0 = arith.constant 0 : i32
    return %arg0, %c0_i32 : i32, i32
  }
}

module attributes {stable_mosaic.version = 11 : i64} {
  func.func @mlp_kernel(%arg0: i32, %arg1: memref<16x896xbf16, #tpu.memory_space<vmem>>, %arg2: memref<896x512xbf16, #tpu.memory_space<vmem>>, %arg3: memref<1x512xf32, #tpu.memory_space<vmem>>, %arg4: memref<512x512xbf16, #tpu.memory_space<vmem>>, %arg5: memref<1x512xf32, #tpu.memory_space<vmem>>, %arg6: memref<512x512xbf16, #tpu.memory_space<vmem>>, %arg7: memref<1x512xf32, #tpu.memory_space<vmem>>, %arg8: memref<512x128xbf16, #tpu.memory_space<vmem>>, %arg9: memref<1x128xf32, #tpu.memory_space<vmem>>, %arg10: memref<16x128xf32, #tpu.memory_space<vmem>>) attributes {dimension_semantics = [#tpu.dimension_semantics<parallel>], iteration_bounds = array<i64: 2>, scalar_prefetch = 0 : i64, scratch_operands = 0 : i64, tpu.core_type = #tpu.core_type<tc>, window_params = [{transform_indices = @transform_0, window_bounds = array<i64: 16, 896>}, {pipeline_mode = #tpu.pipeline_mode<synchronous>, transform_indices = @transform_1, window_bounds = array<i64: 896, 512>}, {pipeline_mode = #tpu.pipeline_mode<synchronous>, transform_indices = @transform_2, window_bounds = array<i64: 1, 512>}, {pipeline_mode = #tpu.pipeline_mode<synchronous>, transform_indices = @transform_3, window_bounds = array<i64: 512, 512>}, {pipeline_mode = #tpu.pipeline_mode<synchronous>, transform_indices = @transform_4, window_bounds = array<i64: 1, 512>}, {pipeline_mode = #tpu.pipeline_mode<synchronous>, transform_indices = @transform_5, window_bounds = array<i64: 512, 512>}, {pipeline_mode = #tpu.pipeline_mode<synchronous>, transform_indices = @transform_6, window_bounds = array<i64: 1, 512>}, {pipeline_mode = #tpu.pipeline_mode<synchronous>, transform_indices = @transform_7, window_bounds = array<i64: 512, 128>}, {pipeline_mode = #tpu.pipeline_mode<synchronous>, transform_indices = @transform_8, window_bounds = array<i64: 1, 128>}, {transform_indices = @transform_9, window_bounds = array<i64: 16, 128>}]} {
    %c0 = arith.constant 0 : index
    %c0_0 = arith.constant 0 : index
    %0 = vector.load %arg1[%c0, %c0_0] : memref<16x896xbf16, #tpu.memory_space<vmem>>, vector<16x896xbf16>
    %c0_1 = arith.constant 0 : index
    %c0_2 = arith.constant 0 : index
    %1 = vector.load %arg2[%c0_1, %c0_2] : memref<896x512xbf16, #tpu.memory_space<vmem>>, vector<896x512xbf16>
    %cst = arith.constant dense<0.000000e+00> : vector<16x512xf32>
    %2 = tpu.matmul %0, %1, %cst {dimension_numbers = #tpu.dot_dimension_numbers<[1], [0], [0], [1], [0, 0, 1, 1], [], []>} : vector<16x896xbf16>, vector<896x512xbf16>, vector<16x512xf32> -> vector<16x512xf32>
    %c0_3 = arith.constant 0 : index
    %c0_4 = arith.constant 0 : index
    %3 = vector.load %arg3[%c0_3, %c0_4] : memref<1x512xf32, #tpu.memory_space<vmem>>, vector<1x512xf32>
    %4 = vector.broadcast %3 : vector<1x512xf32> to vector<16x512xf32>
    %5 = arith.addf %2, %4 : vector<16x512xf32>
    %cst_5 = arith.constant 0.000000e+00 : f32
    %6 = vector.broadcast %cst_5 : f32 to vector<16x512xf32>
    %7 = arith.maximumf %5, %6 : vector<16x512xf32>
    %8 = arith.truncf %7 : vector<16x512xf32> to vector<16x512xbf16>
    %c0_6 = arith.constant 0 : index
    %c0_7 = arith.constant 0 : index
    %9 = vector.load %arg4[%c0_6, %c0_7] : memref<512x512xbf16, #tpu.memory_space<vmem>>, vector<512x512xbf16>
    %cst_8 = arith.constant dense<0.000000e+00> : vector<16x512xf32>
    %10 = tpu.matmul %8, %9, %cst_8 {dimension_numbers = #tpu.dot_dimension_numbers<[1], [0], [0], [1], [0, 0, 1, 1], [], []>} : vector<16x512xbf16>, vector<512x512xbf16>, vector<16x512xf32> -> vector<16x512xf32>
    %c0_9 = arith.constant 0 : index
    %c0_10 = arith.constant 0 : index
    %11 = vector.load %arg5[%c0_9, %c0_10] : memref<1x512xf32, #tpu.memory_space<vmem>>, vector<1x512xf32>
    %12 = vector.broadcast %11 : vector<1x512xf32> to vector<16x512xf32>
    %13 = arith.addf %10, %12 : vector<16x512xf32>
    %cst_11 = arith.constant 0.000000e+00 : f32
    %14 = vector.broadcast %cst_11 : f32 to vector<16x512xf32>
    %15 = arith.maximumf %13, %14 : vector<16x512xf32>
    %16 = arith.truncf %15 : vector<16x512xf32> to vector<16x512xbf16>
    %c0_12 = arith.constant 0 : index
    %c0_13 = arith.constant 0 : index
    %17 = vector.load %arg6[%c0_12, %c0_13] : memref<512x512xbf16, #tpu.memory_space<vmem>>, vector<512x512xbf16>
    %cst_14 = arith.constant dense<0.000000e+00> : vector<16x512xf32>
    %18 = tpu.matmul %16, %17, %cst_14 {dimension_numbers = #tpu.dot_dimension_numbers<[1], [0], [0], [1], [0, 0, 1, 1], [], []>} : vector<16x512xbf16>, vector<512x512xbf16>, vector<16x512xf32> -> vector<16x512xf32>
    %c0_15 = arith.constant 0 : index
    %c0_16 = arith.constant 0 : index
    %19 = vector.load %arg7[%c0_15, %c0_16] : memref<1x512xf32, #tpu.memory_space<vmem>>, vector<1x512xf32>
    %20 = vector.broadcast %19 : vector<1x512xf32> to vector<16x512xf32>
    %21 = arith.addf %18, %20 : vector<16x512xf32>
    %cst_17 = arith.constant 0.000000e+00 : f32
    %22 = vector.broadcast %cst_17 : f32 to vector<16x512xf32>
    %23 = arith.maximumf %21, %22 : vector<16x512xf32>
    %24 = arith.truncf %23 : vector<16x512xf32> to vector<16x512xbf16>
    %c0_18 = arith.constant 0 : index
    %c0_19 = arith.constant 0 : index
    %25 = vector.load %arg8[%c0_18, %c0_19] : memref<512x128xbf16, #tpu.memory_space<vmem>>, vector<512x128xbf16>
    %cst_20 = arith.constant dense<0.000000e+00> : vector<16x128xf32>
    %26 = tpu.matmul %24, %25, %cst_20 {dimension_numbers = #tpu.dot_dimension_numbers<[1], [0], [0], [1], [0, 0, 1, 1], [], []>} : vector<16x512xbf16>, vector<512x128xbf16>, vector<16x128xf32> -> vector<16x128xf32>
    %c0_21 = arith.constant 0 : index
    %c0_22 = arith.constant 0 : index
    %27 = vector.load %arg9[%c0_21, %c0_22] : memref<1x128xf32, #tpu.memory_space<vmem>>, vector<1x128xf32>
    %28 = vector.broadcast %27 : vector<1x128xf32> to vector<16x128xf32>
    %29 = arith.addf %26, %28 : vector<16x128xf32>
    %c0_23 = arith.constant 0 : index
    %c0_24 = arith.constant 0 : index
    %30 = vector.load %arg10[%c0_23, %c0_24] : memref<16x128xf32, #tpu.memory_space<vmem>>, vector<16x128xf32>
    tpu.vector_store %arg10[%c0_23, %c0_24], %29 {strides = array<i32>} : memref<16x128xf32, #tpu.memory_space<vmem>>, vector<16x128xf32>,
    return
  }
  func.func @transform_0(%arg0: i32) -> (i32, i32) {
    %c0_i32 = arith.constant 0 : i32
    %c0_i32_0 = arith.constant 0 : i32
    return %arg0, %c0_i32 : i32, i32
  }
  func.func @transform_1(%arg0: i32) -> (i32, i32) {
    %c0_i32 = arith.constant 0 : i32
    %c0_i32_0 = arith.constant 0 : i32
    %c0_i32_1 = arith.constant 0 : i32
    return %c0_i32, %c0_i32_0 : i32, i32
  }
  func.func @transform_2(%arg0: i32) -> (i32, i32) {
    %c0_i32 = arith.constant 0 : i32
    %c0_i32_0 = arith.constant 0 : i32
    %c0_i32_1 = arith.constant 0 : i32
    return %c0_i32, %c0_i32_0 : i32, i32
  }
  func.func @transform_3(%arg0: i32) -> (i32, i32) {
    %c0_i32 = arith.constant 0 : i32
    %c0_i32_0 = arith.constant 0 : i32
    %c0_i32_1 = arith.constant 0 : i32
    return %c0_i32, %c0_i32_0 : i32, i32
  }
  func.func @transform_4(%arg0: i32) -> (i32, i32) {
    %c0_i32 = arith.constant 0 : i32
    %c0_i32_0 = arith.constant 0 : i32
    %c0_i32_1 = arith.constant 0 : i32
    return %c0_i32, %c0_i32_0 : i32, i32
  }
  func.func @transform_5(%arg0: i32) -> (i32, i32) {
    %c0_i32 = arith.constant 0 : i32
    %c0_i32_0 = arith.constant 0 : i32
    %c0_i32_1 = arith.constant 0 : i32
    return %c0_i32, %c0_i32_0 : i32, i32
  }
  func.func @transform_6(%arg0: i32) -> (i32, i32) {
    %c0_i32 = arith.constant 0 : i32
    %c0_i32_0 = arith.constant 0 : i32
    %c0_i32_1 = arith.constant 0 : i32
    return %c0_i32, %c0_i32_0 : i32, i32
  }
  func.func @transform_7(%arg0: i32) -> (i32, i32) {
    %c0_i32 = arith.constant 0 : i32
    %c0_i32_0 = arith.constant 0 : i32
    %c0_i32_1 = arith.constant 0 : i32
    return %c0_i32, %c0_i32_0 : i32, i32
  }
  func.func @transform_8(%arg0: i32) -> (i32, i32) {
    %c0_i32 = arith.constant 0 : i32
    %c0_i32_0 = arith.constant 0 : i32
    %c0_i32_1 = arith.constant 0 : i32
    return %c0_i32, %c0_i32_0 : i32, i32
  }
  func.func @transform_9(%arg0: i32) -> (i32, i32) {
    %c0_i32 = arith.constant 0 : i32
    %c0_i32_0 = arith.constant 0 : i32
    return %arg0, %c0_i32 : i32, i32
  }
}

</mosaic_0001>

<llo_original>
// kernel: tpu_custom_call.1
$region0: #{tpu_custom_call.1}
  #allocation0 [shape = 'u32[]', space=smem, size = 0x4, offset = 0x4, fixed_abs, tag = 'smem constant byte address 0x4 - core index']
  #allocation1 [shape = 'u32[72,128]{1,0:T(1,128)}', space=vmem, size = 0x9000, scoped, tag = 'internal scratch']
  %s0 = inlined_call_operand.hbm [shape: bf16[32,896], index: 0, kind: input, shape index: {}]
  %s1 = inlined_call_operand.hbm [shape: bf16[896,512], index: 1, kind: input, shape index: {}]
  %s2 = inlined_call_operand.hbm [shape: f32[1,512], index: 2, kind: input, shape index: {}]
  %s3 = inlined_call_operand.hbm [shape: bf16[512,512], index: 3, kind: input, shape index: {}]
  %s4 = inlined_call_operand.hbm [shape: f32[1,512], index: 4, kind: input, shape index: {}]
  %s5 = inlined_call_operand.hbm [shape: bf16[512,512], index: 5, kind: input, shape index: {}]
  %s6 = inlined_call_operand.vmem [shape: f32[1,512], index: 6, kind: input, shape index: {}]
  %s7 = inlined_call_operand.hbm [shape: bf16[512,128], index: 7, kind: input, shape index: {}]
  %s8 = inlined_call_operand.vmem [shape: f32[1,128], index: 8, kind: input, shape index: {}]
  %s9 = inlined_call_operand.hbm [shape: f32[32,128], index: 9, kind: output, shape index: {}]
  %s10 = sld [smem:[#allocation0]]
  $region97: #{tpu_custom_call.1} parent=0
    _
  %s12 = ssub.s32 1, %s10
  %s13 = scalar_select 0, %s12, %s10
  $region1: #{tpu_custom_call.1} parent=0
    #allocation2 [shape = 'u8[57344]{0}', space=vmem, size = 0xe000, scoped, tag = 'input window, operand 0']
    #allocation3 [shape = 's32[2]{0}', space=sflag, size = 0x8, scoped, tag = 'scoped memory for tpu_custom_call.1']
    #allocation4 [shape = 's32[2]{0}', space=sflag, size = 0x8, scoped, tag = 'scoped memory for tpu_custom_call.1']
    #allocation5 [shape = 'u8[917504]{0}', space=vmem, size = 0xe0000, scoped, tag = 'input window, operand 1, single buffered']
    #allocation6 [shape = 's32[1]{0}', space=sflag, size = 0x4, scoped, tag = 'scoped memory for tpu_custom_call.1']
    #allocation7 [shape = 'u8[2048]{0}', space=vmem, size = 0x800, scoped, tag = 'input window, operand 2, single buffered']
    #allocation8 [shape = 'u8[524288]{0}', space=vmem, size = 0x80000, scoped, tag = 'input window, operand 3, single buffered']
    #allocation9 [shape = 's32[1]{0}', space=sflag, size = 0x4, scoped, tag = 'scoped memory for tpu_custom_call.1']
    #allocation10 [shape = 'u8[2048]{0}', space=vmem, size = 0x800, scoped, tag = 'input window, operand 4, single buffered']
    #allocation11 [shape = 'u8[524288]{0}', space=vmem, size = 0x80000, scoped, tag = 'input window, operand 5, single buffered']
    #allocation12 [shape = 's32[1]{0}', space=sflag, size = 0x4, scoped, tag = 'scoped memory for tpu_custom_call.1']
    #allocation13 [shape = 'u8[131072]{0}', space=vmem, size = 0x20000, scoped, tag = 'input window, operand 7, single buffered']
    #allocation14 [shape = 'u8[16384]{0}', space=vmem, size = 0x4000, scoped, tag = 'output window, operand 0']
    %14 = vsyncpa [#allocation3], 0
    %s15 = scalar_lea.sflag [#allocation3], 1
    %16 = vsyncpa %s15, 0
    %17 = vsyncpa [#allocation6], 0
    %18 = vsyncpa [#allocation9], 0
    %19 = vsyncpa [#allocation12], 0
    %20 = vsyncpa [#allocation4], 0
    %s21 = scalar_lea.sflag [#allocation4], 1
    %22 = vsyncpa %s21, 0
    loop: start=0, step=1, limit=4
    $region2: #{tpu_custom_call.1} parent=1 // loop_pre_header
      _
    $region3: #{tpu_custom_call.1} parent=1 // loop_header
      %s24 = sphi 0, %s28
      %p25 = scmp.ge.s32.totalorder %s24, 4
      %s34 = sphi 0, %s36
      %s37 = sphi 0, %s34
      %s38 = sphi 0, %s37
      %s54 = sphi 0, %s38
      %s58 = sphi 0, %s58
      %s60 = sphi 0, %s58
      %s61 = sphi 0, %s60
      %s75 = sphi 0, %s61
      %s79 = sphi 0, %s79
      %s81 = sphi 0, %s79
      %s82 = sphi 0, %s81
      %s96 = sphi 0, %s82
      %s100 = sphi 0, %s100
      %s102 = sphi 0, %s100
      %s103 = sphi 0, %s102
      %s117 = sphi 0, %s103
      %s121 = sphi 0, %s121
      %s123 = sphi 0, %s121
      %s124 = sphi 0, %s123
      %s138 = sphi 0, %s124
      %s142 = sphi 0, %s142
      %s144 = sphi 0, %s142
      %s145 = sphi 0, %s144
      %s159 = sphi 0, %s145
      %s163 = sphi 0, %s163
      %s165 = sphi 0, %s163
      %s166 = sphi 0, %s165
      %s180 = sphi 0, %s166
      %s184 = sphi 0, %s184
      %s186 = sphi 0, %s184
      %s187 = sphi 0, %s186
      %s201 = sphi 0, %s187
      %s205 = sphi 0, %s205
      %s207 = sphi 0, %s205
      %s208 = sphi 0, %s207
      %s222 = sphi 0, %s208
      %s228 = sphi 0, %s230
      %s231 = sphi 0, %s228
      %s232 = sphi 0, %s231
      %s248 = sphi 0, %s232
    $region4: #{tpu_custom_call.1} parent=1 // loop_header_branch
      %27 = sbr.rel (%p25) target = $region8
    $region5: #{tpu_custom_call.1} parent=1 // loop_body
      %s29 = ssub.s32 %s24, 1
      %s30 = ssub.s32 %s24, 2
      %s31 = sadd.s32 %s24, 1
      %s32 = ssub.s32 %s24, %s31
      %p33 = scmp.eq.s32.totalorder %s32, 0
      %s35 = sadd.s32 %s34, 1
      %s36 = scalar_select %p33, %s34, %s35
      %p39 = pneg %p33
      %p40 = scmp.eq.s32.totalorder %s24, 1
      %p41 = por %p39, %p40
      %p42 = scmp.ne.s32.totalorder %s34, %s37
      %p43 = scmp.eq.s32.totalorder %s24, 0
      %p44 = por %p42, %p43
      %p45 = scmp.ne.s32.totalorder %s34, %s37
      %p46 = scmp.eq.s32.totalorder %s29, 1
      %p47 = por %p45, %p46
      %p48 = scmp.ne.s32.totalorder %s37, %s38
      %p49 = scmp.eq.s32.totalorder %s29, 0
      %p50 = por %p48, %p49
      %p51 = scmp.ne.s32.totalorder %s37, %s38
      %p52 = scmp.eq.s32.totalorder %s30, 1
      %p53 = por %p51, %p52
      %p55 = scmp.ne.s32.totalorder %s38, %s54
      %p56 = scmp.eq.s32.totalorder %s30, 0
      %p57 = por %p55, %p56
      %s59 = sadd.s32 %s58, 1
      %p62 = scmp.eq.s32.totalorder %s24, 1
      %p63 = scmp.ne.s32.totalorder %s58, %s60
      %p64 = scmp.eq.s32.totalorder %s24, 0
      %p65 = por %p63, %p64
      %p66 = scmp.ne.s32.totalorder %s58, %s60
      %p67 = scmp.eq.s32.totalorder %s29, 1
      %p68 = por %p66, %p67
      %p69 = scmp.ne.s32.totalorder %s60, %s61
      %p70 = scmp.eq.s32.totalorder %s29, 0
      %p71 = por %p69, %p70
      %p72 = scmp.ne.s32.totalorder %s60, %s61
      %p73 = scmp.eq.s32.totalorder %s30, 1
      %p74 = por %p72, %p73
      %p76 = scmp.ne.s32.totalorder %s61, %s75
      %p77 = scmp.eq.s32.totalorder %s30, 0
      %p78 = por %p76, %p77
      %s80 = sadd.s32 %s79, 1
      %p83 = scmp.eq.s32.totalorder %s24, 1
      %p84 = scmp.ne.s32.totalorder %s79, %s81
      %p85 = scmp.eq.s32.totalorder %s24, 0
      %p86 = por %p84, %p85
      %p87 = scmp.ne.s32.totalorder %s79, %s81
      %p88 = scmp.eq.s32.totalorder %s29, 1
      %p89 = por %p87, %p88
      %p90 = scmp.ne.s32.totalorder %s81, %s82
      %p91 = scmp.eq.s32.totalorder %s29, 0
      %p92 = por %p90, %p91
      %p93 = scmp.ne.s32.totalorder %s81, %s82
      %p94 = scmp.eq.s32.totalorder %s30, 1
      %p95 = por %p93, %p94
      %p97 = scmp.ne.s32.totalorder %s82, %s96
      %p98 = scmp.eq.s32.totalorder %s30, 0
      %p99 = por %p97, %p98
      %s101 = sadd.s32 %s100, 1
      %p104 = scmp.eq.s32.totalorder %s24, 1
      %p105 = scmp.ne.s32.totalorder %s100, %s102
      %p106 = scmp.eq.s32.totalorder %s24, 0
      %p107 = por %p105, %p106
      %p108 = scmp.ne.s32.totalorder %s100, %s102
      %p109 = scmp.eq.s32.totalorder %s29, 1
      %p110 = por %p108, %p109
      %p111 = scmp.ne.s32.totalorder %s102, %s103
      %p112 = scmp.eq.s32.totalorder %s29, 0
      %p113 = por %p111, %p112
      %p114 = scmp.ne.s32.totalorder %s102, %s103
      %p115 = scmp.eq.s32.totalorder %s30, 1
      %p116 = por %p114, %p115
      %p118 = scmp.ne.s32.totalorder %s103, %s117
      %p119 = scmp.eq.s32.totalorder %s30, 0
      %p120 = por %p118, %p119
      %s122 = sadd.s32 %s121, 1
      %p125 = scmp.eq.s32.totalorder %s24, 1
      %p126 = scmp.ne.s32.totalorder %s121, %s123
      %p127 = scmp.eq.s32.totalorder %s24, 0
      %p128 = por %p126, %p127
      %p129 = scmp.ne.s32.totalorder %s121, %s123
      %p130 = scmp.eq.s32.totalorder %s29, 1
      %p131 = por %p129, %p130
      %p132 = scmp.ne.s32.totalorder %s123, %s124
      %p133 = scmp.eq.s32.totalorder %s29, 0
      %p134 = por %p132, %p133
      %p135 = scmp.ne.s32.totalorder %s123, %s124
      %p136 = scmp.eq.s32.totalorder %s30, 1
      %p137 = por %p135, %p136
      %p139 = scmp.ne.s32.totalorder %s124, %s138
      %p140 = scmp.eq.s32.totalorder %s30, 0
      %p141 = por %p139, %p140
      %s143 = sadd.s32 %s142, 1
      %p146 = scmp.eq.s32.totalorder %s24, 1
      %p147 = scmp.ne.s32.totalorder %s142, %s144
      %p148 = scmp.eq.s32.totalorder %s24, 0
      %p149 = por %p147, %p148
      %p150 = scmp.ne.s32.totalorder %s142, %s144
      %p151 = scmp.eq.s32.totalorder %s29, 1
      %p152 = por %p150, %p151
      %p153 = scmp.ne.s32.totalorder %s144, %s145
      %p154 = scmp.eq.s32.totalorder %s29, 0
      %p155 = por %p153, %p154
      %p156 = scmp.ne.s32.totalorder %s144, %s145
      %p157 = scmp.eq.s32.totalorder %s30, 1
      %p158 = por %p156, %p157
      %p160 = scmp.ne.s32.totalorder %s145, %s159
      %p161 = scmp.eq.s32.totalorder %s30, 0
      %p162 = por %p160, %p161
      %s164 = sadd.s32 %s163, 1
      %p167 = scmp.eq.s32.totalorder %s24, 1
      %p168 = scmp.ne.s32.totalorder %s163, %s165
      %p169 = scmp.eq.s32.totalorder %s24, 0
      %p170 = por %p168, %p169
      %p171 = scmp.ne.s32.totalorder %s163, %s165
      %p172 = scmp.eq.s32.totalorder %s29, 1
      %p173 = por %p171, %p172
      %p174 = scmp.ne.s32.totalorder %s165, %s166
      %p175 = scmp.eq.s32.totalorder %s29, 0
      %p176 = por %p174, %p175
      %p177 = scmp.ne.s32.totalorder %s165, %s166
      %p178 = scmp.eq.s32.totalorder %s30, 1
      %p179 = por %p177, %p178
      %p181 = scmp.ne.s32.totalorder %s166, %s180
      %p182 = scmp.eq.s32.totalorder %s30, 0
      %p183 = por %p181, %p182
      %s185 = sadd.s32 %s184, 1
      %p188 = scmp.eq.s32.totalorder %s24, 1
      %p189 = scmp.ne.s32.totalorder %s184, %s186
      %p190 = scmp.eq.s32.totalorder %s24, 0
      %p191 = por %p189, %p190
      %p192 = scmp.ne.s32.totalorder %s184, %s186
      %p193 = scmp.eq.s32.totalorder %s29, 1
      %p194 = por %p192, %p193
      %p195 = scmp.ne.s32.totalorder %s186, %s187
      %p196 = scmp.eq.s32.totalorder %s29, 0
      %p197 = por %p195, %p196
      %p198 = scmp.ne.s32.totalorder %s186, %s187
      %p199 = scmp.eq.s32.totalorder %s30, 1
      %p200 = por %p198, %p199
      %p202 = scmp.ne.s32.totalorder %s187, %s201
      %p203 = scmp.eq.s32.totalorder %s30, 0
      %p204 = por %p202, %p203
      %s206 = sadd.s32 %s205, 1
      %p209 = scmp.eq.s32.totalorder %s24, 1
      %p210 = scmp.ne.s32.totalorder %s205, %s207
      %p211 = scmp.eq.s32.totalorder %s24, 0
      %p212 = por %p210, %p211
      %p213 = scmp.ne.s32.totalorder %s205, %s207
      %p214 = scmp.eq.s32.totalorder %s29, 1
      %p215 = por %p213, %p214
      %p216 = scmp.ne.s32.totalorder %s207, %s208
      %p217 = scmp.eq.s32.totalorder %s29, 0
      %p218 = por %p216, %p217
      %p219 = scmp.ne.s32.totalorder %s207, %s208
      %p220 = scmp.eq.s32.totalorder %s30, 1
      %p221 = por %p219, %p220
      %p223 = scmp.ne.s32.totalorder %s208, %s222
      %p224 = scmp.eq.s32.totalorder %s30, 0
      %p225 = por %p223, %p224
      %s226 = ssub.s32 %s24, %s31
      %p227 = scmp.eq.s32.totalorder %s226, 0
      %s229 = sadd.s32 %s228, 1
      %s230 = scalar_select %p227, %s228, %s229
      %p233 = pneg %p227
      %p234 = scmp.eq.s32.totalorder %s24, 1
      %p235 = por %p233, %p234
      %p236 = scmp.ne.s32.totalorder %s228, %s231
      %p237 = scmp.eq.s32.totalorder %s24, 0
      %p238 = por %p236, %p237
      %p239 = scmp.ne.s32.totalorder %s228, %s231
      %p240 = scmp.eq.s32.totalorder %s29, 1
      %p241 = por %p239, %p240
      %p242 = scmp.ne.s32.totalorder %s231, %s232
      %p243 = scmp.eq.s32.totalorder %s29, 0
      %p244 = por %p242, %p243
      %p245 = scmp.ne.s32.totalorder %s231, %s232
      %p246 = scmp.eq.s32.totalorder %s30, 1
      %p247 = por %p245, %p246
      %p249 = scmp.ne.s32.totalorder %s232, %s248
      %p250 = scmp.eq.s32.totalorder %s30, 0
      %p251 = por %p249, %p250
      %p252 = scmp.le.s32.totalorder 1, %s24
      %p253 = scmp.lt.s32.totalorder %s24, 3
      %p254 = pnand %p252, %p253
      %p255 = pneg %p254
      // Predicated region
      $region9: #{tpu_custom_call.1} parent=5 // pred_check
        _
      $region10: #{tpu_custom_call.1} parent=5 // pred_check_branch
        %257 = sbr.rel (%p254) target = $region12
      $region11: #{tpu_custom_call.1} parent=5 // pred_region
        %s258 = ssub.s32 %s24, 1
        // Predicated region
        $region13: #{tpu_custom_call.1} parent=11 // pred_check
          %p259 = pneg %p71
        $region14: #{tpu_custom_call.1} parent=11 // pred_check_branch
          %261 = sbr.rel (%p259) target = $region16
        $region15: #{tpu_custom_call.1} parent=11 // pred_region
          %263 = vsyncadd [#allocation6], 0
          %s264 = sshll.u32 %s1, 4
          %s265 = int_to_ptr.hbm [resolvable:$true] %s264
          %s266 = sshll.u32 [#allocation5], 4
          %s267 = int_to_ptr.vmem [resolvable:$true] %s266
          %272 = dma.hbm_to_vmem [thread:$0]  %s265, 28672, %s267, [#allocation6], 256, 256, 16
        $region16: #{tpu_custom_call.1} parent=11 // pred_fallthru
          _
        // Predicated region
        $region17: #{tpu_custom_call.1} parent=11 // pred_check
          %p273 = pneg %p92
        $region18: #{tpu_custom_call.1} parent=11 // pred_check_branch
          %275 = sbr.rel (%p273) target = $region20
        $region19: #{tpu_custom_call.1} parent=11 // pred_region
          %277 = vsyncadd [#allocation6], 0
          %s279 = sshll.u32 %s2, 4
          %s280 = int_to_ptr.hbm [resolvable:$true] %s279
          %s281 = sshll.u32 [#allocation7], 4
          %s282 = int_to_ptr.vmem [resolvable:$true] %s281
          %284 = dma.hbm_to_vmem [thread:$0]  %s280, 64, %s282, [#allocation6]
        $region20: #{tpu_custom_call.1} parent=11 // pred_fallthru
          _
        // Predicated region
        $region21: #{tpu_custom_call.1} parent=11 // pred_check
          %p285 = pneg %p113
        $region22: #{tpu_custom_call.1} parent=11 // pred_check_branch
          %287 = sbr.rel (%p285) target = $region24
        $region23: #{tpu_custom_call.1} parent=11 // pred_region
          %289 = vsyncadd [#allocation9], 0
          %s290 = sshll.u32 %s3, 4
          %s291 = int_to_ptr.hbm [resolvable:$true] %s290
          %s292 = sshll.u32 [#allocation8], 4
          %s293 = int_to_ptr.vmem [resolvable:$true] %s292
          %298 = dma.hbm_to_vmem [thread:$0]  %s291, 16384, %s293, [#allocation9], 256, 256, 16
        $region24: #{tpu_custom_call.1} parent=11 // pred_fallthru
          _
        // Predicated region
        $region25: #{tpu_custom_call.1} parent=11 // pred_check
          %p299 = pneg %p134
        $region26: #{tpu_custom_call.1} parent=11 // pred_check_branch
          %301 = sbr.rel (%p299) target = $region28
        $region27: #{tpu_custom_call.1} parent=11 // pred_region
          %303 = vsyncadd [#allocation9], 0
          %s305 = sshll.u32 %s4, 4
          %s306 = int_to_ptr.hbm [resolvable:$true] %s305
          %s307 = sshll.u32 [#allocation10], 4
          %s308 = int_to_ptr.vmem [resolvable:$true] %s307
          %310 = dma.hbm_to_vmem [thread:$0]  %s306, 64, %s308, [#allocation9]
        $region28: #{tpu_custom_call.1} parent=11 // pred_fallthru
          _
        // Predicated region
        $region29: #{tpu_custom_call.1} parent=11 // pred_check
          %p311 = pneg %p155
        $region30: #{tpu_custom_call.1} parent=11 // pred_check_branch
          %313 = sbr.rel (%p311) target = $region32
        $region31: #{tpu_custom_call.1} parent=11 // pred_region
          %315 = vsyncadd [#allocation12], 0
          %s316 = sshll.u32 %s5, 4
          %s317 = int_to_ptr.hbm [resolvable:$true] %s316
          %s318 = sshll.u32 [#allocation11], 4
          %s319 = int_to_ptr.vmem [resolvable:$true] %s318
          %324 = dma.hbm_to_vmem [thread:$0]  %s317, 16384, %s319, [#allocation12], 256, 256, 16
        $region32: #{tpu_custom_call.1} parent=11 // pred_fallthru
          _
        // Predicated region
        $region33: #{tpu_custom_call.1} parent=11 // pred_check
          %p325 = pneg %p176
        $region34: #{tpu_custom_call.1} parent=11 // pred_check_branch
          %327 = sbr.rel (%p325) target = $region36
        $region35: #{tpu_custom_call.1} parent=11 // pred_region
          _
        $region36: #{tpu_custom_call.1} parent=11 // pred_fallthru
          _
        // Predicated region
        $region37: #{tpu_custom_call.1} parent=11 // pred_check
          %p328 = pneg %p197
        $region38: #{tpu_custom_call.1} parent=11 // pred_check_branch
          %330 = sbr.rel (%p328) target = $region40
        $region39: #{tpu_custom_call.1} parent=11 // pred_region
          %332 = vsyncadd [#allocation12], 0
          %s333 = sshll.u32 %s7, 4
          %s334 = int_to_ptr.hbm [resolvable:$true] %s333
          %s335 = sshll.u32 [#allocation13], 4
          %s336 = int_to_ptr.vmem [resolvable:$true] %s335
          %341 = dma.hbm_to_vmem [thread:$0]  %s334, 4096, %s336, [#allocation12], 64, 64, 4
        $region40: #{tpu_custom_call.1} parent=11 // pred_fallthru
          _
        // Predicated region
        $region41: #{tpu_custom_call.1} parent=11 // pred_check
          %p342 = pneg %p218
        $region42: #{tpu_custom_call.1} parent=11 // pred_check_branch
          %344 = sbr.rel (%p342) target = $region44
        $region43: #{tpu_custom_call.1} parent=11 // pred_region
          _
        $region44: #{tpu_custom_call.1} parent=11 // pred_fallthru
          _
      $region12: #{tpu_custom_call.1} parent=5 // pred_fallthru
        _
      %p345 = scmp.lt.s32.totalorder %s24, 2
      // Predicated region
      $region45: #{tpu_custom_call.1} parent=5 // pred_check
        %p346 = pneg %p345
      $region46: #{tpu_custom_call.1} parent=5 // pred_check_branch
        %348 = sbr.rel (%p346) target = $region48
      $region47: #{tpu_custom_call.1} parent=5 // pred_region
        // Predicated region
        $region49: #{tpu_custom_call.1} parent=47 // pred_check
          %p349 = pneg %p44
        $region50: #{tpu_custom_call.1} parent=47 // pred_check_branch
          %351 = sbr.rel (%p349) target = $region52
        $region51: #{tpu_custom_call.1} parent=47 // pred_region
          %s352 = sand.u32 %s34, 1
          %s353 = scalar_lea.sflag [#allocation3], %s352
          %s354 = sand.u32 %s34, 1
          %s355 = smul.addr %s354, 56
          %s356 = scalar_lea.vmem [#allocation2], %s355
          %s357 = smul.u32 2, %s24
          %359 = vsyncadd %s353, 0
          %s360 = smul.addr %s357, 7
          %s361 = smul.addr %s360, 4
          %s362 = scalar_lea.hbm %s0, %s361
          %s363 = sshll.u32 %s362, 4
          %s364 = int_to_ptr.hbm [resolvable:$true] %s363
          %s365 = sshll.u32 %s356, 4
          %s366 = int_to_ptr.vmem [resolvable:$true] %s365
          %371 = dma.hbm_to_vmem [thread:$0]  %s364, 896, %s366, %s353, 448, 448, 28
        $region52: #{tpu_custom_call.1} parent=47 // pred_fallthru
          _
      $region48: #{tpu_custom_call.1} parent=5 // pred_fallthru
        _
      %p372 = scmp.le.s32.totalorder 1, %s24
      %p373 = scmp.lt.s32.totalorder %s24, 3
      %p374 = pnand %p372, %p373
      %p375 = pneg %p374
      // Predicated region
      $region53: #{tpu_custom_call.1} parent=5 // pred_check
        _
      $region54: #{tpu_custom_call.1} parent=5 // pred_check_branch
        %377 = sbr.rel (%p374) target = $region56
      $region55: #{tpu_custom_call.1} parent=5 // pred_region
        %s378 = ssub.s32 %s24, 1
        %s379 = sand.u32 %s37, 1
        %s380 = scalar_lea.sflag [#allocation3], %s379
        %s381 = sand.u32 %s37, 1
        %s382 = smul.addr %s381, 56
        %s383 = scalar_lea.vmem [#allocation2], %s382
        // Predicated region
        $region57: #{tpu_custom_call.1} parent=55 // pred_check
          %p384 = pneg %p50
        $region58: #{tpu_custom_call.1} parent=55 // pred_check_branch
          %386 = sbr.rel (%p384) target = $region60
        $region59: #{tpu_custom_call.1} parent=55 // pred_region
          %388 = dma.done %s380, 896
        $region60: #{tpu_custom_call.1} parent=55 // pred_fallthru
          _
        // Predicated region
        $region61: #{tpu_custom_call.1} parent=55 // pred_check
          %p389 = pneg %p71
        $region62: #{tpu_custom_call.1} parent=55 // pred_check_branch
          %391 = sbr.rel (%p389) target = $region64
        $region63: #{tpu_custom_call.1} parent=55 // pred_region
          %393 = dma.done [#allocation6], 28672
        $region64: #{tpu_custom_call.1} parent=55 // pred_fallthru
          _
        // Predicated region
        $region65: #{tpu_custom_call.1} parent=55 // pred_check
          %p394 = pneg %p92
        $region66: #{tpu_custom_call.1} parent=55 // pred_check_branch
          %396 = sbr.rel (%p394) target = $region68
        $region67: #{tpu_custom_call.1} parent=55 // pred_region
          %398 = dma.done [#allocation6], 64
        $region68: #{tpu_custom_call.1} parent=55 // pred_fallthru
          _
        // Predicated region
        $region69: #{tpu_custom_call.1} parent=55 // pred_check
          %p399 = pneg %p113
        $region70: #{tpu_custom_call.1} parent=55 // pred_check_branch
          %401 = sbr.rel (%p399) target = $region72
        $region71: #{tpu_custom_call.1} parent=55 // pred_region
          %403 = dma.done [#allocation9], 16384
        $region72: #{tpu_custom_call.1} parent=55 // pred_fallthru
          _
        // Predicated region
        $region73: #{tpu_custom_call.1} parent=55 // pred_check
          %p404 = pneg %p134
        $region74: #{tpu_custom_call.1} parent=55 // pred_check_branch
          %406 = sbr.rel (%p404) target = $region76
        $region75: #{tpu_custom_call.1} parent=55 // pred_region
          %408 = dma.done [#allocation9], 64
        $region76: #{tpu_custom_call.1} parent=55 // pred_fallthru
          _
        // Predicated region
        $region77: #{tpu_custom_call.1} parent=55 // pred_check
          %p409 = pneg %p155
        $region78: #{tpu_custom_call.1} parent=55 // pred_check_branch
          %411 = sbr.rel (%p409) target = $region80
        $region79: #{tpu_custom_call.1} parent=55 // pred_region
          %413 = dma.done [#allocation12], 16384
        $region80: #{tpu_custom_call.1} parent=55 // pred_fallthru
          _
        // Predicated region
        $region81: #{tpu_custom_call.1} parent=55 // pred_check
          %p414 = pneg %p197
        $region82: #{tpu_custom_call.1} parent=55 // pred_check_branch
          %416 = sbr.rel (%p414) target = $region84
        $region83: #{tpu_custom_call.1} parent=55 // pred_region
          %418 = dma.done [#allocation12], 4096
        $region84: #{tpu_custom_call.1} parent=55 // pred_fallthru
          _
        %s419 = sand.u32 %s37, 1
        %s420 = scalar_lea.sflag [#allocation3], %s419
        %s421 = sand.u32 %s37, 1
        %s422 = smul.addr %s421, 56
        %s423 = scalar_lea.vmem [#allocation2], %s422
        %p424 = pneg %p50
        %p425 = pneg %p47
        %p426 = pneg %p71
        %p427 = pneg %p68
        %p428 = pneg %p92
        %p429 = pneg %p89
        %p430 = pneg %p113
        %p431 = pneg %p110
        %p432 = pneg %p134
        %p433 = pneg %p131
        %p434 = pneg %p155
        %p435 = pneg %p152
        %p436 = pneg %p176
        %p437 = pneg %p173
        %p438 = pneg %p197
        %p439 = pneg %p194
        %p440 = pneg %p218
        %p441 = pneg %p215
        %p442 = pneg %p244
        %p443 = pneg %p241
        %s444 = sand.u32 %s231, 1
        %s445 = scalar_lea.sflag [#allocation4], %s444
        %s446 = sand.u32 %s231, 1
        %s447 = smul.addr %s446, 16
        %s448 = scalar_lea.vmem [#allocation14], %s447
        %s449 = smul.u32 2, %s29
        %s450 = smul.u32 2, %s29
        %v451 = vld [vmem:[%s383] sm:$0xff]
        %v452 = vld [vmem:[%s383 + $0x8] sm:$0xff]
        %v453 = vld [vmem:[%s383 + $0x10] sm:$0xff]
        %v454 = vld [vmem:[%s383 + $0x18] sm:$0xf]
        %v455 = vld [vmem:[%s383 + $0x1c] sm:$0xff]
        %v456 = vld [vmem:[%s383 + $0x24] sm:$0xff]
        %v457 = vld [vmem:[%s383 + $0x2c] sm:$0xff]
        %v458 = vld [vmem:[%s383 + $0x34] sm:$0xf]
        %v459 = vld [vmem:[#allocation5] sm:$0xff]
        %v460 = vld [vmem:[#allocation5 + $0x8] sm:$0xff]
        %v461 = vld [vmem:[#allocation5 + $0x10] sm:$0xff]
        %v462 = vld [vmem:[#allocation5 + $0x18] sm:$0xff]
        %v463 = vld [vmem:[#allocation5 + $0x20] sm:$0xff]
        %v464 = vld [vmem:[#allocation5 + $0x28] sm:$0xff]
        %v465 = vld [vmem:[#allocation5 + $0x30] sm:$0xff]
        %v466 = vld [vmem:[#allocation5 + $0x38] sm:$0xff]
        %v467 = vld [vmem:[#allocation5 + $0x40] sm:$0xff]
        %v468 = vld [vmem:[#allocation5 + $0x48] sm:$0xff]
        %v469 = vld [vmem:[#allocation5 + $0x50] sm:$0xff]
        %v470 = vld [vmem:[#allocation5 + $0x58] sm:$0xff]
        %v471 = vld [vmem:[#allocation5 + $0x60] sm:$0xff]
        %v472 = vld [vmem:[#allocation5 + $0x68] sm:$0xff]
        %v473 = vld [vmem:[#allocation5 + $0x70] sm:$0xff]
        %v474 = vld [vmem:[#allocation5 + $0x78] sm:$0xff]
        %v475 = vld [vmem:[#allocation5 + $0x80] sm:$0xff]
        %v476 = vld [vmem:[#allocation5 + $0x88] sm:$0xff]
        %v477 = vld [vmem:[#allocation5 + $0x90] sm:$0xff]
        %v478 = vld [vmem:[#allocation5 + $0x98] sm:$0xff]
        %v479 = vld [vmem:[#allocation5 + $0xa0] sm:$0xff]
        %v480 = vld [vmem:[#allocation5 + $0xa8] sm:$0xff]
        %v481 = vld [vmem:[#allocation5 + $0xb0] sm:$0xff]
        %v482 = vld [vmem:[#allocation5 + $0xb8] sm:$0xff]
        %v483 = vld [vmem:[#allocation5 + $0xc0] sm:$0xff]
        %v484 = vld [vmem:[#allocation5 + $0xc8] sm:$0xff]
        %v485 = vld [vmem:[#allocation5 + $0xd0] sm:$0xff]
        %v486 = vld [vmem:[#allocation5 + $0xd8] sm:$0xff]
        %v487 = vld [vmem:[#allocation5 + $0xe0] sm:$0xff]
        %v488 = vld [vmem:[#allocation5 + $0xe8] sm:$0xff]
        %v489 = vld [vmem:[#allocation5 + $0xf0] sm:$0xff]
        %v490 = vld [vmem:[#allocation5 + $0xf8] sm:$0xff]
        %v491 = vld [vmem:[#allocation5 + $0x100] sm:$0xff]
        %v492 = vld [vmem:[#allocation5 + $0x108] sm:$0xff]
        %v493 = vld [vmem:[#allocation5 + $0x110] sm:$0xff]
        %v494 = vld [vmem:[#allocation5 + $0x118] sm:$0xff]
        %v495 = vld [vmem:[#allocation5 + $0x120] sm:$0xff]
        %v496 = vld [vmem:[#allocation5 + $0x128] sm:$0xff]
        %v497 = vld [vmem:[#allocation5 + $0x130] sm:$0xff]
        %v498 = vld [vmem:[#allocation5 + $0x138] sm:$0xff]
        %v499 = vld [vmem:[#allocation5 + $0x140] sm:$0xff]
        %v500 = vld [vmem:[#allocation5 + $0x148] sm:$0xff]
        %v501 = vld [vmem:[#allocation5 + $0x150] sm:$0xff]
        %v502 = vld [vmem:[#allocation5 + $0x158] sm:$0xff]
        %v503 = vld [vmem:[#allocation5 + $0x160] sm:$0xff]
        %v504 = vld [vmem:[#allocation5 + $0x168] sm:$0xff]
        %v505 = vld [vmem:[#allocation5 + $0x170] sm:$0xff]
        %v506 = vld [vmem:[#allocation5 + $0x178] sm:$0xff]
        %v507 = vld [vmem:[#allocation5 + $0x180] sm:$0xff]
        %v508 = vld [vmem:[#allocation5 + $0x188] sm:$0xff]
        %v509 = vld [vmem:[#allocation5 + $0x190] sm:$0xff]
        %v510 = vld [vmem:[#allocation5 + $0x198] sm:$0xff]
        %v511 = vld [vmem:[#allocation5 + $0x1a0] sm:$0xff]
        %v512 = vld [vmem:[#allocation5 + $0x1a8] sm:$0xff]
        %v513 = vld [vmem:[#allocation5 + $0x1b0] sm:$0xff]
        %v514 = vld [vmem:[#allocation5 + $0x1b8] sm:$0xff]
        %v515 = vld [vmem:[#allocation5 + $0x1c0] sm:$0xff]
        %v516 = vld [vmem:[#allocation5 + $0x1c8] sm:$0xff]
        %v517 = vld [vmem:[#allocation5 + $0x1d0] sm:$0xff]
        %v518 = vld [vmem:[#allocation5 + $0x1d8] sm:$0xff]
        %v519 = vld [vmem:[#allocation5 + $0x1e0] sm:$0xff]
        %v520 = vld [vmem:[#allocation5 + $0x1e8] sm:$0xff]
        %v521 = vld [vmem:[#allocation5 + $0x1f0] sm:$0xff]
        %v522 = vld [vmem:[#allocation5 + $0x1f8] sm:$0xff]
        %v523 = vld [vmem:[#allocation5 + $0x200] sm:$0xff]
        %v524 = vld [vmem:[#allocation5 + $0x208] sm:$0xff]
        %v525 = vld [vmem:[#allocation5 + $0x210] sm:$0xff]
        %v526 = vld [vmem:[#allocation5 + $0x218] sm:$0xff]
        %v527 = vld [vmem:[#allocation5 + $0x220] sm:$0xff]
        %v528 = vld [vmem:[#allocation5 + $0x228] sm:$0xff]
        %v529 = vld [vmem:[#allocation5 + $0x230] sm:$0xff]
        %v530 = vld [vmem:[#allocation5 + $0x238] sm:$0xff]
        %v531 = vld [vmem:[#allocation5 + $0x240] sm:$0xff]
        %v532 = vld [vmem:[#allocation5 + $0x248] sm:$0xff]
        %v533 = vld [vmem:[#allocation5 + $0x250] sm:$0xff]
        %v534 = vld [vmem:[#allocation5 + $0x258] sm:$0xff]
        %v535 = vld [vmem:[#allocation5 + $0x260] sm:$0xff]
        %v536 = vld [vmem:[#allocation5 + $0x268] sm:$0xff]
        %v537 = vld [vmem:[#allocation5 + $0x270] sm:$0xff]
        %v538 = vld [vmem:[#allocation5 + $0x278] sm:$0xff]
        %v539 = vld [vmem:[#allocation5 + $0x280] sm:$0xff]
        %v540 = vld [vmem:[#allocation5 + $0x288] sm:$0xff]
        %v541 = vld [vmem:[#allocation5 + $0x290] sm:$0xff]
        %v542 = vld [vmem:[#allocation5 + $0x298] sm:$0xff]
        %v543 = vld [vmem:[#allocation5 + $0x2a0] sm:$0xff]
        %v544 = vld [vmem:[#allocation5 + $0x2a8] sm:$0xff]
        %v545 = vld [vmem:[#allocation5 + $0x2b0] sm:$0xff]
        %v546 = vld [vmem:[#allocation5 + $0x2b8] sm:$0xff]
        %v547 = vld [vmem:[#allocation5 + $0x2c0] sm:$0xff]
        %v548 = vld [vmem:[#allocation5 + $0x2c8] sm:$0xff]
        %v549 = vld [vmem:[#allocation5 + $0x2d0] sm:$0xff]
        %v550 = vld [vmem:[#allocation5 + $0x2d8] sm:$0xff]
        %v551 = vld [vmem:[#allocation5 + $0x2e0] sm:$0xff]
        %v552 = vld [vmem:[#allocation5 + $0x2e8] sm:$0xff]
        %v553 = vld [vmem:[#allocation5 + $0x2f0] sm:$0xff]
        %v554 = vld [vmem:[#allocation5 + $0x2f8] sm:$0xff]
        %v555 = vld [vmem:[#allocation5 + $0x300] sm:$0xff]
        %v556 = vld [vmem:[#allocation5 + $0x308] sm:$0xff]
        %v557 = vld [vmem:[#allocation5 + $0x310] sm:$0xff]
        %v558 = vld [vmem:[#allocation5 + $0x318] sm:$0xff]
        %v559 = vld [vmem:[#allocation5 + $0x320] sm:$0xff]
        %v560 = vld [vmem:[#allocation5 + $0x328] sm:$0xff]
        %v561 = vld [vmem:[#allocation5 + $0x330] sm:$0xff]
        %v562 = vld [vmem:[#allocation5 + $0x338] sm:$0xff]
        %v563 = vld [vmem:[#allocation5 + $0x340] sm:$0xff]
        %v564 = vld [vmem:[#allocation5 + $0x348] sm:$0xff]
        %v565 = vld [vmem:[#allocation5 + $0x350] sm:$0xff]
        %v566 = vld [vmem:[#allocation5 + $0x358] sm:$0xff]
        %v567 = vld [vmem:[#allocation5 + $0x360] sm:$0xff]
        %v568 = vld [vmem:[#allocation5 + $0x368] sm:$0xff]
        %v569 = vld [vmem:[#allocation5 + $0x370] sm:$0xff]
        %v570 = vld [vmem:[#allocation5 + $0x378] sm:$0xff]
        %v571 = vld [vmem:[#allocation5 + $0x380] sm:$0xff]
        %v572 = vld [vmem:[#allocation5 + $0x388] sm:$0xff]
        %v573 = vld [vmem:[#allocation5 + $0x390] sm:$0xff]
        %v574 = vld [vmem:[#allocation5 + $0x398] sm:$0xff]
        %v575 = vld [vmem:[#allocation5 + $0x3a0] sm:$0xff]
        %v576 = vld [vmem:[#allocation5 + $0x3a8] sm:$0xff]
        %v577 = vld [vmem:[#allocation5 + $0x3b0] sm:$0xff]
        %v578 = vld [vmem:[#allocation5 + $0x3b8] sm:$0xff]
        %v579 = vld [vmem:[#allocation5 + $0x3c0] sm:$0xff]
        %v580 = vld [vmem:[#allocation5 + $0x3c8] sm:$0xff]
        %v581 = vld [vmem:[#allocation5 + $0x3d0] sm:$0xff]
        %v582 = vld [vmem:[#allocation5 + $0x3d8] sm:$0xff]
        %v583 = vld [vmem:[#allocation5 + $0x3e0] sm:$0xff]
        %v584 = vld [vmem:[#allocation5 + $0x3e8] sm:$0xff]
        %v585 = vld [vmem:[#allocation5 + $0x3f0] sm:$0xff]
        %v586 = vld [vmem:[#allocation5 + $0x3f8] sm:$0xff]
        %v587 = vld [vmem:[#allocation5 + $0x400] sm:$0xff]
        %v588 = vld [vmem:[#allocation5 + $0x408] sm:$0xff]
        %v589 = vld [vmem:[#allocation5 + $0x410] sm:$0xff]
        %v590 = vld [vmem:[#allocation5 + $0x418] sm:$0xff]
        %v591 = vld [vmem:[#allocation5 + $0x420] sm:$0xff]
        %v592 = vld [vmem:[#allocation5 + $0x428] sm:$0xff]
        %v593 = vld [vmem:[#allocation5 + $0x430] sm:$0xff]
        %v594 = vld [vmem:[#allocation5 + $0x438] sm:$0xff]
        %v595 = vld [vmem:[#allocation5 + $0x440] sm:$0xff]
        %v596 = vld [vmem:[#allocation5 + $0x448] sm:$0xff]
        %v597 = vld [vmem:[#allocation5 + $0x450] sm:$0xff]
        %v598 = vld [vmem:[#allocation5 + $0x458] sm:$0xff]
        %v599 = vld [vmem:[#allocation5 + $0x460] sm:$0xff]
        %v600 = vld [vmem:[#allocation5 + $0x468] sm:$0xff]
        %v601 = vld [vmem:[#allocation5 + $0x470] sm:$0xff]
        %v602 = vld [vmem:[#allocation5 + $0x478] sm:$0xff]
        %v603 = vld [vmem:[#allocation5 + $0x480] sm:$0xff]
        %v604 = vld [vmem:[#allocation5 + $0x488] sm:$0xff]
        %v605 = vld [vmem:[#allocation5 + $0x490] sm:$0xff]
        %v606 = vld [vmem:[#allocation5 + $0x498] sm:$0xff]
        %v607 = vld [vmem:[#allocation5 + $0x4a0] sm:$0xff]
        %v608 = vld [vmem:[#allocation5 + $0x4a8] sm:$0xff]
        %v609 = vld [vmem:[#allocation5 + $0x4b0] sm:$0xff]
        %v610 = vld [vmem:[#allocation5 + $0x4b8] sm:$0xff]
        %v611 = vld [vmem:[#allocation5 + $0x4c0] sm:$0xff]
        %v612 = vld [vmem:[#allocation5 + $0x4c8] sm:$0xff]
        %v613 = vld [vmem:[#allocation5 + $0x4d0] sm:$0xff]
        %v614 = vld [vmem:[#allocation5 + $0x4d8] sm:$0xff]
        %v615 = vld [vmem:[#allocation5 + $0x4e0] sm:$0xff]
        %v616 = vld [vmem:[#allocation5 + $0x4e8] sm:$0xff]
        %v617 = vld [vmem:[#allocation5 + $0x4f0] sm:$0xff]
        %v618 = vld [vmem:[#allocation5 + $0x4f8] sm:$0xff]
        %v619 = vld [vmem:[#allocation5 + $0x500] sm:$0xff]
        %v620 = vld [vmem:[#allocation5 + $0x508] sm:$0xff]
        %v621 = vld [vmem:[#allocation5 + $0x510] sm:$0xff]
        %v622 = vld [vmem:[#allocation5 + $0x518] sm:$0xff]
        %v623 = vld [vmem:[#allocation5 + $0x520] sm:$0xff]
        %v624 = vld [vmem:[#allocation5 + $0x528] sm:$0xff]
        %v625 = vld [vmem:[#allocation5 + $0x530] sm:$0xff]
        %v626 = vld [vmem:[#allocation5 + $0x538] sm:$0xff]
        %v627 = vld [vmem:[#allocation5 + $0x540] sm:$0xff]
        %v628 = vld [vmem:[#allocation5 + $0x548] sm:$0xff]
        %v629 = vld [vmem:[#allocation5 + $0x550] sm:$0xff]
        %v630 = vld [vmem:[#allocation5 + $0x558] sm:$0xff]
        %v631 = vld [vmem:[#allocation5 + $0x560] sm:$0xff]
        %v632 = vld [vmem:[#allocation5 + $0x568] sm:$0xff]
        %v633 = vld [vmem:[#allocation5 + $0x570] sm:$0xff]
        %v634 = vld [vmem:[#allocation5 + $0x578] sm:$0xff]
        %v635 = vld [vmem:[#allocation5 + $0x580] sm:$0xff]
        %v636 = vld [vmem:[#allocation5 + $0x588] sm:$0xff]
        %v637 = vld [vmem:[#allocation5 + $0x590] sm:$0xff]
        %v638 = vld [vmem:[#allocation5 + $0x598] sm:$0xff]
        %v639 = vld [vmem:[#allocation5 + $0x5a0] sm:$0xff]
        %v640 = vld [vmem:[#allocation5 + $0x5a8] sm:$0xff]
        %v641 = vld [vmem:[#allocation5 + $0x5b0] sm:$0xff]
        %v642 = vld [vmem:[#allocation5 + $0x5b8] sm:$0xff]
        %v643 = vld [vmem:[#allocation5 + $0x5c0] sm:$0xff]
        %v644 = vld [vmem:[#allocation5 + $0x5c8] sm:$0xff]
        %v645 = vld [vmem:[#allocation5 + $0x5d0] sm:$0xff]
        %v646 = vld [vmem:[#allocation5 + $0x5d8] sm:$0xff]
        %v647 = vld [vmem:[#allocation5 + $0x5e0] sm:$0xff]
        %v648 = vld [vmem:[#allocation5 + $0x5e8] sm:$0xff]
        %v649 = vld [vmem:[#allocation5 + $0x5f0] sm:$0xff]
        %v650 = vld [vmem:[#allocation5 + $0x5f8] sm:$0xff]
        %v651 = vld [vmem:[#allocation5 + $0x600] sm:$0xff]
        %v652 = vld [vmem:[#allocation5 + $0x608] sm:$0xff]
        %v653 = vld [vmem:[#allocation5 + $0x610] sm:$0xff]
        %v654 = vld [vmem:[#allocation5 + $0x618] sm:$0xff]
        %v655 = vld [vmem:[#allocation5 + $0x620] sm:$0xff]
        %v656 = vld [vmem:[#allocation5 + $0x628] sm:$0xff]
        %v657 = vld [vmem:[#allocation5 + $0x630] sm:$0xff]
        %v658 = vld [vmem:[#allocation5 + $0x638] sm:$0xff]
        %v659 = vld [vmem:[#allocation5 + $0x640] sm:$0xff]
        %v660 = vld [vmem:[#allocation5 + $0x648] sm:$0xff]
        %v661 = vld [vmem:[#allocation5 + $0x650] sm:$0xff]
        %v662 = vld [vmem:[#allocation5 + $0x658] sm:$0xff]
        %v663 = vld [vmem:[#allocation5 + $0x660] sm:$0xff]
        %v664 = vld [vmem:[#allocation5 + $0x668] sm:$0xff]
        %v665 = vld [vmem:[#allocation5 + $0x670] sm:$0xff]
        %v666 = vld [vmem:[#allocation5 + $0x678] sm:$0xff]
        %v667 = vld [vmem:[#allocation5 + $0x680] sm:$0xff]
        %v668 = vld [vmem:[#allocation5 + $0x688] sm:$0xff]
        %v669 = vld [vmem:[#allocation5 + $0x690] sm:$0xff]
        %v670 = vld [vmem:[#allocation5 + $0x698] sm:$0xff]
        %v671 = vld [vmem:[#allocation5 + $0x6a0] sm:$0xff]
        %v672 = vld [vmem:[#allocation5 + $0x6a8] sm:$0xff]
        %v673 = vld [vmem:[#allocation5 + $0x6b0] sm:$0xff]
        %v674 = vld [vmem:[#allocation5 + $0x6b8] sm:$0xff]
        %v675 = vld [vmem:[#allocation5 + $0x6c0] sm:$0xff]
        %v676 = vld [vmem:[#allocation5 + $0x6c8] sm:$0xff]
        %v677 = vld [vmem:[#allocation5 + $0x6d0] sm:$0xff]
        %v678 = vld [vmem:[#allocation5 + $0x6d8] sm:$0xff]
        %v679 = vld [vmem:[#allocation5 + $0x6e0] sm:$0xff]
        %v680 = vld [vmem:[#allocation5 + $0x6e8] sm:$0xff]
        %v681 = vld [vmem:[#allocation5 + $0x6f0] sm:$0xff]
        %v682 = vld [vmem:[#allocation5 + $0x6f8] sm:$0xff]
        %v683 = vld [vmem:[#allocation7] sm:$0xf]
        %v685 = vperm.slane %v683, 0
        %v686 = vperm.slane %v683, 1
        %v687 = vperm.slane %v683, 2
        %v688 = vperm.slane %v683, 3
        %v701 = vunpack.c.l.b16 %v451
        %v702 = vunpack.c.h.b16 %v451
        %v703 = vunpack.c.l.b16 %v452
        %v704 = vunpack.c.h.b16 %v452
        %v705 = vunpack.c.l.b16 %v453
        %v706 = vunpack.c.h.b16 %v453
        %v707 = vunpack.c.l.b16 %v454
        %v708 = vunpack.c.l.b16 %v455
        %v709 = vunpack.c.h.b16 %v455
        %v710 = vunpack.c.l.b16 %v456
        %v711 = vunpack.c.h.b16 %v456
        %v712 = vunpack.c.l.b16 %v457
        %v713 = vunpack.c.h.b16 %v457
        %v714 = vunpack.c.l.b16 %v458
        %v715 = vpack.c.b16 %v708, %v701
        %v716 = vpack.c.b16 %v709, %v702
        %v717 = vpack.c.b16 %v710, %v703
        %v718 = vpack.c.b16 %v711, %v704
        %v719 = vpack.c.b16 %v712, %v705
        %v720 = vpack.c.b16 %v713, %v706
        %v721 = vpack.c.b16 %v714, %v707
        %v953 = vunpack.c.l.b16 %v459
        %v954 = vunpack.c.h.b16 %v459
        %v955 = vunpack.c.l.b16 %v460
        %v956 = vunpack.c.h.b16 %v460
        %v957 = vunpack.c.l.b16 %v461
        %v958 = vunpack.c.h.b16 %v461
        %v959 = vunpack.c.l.b16 %v462
        %v960 = vunpack.c.h.b16 %v462
        %v961 = vunpack.c.l.b16 %v463
        %v962 = vunpack.c.h.b16 %v463
        %v963 = vunpack.c.l.b16 %v464
        %v964 = vunpack.c.h.b16 %v464
        %v965 = vunpack.c.l.b16 %v465
        %v966 = vunpack.c.h.b16 %v465
        %v967 = vunpack.c.l.b16 %v466
        %v968 = vunpack.c.h.b16 %v466
        %v969 = vunpack.c.l.b16 %v467
        %v970 = vunpack.c.h.b16 %v467
        %v971 = vunpack.c.l.b16 %v468
        %v972 = vunpack.c.h.b16 %v468
        %v973 = vunpack.c.l.b16 %v469
        %v974 = vunpack.c.h.b16 %v469
        %v975 = vunpack.c.l.b16 %v470
        %v976 = vunpack.c.h.b16 %v470
        %v977 = vunpack.c.l.b16 %v471
        %v978 = vunpack.c.h.b16 %v471
        %v979 = vunpack.c.l.b16 %v472
        %v980 = vunpack.c.h.b16 %v472
        %v981 = vunpack.c.l.b16 %v473
        %v982 = vunpack.c.h.b16 %v473
        %v983 = vunpack.c.l.b16 %v474
        %v984 = vunpack.c.h.b16 %v474
        %v985 = vunpack.c.l.b16 %v475
        %v986 = vunpack.c.h.b16 %v475
        %v987 = vunpack.c.l.b16 %v476
        %v988 = vunpack.c.h.b16 %v476
        %v989 = vunpack.c.l.b16 %v477
        %v990 = vunpack.c.h.b16 %v477
        %v991 = vunpack.c.l.b16 %v478
        %v992 = vunpack.c.h.b16 %v478
        %v993 = vunpack.c.l.b16 %v479
        %v994 = vunpack.c.h.b16 %v479
        %v995 = vunpack.c.l.b16 %v480
        %v996 = vunpack.c.h.b16 %v480
        %v997 = vunpack.c.l.b16 %v481
        %v998 = vunpack.c.h.b16 %v481
        %v999 = vunpack.c.l.b16 %v482
        %v1000 = vunpack.c.h.b16 %v482
        %v1001 = vunpack.c.l.b16 %v483
        %v1002 = vunpack.c.h.b16 %v483
        %v1003 = vunpack.c.l.b16 %v484
        %v1004 = vunpack.c.h.b16 %v484
        %v1005 = vunpack.c.l.b16 %v485
        %v1006 = vunpack.c.h.b16 %v485
        %v1007 = vunpack.c.l.b16 %v486
        %v1008 = vunpack.c.h.b16 %v486
        %v1009 = vunpack.c.l.b16 %v487
        %v1010 = vunpack.c.h.b16 %v487
        %v1011 = vunpack.c.l.b16 %v488
        %v1012 = vunpack.c.h.b16 %v488
        %v1013 = vunpack.c.l.b16 %v489
        %v1014 = vunpack.c.h.b16 %v489
        %v1015 = vunpack.c.l.b16 %v490
        %v1016 = vunpack.c.h.b16 %v490
        %v1017 = vunpack.c.l.b16 %v491
        %v1018 = vunpack.c.h.b16 %v491
        %v1019 = vunpack.c.l.b16 %v492
        %v1020 = vunpack.c.h.b16 %v492
        %v1021 = vunpack.c.l.b16 %v493
        %v1022 = vunpack.c.h.b16 %v493
        %v1023 = vunpack.c.l.b16 %v494
        %v1024 = vunpack.c.h.b16 %v494
        %v1025 = vunpack.c.l.b16 %v495
        %v1026 = vunpack.c.h.b16 %v495
        %v1027 = vunpack.c.l.b16 %v496
        %v1028 = vunpack.c.h.b16 %v496
        %v1029 = vunpack.c.l.b16 %v497
        %v1030 = vunpack.c.h.b16 %v497
        %v1031 = vunpack.c.l.b16 %v498
        %v1032 = vunpack.c.h.b16 %v498
        %v1033 = vunpack.c.l.b16 %v499
        %v1034 = vunpack.c.h.b16 %v499
        %v1035 = vunpack.c.l.b16 %v500
        %v1036 = vunpack.c.h.b16 %v500
        %v1037 = vunpack.c.l.b16 %v501
        %v1038 = vunpack.c.h.b16 %v501
        %v1039 = vunpack.c.l.b16 %v502
        %v1040 = vunpack.c.h.b16 %v502
        %v1041 = vunpack.c.l.b16 %v503
        %v1042 = vunpack.c.h.b16 %v503
        %v1043 = vunpack.c.l.b16 %v504
        %v1044 = vunpack.c.h.b16 %v504
        %v1045 = vunpack.c.l.b16 %v505
        %v1046 = vunpack.c.h.b16 %v505
        %v1047 = vunpack.c.l.b16 %v506
        %v1048 = vunpack.c.h.b16 %v506
        %v1049 = vunpack.c.l.b16 %v507
        %v1050 = vunpack.c.h.b16 %v507
        %v1051 = vunpack.c.l.b16 %v508
        %v1052 = vunpack.c.h.b16 %v508
        %v1053 = vunpack.c.l.b16 %v509
        %v1054 = vunpack.c.h.b16 %v509
        %v1055 = vunpack.c.l.b16 %v510
        %v1056 = vunpack.c.h.b16 %v510
        %v1057 = vunpack.c.l.b16 %v511
        %v1058 = vunpack.c.h.b16 %v511
        %v1059 = vunpack.c.l.b16 %v512
        %v1060 = vunpack.c.h.b16 %v512
        %v1061 = vunpack.c.l.b16 %v513
        %v1062 = vunpack.c.h.b16 %v513
        %v1063 = vunpack.c.l.b16 %v514
        %v1064 = vunpack.c.h.b16 %v514
        %v1065 = vunpack.c.l.b16 %v515
        %v1066 = vunpack.c.h.b16 %v515
        %v1067 = vunpack.c.l.b16 %v516
        %v1068 = vunpack.c.h.b16 %v516
        %v1069 = vunpack.c.l.b16 %v517
        %v1070 = vunpack.c.h.b16 %v517
        %v1071 = vunpack.c.l.b16 %v518
        %v1072 = vunpack.c.h.b16 %v518
        %v1073 = vunpack.c.l.b16 %v519
        %v1074 = vunpack.c.h.b16 %v519
        %v1075 = vunpack.c.l.b16 %v520
        %v1076 = vunpack.c.h.b16 %v520
        %v1077 = vunpack.c.l.b16 %v521
        %v1078 = vunpack.c.h.b16 %v521
        %v1079 = vunpack.c.l.b16 %v522
        %v1080 = vunpack.c.h.b16 %v522
        %v1081 = vunpack.c.l.b16 %v523
        %v1082 = vunpack.c.h.b16 %v523
        %v1083 = vunpack.c.l.b16 %v524
        %v1084 = vunpack.c.h.b16 %v524
        %v1085 = vunpack.c.l.b16 %v525
        %v1086 = vunpack.c.h.b16 %v525
        %v1087 = vunpack.c.l.b16 %v526
        %v1088 = vunpack.c.h.b16 %v526
        %v1089 = vunpack.c.l.b16 %v527
        %v1090 = vunpack.c.h.b16 %v527
        %v1091 = vunpack.c.l.b16 %v528
        %v1092 = vunpack.c.h.b16 %v528
        %v1093 = vunpack.c.l.b16 %v529
        %v1094 = vunpack.c.h.b16 %v529
        %v1095 = vunpack.c.l.b16 %v530
        %v1096 = vunpack.c.h.b16 %v530
        %v1097 = vunpack.c.l.b16 %v531
        %v1098 = vunpack.c.h.b16 %v531
        %v1099 = vunpack.c.l.b16 %v532
        %v1100 = vunpack.c.h.b16 %v532
        %v1101 = vunpack.c.l.b16 %v533
        %v1102 = vunpack.c.h.b16 %v533
        %v1103 = vunpack.c.l.b16 %v534
        %v1104 = vunpack.c.h.b16 %v534
        %v1105 = vunpack.c.l.b16 %v535
        %v1106 = vunpack.c.h.b16 %v535
        %v1107 = vunpack.c.l.b16 %v536
        %v1108 = vunpack.c.h.b16 %v536
        %v1109 = vunpack.c.l.b16 %v537
        %v1110 = vunpack.c.h.b16 %v537
        %v1111 = vunpack.c.l.b16 %v538
        %v1112 = vunpack.c.h.b16 %v538
        %v1113 = vunpack.c.l.b16 %v539
        %v1114 = vunpack.c.h.b16 %v539
        %v1115 = vunpack.c.l.b16 %v540
        %v1116 = vunpack.c.h.b16 %v540
        %v1117 = vunpack.c.l.b16 %v541
        %v1118 = vunpack.c.h.b16 %v541
        %v1119 = vunpack.c.l.b16 %v542
        %v1120 = vunpack.c.h.b16 %v542
        %v1121 = vunpack.c.l.b16 %v543
        %v1122 = vunpack.c.h.b16 %v543
        %v1123 = vunpack.c.l.b16 %v544
        %v1124 = vunpack.c.h.b16 %v544
        %v1125 = vunpack.c.l.b16 %v545
        %v1126 = vunpack.c.h.b16 %v545
        %v1127 = vunpack.c.l.b16 %v546
        %v1128 = vunpack.c.h.b16 %v546
        %v1129 = vunpack.c.l.b16 %v547
        %v1130 = vunpack.c.h.b16 %v547
        %v1131 = vunpack.c.l.b16 %v548
        %v1132 = vunpack.c.h.b16 %v548
        %v1133 = vunpack.c.l.b16 %v549
        %v1134 = vunpack.c.h.b16 %v549
        %v1135 = vunpack.c.l.b16 %v550
        %v1136 = vunpack.c.h.b16 %v550
        %v1137 = vunpack.c.l.b16 %v551
        %v1138 = vunpack.c.h.b16 %v551
        %v1139 = vunpack.c.l.b16 %v552
        %v1140 = vunpack.c.h.b16 %v552
        %v1141 = vunpack.c.l.b16 %v553
        %v1142 = vunpack.c.h.b16 %v553
        %v1143 = vunpack.c.l.b16 %v554
        %v1144 = vunpack.c.h.b16 %v554
        %v1145 = vunpack.c.l.b16 %v555
        %v1146 = vunpack.c.h.b16 %v555
        %v1147 = vunpack.c.l.b16 %v556
        %v1148 = vunpack.c.h.b16 %v556
        %v1149 = vunpack.c.l.b16 %v557
        %v1150 = vunpack.c.h.b16 %v557
        %v1151 = vunpack.c.l.b16 %v558
        %v1152 = vunpack.c.h.b16 %v558
        %v1153 = vunpack.c.l.b16 %v559
        %v1154 = vunpack.c.h.b16 %v559
        %v1155 = vunpack.c.l.b16 %v560
        %v1156 = vunpack.c.h.b16 %v560
        %v1157 = vunpack.c.l.b16 %v561
        %v1158 = vunpack.c.h.b16 %v561
        %v1159 = vunpack.c.l.b16 %v562
        %v1160 = vunpack.c.h.b16 %v562
        %v1161 = vunpack.c.l.b16 %v563
        %v1162 = vunpack.c.h.b16 %v563
        %v1163 = vunpack.c.l.b16 %v564
        %v1164 = vunpack.c.h.b16 %v564
        %v1165 = vunpack.c.l.b16 %v565
        %v1166 = vunpack.c.h.b16 %v565
        %v1167 = vunpack.c.l.b16 %v566
        %v1168 = vunpack.c.h.b16 %v566
        %v1169 = vunpack.c.l.b16 %v567
        %v1170 = vunpack.c.h.b16 %v567
        %v1171 = vunpack.c.l.b16 %v568
        %v1172 = vunpack.c.h.b16 %v568
        %v1173 = vunpack.c.l.b16 %v569
        %v1174 = vunpack.c.h.b16 %v569
        %v1175 = vunpack.c.l.b16 %v570
        %v1176 = vunpack.c.h.b16 %v570
        %v1177 = vunpack.c.l.b16 %v571
        %v1178 = vunpack.c.h.b16 %v571
        %v1179 = vunpack.c.l.b16 %v572
        %v1180 = vunpack.c.h.b16 %v572
        %v1181 = vunpack.c.l.b16 %v573
        %v1182 = vunpack.c.h.b16 %v573
        %v1183 = vunpack.c.l.b16 %v574
        %v1184 = vunpack.c.h.b16 %v574
        %v1185 = vunpack.c.l.b16 %v575
        %v1186 = vunpack.c.h.b16 %v575
        %v1187 = vunpack.c.l.b16 %v576
        %v1188 = vunpack.c.h.b16 %v576
        %v1189 = vunpack.c.l.b16 %v577
        %v1190 = vunpack.c.h.b16 %v577
        %v1191 = vunpack.c.l.b16 %v578
        %v1192 = vunpack.c.h.b16 %v578
        %v1193 = vunpack.c.l.b16 %v579
        %v1194 = vunpack.c.h.b16 %v579
        %v1195 = vunpack.c.l.b16 %v580
        %v1196 = vunpack.c.h.b16 %v580
        %v1197 = vunpack.c.l.b16 %v581
        %v1198 = vunpack.c.h.b16 %v581
        %v1199 = vunpack.c.l.b16 %v582
        %v1200 = vunpack.c.h.b16 %v582
        %v1201 = vunpack.c.l.b16 %v583
        %v1202 = vunpack.c.h.b16 %v583
        %v1203 = vunpack.c.l.b16 %v584
        %v1204 = vunpack.c.h.b16 %v584
        %v1205 = vunpack.c.l.b16 %v585
        %v1206 = vunpack.c.h.b16 %v585
        %v1207 = vunpack.c.l.b16 %v586
        %v1208 = vunpack.c.h.b16 %v586
        %v1209 = vunpack.c.l.b16 %v587
        %v1210 = vunpack.c.h.b16 %v587
        %v1211 = vunpack.c.l.b16 %v588
        %v1212 = vunpack.c.h.b16 %v588
        %v1213 = vunpack.c.l.b16 %v589
        %v1214 = vunpack.c.h.b16 %v589
        %v1215 = vunpack.c.l.b16 %v590
        %v1216 = vunpack.c.h.b16 %v590
        %v1217 = vunpack.c.l.b16 %v591
        %v1218 = vunpack.c.h.b16 %v591
        %v1219 = vunpack.c.l.b16 %v592
        %v1220 = vunpack.c.h.b16 %v592
        %v1221 = vunpack.c.l.b16 %v593
        %v1222 = vunpack.c.h.b16 %v593
        %v1223 = vunpack.c.l.b16 %v594
        %v1224 = vunpack.c.h.b16 %v594
        %v1225 = vunpack.c.l.b16 %v595
        %v1226 = vunpack.c.h.b16 %v595
        %v1227 = vunpack.c.l.b16 %v596
        %v1228 = vunpack.c.h.b16 %v596
        %v1229 = vunpack.c.l.b16 %v597
        %v1230 = vunpack.c.h.b16 %v597
        %v1231 = vunpack.c.l.b16 %v598
        %v1232 = vunpack.c.h.b16 %v598
        %v1233 = vunpack.c.l.b16 %v599
        %v1234 = vunpack.c.h.b16 %v599
        %v1235 = vunpack.c.l.b16 %v600
        %v1236 = vunpack.c.h.b16 %v600
        %v1237 = vunpack.c.l.b16 %v601
        %v1238 = vunpack.c.h.b16 %v601
        %v1239 = vunpack.c.l.b16 %v602
        %v1240 = vunpack.c.h.b16 %v602
        %v1241 = vunpack.c.l.b16 %v603
        %v1242 = vunpack.c.h.b16 %v603
        %v1243 = vunpack.c.l.b16 %v604
        %v1244 = vunpack.c.h.b16 %v604
        %v1245 = vunpack.c.l.b16 %v605
        %v1246 = vunpack.c.h.b16 %v605
        %v1247 = vunpack.c.l.b16 %v606
        %v1248 = vunpack.c.h.b16 %v606
        %v1249 = vunpack.c.l.b16 %v607
        %v1250 = vunpack.c.h.b16 %v607
        %v1251 = vunpack.c.l.b16 %v608
        %v1252 = vunpack.c.h.b16 %v608
        %v1253 = vunpack.c.l.b16 %v609
        %v1254 = vunpack.c.h.b16 %v609
        %v1255 = vunpack.c.l.b16 %v610
        %v1256 = vunpack.c.h.b16 %v610
        %v1257 = vunpack.c.l.b16 %v611
        %v1258 = vunpack.c.h.b16 %v611
        %v1259 = vunpack.c.l.b16 %v612
        %v1260 = vunpack.c.h.b16 %v612
        %v1261 = vunpack.c.l.b16 %v613
        %v1262 = vunpack.c.h.b16 %v613
        %v1263 = vunpack.c.l.b16 %v614
        %v1264 = vunpack.c.h.b16 %v614
        %v1265 = vunpack.c.l.b16 %v615
        %v1266 = vunpack.c.h.b16 %v615
        %v1267 = vunpack.c.l.b16 %v616
        %v1268 = vunpack.c.h.b16 %v616
        %v1269 = vunpack.c.l.b16 %v617
        %v1270 = vunpack.c.h.b16 %v617
        %v1271 = vunpack.c.l.b16 %v618
        %v1272 = vunpack.c.h.b16 %v618
        %v1273 = vunpack.c.l.b16 %v619
        %v1274 = vunpack.c.h.b16 %v619
        %v1275 = vunpack.c.l.b16 %v620
        %v1276 = vunpack.c.h.b16 %v620
        %v1277 = vunpack.c.l.b16 %v621
        %v1278 = vunpack.c.h.b16 %v621
        %v1279 = vunpack.c.l.b16 %v622
        %v1280 = vunpack.c.h.b16 %v622
        %v1281 = vunpack.c.l.b16 %v623
        %v1282 = vunpack.c.h.b16 %v623
        %v1283 = vunpack.c.l.b16 %v624
        %v1284 = vunpack.c.h.b16 %v624
        %v1285 = vunpack.c.l.b16 %v625
        %v1286 = vunpack.c.h.b16 %v625
        %v1287 = vunpack.c.l.b16 %v626
        %v1288 = vunpack.c.h.b16 %v626
        %v1289 = vunpack.c.l.b16 %v627
        %v1290 = vunpack.c.h.b16 %v627
        %v1291 = vunpack.c.l.b16 %v628
        %v1292 = vunpack.c.h.b16 %v628
        %v1293 = vunpack.c.l.b16 %v629
        %v1294 = vunpack.c.h.b16 %v629
        %v1295 = vunpack.c.l.b16 %v630
        %v1296 = vunpack.c.h.b16 %v630
        %v1297 = vunpack.c.l.b16 %v631
        %v1298 = vunpack.c.h.b16 %v631
        %v1299 = vunpack.c.l.b16 %v632
        %v1300 = vunpack.c.h.b16 %v632
        %v1301 = vunpack.c.l.b16 %v633
        %v1302 = vunpack.c.h.b16 %v633
        %v1303 = vunpack.c.l.b16 %v634
        %v1304 = vunpack.c.h.b16 %v634
        %v1305 = vunpack.c.l.b16 %v635
        %v1306 = vunpack.c.h.b16 %v635
        %v1307 = vunpack.c.l.b16 %v636
        %v1308 = vunpack.c.h.b16 %v636
        %v1309 = vunpack.c.l.b16 %v637
        %v1310 = vunpack.c.h.b16 %v637
        %v1311 = vunpack.c.l.b16 %v638
        %v1312 = vunpack.c.h.b16 %v638
        %v1313 = vunpack.c.l.b16 %v639
        %v1314 = vunpack.c.h.b16 %v639
        %v1315 = vunpack.c.l.b16 %v640
        %v1316 = vunpack.c.h.b16 %v640
        %v1317 = vunpack.c.l.b16 %v641
        %v1318 = vunpack.c.h.b16 %v641
        %v1319 = vunpack.c.l.b16 %v642
        %v1320 = vunpack.c.h.b16 %v642
        %v1321 = vunpack.c.l.b16 %v643
        %v1322 = vunpack.c.h.b16 %v643
        %v1323 = vunpack.c.l.b16 %v644
        %v1324 = vunpack.c.h.b16 %v644
        %v1325 = vunpack.c.l.b16 %v645
        %v1326 = vunpack.c.h.b16 %v645
        %v1327 = vunpack.c.l.b16 %v646
        %v1328 = vunpack.c.h.b16 %v646
        %v1329 = vunpack.c.l.b16 %v647
        %v1330 = vunpack.c.h.b16 %v647
        %v1331 = vunpack.c.l.b16 %v648
        %v1332 = vunpack.c.h.b16 %v648
        %v1333 = vunpack.c.l.b16 %v649
        %v1334 = vunpack.c.h.b16 %v649
        %v1335 = vunpack.c.l.b16 %v650
        %v1336 = vunpack.c.h.b16 %v650
        %v1337 = vunpack.c.l.b16 %v651
        %v1338 = vunpack.c.h.b16 %v651
        %v1339 = vunpack.c.l.b16 %v652
        %v1340 = vunpack.c.h.b16 %v652
        %v1341 = vunpack.c.l.b16 %v653
        %v1342 = vunpack.c.h.b16 %v653
        %v1343 = vunpack.c.l.b16 %v654
        %v1344 = vunpack.c.h.b16 %v654
        %v1345 = vunpack.c.l.b16 %v655
        %v1346 = vunpack.c.h.b16 %v655
        %v1347 = vunpack.c.l.b16 %v656
        %v1348 = vunpack.c.h.b16 %v656
        %v1349 = vunpack.c.l.b16 %v657
        %v1350 = vunpack.c.h.b16 %v657
        %v1351 = vunpack.c.l.b16 %v658
        %v1352 = vunpack.c.h.b16 %v658
        %v1353 = vunpack.c.l.b16 %v659
        %v1354 = vunpack.c.h.b16 %v659
        %v1355 = vunpack.c.l.b16 %v660
        %v1356 = vunpack.c.h.b16 %v660
        %v1357 = vunpack.c.l.b16 %v661
        %v1358 = vunpack.c.h.b16 %v661
        %v1359 = vunpack.c.l.b16 %v662
        %v1360 = vunpack.c.h.b16 %v662
        %v1361 = vunpack.c.l.b16 %v663
        %v1362 = vunpack.c.h.b16 %v663
        %v1363 = vunpack.c.l.b16 %v664
        %v1364 = vunpack.c.h.b16 %v664
        %v1365 = vunpack.c.l.b16 %v665
        %v1366 = vunpack.c.h.b16 %v665
        %v1367 = vunpack.c.l.b16 %v666
        %v1368 = vunpack.c.h.b16 %v666
        %v1369 = vunpack.c.l.b16 %v667
        %v1370 = vunpack.c.h.b16 %v667
        %v1371 = vunpack.c.l.b16 %v668
        %v1372 = vunpack.c.h.b16 %v668
        %v1373 = vunpack.c.l.b16 %v669
        %v1374 = vunpack.c.h.b16 %v669
        %v1375 = vunpack.c.l.b16 %v670
        %v1376 = vunpack.c.h.b16 %v670
        %v1377 = vunpack.c.l.b16 %v671
        %v1378 = vunpack.c.h.b16 %v671
        %v1379 = vunpack.c.l.b16 %v672
        %v1380 = vunpack.c.h.b16 %v672
        %v1381 = vunpack.c.l.b16 %v673
        %v1382 = vunpack.c.h.b16 %v673
        %v1383 = vunpack.c.l.b16 %v674
        %v1384 = vunpack.c.h.b16 %v674
        %v1385 = vunpack.c.l.b16 %v675
        %v1386 = vunpack.c.h.b16 %v675
        %v1387 = vunpack.c.l.b16 %v676
        %v1388 = vunpack.c.h.b16 %v676
        %v1389 = vunpack.c.l.b16 %v677
        %v1390 = vunpack.c.h.b16 %v677
        %v1391 = vunpack.c.l.b16 %v678
        %v1392 = vunpack.c.h.b16 %v678
        %v1393 = vunpack.c.l.b16 %v679
        %v1394 = vunpack.c.h.b16 %v679
        %v1395 = vunpack.c.l.b16 %v680
        %v1396 = vunpack.c.h.b16 %v680
        %v1397 = vunpack.c.l.b16 %v681
        %v1398 = vunpack.c.h.b16 %v681
        %v1399 = vunpack.c.l.b16 %v682
        %v1400 = vunpack.c.h.b16 %v682
        %v1401 = vpack.c.b16 %v957, %v953
        %v1402 = vpack.c.b16 %v958, %v954
        %v1403 = vpack.c.b16 %v959, %v955
        %v1404 = vpack.c.b16 %v960, %v956
        %v1405 = vpack.c.b16 %v965, %v961
        %v1406 = vpack.c.b16 %v966, %v962
        %v1407 = vpack.c.b16 %v967, %v963
        %v1408 = vpack.c.b16 %v968, %v964
        %v1409 = vpack.c.b16 %v973, %v969
        %v1410 = vpack.c.b16 %v974, %v970
        %v1411 = vpack.c.b16 %v975, %v971
        %v1412 = vpack.c.b16 %v976, %v972
        %v1413 = vpack.c.b16 %v981, %v977
        %v1414 = vpack.c.b16 %v982, %v978
        %v1415 = vpack.c.b16 %v983, %v979
        %v1416 = vpack.c.b16 %v984, %v980
        %v1417 = vpack.c.b16 %v989, %v985
        %v1418 = vpack.c.b16 %v990, %v986
        %v1419 = vpack.c.b16 %v991, %v987
        %v1420 = vpack.c.b16 %v992, %v988
        %v1421 = vpack.c.b16 %v997, %v993
        %v1422 = vpack.c.b16 %v998, %v994
        %v1423 = vpack.c.b16 %v999, %v995
        %v1424 = vpack.c.b16 %v1000, %v996
        %v1425 = vpack.c.b16 %v1005, %v1001
        %v1426 = vpack.c.b16 %v1006, %v1002
        %v1427 = vpack.c.b16 %v1007, %v1003
        %v1428 = vpack.c.b16 %v1008, %v1004
        %v1429 = vpack.c.b16 %v1013, %v1009
        %v1430 = vpack.c.b16 %v1014, %v1010
        %v1431 = vpack.c.b16 %v1015, %v1011
        %v1432 = vpack.c.b16 %v1016, %v1012
        %v1433 = vpack.c.b16 %v1021, %v1017
        %v1434 = vpack.c.b16 %v1022, %v1018
        %v1435 = vpack.c.b16 %v1023, %v1019
        %v1436 = vpack.c.b16 %v1024, %v1020
        %v1437 = vpack.c.b16 %v1029, %v1025
        %v1438 = vpack.c.b16 %v1030, %v1026
        %v1439 = vpack.c.b16 %v1031, %v1027
        %v1440 = vpack.c.b16 %v1032, %v1028
        %v1441 = vpack.c.b16 %v1037, %v1033
        %v1442 = vpack.c.b16 %v1038, %v1034
        %v1443 = vpack.c.b16 %v1039, %v1035
        %v1444 = vpack.c.b16 %v1040, %v1036
        %v1445 = vpack.c.b16 %v1045, %v1041
        %v1446 = vpack.c.b16 %v1046, %v1042
        %v1447 = vpack.c.b16 %v1047, %v1043
        %v1448 = vpack.c.b16 %v1048, %v1044
        %v1449 = vpack.c.b16 %v1053, %v1049
        %v1450 = vpack.c.b16 %v1054, %v1050
        %v1451 = vpack.c.b16 %v1055, %v1051
        %v1452 = vpack.c.b16 %v1056, %v1052
        %v1453 = vpack.c.b16 %v1061, %v1057
        %v1454 = vpack.c.b16 %v1062, %v1058
        %v1455 = vpack.c.b16 %v1063, %v1059
        %v1456 = vpack.c.b16 %v1064, %v1060
        %v1457 = vpack.c.b16 %v1069, %v1065
        %v1458 = vpack.c.b16 %v1070, %v1066
        %v1459 = vpack.c.b16 %v1071, %v1067
        %v1460 = vpack.c.b16 %v1072, %v1068
        %v1461 = vpack.c.b16 %v1077, %v1073
        %v1462 = vpack.c.b16 %v1078, %v1074
        %v1463 = vpack.c.b16 %v1079, %v1075
        %v1464 = vpack.c.b16 %v1080, %v1076
        %v1465 = vpack.c.b16 %v1085, %v1081
        %v1466 = vpack.c.b16 %v1086, %v1082
        %v1467 = vpack.c.b16 %v1087, %v1083
        %v1468 = vpack.c.b16 %v1088, %v1084
        %v1469 = vpack.c.b16 %v1093, %v1089
        %v1470 = vpack.c.b16 %v1094, %v1090
        %v1471 = vpack.c.b16 %v1095, %v1091
        %v1472 = vpack.c.b16 %v1096, %v1092
        %v1473 = vpack.c.b16 %v1101, %v1097
        %v1474 = vpack.c.b16 %v1102, %v1098
        %v1475 = vpack.c.b16 %v1103, %v1099
        %v1476 = vpack.c.b16 %v1104, %v1100
        %v1477 = vpack.c.b16 %v1109, %v1105
        %v1478 = vpack.c.b16 %v1110, %v1106
        %v1479 = vpack.c.b16 %v1111, %v1107
        %v1480 = vpack.c.b16 %v1112, %v1108
        %v1481 = vpack.c.b16 %v1117, %v1113
        %v1482 = vpack.c.b16 %v1118, %v1114
        %v1483 = vpack.c.b16 %v1119, %v1115
        %v1484 = vpack.c.b16 %v1120, %v1116
        %v1485 = vpack.c.b16 %v1125, %v1121
        %v1486 = vpack.c.b16 %v1126, %v1122
        %v1487 = vpack.c.b16 %v1127, %v1123
        %v1488 = vpack.c.b16 %v1128, %v1124
        %v1489 = vpack.c.b16 %v1133, %v1129
        %v1490 = vpack.c.b16 %v1134, %v1130
        %v1491 = vpack.c.b16 %v1135, %v1131
        %v1492 = vpack.c.b16 %v1136, %v1132
        %v1493 = vpack.c.b16 %v1141, %v1137
        %v1494 = vpack.c.b16 %v1142, %v1138
        %v1495 = vpack.c.b16 %v1143, %v1139
        %v1496 = vpack.c.b16 %v1144, %v1140
        %v1497 = vpack.c.b16 %v1149, %v1145
        %v1498 = vpack.c.b16 %v1150, %v1146
        %v1499 = vpack.c.b16 %v1151, %v1147
        %v1500 = vpack.c.b16 %v1152, %v1148
        %v1501 = vpack.c.b16 %v1157, %v1153
        %v1502 = vpack.c.b16 %v1158, %v1154
        %v1503 = vpack.c.b16 %v1159, %v1155
        %v1504 = vpack.c.b16 %v1160, %v1156
        %v1505 = vpack.c.b16 %v1165, %v1161
        %v1506 = vpack.c.b16 %v1166, %v1162
        %v1507 = vpack.c.b16 %v1167, %v1163
        %v1508 = vpack.c.b16 %v1168, %v1164
        %v1509 = vpack.c.b16 %v1173, %v1169
        %v1510 = vpack.c.b16 %v1174, %v1170
        %v1511 = vpack.c.b16 %v1175, %v1171
        %v1512 = vpack.c.b16 %v1176, %v1172
        %v1513 = vpack.c.b16 %v1181, %v1177
        %v1514 = vpack.c.b16 %v1182, %v1178
        %v1515 = vpack.c.b16 %v1183, %v1179
        %v1516 = vpack.c.b16 %v1184, %v1180
        %v1517 = vpack.c.b16 %v1189, %v1185
        %v1518 = vpack.c.b16 %v1190, %v1186
        %v1519 = vpack.c.b16 %v1191, %v1187
        %v1520 = vpack.c.b16 %v1192, %v1188
        %v1521 = vpack.c.b16 %v1197, %v1193
        %v1522 = vpack.c.b16 %v1198, %v1194
        %v1523 = vpack.c.b16 %v1199, %v1195
        %v1524 = vpack.c.b16 %v1200, %v1196
        %v1525 = vpack.c.b16 %v1205, %v1201
        %v1526 = vpack.c.b16 %v1206, %v1202
        %v1527 = vpack.c.b16 %v1207, %v1203
        %v1528 = vpack.c.b16 %v1208, %v1204
        %v1529 = vpack.c.b16 %v1213, %v1209
        %v1530 = vpack.c.b16 %v1214, %v1210
        %v1531 = vpack.c.b16 %v1215, %v1211
        %v1532 = vpack.c.b16 %v1216, %v1212
        %v1533 = vpack.c.b16 %v1221, %v1217
        %v1534 = vpack.c.b16 %v1222, %v1218
        %v1535 = vpack.c.b16 %v1223, %v1219
        %v1536 = vpack.c.b16 %v1224, %v1220
        %v1537 = vpack.c.b16 %v1229, %v1225
        %v1538 = vpack.c.b16 %v1230, %v1226
        %v1539 = vpack.c.b16 %v1231, %v1227
        %v1540 = vpack.c.b16 %v1232, %v1228
        %v1541 = vpack.c.b16 %v1237, %v1233
        %v1542 = vpack.c.b16 %v1238, %v1234
        %v1543 = vpack.c.b16 %v1239, %v1235
        %v1544 = vpack.c.b16 %v1240, %v1236
        %v1545 = vpack.c.b16 %v1245, %v1241
        %v1546 = vpack.c.b16 %v1246, %v1242
        %v1547 = vpack.c.b16 %v1247, %v1243
        %v1548 = vpack.c.b16 %v1248, %v1244
        %v1549 = vpack.c.b16 %v1253, %v1249
        %v1550 = vpack.c.b16 %v1254, %v1250
        %v1551 = vpack.c.b16 %v1255, %v1251
        %v1552 = vpack.c.b16 %v1256, %v1252
        %v1553 = vpack.c.b16 %v1261, %v1257
        %v1554 = vpack.c.b16 %v1262, %v1258
        %v1555 = vpack.c.b16 %v1263, %v1259
        %v1556 = vpack.c.b16 %v1264, %v1260
        %v1557 = vpack.c.b16 %v1269, %v1265
        %v1558 = vpack.c.b16 %v1270, %v1266
        %v1559 = vpack.c.b16 %v1271, %v1267
        %v1560 = vpack.c.b16 %v1272, %v1268
        %v1561 = vpack.c.b16 %v1277, %v1273
        %v1562 = vpack.c.b16 %v1278, %v1274
        %v1563 = vpack.c.b16 %v1279, %v1275
        %v1564 = vpack.c.b16 %v1280, %v1276
        %v1565 = vpack.c.b16 %v1285, %v1281
        %v1566 = vpack.c.b16 %v1286, %v1282
        %v1567 = vpack.c.b16 %v1287, %v1283
        %v1568 = vpack.c.b16 %v1288, %v1284
        %v1569 = vpack.c.b16 %v1293, %v1289
        %v1570 = vpack.c.b16 %v1294, %v1290
        %v1571 = vpack.c.b16 %v1295, %v1291
        %v1572 = vpack.c.b16 %v1296, %v1292
        %v1573 = vpack.c.b16 %v1301, %v1297
        %v1574 = vpack.c.b16 %v1302, %v1298
        %v1575 = vpack.c.b16 %v1303, %v1299
        %v1576 = vpack.c.b16 %v1304, %v1300
        %v1577 = vpack.c.b16 %v1309, %v1305
        %v1578 = vpack.c.b16 %v1310, %v1306
        %v1579 = vpack.c.b16 %v1311, %v1307
        %v1580 = vpack.c.b16 %v1312, %v1308
        %v1581 = vpack.c.b16 %v1317, %v1313
        %v1582 = vpack.c.b16 %v1318, %v1314
        %v1583 = vpack.c.b16 %v1319, %v1315
        %v1584 = vpack.c.b16 %v1320, %v1316
        %v1585 = vpack.c.b16 %v1325, %v1321
        %v1586 = vpack.c.b16 %v1326, %v1322
        %v1587 = vpack.c.b16 %v1327, %v1323
        %v1588 = vpack.c.b16 %v1328, %v1324
        %v1589 = vpack.c.b16 %v1333, %v1329
        %v1590 = vpack.c.b16 %v1334, %v1330
        %v1591 = vpack.c.b16 %v1335, %v1331
        %v1592 = vpack.c.b16 %v1336, %v1332
        %v1593 = vpack.c.b16 %v1341, %v1337
        %v1594 = vpack.c.b16 %v1342, %v1338
        %v1595 = vpack.c.b16 %v1343, %v1339
        %v1596 = vpack.c.b16 %v1344, %v1340
        %v1597 = vpack.c.b16 %v1349, %v1345
        %v1598 = vpack.c.b16 %v1350, %v1346
        %v1599 = vpack.c.b16 %v1351, %v1347
        %v1600 = vpack.c.b16 %v1352, %v1348
        %v1601 = vpack.c.b16 %v1357, %v1353
        %v1602 = vpack.c.b16 %v1358, %v1354
        %v1603 = vpack.c.b16 %v1359, %v1355
        %v1604 = vpack.c.b16 %v1360, %v1356
        %v1605 = vpack.c.b16 %v1365, %v1361
        %v1606 = vpack.c.b16 %v1366, %v1362
        %v1607 = vpack.c.b16 %v1367, %v1363
        %v1608 = vpack.c.b16 %v1368, %v1364
        %v1609 = vpack.c.b16 %v1373, %v1369
        %v1610 = vpack.c.b16 %v1374, %v1370
        %v1611 = vpack.c.b16 %v1375, %v1371
        %v1612 = vpack.c.b16 %v1376, %v1372
        %v1613 = vpack.c.b16 %v1381, %v1377
        %v1614 = vpack.c.b16 %v1382, %v1378
        %v1615 = vpack.c.b16 %v1383, %v1379
        %v1616 = vpack.c.b16 %v1384, %v1380
        %v1617 = vpack.c.b16 %v1389, %v1385
        %v1618 = vpack.c.b16 %v1390, %v1386
        %v1619 = vpack.c.b16 %v1391, %v1387
        %v1620 = vpack.c.b16 %v1392, %v1388
        %v1621 = vpack.c.b16 %v1397, %v1393
        %v1622 = vpack.c.b16 %v1398, %v1394
        %v1623 = vpack.c.b16 %v1399, %v1395
        %v1624 = vpack.c.b16 %v1400, %v1396
        %1849 = vmatpush.bf16.msra.mxu0 %v1429
        %1850 = vmatpush.bf16.msra.mxu0 %v1425
        %1851 = vmatpush.bf16.msra.mxu0 %v1421
        %1852 = vmatpush.bf16.msra.mxu0 %v1417
        %1853 = vmatpush.bf16.msra.mxu0 %v1413
        %1854 = vmatpush.bf16.msra.mxu0 %v1409
        %1855 = vmatpush.bf16.msra.mxu0 %v1405
        %1856 = vmatpush.bf16.msra.mxu0 %v1401
        %1857 = vmatmul.bf16.gmra.mxu0 %v715
        %v1858 = vpop.f32.mrf.mxu0
        %v1859 = vadd.f32 %v685, %v1858
        %v1860 = vpop.f32.mrf.mxu0
        %v1861 = vadd.f32 %v685, %v1860
        %1862 = vdwg.mxu0
        %1863 = vmatpush.bf16.msra.mxu0 %v1461
        %1864 = vmatpush.bf16.msra.mxu0 %v1457
        %1865 = vmatpush.bf16.msra.mxu0 %v1453
        %1866 = vmatpush.bf16.msra.mxu0 %v1449
        %1867 = vmatpush.bf16.msra.mxu0 %v1445
        %1868 = vmatpush.bf16.msra.mxu0 %v1441
        %1869 = vmatpush.bf16.msra.mxu0 %v1437
        %1870 = vmatpush.bf16.msra.mxu0 %v1433
        %1871 = vmatmul.bf16.gmra.mxu0 %v716
        %v1872 = vpop.f32.mrf.mxu0
        %v1873 = vadd.f32 %v1859, %v1872
        %v1874 = vpop.f32.mrf.mxu0
        %v1875 = vadd.f32 %v1861, %v1874
        %1876 = vdwg.mxu0
        %1877 = vmatpush.bf16.msra.mxu0 %v1493
        %1878 = vmatpush.bf16.msra.mxu0 %v1489
        %1879 = vmatpush.bf16.msra.mxu0 %v1485
        %1880 = vmatpush.bf16.msra.mxu0 %v1481
        %1881 = vmatpush.bf16.msra.mxu0 %v1477
        %1882 = vmatpush.bf16.msra.mxu0 %v1473
        %1883 = vmatpush.bf16.msra.mxu0 %v1469
        %1884 = vmatpush.bf16.msra.mxu0 %v1465
        %1885 = vmatmul.bf16.gmra.mxu0 %v717
        %v1886 = vpop.f32.mrf.mxu0
        %v1887 = vadd.f32 %v1873, %v1886
        %v1888 = vpop.f32.mrf.mxu0
        %v1889 = vadd.f32 %v1875, %v1888
        %1890 = vdwg.mxu0
        %1891 = vmatpush.bf16.msra.mxu0 %v1525
        %1892 = vmatpush.bf16.msra.mxu0 %v1521
        %1893 = vmatpush.bf16.msra.mxu0 %v1517
        %1894 = vmatpush.bf16.msra.mxu0 %v1513
        %1895 = vmatpush.bf16.msra.mxu0 %v1509
        %1896 = vmatpush.bf16.msra.mxu0 %v1505
        %1897 = vmatpush.bf16.msra.mxu0 %v1501
        %1898 = vmatpush.bf16.msra.mxu0 %v1497
        %1899 = vmatmul.bf16.gmra.mxu0 %v718
        %v1900 = vpop.f32.mrf.mxu0
        %v1901 = vadd.f32 %v1887, %v1900
        %v1902 = vpop.f32.mrf.mxu0
        %v1903 = vadd.f32 %v1889, %v1902
        %1904 = vdwg.mxu0
        %1905 = vmatpush.bf16.msra.mxu0 %v1557
        %1906 = vmatpush.bf16.msra.mxu0 %v1553
        %1907 = vmatpush.bf16.msra.mxu0 %v1549
        %1908 = vmatpush.bf16.msra.mxu0 %v1545
        %1909 = vmatpush.bf16.msra.mxu0 %v1541
        %1910 = vmatpush.bf16.msra.mxu0 %v1537
        %1911 = vmatpush.bf16.msra.mxu0 %v1533
        %1912 = vmatpush.bf16.msra.mxu0 %v1529
        %1913 = vmatmul.bf16.gmra.mxu0 %v719
        %v1914 = vpop.f32.mrf.mxu0
        %v1915 = vadd.f32 %v1901, %v1914
        %v1916 = vpop.f32.mrf.mxu0
        %v1917 = vadd.f32 %v1903, %v1916
        %1918 = vdwg.mxu0
        %1919 = vmatpush.bf16.msra.mxu0 %v1589
        %1920 = vmatpush.bf16.msra.mxu0 %v1585
        %1921 = vmatpush.bf16.msra.mxu0 %v1581
        %1922 = vmatpush.bf16.msra.mxu0 %v1577
        %1923 = vmatpush.bf16.msra.mxu0 %v1573
        %1924 = vmatpush.bf16.msra.mxu0 %v1569
        %1925 = vmatpush.bf16.msra.mxu0 %v1565
        %1926 = vmatpush.bf16.msra.mxu0 %v1561
        %1927 = vmatmul.bf16.gmra.mxu0 %v720
        %v1928 = vpop.f32.mrf.mxu0
        %v1929 = vadd.f32 %v1915, %v1928
        %v1930 = vpop.f32.mrf.mxu0
        %v1931 = vadd.f32 %v1917, %v1930
        %1932 = vdwg.mxu0
        %1933 = vmatpush.bf16.msra.mxu0 %v1621
        %1934 = vmatpush.bf16.msra.mxu0 %v1617
        %1935 = vmatpush.bf16.msra.mxu0 %v1613
        %1936 = vmatpush.bf16.msra.mxu0 %v1609
        %1937 = vmatpush.bf16.msra.mxu0 %v1605
        %1938 = vmatpush.bf16.msra.mxu0 %v1601
        %1939 = vmatpush.bf16.msra.mxu0 %v1597
        %1940 = vmatpush.bf16.msra.mxu0 %v1593
        %1941 = vmatmul.bf16.gmra.mxu0 %v721
        %v1942 = vpop.f32.mrf.mxu0
        %v1943 = vadd.f32 %v1929, %v1942
        %v1944 = vpop.f32.mrf.mxu0
        %v1945 = vadd.f32 %v1931, %v1944
        %1946 = vdwg.mxu0
        %1947 = vmatpush.bf16.msra.mxu0 %v1430
        %1948 = vmatpush.bf16.msra.mxu0 %v1426
        %1949 = vmatpush.bf16.msra.mxu0 %v1422
        %1950 = vmatpush.bf16.msra.mxu0 %v1418
        %1951 = vmatpush.bf16.msra.mxu0 %v1414
        %1952 = vmatpush.bf16.msra.mxu0 %v1410
        %1953 = vmatpush.bf16.msra.mxu0 %v1406
        %1954 = vmatpush.bf16.msra.mxu0 %v1402
        %1955 = vmatmul.bf16.gmra.mxu0 %v715
        %v1956 = vpop.f32.mrf.mxu0
        %v1957 = vadd.f32 %v686, %v1956
        %v1958 = vpop.f32.mrf.mxu0
        %v1959 = vadd.f32 %v686, %v1958
        %1960 = vdwg.mxu0
        %1961 = vmatpush.bf16.msra.mxu0 %v1462
        %1962 = vmatpush.bf16.msra.mxu0 %v1458
        %1963 = vmatpush.bf16.msra.mxu0 %v1454
        %1964 = vmatpush.bf16.msra.mxu0 %v1450
        %1965 = vmatpush.bf16.msra.mxu0 %v1446
        %1966 = vmatpush.bf16.msra.mxu0 %v1442
        %1967 = vmatpush.bf16.msra.mxu0 %v1438
        %1968 = vmatpush.bf16.msra.mxu0 %v1434
        %1969 = vmatmul.bf16.gmra.mxu0 %v716
        %v1970 = vpop.f32.mrf.mxu0
        %v1971 = vadd.f32 %v1957, %v1970
        %v1972 = vpop.f32.mrf.mxu0
        %v1973 = vadd.f32 %v1959, %v1972
        %1974 = vdwg.mxu0
        %1975 = vmatpush.bf16.msra.mxu0 %v1494
        %1976 = vmatpush.bf16.msra.mxu0 %v1490
        %1977 = vmatpush.bf16.msra.mxu0 %v1486
        %1978 = vmatpush.bf16.msra.mxu0 %v1482
        %1979 = vmatpush.bf16.msra.mxu0 %v1478
        %1980 = vmatpush.bf16.msra.mxu0 %v1474
        %1981 = vmatpush.bf16.msra.mxu0 %v1470
        %1982 = vmatpush.bf16.msra.mxu0 %v1466
        %1983 = vmatmul.bf16.gmra.mxu0 %v717
        %v1984 = vpop.f32.mrf.mxu0
        %v1985 = vadd.f32 %v1971, %v1984
        %v1986 = vpop.f32.mrf.mxu0
        %v1987 = vadd.f32 %v1973, %v1986
        %1988 = vdwg.mxu0
        %1989 = vmatpush.bf16.msra.mxu0 %v1526
        %1990 = vmatpush.bf16.msra.mxu0 %v1522
        %1991 = vmatpush.bf16.msra.mxu0 %v1518
        %1992 = vmatpush.bf16.msra.mxu0 %v1514
        %1993 = vmatpush.bf16.msra.mxu0 %v1510
        %1994 = vmatpush.bf16.msra.mxu0 %v1506
        %1995 = vmatpush.bf16.msra.mxu0 %v1502
        %1996 = vmatpush.bf16.msra.mxu0 %v1498
        %1997 = vmatmul.bf16.gmra.mxu0 %v718
        %v1998 = vpop.f32.mrf.mxu0
        %v1999 = vadd.f32 %v1985, %v1998
        %v2000 = vpop.f32.mrf.mxu0
        %v2001 = vadd.f32 %v1987, %v2000
        %2002 = vdwg.mxu0
        %2003 = vmatpush.bf16.msra.mxu0 %v1558
        %2004 = vmatpush.bf16.msra.mxu0 %v1554
        %2005 = vmatpush.bf16.msra.mxu0 %v1550
        %2006 = vmatpush.bf16.msra.mxu0 %v1546
        %2007 = vmatpush.bf16.msra.mxu0 %v1542
        %2008 = vmatpush.bf16.msra.mxu0 %v1538
        %2009 = vmatpush.bf16.msra.mxu0 %v1534
        %2010 = vmatpush.bf16.msra.mxu0 %v1530
        %2011 = vmatmul.bf16.gmra.mxu0 %v719
        %v2012 = vpop.f32.mrf.mxu0
        %v2013 = vadd.f32 %v1999, %v2012
        %v2014 = vpop.f32.mrf.mxu0
        %v2015 = vadd.f32 %v2001, %v2014
        %2016 = vdwg.mxu0
        %2017 = vmatpush.bf16.msra.mxu0 %v1590
        %2018 = vmatpush.bf16.msra.mxu0 %v1586
        %2019 = vmatpush.bf16.msra.mxu0 %v1582
        %2020 = vmatpush.bf16.msra.mxu0 %v1578
        %2021 = vmatpush.bf16.msra.mxu0 %v1574
        %2022 = vmatpush.bf16.msra.mxu0 %v1570
        %2023 = vmatpush.bf16.msra.mxu0 %v1566
        %2024 = vmatpush.bf16.msra.mxu0 %v1562
        %2025 = vmatmul.bf16.gmra.mxu0 %v720
        %v2026 = vpop.f32.mrf.mxu0
        %v2027 = vadd.f32 %v2013, %v2026
        %v2028 = vpop.f32.mrf.mxu0
        %v2029 = vadd.f32 %v2015, %v2028
        %2030 = vdwg.mxu0
        %2031 = vmatpush.bf16.msra.mxu0 %v1622
        %2032 = vmatpush.bf16.msra.mxu0 %v1618
        %2033 = vmatpush.bf16.msra.mxu0 %v1614
        %2034 = vmatpush.bf16.msra.mxu0 %v1610
        %2035 = vmatpush.bf16.msra.mxu0 %v1606
        %2036 = vmatpush.bf16.msra.mxu0 %v1602
        %2037 = vmatpush.bf16.msra.mxu0 %v1598
        %2038 = vmatpush.bf16.msra.mxu0 %v1594
        %2039 = vmatmul.bf16.gmra.mxu0 %v721
        %v2040 = vpop.f32.mrf.mxu0
        %v2041 = vadd.f32 %v2027, %v2040
        %v2042 = vpop.f32.mrf.mxu0
        %v2043 = vadd.f32 %v2029, %v2042
        %2044 = vdwg.mxu0
        %2045 = vmatpush.bf16.msra.mxu0 %v1431
        %2046 = vmatpush.bf16.msra.mxu0 %v1427
        %2047 = vmatpush.bf16.msra.mxu0 %v1423
        %2048 = vmatpush.bf16.msra.mxu0 %v1419
        %2049 = vmatpush.bf16.msra.mxu0 %v1415
        %2050 = vmatpush.bf16.msra.mxu0 %v1411
        %2051 = vmatpush.bf16.msra.mxu0 %v1407
        %2052 = vmatpush.bf16.msra.mxu0 %v1403
        %2053 = vmatmul.bf16.gmra.mxu0 %v715
        %v2054 = vpop.f32.mrf.mxu0
        %v2055 = vadd.f32 %v687, %v2054
        %v2056 = vpop.f32.mrf.mxu0
        %v2057 = vadd.f32 %v687, %v2056
        %2058 = vdwg.mxu0
        %2059 = vmatpush.bf16.msra.mxu0 %v1463
        %2060 = vmatpush.bf16.msra.mxu0 %v1459
        %2061 = vmatpush.bf16.msra.mxu0 %v1455
        %2062 = vmatpush.bf16.msra.mxu0 %v1451
        %2063 = vmatpush.bf16.msra.mxu0 %v1447
        %2064 = vmatpush.bf16.msra.mxu0 %v1443
        %2065 = vmatpush.bf16.msra.mxu0 %v1439
        %2066 = vmatpush.bf16.msra.mxu0 %v1435
        %2067 = vmatmul.bf16.gmra.mxu0 %v716
        %v2068 = vpop.f32.mrf.mxu0
        %v2069 = vadd.f32 %v2055, %v2068
        %v2070 = vpop.f32.mrf.mxu0
        %v2071 = vadd.f32 %v2057, %v2070
        %2072 = vdwg.mxu0
        %2073 = vmatpush.bf16.msra.mxu0 %v1495
        %2074 = vmatpush.bf16.msra.mxu0 %v1491
        %2075 = vmatpush.bf16.msra.mxu0 %v1487
        %2076 = vmatpush.bf16.msra.mxu0 %v1483
        %2077 = vmatpush.bf16.msra.mxu0 %v1479
        %2078 = vmatpush.bf16.msra.mxu0 %v1475
        %2079 = vmatpush.bf16.msra.mxu0 %v1471
        %2080 = vmatpush.bf16.msra.mxu0 %v1467
        %2081 = vmatmul.bf16.gmra.mxu0 %v717
        %v2082 = vpop.f32.mrf.mxu0
        %v2083 = vadd.f32 %v2069, %v2082
        %v2084 = vpop.f32.mrf.mxu0
        %v2085 = vadd.f32 %v2071, %v2084
        %2086 = vdwg.mxu0
        %2087 = vmatpush.bf16.msra.mxu0 %v1527
        %2088 = vmatpush.bf16.msra.mxu0 %v1523
        %2089 = vmatpush.bf16.msra.mxu0 %v1519
        %2090 = vmatpush.bf16.msra.mxu0 %v1515
        %2091 = vmatpush.bf16.msra.mxu0 %v1511
        %2092 = vmatpush.bf16.msra.mxu0 %v1507
        %2093 = vmatpush.bf16.msra.mxu0 %v1503
        %2094 = vmatpush.bf16.msra.mxu0 %v1499
        %2095 = vmatmul.bf16.gmra.mxu0 %v718
        %v2096 = vpop.f32.mrf.mxu0
        %v2097 = vadd.f32 %v2083, %v2096
        %v2098 = vpop.f32.mrf.mxu0
        %v2099 = vadd.f32 %v2085, %v2098
        %2100 = vdwg.mxu0
        %2101 = vmatpush.bf16.msra.mxu0 %v1559
        %2102 = vmatpush.bf16.msra.mxu0 %v1555
        %2103 = vmatpush.bf16.msra.mxu0 %v1551
        %2104 = vmatpush.bf16.msra.mxu0 %v1547
        %2105 = vmatpush.bf16.msra.mxu0 %v1543
        %2106 = vmatpush.bf16.msra.mxu0 %v1539
        %2107 = vmatpush.bf16.msra.mxu0 %v1535
        %2108 = vmatpush.bf16.msra.mxu0 %v1531
        %2109 = vmatmul.bf16.gmra.mxu0 %v719
        %v2110 = vpop.f32.mrf.mxu0
        %v2111 = vadd.f32 %v2097, %v2110
        %v2112 = vpop.f32.mrf.mxu0
        %v2113 = vadd.f32 %v2099, %v2112
        %2114 = vdwg.mxu0
        %2115 = vmatpush.bf16.msra.mxu0 %v1591
        %2116 = vmatpush.bf16.msra.mxu0 %v1587
        %2117 = vmatpush.bf16.msra.mxu0 %v1583
        %2118 = vmatpush.bf16.msra.mxu0 %v1579
        %2119 = vmatpush.bf16.msra.mxu0 %v1575
        %2120 = vmatpush.bf16.msra.mxu0 %v1571
        %2121 = vmatpush.bf16.msra.mxu0 %v1567
        %2122 = vmatpush.bf16.msra.mxu0 %v1563
        %2123 = vmatmul.bf16.gmra.mxu0 %v720
        %v2124 = vpop.f32.mrf.mxu0
        %v2125 = vadd.f32 %v2111, %v2124
        %v2126 = vpop.f32.mrf.mxu0
        %v2127 = vadd.f32 %v2113, %v2126
        %2128 = vdwg.mxu0
        %2129 = vmatpush.bf16.msra.mxu0 %v1623
        %2130 = vmatpush.bf16.msra.mxu0 %v1619
        %2131 = vmatpush.bf16.msra.mxu0 %v1615
        %2132 = vmatpush.bf16.msra.mxu0 %v1611
        %2133 = vmatpush.bf16.msra.mxu0 %v1607
        %2134 = vmatpush.bf16.msra.mxu0 %v1603
        %2135 = vmatpush.bf16.msra.mxu0 %v1599
        %2136 = vmatpush.bf16.msra.mxu0 %v1595
        %2137 = vmatmul.bf16.gmra.mxu0 %v721
        %v2138 = vpop.f32.mrf.mxu0
        %v2139 = vadd.f32 %v2125, %v2138
        %v2140 = vpop.f32.mrf.mxu0
        %v2141 = vadd.f32 %v2127, %v2140
        %2142 = vdwg.mxu0
        %2143 = vmatpush.bf16.msra.mxu0 %v1432
        %2144 = vmatpush.bf16.msra.mxu0 %v1428
        %2145 = vmatpush.bf16.msra.mxu0 %v1424
        %2146 = vmatpush.bf16.msra.mxu0 %v1420
        %2147 = vmatpush.bf16.msra.mxu0 %v1416
        %2148 = vmatpush.bf16.msra.mxu0 %v1412
        %2149 = vmatpush.bf16.msra.mxu0 %v1408
        %2150 = vmatpush.bf16.msra.mxu0 %v1404
        %2151 = vmatmul.bf16.gmra.mxu0 %v715
        %v2152 = vpop.f32.mrf.mxu0
        %v2153 = vadd.f32 %v688, %v2152
        %v2154 = vpop.f32.mrf.mxu0
        %v2155 = vadd.f32 %v688, %v2154
        %2156 = vdwg.mxu0
        %2157 = vmatpush.bf16.msra.mxu0 %v1464
        %2158 = vmatpush.bf16.msra.mxu0 %v1460
        %2159 = vmatpush.bf16.msra.mxu0 %v1456
        %2160 = vmatpush.bf16.msra.mxu0 %v1452
        %2161 = vmatpush.bf16.msra.mxu0 %v1448
        %2162 = vmatpush.bf16.msra.mxu0 %v1444
        %2163 = vmatpush.bf16.msra.mxu0 %v1440
        %2164 = vmatpush.bf16.msra.mxu0 %v1436
        %2165 = vmatmul.bf16.gmra.mxu0 %v716
        %v2166 = vpop.f32.mrf.mxu0
        %v2167 = vadd.f32 %v2153, %v2166
        %v2168 = vpop.f32.mrf.mxu0
        %v2169 = vadd.f32 %v2155, %v2168
        %2170 = vdwg.mxu0
        %2171 = vmatpush.bf16.msra.mxu0 %v1496
        %2172 = vmatpush.bf16.msra.mxu0 %v1492
        %2173 = vmatpush.bf16.msra.mxu0 %v1488
        %2174 = vmatpush.bf16.msra.mxu0 %v1484
        %2175 = vmatpush.bf16.msra.mxu0 %v1480
        %2176 = vmatpush.bf16.msra.mxu0 %v1476
        %2177 = vmatpush.bf16.msra.mxu0 %v1472
        %2178 = vmatpush.bf16.msra.mxu0 %v1468
        %2179 = vmatmul.bf16.gmra.mxu0 %v717
        %v2180 = vpop.f32.mrf.mxu0
        %v2181 = vadd.f32 %v2167, %v2180
        %v2182 = vpop.f32.mrf.mxu0
        %v2183 = vadd.f32 %v2169, %v2182
        %2184 = vdwg.mxu0
        %2185 = vmatpush.bf16.msra.mxu0 %v1528
        %2186 = vmatpush.bf16.msra.mxu0 %v1524
        %2187 = vmatpush.bf16.msra.mxu0 %v1520
        %2188 = vmatpush.bf16.msra.mxu0 %v1516
        %2189 = vmatpush.bf16.msra.mxu0 %v1512
        %2190 = vmatpush.bf16.msra.mxu0 %v1508
        %2191 = vmatpush.bf16.msra.mxu0 %v1504
        %2192 = vmatpush.bf16.msra.mxu0 %v1500
        %2193 = vmatmul.bf16.gmra.mxu0 %v718
        %v2194 = vpop.f32.mrf.mxu0
        %v2195 = vadd.f32 %v2181, %v2194
        %v2196 = vpop.f32.mrf.mxu0
        %v2197 = vadd.f32 %v2183, %v2196
        %2198 = vdwg.mxu0
        %2199 = vmatpush.bf16.msra.mxu0 %v1560
        %2200 = vmatpush.bf16.msra.mxu0 %v1556
        %2201 = vmatpush.bf16.msra.mxu0 %v1552
        %2202 = vmatpush.bf16.msra.mxu0 %v1548
        %2203 = vmatpush.bf16.msra.mxu0 %v1544
        %2204 = vmatpush.bf16.msra.mxu0 %v1540
        %2205 = vmatpush.bf16.msra.mxu0 %v1536
        %2206 = vmatpush.bf16.msra.mxu0 %v1532
        %2207 = vmatmul.bf16.gmra.mxu0 %v719
        %v2208 = vpop.f32.mrf.mxu0
        %v2209 = vadd.f32 %v2195, %v2208
        %v2210 = vpop.f32.mrf.mxu0
        %v2211 = vadd.f32 %v2197, %v2210
        %2212 = vdwg.mxu0
        %2213 = vmatpush.bf16.msra.mxu0 %v1592
        %2214 = vmatpush.bf16.msra.mxu0 %v1588
        %2215 = vmatpush.bf16.msra.mxu0 %v1584
        %2216 = vmatpush.bf16.msra.mxu0 %v1580
        %2217 = vmatpush.bf16.msra.mxu0 %v1576
        %2218 = vmatpush.bf16.msra.mxu0 %v1572
        %2219 = vmatpush.bf16.msra.mxu0 %v1568
        %2220 = vmatpush.bf16.msra.mxu0 %v1564
        %2221 = vmatmul.bf16.gmra.mxu0 %v720
        %v2222 = vpop.f32.mrf.mxu0
        %v2223 = vadd.f32 %v2209, %v2222
        %v2224 = vpop.f32.mrf.mxu0
        %v2225 = vadd.f32 %v2211, %v2224
        %2226 = vdwg.mxu0
        %2227 = vmatpush.bf16.msra.mxu0 %v1624
        %2228 = vmatpush.bf16.msra.mxu0 %v1620
        %2229 = vmatpush.bf16.msra.mxu0 %v1616
        %2230 = vmatpush.bf16.msra.mxu0 %v1612
        %2231 = vmatpush.bf16.msra.mxu0 %v1608
        %2232 = vmatpush.bf16.msra.mxu0 %v1604
        %2233 = vmatpush.bf16.msra.mxu0 %v1600
        %2234 = vmatpush.bf16.msra.mxu0 %v1596
        %2235 = vmatmul.bf16.gmra.mxu0 %v721
        %v2236 = vpop.f32.mrf.mxu0
        %v2237 = vadd.f32 %v2223, %v2236
        %v2238 = vpop.f32.mrf.mxu0
        %v2239 = vadd.f32 %v2225, %v2238
        %2240 = vdwg.mxu0
        %v2241 = vmax.f32 %v1943, 0.0
        %v2242 = vmax.f32 %v2041, 0.0
        %v2243 = vmax.f32 %v2139, 0.0
        %v2244 = vmax.f32 %v2237, 0.0
        %v2245 = vmax.f32 %v1945, 0.0
        %v2246 = vmax.f32 %v2043, 0.0
        %v2247 = vmax.f32 %v2141, 0.0
        %v2248 = vmax.f32 %v2239, 0.0
        %v2249 = vpack.c.bf16 %v2245, %v2241
        %v2250 = vpack.c.bf16 %v2246, %v2242
        %v2251 = vpack.c.bf16 %v2247, %v2243
        %v2252 = vpack.c.bf16 %v2248, %v2244
        %v2253 = vld [vmem:[#allocation8] sm:$0xff]
        %v2254 = vld [vmem:[#allocation8 + $0x8] sm:$0xff]
        %v2255 = vld [vmem:[#allocation8 + $0x10] sm:$0xff]
        %v2256 = vld [vmem:[#allocation8 + $0x18] sm:$0xff]
        %v2257 = vld [vmem:[#allocation8 + $0x20] sm:$0xff]
        %v2258 = vld [vmem:[#allocation8 + $0x28] sm:$0xff]
        %v2259 = vld [vmem:[#allocation8 + $0x30] sm:$0xff]
        %v2260 = vld [vmem:[#allocation8 + $0x38] sm:$0xff]
        %v2261 = vld [vmem:[#allocation8 + $0x40] sm:$0xff]
        %v2262 = vld [vmem:[#allocation8 + $0x48] sm:$0xff]
        %v2263 = vld [vmem:[#allocation8 + $0x50] sm:$0xff]
        %v2264 = vld [vmem:[#allocation8 + $0x58] sm:$0xff]
        %v2265 = vld [vmem:[#allocation8 + $0x60] sm:$0xff]
        %v2266 = vld [vmem:[#allocation8 + $0x68] sm:$0xff]
        %v2267 = vld [vmem:[#allocation8 + $0x70] sm:$0xff]
        %v2268 = vld [vmem:[#allocation8 + $0x78] sm:$0xff]
        %v2269 = vld [vmem:[#allocation8 + $0x80] sm:$0xff]
        %v2270 = vld [vmem:[#allocation8 + $0x88] sm:$0xff]
        %v2271 = vld [vmem:[#allocation8 + $0x90] sm:$0xff]
        %v2272 = vld [vmem:[#allocation8 + $0x98] sm:$0xff]
        %v2273 = vld [vmem:[#allocation8 + $0xa0] sm:$0xff]
        %v2274 = vld [vmem:[#allocation8 + $0xa8] sm:$0xff]
        %v2275 = vld [vmem:[#allocation8 + $0xb0] sm:$0xff]
        %v2276 = vld [vmem:[#allocation8 + $0xb8] sm:$0xff]
        %v2277 = vld [vmem:[#allocation8 + $0xc0] sm:$0xff]
        %v2278 = vld [vmem:[#allocation8 + $0xc8] sm:$0xff]
        %v2279 = vld [vmem:[#allocation8 + $0xd0] sm:$0xff]
        %v2280 = vld [vmem:[#allocation8 + $0xd8] sm:$0xff]
        %v2281 = vld [vmem:[#allocation8 + $0xe0] sm:$0xff]
        %v2282 = vld [vmem:[#allocation8 + $0xe8] sm:$0xff]
        %v2283 = vld [vmem:[#allocation8 + $0xf0] sm:$0xff]
        %v2284 = vld [vmem:[#allocation8 + $0xf8] sm:$0xff]
        %v2285 = vld [vmem:[#allocation8 + $0x100] sm:$0xff]
        %v2286 = vld [vmem:[#allocation8 + $0x108] sm:$0xff]
        %v2287 = vld [vmem:[#allocation8 + $0x110] sm:$0xff]
        %v2288 = vld [vmem:[#allocation8 + $0x118] sm:$0xff]
        %v2289 = vld [vmem:[#allocation8 + $0x120] sm:$0xff]
        %v2290 = vld [vmem:[#allocation8 + $0x128] sm:$0xff]
        %v2291 = vld [vmem:[#allocation8 + $0x130] sm:$0xff]
        %v2292 = vld [vmem:[#allocation8 + $0x138] sm:$0xff]
        %v2293 = vld [vmem:[#allocation8 + $0x140] sm:$0xff]
        %v2294 = vld [vmem:[#allocation8 + $0x148] sm:$0xff]
        %v2295 = vld [vmem:[#allocation8 + $0x150] sm:$0xff]
        %v2296 = vld [vmem:[#allocation8 + $0x158] sm:$0xff]
        %v2297 = vld [vmem:[#allocation8 + $0x160] sm:$0xff]
        %v2298 = vld [vmem:[#allocation8 + $0x168] sm:$0xff]
        %v2299 = vld [vmem:[#allocation8 + $0x170] sm:$0xff]
        %v2300 = vld [vmem:[#allocation8 + $0x178] sm:$0xff]
        %v2301 = vld [vmem:[#allocation8 + $0x180] sm:$0xff]
        %v2302 = vld [vmem:[#allocation8 + $0x188] sm:$0xff]
        %v2303 = vld [vmem:[#allocation8 + $0x190] sm:$0xff]
        %v2304 = vld [vmem:[#allocation8 + $0x198] sm:$0xff]
        %v2305 = vld [vmem:[#allocation8 + $0x1a0] sm:$0xff]
        %v2306 = vld [vmem:[#allocation8 + $0x1a8] sm:$0xff]
        %v2307 = vld [vmem:[#allocation8 + $0x1b0] sm:$0xff]
        %v2308 = vld [vmem:[#allocation8 + $0x1b8] sm:$0xff]
        %v2309 = vld [vmem:[#allocation8 + $0x1c0] sm:$0xff]
        %v2310 = vld [vmem:[#allocation8 + $0x1c8] sm:$0xff]
        %v2311 = vld [vmem:[#allocation8 + $0x1d0] sm:$0xff]
        %v2312 = vld [vmem:[#allocation8 + $0x1d8] sm:$0xff]
        %v2313 = vld [vmem:[#allocation8 + $0x1e0] sm:$0xff]
        %v2314 = vld [vmem:[#allocation8 + $0x1e8] sm:$0xff]
        %v2315 = vld [vmem:[#allocation8 + $0x1f0] sm:$0xff]
        %v2316 = vld [vmem:[#allocation8 + $0x1f8] sm:$0xff]
        %v2317 = vld [vmem:[#allocation8 + $0x200] sm:$0xff]
        %v2318 = vld [vmem:[#allocation8 + $0x208] sm:$0xff]
        %v2319 = vld [vmem:[#allocation8 + $0x210] sm:$0xff]
        %v2320 = vld [vmem:[#allocation8 + $0x218] sm:$0xff]
        %v2321 = vld [vmem:[#allocation8 + $0x220] sm:$0xff]
        %v2322 = vld [vmem:[#allocation8 + $0x228] sm:$0xff]
        %v2323 = vld [vmem:[#allocation8 + $0x230] sm:$0xff]
        %v2324 = vld [vmem:[#allocation8 + $0x238] sm:$0xff]
        %v2325 = vld [vmem:[#allocation8 + $0x240] sm:$0xff]
        %v2326 = vld [vmem:[#allocation8 + $0x248] sm:$0xff]
        %v2327 = vld [vmem:[#allocation8 + $0x250] sm:$0xff]
        %v2328 = vld [vmem:[#allocation8 + $0x258] sm:$0xff]
        %v2329 = vld [vmem:[#allocation8 + $0x260] sm:$0xff]
        %v2330 = vld [vmem:[#allocation8 + $0x268] sm:$0xff]
        %v2331 = vld [vmem:[#allocation8 + $0x270] sm:$0xff]
        %v2332 = vld [vmem:[#allocation8 + $0x278] sm:$0xff]
        %v2333 = vld [vmem:[#allocation8 + $0x280] sm:$0xff]
        %v2334 = vld [vmem:[#allocation8 + $0x288] sm:$0xff]
        %v2335 = vld [vmem:[#allocation8 + $0x290] sm:$0xff]
        %v2336 = vld [vmem:[#allocation8 + $0x298] sm:$0xff]
        %v2337 = vld [vmem:[#allocation8 + $0x2a0] sm:$0xff]
        %v2338 = vld [vmem:[#allocation8 + $0x2a8] sm:$0xff]
        %v2339 = vld [vmem:[#allocation8 + $0x2b0] sm:$0xff]
        %v2340 = vld [vmem:[#allocation8 + $0x2b8] sm:$0xff]
        %v2341 = vld [vmem:[#allocation8 + $0x2c0] sm:$0xff]
        %v2342 = vld [vmem:[#allocation8 + $0x2c8] sm:$0xff]
        %v2343 = vld [vmem:[#allocation8 + $0x2d0] sm:$0xff]
        %v2344 = vld [vmem:[#allocation8 + $0x2d8] sm:$0xff]
        %v2345 = vld [vmem:[#allocation8 + $0x2e0] sm:$0xff]
        %v2346 = vld [vmem:[#allocation8 + $0x2e8] sm:$0xff]
        %v2347 = vld [vmem:[#allocation8 + $0x2f0] sm:$0xff]
        %v2348 = vld [vmem:[#allocation8 + $0x2f8] sm:$0xff]
        %v2349 = vld [vmem:[#allocation8 + $0x300] sm:$0xff]
        %v2350 = vld [vmem:[#allocation8 + $0x308] sm:$0xff]
        %v2351 = vld [vmem:[#allocation8 + $0x310] sm:$0xff]
        %v2352 = vld [vmem:[#allocation8 + $0x318] sm:$0xff]
        %v2353 = vld [vmem:[#allocation8 + $0x320] sm:$0xff]
        %v2354 = vld [vmem:[#allocation8 + $0x328] sm:$0xff]
        %v2355 = vld [vmem:[#allocation8 + $0x330] sm:$0xff]
        %v2356 = vld [vmem:[#allocation8 + $0x338] sm:$0xff]
        %v2357 = vld [vmem:[#allocation8 + $0x340] sm:$0xff]
        %v2358 = vld [vmem:[#allocation8 + $0x348] sm:$0xff]
        %v2359 = vld [vmem:[#allocation8 + $0x350] sm:$0xff]
        %v2360 = vld [vmem:[#allocation8 + $0x358] sm:$0xff]
        %v2361 = vld [vmem:[#allocation8 + $0x360] sm:$0xff]
        %v2362 = vld [vmem:[#allocation8 + $0x368] sm:$0xff]
        %v2363 = vld [vmem:[#allocation8 + $0x370] sm:$0xff]
        %v2364 = vld [vmem:[#allocation8 + $0x378] sm:$0xff]
        %v2365 = vld [vmem:[#allocation8 + $0x380] sm:$0xff]
        %v2366 = vld [vmem:[#allocation8 + $0x388] sm:$0xff]
        %v2367 = vld [vmem:[#allocation8 + $0x390] sm:$0xff]
        %v2368 = vld [vmem:[#allocation8 + $0x398] sm:$0xff]
        %v2369 = vld [vmem:[#allocation8 + $0x3a0] sm:$0xff]
        %v2370 = vld [vmem:[#allocation8 + $0x3a8] sm:$0xff]
        %v2371 = vld [vmem:[#allocation8 + $0x3b0] sm:$0xff]
        %v2372 = vld [vmem:[#allocation8 + $0x3b8] sm:$0xff]
        %v2373 = vld [vmem:[#allocation8 + $0x3c0] sm:$0xff]
        %v2374 = vld [vmem:[#allocation8 + $0x3c8] sm:$0xff]
        %v2375 = vld [vmem:[#allocation8 + $0x3d0] sm:$0xff]
        %v2376 = vld [vmem:[#allocation8 + $0x3d8] sm:$0xff]
        %v2377 = vld [vmem:[#allocation8 + $0x3e0] sm:$0xff]
        %v2378 = vld [vmem:[#allocation8 + $0x3e8] sm:$0xff]
        %v2379 = vld [vmem:[#allocation8 + $0x3f0] sm:$0xff]
        %v2380 = vld [vmem:[#allocation8 + $0x3f8] sm:$0xff]
        %v2381 = vld [vmem:[#allocation10] sm:$0xf]
        %v2383 = vperm.slane %v2381, 0
        %v2384 = vperm.slane %v2381, 1
        %v2385 = vperm.slane %v2381, 2
        %v2386 = vperm.slane %v2381, 3
        %v2519 = vunpack.c.l.b16 %v2253
        %v2520 = vunpack.c.h.b16 %v2253
        %v2521 = vunpack.c.l.b16 %v2254
        %v2522 = vunpack.c.h.b16 %v2254
        %v2523 = vunpack.c.l.b16 %v2255
        %v2524 = vunpack.c.h.b16 %v2255
        %v2525 = vunpack.c.l.b16 %v2256
        %v2526 = vunpack.c.h.b16 %v2256
        %v2527 = vunpack.c.l.b16 %v2257
        %v2528 = vunpack.c.h.b16 %v2257
        %v2529 = vunpack.c.l.b16 %v2258
        %v2530 = vunpack.c.h.b16 %v2258
        %v2531 = vunpack.c.l.b16 %v2259
        %v2532 = vunpack.c.h.b16 %v2259
        %v2533 = vunpack.c.l.b16 %v2260
        %v2534 = vunpack.c.h.b16 %v2260
        %v2535 = vunpack.c.l.b16 %v2261
        %v2536 = vunpack.c.h.b16 %v2261
        %v2537 = vunpack.c.l.b16 %v2262
        %v2538 = vunpack.c.h.b16 %v2262
        %v2539 = vunpack.c.l.b16 %v2263
        %v2540 = vunpack.c.h.b16 %v2263
        %v2541 = vunpack.c.l.b16 %v2264
        %v2542 = vunpack.c.h.b16 %v2264
        %v2543 = vunpack.c.l.b16 %v2265
        %v2544 = vunpack.c.h.b16 %v2265
        %v2545 = vunpack.c.l.b16 %v2266
        %v2546 = vunpack.c.h.b16 %v2266
        %v2547 = vunpack.c.l.b16 %v2267
        %v2548 = vunpack.c.h.b16 %v2267
        %v2549 = vunpack.c.l.b16 %v2268
        %v2550 = vunpack.c.h.b16 %v2268
        %v2551 = vunpack.c.l.b16 %v2269
        %v2552 = vunpack.c.h.b16 %v2269
        %v2553 = vunpack.c.l.b16 %v2270
        %v2554 = vunpack.c.h.b16 %v2270
        %v2555 = vunpack.c.l.b16 %v2271
        %v2556 = vunpack.c.h.b16 %v2271
        %v2557 = vunpack.c.l.b16 %v2272
        %v2558 = vunpack.c.h.b16 %v2272
        %v2559 = vunpack.c.l.b16 %v2273
        %v2560 = vunpack.c.h.b16 %v2273
        %v2561 = vunpack.c.l.b16 %v2274
        %v2562 = vunpack.c.h.b16 %v2274
        %v2563 = vunpack.c.l.b16 %v2275
        %v2564 = vunpack.c.h.b16 %v2275
        %v2565 = vunpack.c.l.b16 %v2276
        %v2566 = vunpack.c.h.b16 %v2276
        %v2567 = vunpack.c.l.b16 %v2277
        %v2568 = vunpack.c.h.b16 %v2277
        %v2569 = vunpack.c.l.b16 %v2278
        %v2570 = vunpack.c.h.b16 %v2278
        %v2571 = vunpack.c.l.b16 %v2279
        %v2572 = vunpack.c.h.b16 %v2279
        %v2573 = vunpack.c.l.b16 %v2280
        %v2574 = vunpack.c.h.b16 %v2280
        %v2575 = vunpack.c.l.b16 %v2281
        %v2576 = vunpack.c.h.b16 %v2281
        %v2577 = vunpack.c.l.b16 %v2282
        %v2578 = vunpack.c.h.b16 %v2282
        %v2579 = vunpack.c.l.b16 %v2283
        %v2580 = vunpack.c.h.b16 %v2283
        %v2581 = vunpack.c.l.b16 %v2284
        %v2582 = vunpack.c.h.b16 %v2284
        %v2583 = vunpack.c.l.b16 %v2285
        %v2584 = vunpack.c.h.b16 %v2285
        %v2585 = vunpack.c.l.b16 %v2286
        %v2586 = vunpack.c.h.b16 %v2286
        %v2587 = vunpack.c.l.b16 %v2287
        %v2588 = vunpack.c.h.b16 %v2287
        %v2589 = vunpack.c.l.b16 %v2288
        %v2590 = vunpack.c.h.b16 %v2288
        %v2591 = vunpack.c.l.b16 %v2289
        %v2592 = vunpack.c.h.b16 %v2289
        %v2593 = vunpack.c.l.b16 %v2290
        %v2594 = vunpack.c.h.b16 %v2290
        %v2595 = vunpack.c.l.b16 %v2291
        %v2596 = vunpack.c.h.b16 %v2291
        %v2597 = vunpack.c.l.b16 %v2292
        %v2598 = vunpack.c.h.b16 %v2292
        %v2599 = vunpack.c.l.b16 %v2293
        %v2600 = vunpack.c.h.b16 %v2293
        %v2601 = vunpack.c.l.b16 %v2294
        %v2602 = vunpack.c.h.b16 %v2294
        %v2603 = vunpack.c.l.b16 %v2295
        %v2604 = vunpack.c.h.b16 %v2295
        %v2605 = vunpack.c.l.b16 %v2296
        %v2606 = vunpack.c.h.b16 %v2296
        %v2607 = vunpack.c.l.b16 %v2297
        %v2608 = vunpack.c.h.b16 %v2297
        %v2609 = vunpack.c.l.b16 %v2298
        %v2610 = vunpack.c.h.b16 %v2298
        %v2611 = vunpack.c.l.b16 %v2299
        %v2612 = vunpack.c.h.b16 %v2299
        %v2613 = vunpack.c.l.b16 %v2300
        %v2614 = vunpack.c.h.b16 %v2300
        %v2615 = vunpack.c.l.b16 %v2301
        %v2616 = vunpack.c.h.b16 %v2301
        %v2617 = vunpack.c.l.b16 %v2302
        %v2618 = vunpack.c.h.b16 %v2302
        %v2619 = vunpack.c.l.b16 %v2303
        %v2620 = vunpack.c.h.b16 %v2303
        %v2621 = vunpack.c.l.b16 %v2304
        %v2622 = vunpack.c.h.b16 %v2304
        %v2623 = vunpack.c.l.b16 %v2305
        %v2624 = vunpack.c.h.b16 %v2305
        %v2625 = vunpack.c.l.b16 %v2306
        %v2626 = vunpack.c.h.b16 %v2306
        %v2627 = vunpack.c.l.b16 %v2307
        %v2628 = vunpack.c.h.b16 %v2307
        %v2629 = vunpack.c.l.b16 %v2308
        %v2630 = vunpack.c.h.b16 %v2308
        %v2631 = vunpack.c.l.b16 %v2309
        %v2632 = vunpack.c.h.b16 %v2309
        %v2633 = vunpack.c.l.b16 %v2310
        %v2634 = vunpack.c.h.b16 %v2310
        %v2635 = vunpack.c.l.b16 %v2311
        %v2636 = vunpack.c.h.b16 %v2311
        %v2637 = vunpack.c.l.b16 %v2312
        %v2638 = vunpack.c.h.b16 %v2312
        %v2639 = vunpack.c.l.b16 %v2313
        %v2640 = vunpack.c.h.b16 %v2313
        %v2641 = vunpack.c.l.b16 %v2314
        %v2642 = vunpack.c.h.b16 %v2314
        %v2643 = vunpack.c.l.b16 %v2315
        %v2644 = vunpack.c.h.b16 %v2315
        %v2645 = vunpack.c.l.b16 %v2316
        %v2646 = vunpack.c.h.b16 %v2316
        %v2647 = vunpack.c.l.b16 %v2317
        %v2648 = vunpack.c.h.b16 %v2317
        %v2649 = vunpack.c.l.b16 %v2318
        %v2650 = vunpack.c.h.b16 %v2318
        %v2651 = vunpack.c.l.b16 %v2319
        %v2652 = vunpack.c.h.b16 %v2319
        %v2653 = vunpack.c.l.b16 %v2320
        %v2654 = vunpack.c.h.b16 %v2320
        %v2655 = vunpack.c.l.b16 %v2321
        %v2656 = vunpack.c.h.b16 %v2321
        %v2657 = vunpack.c.l.b16 %v2322
        %v2658 = vunpack.c.h.b16 %v2322
        %v2659 = vunpack.c.l.b16 %v2323
        %v2660 = vunpack.c.h.b16 %v2323
        %v2661 = vunpack.c.l.b16 %v2324
        %v2662 = vunpack.c.h.b16 %v2324
        %v2663 = vunpack.c.l.b16 %v2325
        %v2664 = vunpack.c.h.b16 %v2325
        %v2665 = vunpack.c.l.b16 %v2326
        %v2666 = vunpack.c.h.b16 %v2326
        %v2667 = vunpack.c.l.b16 %v2327
        %v2668 = vunpack.c.h.b16 %v2327
        %v2669 = vunpack.c.l.b16 %v2328
        %v2670 = vunpack.c.h.b16 %v2328
        %v2671 = vunpack.c.l.b16 %v2329
        %v2672 = vunpack.c.h.b16 %v2329
        %v2673 = vunpack.c.l.b16 %v2330
        %v2674 = vunpack.c.h.b16 %v2330
        %v2675 = vunpack.c.l.b16 %v2331
        %v2676 = vunpack.c.h.b16 %v2331
        %v2677 = vunpack.c.l.b16 %v2332
        %v2678 = vunpack.c.h.b16 %v2332
        %v2679 = vunpack.c.l.b16 %v2333
        %v2680 = vunpack.c.h.b16 %v2333
        %v2681 = vunpack.c.l.b16 %v2334
        %v2682 = vunpack.c.h.b16 %v2334
        %v2683 = vunpack.c.l.b16 %v2335
        %v2684 = vunpack.c.h.b16 %v2335
        %v2685 = vunpack.c.l.b16 %v2336
        %v2686 = vunpack.c.h.b16 %v2336
        %v2687 = vunpack.c.l.b16 %v2337
        %v2688 = vunpack.c.h.b16 %v2337
        %v2689 = vunpack.c.l.b16 %v2338
        %v2690 = vunpack.c.h.b16 %v2338
        %v2691 = vunpack.c.l.b16 %v2339
        %v2692 = vunpack.c.h.b16 %v2339
        %v2693 = vunpack.c.l.b16 %v2340
        %v2694 = vunpack.c.h.b16 %v2340
        %v2695 = vunpack.c.l.b16 %v2341
        %v2696 = vunpack.c.h.b16 %v2341
        %v2697 = vunpack.c.l.b16 %v2342
        %v2698 = vunpack.c.h.b16 %v2342
        %v2699 = vunpack.c.l.b16 %v2343
        %v2700 = vunpack.c.h.b16 %v2343
        %v2701 = vunpack.c.l.b16 %v2344
        %v2702 = vunpack.c.h.b16 %v2344
        %v2703 = vunpack.c.l.b16 %v2345
        %v2704 = vunpack.c.h.b16 %v2345
        %v2705 = vunpack.c.l.b16 %v2346
        %v2706 = vunpack.c.h.b16 %v2346
        %v2707 = vunpack.c.l.b16 %v2347
        %v2708 = vunpack.c.h.b16 %v2347
        %v2709 = vunpack.c.l.b16 %v2348
        %v2710 = vunpack.c.h.b16 %v2348
        %v2711 = vunpack.c.l.b16 %v2349
        %v2712 = vunpack.c.h.b16 %v2349
        %v2713 = vunpack.c.l.b16 %v2350
        %v2714 = vunpack.c.h.b16 %v2350
        %v2715 = vunpack.c.l.b16 %v2351
        %v2716 = vunpack.c.h.b16 %v2351
        %v2717 = vunpack.c.l.b16 %v2352
        %v2718 = vunpack.c.h.b16 %v2352
        %v2719 = vunpack.c.l.b16 %v2353
        %v2720 = vunpack.c.h.b16 %v2353
        %v2721 = vunpack.c.l.b16 %v2354
        %v2722 = vunpack.c.h.b16 %v2354
        %v2723 = vunpack.c.l.b16 %v2355
        %v2724 = vunpack.c.h.b16 %v2355
        %v2725 = vunpack.c.l.b16 %v2356
        %v2726 = vunpack.c.h.b16 %v2356
        %v2727 = vunpack.c.l.b16 %v2357
        %v2728 = vunpack.c.h.b16 %v2357
        %v2729 = vunpack.c.l.b16 %v2358
        %v2730 = vunpack.c.h.b16 %v2358
        %v2731 = vunpack.c.l.b16 %v2359
        %v2732 = vunpack.c.h.b16 %v2359
        %v2733 = vunpack.c.l.b16 %v2360
        %v2734 = vunpack.c.h.b16 %v2360
        %v2735 = vunpack.c.l.b16 %v2361
        %v2736 = vunpack.c.h.b16 %v2361
        %v2737 = vunpack.c.l.b16 %v2362
        %v2738 = vunpack.c.h.b16 %v2362
        %v2739 = vunpack.c.l.b16 %v2363
        %v2740 = vunpack.c.h.b16 %v2363
        %v2741 = vunpack.c.l.b16 %v2364
        %v2742 = vunpack.c.h.b16 %v2364
        %v2743 = vunpack.c.l.b16 %v2365
        %v2744 = vunpack.c.h.b16 %v2365
        %v2745 = vunpack.c.l.b16 %v2366
        %v2746 = vunpack.c.h.b16 %v2366
        %v2747 = vunpack.c.l.b16 %v2367
        %v2748 = vunpack.c.h.b16 %v2367
        %v2749 = vunpack.c.l.b16 %v2368
        %v2750 = vunpack.c.h.b16 %v2368
        %v2751 = vunpack.c.l.b16 %v2369
        %v2752 = vunpack.c.h.b16 %v2369
        %v2753 = vunpack.c.l.b16 %v2370
        %v2754 = vunpack.c.h.b16 %v2370
        %v2755 = vunpack.c.l.b16 %v2371
        %v2756 = vunpack.c.h.b16 %v2371
        %v2757 = vunpack.c.l.b16 %v2372
        %v2758 = vunpack.c.h.b16 %v2372
        %v2759 = vunpack.c.l.b16 %v2373
        %v2760 = vunpack.c.h.b16 %v2373
        %v2761 = vunpack.c.l.b16 %v2374
        %v2762 = vunpack.c.h.b16 %v2374
        %v2763 = vunpack.c.l.b16 %v2375
        %v2764 = vunpack.c.h.b16 %v2375
        %v2765 = vunpack.c.l.b16 %v2376
        %v2766 = vunpack.c.h.b16 %v2376
        %v2767 = vunpack.c.l.b16 %v2377
        %v2768 = vunpack.c.h.b16 %v2377
        %v2769 = vunpack.c.l.b16 %v2378
        %v2770 = vunpack.c.h.b16 %v2378
        %v2771 = vunpack.c.l.b16 %v2379
        %v2772 = vunpack.c.h.b16 %v2379
        %v2773 = vunpack.c.l.b16 %v2380
        %v2774 = vunpack.c.h.b16 %v2380
        %v2775 = vpack.c.b16 %v2523, %v2519
        %v2776 = vpack.c.b16 %v2524, %v2520
        %v2777 = vpack.c.b16 %v2525, %v2521
        %v2778 = vpack.c.b16 %v2526, %v2522
        %v2779 = vpack.c.b16 %v2531, %v2527
        %v2780 = vpack.c.b16 %v2532, %v2528
        %v2781 = vpack.c.b16 %v2533, %v2529
        %v2782 = vpack.c.b16 %v2534, %v2530
        %v2783 = vpack.c.b16 %v2539, %v2535
        %v2784 = vpack.c.b16 %v2540, %v2536
        %v2785 = vpack.c.b16 %v2541, %v2537
        %v2786 = vpack.c.b16 %v2542, %v2538
        %v2787 = vpack.c.b16 %v2547, %v2543
        %v2788 = vpack.c.b16 %v2548, %v2544
        %v2789 = vpack.c.b16 %v2549, %v2545
        %v2790 = vpack.c.b16 %v2550, %v2546
        %v2791 = vpack.c.b16 %v2555, %v2551
        %v2792 = vpack.c.b16 %v2556, %v2552
        %v2793 = vpack.c.b16 %v2557, %v2553
        %v2794 = vpack.c.b16 %v2558, %v2554
        %v2795 = vpack.c.b16 %v2563, %v2559
        %v2796 = vpack.c.b16 %v2564, %v2560
        %v2797 = vpack.c.b16 %v2565, %v2561
        %v2798 = vpack.c.b16 %v2566, %v2562
        %v2799 = vpack.c.b16 %v2571, %v2567
        %v2800 = vpack.c.b16 %v2572, %v2568
        %v2801 = vpack.c.b16 %v2573, %v2569
        %v2802 = vpack.c.b16 %v2574, %v2570
        %v2803 = vpack.c.b16 %v2579, %v2575
        %v2804 = vpack.c.b16 %v2580, %v2576
        %v2805 = vpack.c.b16 %v2581, %v2577
        %v2806 = vpack.c.b16 %v2582, %v2578
        %v2807 = vpack.c.b16 %v2587, %v2583
        %v2808 = vpack.c.b16 %v2588, %v2584
        %v2809 = vpack.c.b16 %v2589, %v2585
        %v2810 = vpack.c.b16 %v2590, %v2586
        %v2811 = vpack.c.b16 %v2595, %v2591
        %v2812 = vpack.c.b16 %v2596, %v2592
        %v2813 = vpack.c.b16 %v2597, %v2593
        %v2814 = vpack.c.b16 %v2598, %v2594
        %v2815 = vpack.c.b16 %v2603, %v2599
        %v2816 = vpack.c.b16 %v2604, %v2600
        %v2817 = vpack.c.b16 %v2605, %v2601
        %v2818 = vpack.c.b16 %v2606, %v2602
        %v2819 = vpack.c.b16 %v2611, %v2607
        %v2820 = vpack.c.b16 %v2612, %v2608
        %v2821 = vpack.c.b16 %v2613, %v2609
        %v2822 = vpack.c.b16 %v2614, %v2610
        %v2823 = vpack.c.b16 %v2619, %v2615
        %v2824 = vpack.c.b16 %v2620, %v2616
        %v2825 = vpack.c.b16 %v2621, %v2617
        %v2826 = vpack.c.b16 %v2622, %v2618
        %v2827 = vpack.c.b16 %v2627, %v2623
        %v2828 = vpack.c.b16 %v2628, %v2624
        %v2829 = vpack.c.b16 %v2629, %v2625
        %v2830 = vpack.c.b16 %v2630, %v2626
        %v2831 = vpack.c.b16 %v2635, %v2631
        %v2832 = vpack.c.b16 %v2636, %v2632
        %v2833 = vpack.c.b16 %v2637, %v2633
        %v2834 = vpack.c.b16 %v2638, %v2634
        %v2835 = vpack.c.b16 %v2643, %v2639
        %v2836 = vpack.c.b16 %v2644, %v2640
        %v2837 = vpack.c.b16 %v2645, %v2641
        %v2838 = vpack.c.b16 %v2646, %v2642
        %v2839 = vpack.c.b16 %v2651, %v2647
        %v2840 = vpack.c.b16 %v2652, %v2648
        %v2841 = vpack.c.b16 %v2653, %v2649
        %v2842 = vpack.c.b16 %v2654, %v2650
        %v2843 = vpack.c.b16 %v2659, %v2655
        %v2844 = vpack.c.b16 %v2660, %v2656
        %v2845 = vpack.c.b16 %v2661, %v2657
        %v2846 = vpack.c.b16 %v2662, %v2658
        %v2847 = vpack.c.b16 %v2667, %v2663
        %v2848 = vpack.c.b16 %v2668, %v2664
        %v2849 = vpack.c.b16 %v2669, %v2665
        %v2850 = vpack.c.b16 %v2670, %v2666
        %v2851 = vpack.c.b16 %v2675, %v2671
        %v2852 = vpack.c.b16 %v2676, %v2672
        %v2853 = vpack.c.b16 %v2677, %v2673
        %v2854 = vpack.c.b16 %v2678, %v2674
        %v2855 = vpack.c.b16 %v2683, %v2679
        %v2856 = vpack.c.b16 %v2684, %v2680
        %v2857 = vpack.c.b16 %v2685, %v2681
        %v2858 = vpack.c.b16 %v2686, %v2682
        %v2859 = vpack.c.b16 %v2691, %v2687
        %v2860 = vpack.c.b16 %v2692, %v2688
        %v2861 = vpack.c.b16 %v2693, %v2689
        %v2862 = vpack.c.b16 %v2694, %v2690
        %v2863 = vpack.c.b16 %v2699, %v2695
        %v2864 = vpack.c.b16 %v2700, %v2696
        %v2865 = vpack.c.b16 %v2701, %v2697
        %v2866 = vpack.c.b16 %v2702, %v2698
        %v2867 = vpack.c.b16 %v2707, %v2703
        %v2868 = vpack.c.b16 %v2708, %v2704
        %v2869 = vpack.c.b16 %v2709, %v2705
        %v2870 = vpack.c.b16 %v2710, %v2706
        %v2871 = vpack.c.b16 %v2715, %v2711
        %v2872 = vpack.c.b16 %v2716, %v2712
        %v2873 = vpack.c.b16 %v2717, %v2713
        %v2874 = vpack.c.b16 %v2718, %v2714
        %v2875 = vpack.c.b16 %v2723, %v2719
        %v2876 = vpack.c.b16 %v2724, %v2720
        %v2877 = vpack.c.b16 %v2725, %v2721
        %v2878 = vpack.c.b16 %v2726, %v2722
        %v2879 = vpack.c.b16 %v2731, %v2727
        %v2880 = vpack.c.b16 %v2732, %v2728
        %v2881 = vpack.c.b16 %v2733, %v2729
        %v2882 = vpack.c.b16 %v2734, %v2730
        %v2883 = vpack.c.b16 %v2739, %v2735
        %v2884 = vpack.c.b16 %v2740, %v2736
        %v2885 = vpack.c.b16 %v2741, %v2737
        %v2886 = vpack.c.b16 %v2742, %v2738
        %v2887 = vpack.c.b16 %v2747, %v2743
        %v2888 = vpack.c.b16 %v2748, %v2744
        %v2889 = vpack.c.b16 %v2749, %v2745
        %v2890 = vpack.c.b16 %v2750, %v2746
        %v2891 = vpack.c.b16 %v2755, %v2751
        %v2892 = vpack.c.b16 %v2756, %v2752
        %v2893 = vpack.c.b16 %v2757, %v2753
        %v2894 = vpack.c.b16 %v2758, %v2754
        %v2895 = vpack.c.b16 %v2763, %v2759
        %v2896 = vpack.c.b16 %v2764, %v2760
        %v2897 = vpack.c.b16 %v2765, %v2761
        %v2898 = vpack.c.b16 %v2766, %v2762
        %v2899 = vpack.c.b16 %v2771, %v2767
        %v2900 = vpack.c.b16 %v2772, %v2768
        %v2901 = vpack.c.b16 %v2773, %v2769
        %v2902 = vpack.c.b16 %v2774, %v2770
        %3031 = vmatpush.bf16.msra.mxu0 %v2803
        %3032 = vmatpush.bf16.msra.mxu0 %v2799
        %3033 = vmatpush.bf16.msra.mxu0 %v2795
        %3034 = vmatpush.bf16.msra.mxu0 %v2791
        %3035 = vmatpush.bf16.msra.mxu0 %v2787
        %3036 = vmatpush.bf16.msra.mxu0 %v2783
        %3037 = vmatpush.bf16.msra.mxu0 %v2779
        %3038 = vmatpush.bf16.msra.mxu0 %v2775
        %3039 = vmatmul.bf16.gmra.mxu0 %v2249
        %v3040 = vpop.f32.mrf.mxu0
        %v3041 = vadd.f32 %v2383, %v3040
        %v3042 = vpop.f32.mrf.mxu0
        %v3043 = vadd.f32 %v2383, %v3042
        %3044 = vdwg.mxu0
        %3045 = vmatpush.bf16.msra.mxu0 %v2835
        %3046 = vmatpush.bf16.msra.mxu0 %v2831
        %3047 = vmatpush.bf16.msra.mxu0 %v2827
        %3048 = vmatpush.bf16.msra.mxu0 %v2823
        %3049 = vmatpush.bf16.msra.mxu0 %v2819
        %3050 = vmatpush.bf16.msra.mxu0 %v2815
        %3051 = vmatpush.bf16.msra.mxu0 %v2811
        %3052 = vmatpush.bf16.msra.mxu0 %v2807
        %3053 = vmatmul.bf16.gmra.mxu0 %v2250
        %v3054 = vpop.f32.mrf.mxu0
        %v3055 = vadd.f32 %v3041, %v3054
        %v3056 = vpop.f32.mrf.mxu0
        %v3057 = vadd.f32 %v3043, %v3056
        %3058 = vdwg.mxu0
        %3059 = vmatpush.bf16.msra.mxu0 %v2867
        %3060 = vmatpush.bf16.msra.mxu0 %v2863
        %3061 = vmatpush.bf16.msra.mxu0 %v2859
        %3062 = vmatpush.bf16.msra.mxu0 %v2855
        %3063 = vmatpush.bf16.msra.mxu0 %v2851
        %3064 = vmatpush.bf16.msra.mxu0 %v2847
        %3065 = vmatpush.bf16.msra.mxu0 %v2843
        %3066 = vmatpush.bf16.msra.mxu0 %v2839
        %3067 = vmatmul.bf16.gmra.mxu0 %v2251
        %v3068 = vpop.f32.mrf.mxu0
        %v3069 = vadd.f32 %v3055, %v3068
        %v3070 = vpop.f32.mrf.mxu0
        %v3071 = vadd.f32 %v3057, %v3070
        %3072 = vdwg.mxu0
        %3073 = vmatpush.bf16.msra.mxu0 %v2899
        %3074 = vmatpush.bf16.msra.mxu0 %v2895
        %3075 = vmatpush.bf16.msra.mxu0 %v2891
        %3076 = vmatpush.bf16.msra.mxu0 %v2887
        %3077 = vmatpush.bf16.msra.mxu0 %v2883
        %3078 = vmatpush.bf16.msra.mxu0 %v2879
        %3079 = vmatpush.bf16.msra.mxu0 %v2875
        %3080 = vmatpush.bf16.msra.mxu0 %v2871
        %3081 = vmatmul.bf16.gmra.mxu0 %v2252
        %v3082 = vpop.f32.mrf.mxu0
        %v3083 = vadd.f32 %v3069, %v3082
        %v3084 = vpop.f32.mrf.mxu0
        %v3085 = vadd.f32 %v3071, %v3084
        %3086 = vdwg.mxu0
        %3087 = vmatpush.bf16.msra.mxu0 %v2804
        %3088 = vmatpush.bf16.msra.mxu0 %v2800
        %3089 = vmatpush.bf16.msra.mxu0 %v2796
        %3090 = vmatpush.bf16.msra.mxu0 %v2792
        %3091 = vmatpush.bf16.msra.mxu0 %v2788
        %3092 = vmatpush.bf16.msra.mxu0 %v2784
        %3093 = vmatpush.bf16.msra.mxu0 %v2780
        %3094 = vmatpush.bf16.msra.mxu0 %v2776
        %3095 = vmatmul.bf16.gmra.mxu0 %v2249
        %v3096 = vpop.f32.mrf.mxu0
        %v3097 = vadd.f32 %v2384, %v3096
        %v3098 = vpop.f32.mrf.mxu0
        %v3099 = vadd.f32 %v2384, %v3098
        %3100 = vdwg.mxu0
        %3101 = vmatpush.bf16.msra.mxu0 %v2836
        %3102 = vmatpush.bf16.msra.mxu0 %v2832
        %3103 = vmatpush.bf16.msra.mxu0 %v2828
        %3104 = vmatpush.bf16.msra.mxu0 %v2824
        %3105 = vmatpush.bf16.msra.mxu0 %v2820
        %3106 = vmatpush.bf16.msra.mxu0 %v2816
        %3107 = vmatpush.bf16.msra.mxu0 %v2812
        %3108 = vmatpush.bf16.msra.mxu0 %v2808
        %3109 = vmatmul.bf16.gmra.mxu0 %v2250
        %v3110 = vpop.f32.mrf.mxu0
        %v3111 = vadd.f32 %v3097, %v3110
        %v3112 = vpop.f32.mrf.mxu0
        %v3113 = vadd.f32 %v3099, %v3112
        %3114 = vdwg.mxu0
        %3115 = vmatpush.bf16.msra.mxu0 %v2868
        %3116 = vmatpush.bf16.msra.mxu0 %v2864
        %3117 = vmatpush.bf16.msra.mxu0 %v2860
        %3118 = vmatpush.bf16.msra.mxu0 %v2856
        %3119 = vmatpush.bf16.msra.mxu0 %v2852
        %3120 = vmatpush.bf16.msra.mxu0 %v2848
        %3121 = vmatpush.bf16.msra.mxu0 %v2844
        %3122 = vmatpush.bf16.msra.mxu0 %v2840
        %3123 = vmatmul.bf16.gmra.mxu0 %v2251
        %v3124 = vpop.f32.mrf.mxu0
        %v3125 = vadd.f32 %v3111, %v3124
        %v3126 = vpop.f32.mrf.mxu0
        %v3127 = vadd.f32 %v3113, %v3126
        %3128 = vdwg.mxu0
        %3129 = vmatpush.bf16.msra.mxu0 %v2900
        %3130 = vmatpush.bf16.msra.mxu0 %v2896
        %3131 = vmatpush.bf16.msra.mxu0 %v2892
        %3132 = vmatpush.bf16.msra.mxu0 %v2888
        %3133 = vmatpush.bf16.msra.mxu0 %v2884
        %3134 = vmatpush.bf16.msra.mxu0 %v2880
        %3135 = vmatpush.bf16.msra.mxu0 %v2876
        %3136 = vmatpush.bf16.msra.mxu0 %v2872
        %3137 = vmatmul.bf16.gmra.mxu0 %v2252
        %v3138 = vpop.f32.mrf.mxu0
        %v3139 = vadd.f32 %v3125, %v3138
        %v3140 = vpop.f32.mrf.mxu0
        %v3141 = vadd.f32 %v3127, %v3140
        %3142 = vdwg.mxu0
        %3143 = vmatpush.bf16.msra.mxu0 %v2805
        %3144 = vmatpush.bf16.msra.mxu0 %v2801
        %3145 = vmatpush.bf16.msra.mxu0 %v2797
        %3146 = vmatpush.bf16.msra.mxu0 %v2793
        %3147 = vmatpush.bf16.msra.mxu0 %v2789
        %3148 = vmatpush.bf16.msra.mxu0 %v2785
        %3149 = vmatpush.bf16.msra.mxu0 %v2781
        %3150 = vmatpush.bf16.msra.mxu0 %v2777
        %3151 = vmatmul.bf16.gmra.mxu0 %v2249
        %v3152 = vpop.f32.mrf.mxu0
        %v3153 = vadd.f32 %v2385, %v3152
        %v3154 = vpop.f32.mrf.mxu0
        %v3155 = vadd.f32 %v2385, %v3154
        %3156 = vdwg.mxu0
        %3157 = vmatpush.bf16.msra.mxu0 %v2837
        %3158 = vmatpush.bf16.msra.mxu0 %v2833
        %3159 = vmatpush.bf16.msra.mxu0 %v2829
        %3160 = vmatpush.bf16.msra.mxu0 %v2825
        %3161 = vmatpush.bf16.msra.mxu0 %v2821
        %3162 = vmatpush.bf16.msra.mxu0 %v2817
        %3163 = vmatpush.bf16.msra.mxu0 %v2813
        %3164 = vmatpush.bf16.msra.mxu0 %v2809
        %3165 = vmatmul.bf16.gmra.mxu0 %v2250
        %v3166 = vpop.f32.mrf.mxu0
        %v3167 = vadd.f32 %v3153, %v3166
        %v3168 = vpop.f32.mrf.mxu0
        %v3169 = vadd.f32 %v3155, %v3168
        %3170 = vdwg.mxu0
        %3171 = vmatpush.bf16.msra.mxu0 %v2869
        %3172 = vmatpush.bf16.msra.mxu0 %v2865
        %3173 = vmatpush.bf16.msra.mxu0 %v2861
        %3174 = vmatpush.bf16.msra.mxu0 %v2857
        %3175 = vmatpush.bf16.msra.mxu0 %v2853
        %3176 = vmatpush.bf16.msra.mxu0 %v2849
        %3177 = vmatpush.bf16.msra.mxu0 %v2845
        %3178 = vmatpush.bf16.msra.mxu0 %v2841
        %3179 = vmatmul.bf16.gmra.mxu0 %v2251
        %v3180 = vpop.f32.mrf.mxu0
        %v3181 = vadd.f32 %v3167, %v3180
        %v3182 = vpop.f32.mrf.mxu0
        %v3183 = vadd.f32 %v3169, %v3182
        %3184 = vdwg.mxu0
        %3185 = vmatpush.bf16.msra.mxu0 %v2901
        %3186 = vmatpush.bf16.msra.mxu0 %v2897
        %3187 = vmatpush.bf16.msra.mxu0 %v2893
        %3188 = vmatpush.bf16.msra.mxu0 %v2889
        %3189 = vmatpush.bf16.msra.mxu0 %v2885
        %3190 = vmatpush.bf16.msra.mxu0 %v2881
        %3191 = vmatpush.bf16.msra.mxu0 %v2877
        %3192 = vmatpush.bf16.msra.mxu0 %v2873
        %3193 = vmatmul.bf16.gmra.mxu0 %v2252
        %v3194 = vpop.f32.mrf.mxu0
        %v3195 = vadd.f32 %v3181, %v3194
        %v3196 = vpop.f32.mrf.mxu0
        %v3197 = vadd.f32 %v3183, %v3196
        %3198 = vdwg.mxu0
        %3199 = vmatpush.bf16.msra.mxu0 %v2806
        %3200 = vmatpush.bf16.msra.mxu0 %v2802
        %3201 = vmatpush.bf16.msra.mxu0 %v2798
        %3202 = vmatpush.bf16.msra.mxu0 %v2794
        %3203 = vmatpush.bf16.msra.mxu0 %v2790
        %3204 = vmatpush.bf16.msra.mxu0 %v2786
        %3205 = vmatpush.bf16.msra.mxu0 %v2782
        %3206 = vmatpush.bf16.msra.mxu0 %v2778
        %3207 = vmatmul.bf16.gmra.mxu0 %v2249
        %v3208 = vpop.f32.mrf.mxu0
        %v3209 = vadd.f32 %v2386, %v3208
        %v3210 = vpop.f32.mrf.mxu0
        %v3211 = vadd.f32 %v2386, %v3210
        %3212 = vdwg.mxu0
        %3213 = vmatpush.bf16.msra.mxu0 %v2838
        %3214 = vmatpush.bf16.msra.mxu0 %v2834
        %3215 = vmatpush.bf16.msra.mxu0 %v2830
        %3216 = vmatpush.bf16.msra.mxu0 %v2826
        %3217 = vmatpush.bf16.msra.mxu0 %v2822
        %3218 = vmatpush.bf16.msra.mxu0 %v2818
        %3219 = vmatpush.bf16.msra.mxu0 %v2814
        %3220 = vmatpush.bf16.msra.mxu0 %v2810
        %3221 = vmatmul.bf16.gmra.mxu0 %v2250
        %v3222 = vpop.f32.mrf.mxu0
        %v3223 = vadd.f32 %v3209, %v3222
        %v3224 = vpop.f32.mrf.mxu0
        %v3225 = vadd.f32 %v3211, %v3224
        %3226 = vdwg.mxu0
        %3227 = vmatpush.bf16.msra.mxu0 %v2870
        %3228 = vmatpush.bf16.msra.mxu0 %v2866
        %3229 = vmatpush.bf16.msra.mxu0 %v2862
        %3230 = vmatpush.bf16.msra.mxu0 %v2858
        %3231 = vmatpush.bf16.msra.mxu0 %v2854
        %3232 = vmatpush.bf16.msra.mxu0 %v2850
        %3233 = vmatpush.bf16.msra.mxu0 %v2846
        %3234 = vmatpush.bf16.msra.mxu0 %v2842
        %3235 = vmatmul.bf16.gmra.mxu0 %v2251
        %v3236 = vpop.f32.mrf.mxu0
        %v3237 = vadd.f32 %v3223, %v3236
        %v3238 = vpop.f32.mrf.mxu0
        %v3239 = vadd.f32 %v3225, %v3238
        %3240 = vdwg.mxu0
        %3241 = vmatpush.bf16.msra.mxu0 %v2902
        %3242 = vmatpush.bf16.msra.mxu0 %v2898
        %3243 = vmatpush.bf16.msra.mxu0 %v2894
        %3244 = vmatpush.bf16.msra.mxu0 %v2890
        %3245 = vmatpush.bf16.msra.mxu0 %v2886
        %3246 = vmatpush.bf16.msra.mxu0 %v2882
        %3247 = vmatpush.bf16.msra.mxu0 %v2878
        %3248 = vmatpush.bf16.msra.mxu0 %v2874
        %3249 = vmatmul.bf16.gmra.mxu0 %v2252
        %v3250 = vpop.f32.mrf.mxu0
        %v3251 = vadd.f32 %v3237, %v3250
        %v3252 = vpop.f32.mrf.mxu0
        %v3253 = vadd.f32 %v3239, %v3252
        %3254 = vdwg.mxu0
        %v3255 = vmax.f32 %v3083, 0.0
        %v3256 = vmax.f32 %v3139, 0.0
        %v3257 = vmax.f32 %v3195, 0.0
        %v3258 = vmax.f32 %v3251, 0.0
        %v3259 = vmax.f32 %v3085, 0.0
        %v3260 = vmax.f32 %v3141, 0.0
        %v3261 = vmax.f32 %v3197, 0.0
        %v3262 = vmax.f32 %v3253, 0.0
        %v3263 = vpack.c.bf16 %v3259, %v3255
        %v3264 = vpack.c.bf16 %v3260, %v3256
        %v3265 = vpack.c.bf16 %v3261, %v3257
        %v3266 = vpack.c.bf16 %v3262, %v3258
        %v3267 = vld [vmem:[#allocation11] sm:$0xff]
        %v3268 = vld [vmem:[#allocation11 + $0x8] sm:$0xff]
        %v3269 = vld [vmem:[#allocation11 + $0x10] sm:$0xff]
        %v3270 = vld [vmem:[#allocation11 + $0x18] sm:$0xff]
        %v3271 = vld [vmem:[#allocation11 + $0x20] sm:$0xff]
        %v3272 = vld [vmem:[#allocation11 + $0x28] sm:$0xff]
        %v3273 = vld [vmem:[#allocation11 + $0x30] sm:$0xff]
        %v3274 = vld [vmem:[#allocation11 + $0x38] sm:$0xff]
        %v3275 = vld [vmem:[#allocation11 + $0x40] sm:$0xff]
        %v3276 = vld [vmem:[#allocation11 + $0x48] sm:$0xff]
        %v3277 = vld [vmem:[#allocation11 + $0x50] sm:$0xff]
        %v3278 = vld [vmem:[#allocation11 + $0x58] sm:$0xff]
        %v3279 = vld [vmem:[#allocation11 + $0x60] sm:$0xff]
        %v3280 = vld [vmem:[#allocation11 + $0x68] sm:$0xff]
        %v3281 = vld [vmem:[#allocation11 + $0x70] sm:$0xff]
        %v3282 = vld [vmem:[#allocation11 + $0x78] sm:$0xff]
        %v3283 = vld [vmem:[#allocation11 + $0x80] sm:$0xff]
        %v3284 = vld [vmem:[#allocation11 + $0x88] sm:$0xff]
        %v3285 = vld [vmem:[#allocation11 + $0x90] sm:$0xff]
        %v3286 = vld [vmem:[#allocation11 + $0x98] sm:$0xff]
        %v3287 = vld [vmem:[#allocation11 + $0xa0] sm:$0xff]
        %v3288 = vld [vmem:[#allocation11 + $0xa8] sm:$0xff]
        %v3289 = vld [vmem:[#allocation11 + $0xb0] sm:$0xff]
        %v3290 = vld [vmem:[#allocation11 + $0xb8] sm:$0xff]
        %v3291 = vld [vmem:[#allocation11 + $0xc0] sm:$0xff]
        %v3292 = vld [vmem:[#allocation11 + $0xc8] sm:$0xff]
        %v3293 = vld [vmem:[#allocation11 + $0xd0] sm:$0xff]
        %v3294 = vld [vmem:[#allocation11 + $0xd8] sm:$0xff]
        %v3295 = vld [vmem:[#allocation11 + $0xe0] sm:$0xff]
        %v3296 = vld [vmem:[#allocation11 + $0xe8] sm:$0xff]
        %v3297 = vld [vmem:[#allocation11 + $0xf0] sm:$0xff]
        %v3298 = vld [vmem:[#allocation11 + $0xf8] sm:$0xff]
        %v3299 = vld [vmem:[#allocation11 + $0x100] sm:$0xff]
        %v3300 = vld [vmem:[#allocation11 + $0x108] sm:$0xff]
        %v3301 = vld [vmem:[#allocation11 + $0x110] sm:$0xff]
        %v3302 = vld [vmem:[#allocation11 + $0x118] sm:$0xff]
        %v3303 = vld [vmem:[#allocation11 + $0x120] sm:$0xff]
        %v3304 = vld [vmem:[#allocation11 + $0x128] sm:$0xff]
        %v3305 = vld [vmem:[#allocation11 + $0x130] sm:$0xff]
        %v3306 = vld [vmem:[#allocation11 + $0x138] sm:$0xff]
        %v3307 = vld [vmem:[#allocation11 + $0x140] sm:$0xff]
        %v3308 = vld [vmem:[#allocation11 + $0x148] sm:$0xff]
        %v3309 = vld [vmem:[#allocation11 + $0x150] sm:$0xff]
        %v3310 = vld [vmem:[#allocation11 + $0x158] sm:$0xff]
        %v3311 = vld [vmem:[#allocation11 + $0x160] sm:$0xff]
        %v3312 = vld [vmem:[#allocation11 + $0x168] sm:$0xff]
        %v3313 = vld [vmem:[#allocation11 + $0x170] sm:$0xff]
        %v3314 = vld [vmem:[#allocation11 + $0x178] sm:$0xff]
        %v3315 = vld [vmem:[#allocation11 + $0x180] sm:$0xff]
        %v3316 = vld [vmem:[#allocation11 + $0x188] sm:$0xff]
        %v3317 = vld [vmem:[#allocation11 + $0x190] sm:$0xff]
        %v3318 = vld [vmem:[#allocation11 + $0x198] sm:$0xff]
        %v3319 = vld [vmem:[#allocation11 + $0x1a0] sm:$0xff]
        %v3320 = vld [vmem:[#allocation11 + $0x1a8] sm:$0xff]
        %v3321 = vld [vmem:[#allocation11 + $0x1b0] sm:$0xff]
        %v3322 = vld [vmem:[#allocation11 + $0x1b8] sm:$0xff]
        %v3323 = vld [vmem:[#allocation11 + $0x1c0] sm:$0xff]
        %v3324 = vld [vmem:[#allocation11 + $0x1c8] sm:$0xff]
        %v3325 = vld [vmem:[#allocation11 + $0x1d0] sm:$0xff]
        %v3326 = vld [vmem:[#allocation11 + $0x1d8] sm:$0xff]
        %v3327 = vld [vmem:[#allocation11 + $0x1e0] sm:$0xff]
        %v3328 = vld [vmem:[#allocation11 + $0x1e8] sm:$0xff]
        %v3329 = vld [vmem:[#allocation11 + $0x1f0] sm:$0xff]
        %v3330 = vld [vmem:[#allocation11 + $0x1f8] sm:$0xff]
        %v3331 = vld [vmem:[#allocation11 + $0x200] sm:$0xff]
        %v3332 = vld [vmem:[#allocation11 + $0x208] sm:$0xff]
        %v3333 = vld [vmem:[#allocation11 + $0x210] sm:$0xff]
        %v3334 = vld [vmem:[#allocation11 + $0x218] sm:$0xff]
        %v3335 = vld [vmem:[#allocation11 + $0x220] sm:$0xff]
        %v3336 = vld [vmem:[#allocation11 + $0x228] sm:$0xff]
        %v3337 = vld [vmem:[#allocation11 + $0x230] sm:$0xff]
        %v3338 = vld [vmem:[#allocation11 + $0x238] sm:$0xff]
        %v3339 = vld [vmem:[#allocation11 + $0x240] sm:$0xff]
        %v3340 = vld [vmem:[#allocation11 + $0x248] sm:$0xff]
        %v3341 = vld [vmem:[#allocation11 + $0x250] sm:$0xff]
        %v3342 = vld [vmem:[#allocation11 + $0x258] sm:$0xff]
        %v3343 = vld [vmem:[#allocation11 + $0x260] sm:$0xff]
        %v3344 = vld [vmem:[#allocation11 + $0x268] sm:$0xff]
        %v3345 = vld [vmem:[#allocation11 + $0x270] sm:$0xff]
        %v3346 = vld [vmem:[#allocation11 + $0x278] sm:$0xff]
        %v3347 = vld [vmem:[#allocation11 + $0x280] sm:$0xff]
        %v3348 = vld [vmem:[#allocation11 + $0x288] sm:$0xff]
        %v3349 = vld [vmem:[#allocation11 + $0x290] sm:$0xff]
        %v3350 = vld [vmem:[#allocation11 + $0x298] sm:$0xff]
        %v3351 = vld [vmem:[#allocation11 + $0x2a0] sm:$0xff]
        %v3352 = vld [vmem:[#allocation11 + $0x2a8] sm:$0xff]
        %v3353 = vld [vmem:[#allocation11 + $0x2b0] sm:$0xff]
        %v3354 = vld [vmem:[#allocation11 + $0x2b8] sm:$0xff]
        %v3355 = vld [vmem:[#allocation11 + $0x2c0] sm:$0xff]
        %v3356 = vld [vmem:[#allocation11 + $0x2c8] sm:$0xff]
        %v3357 = vld [vmem:[#allocation11 + $0x2d0] sm:$0xff]
        %v3358 = vld [vmem:[#allocation11 + $0x2d8] sm:$0xff]
        %v3359 = vld [vmem:[#allocation11 + $0x2e0] sm:$0xff]
        %v3360 = vld [vmem:[#allocation11 + $0x2e8] sm:$0xff]
        %v3361 = vld [vmem:[#allocation11 + $0x2f0] sm:$0xff]
        %v3362 = vld [vmem:[#allocation11 + $0x2f8] sm:$0xff]
        %v3363 = vld [vmem:[#allocation11 + $0x300] sm:$0xff]
        %v3364 = vld [vmem:[#allocation11 + $0x308] sm:$0xff]
        %v3365 = vld [vmem:[#allocation11 + $0x310] sm:$0xff]
        %v3366 = vld [vmem:[#allocation11 + $0x318] sm:$0xff]
        %v3367 = vld [vmem:[#allocation11 + $0x320] sm:$0xff]
        %v3368 = vld [vmem:[#allocation11 + $0x328] sm:$0xff]
        %v3369 = vld [vmem:[#allocation11 + $0x330] sm:$0xff]
        %v3370 = vld [vmem:[#allocation11 + $0x338] sm:$0xff]
        %v3371 = vld [vmem:[#allocation11 + $0x340] sm:$0xff]
        %v3372 = vld [vmem:[#allocation11 + $0x348] sm:$0xff]
        %v3373 = vld [vmem:[#allocation11 + $0x350] sm:$0xff]
        %v3374 = vld [vmem:[#allocation11 + $0x358] sm:$0xff]
        %v3375 = vld [vmem:[#allocation11 + $0x360] sm:$0xff]
        %v3376 = vld [vmem:[#allocation11 + $0x368] sm:$0xff]
        %v3377 = vld [vmem:[#allocation11 + $0x370] sm:$0xff]
        %v3378 = vld [vmem:[#allocation11 + $0x378] sm:$0xff]
        %v3379 = vld [vmem:[#allocation11 + $0x380] sm:$0xff]
        %v3380 = vld [vmem:[#allocation11 + $0x388] sm:$0xff]
        %v3381 = vld [vmem:[#allocation11 + $0x390] sm:$0xff]
        %v3382 = vld [vmem:[#allocation11 + $0x398] sm:$0xff]
        %v3383 = vld [vmem:[#allocation11 + $0x3a0] sm:$0xff]
        %v3384 = vld [vmem:[#allocation11 + $0x3a8] sm:$0xff]
        %v3385 = vld [vmem:[#allocation11 + $0x3b0] sm:$0xff]
        %v3386 = vld [vmem:[#allocation11 + $0x3b8] sm:$0xff]
        %v3387 = vld [vmem:[#allocation11 + $0x3c0] sm:$0xff]
        %v3388 = vld [vmem:[#allocation11 + $0x3c8] sm:$0xff]
        %v3389 = vld [vmem:[#allocation11 + $0x3d0] sm:$0xff]
        %v3390 = vld [vmem:[#allocation11 + $0x3d8] sm:$0xff]
        %v3391 = vld [vmem:[#allocation11 + $0x3e0] sm:$0xff]
        %v3392 = vld [vmem:[#allocation11 + $0x3e8] sm:$0xff]
        %v3393 = vld [vmem:[#allocation11 + $0x3f0] sm:$0xff]
        %v3394 = vld [vmem:[#allocation11 + $0x3f8] sm:$0xff]
        %v3395 = vld [vmem:[%s6] sm:$0xf]
        %v3397 = vperm.slane %v3395, 0
        %v3398 = vperm.slane %v3395, 1
        %v3399 = vperm.slane %v3395, 2
        %v3400 = vperm.slane %v3395, 3
        %v3533 = vunpack.c.l.b16 %v3267
        %v3534 = vunpack.c.h.b16 %v3267
        %v3535 = vunpack.c.l.b16 %v3268
        %v3536 = vunpack.c.h.b16 %v3268
        %v3537 = vunpack.c.l.b16 %v3269
        %v3538 = vunpack.c.h.b16 %v3269
        %v3539 = vunpack.c.l.b16 %v3270
        %v3540 = vunpack.c.h.b16 %v3270
        %v3541 = vunpack.c.l.b16 %v3271
        %v3542 = vunpack.c.h.b16 %v3271
        %v3543 = vunpack.c.l.b16 %v3272
        %v3544 = vunpack.c.h.b16 %v3272
        %v3545 = vunpack.c.l.b16 %v3273
        %v3546 = vunpack.c.h.b16 %v3273
        %v3547 = vunpack.c.l.b16 %v3274
        %v3548 = vunpack.c.h.b16 %v3274
        %v3549 = vunpack.c.l.b16 %v3275
        %v3550 = vunpack.c.h.b16 %v3275
        %v3551 = vunpack.c.l.b16 %v3276
        %v3552 = vunpack.c.h.b16 %v3276
        %v3553 = vunpack.c.l.b16 %v3277
        %v3554 = vunpack.c.h.b16 %v3277
        %v3555 = vunpack.c.l.b16 %v3278
        %v3556 = vunpack.c.h.b16 %v3278
        %v3557 = vunpack.c.l.b16 %v3279
        %v3558 = vunpack.c.h.b16 %v3279
        %v3559 = vunpack.c.l.b16 %v3280
        %v3560 = vunpack.c.h.b16 %v3280
        %v3561 = vunpack.c.l.b16 %v3281
        %v3562 = vunpack.c.h.b16 %v3281
        %v3563 = vunpack.c.l.b16 %v3282
        %v3564 = vunpack.c.h.b16 %v3282
        %v3565 = vunpack.c.l.b16 %v3283
        %v3566 = vunpack.c.h.b16 %v3283
        %v3567 = vunpack.c.l.b16 %v3284
        %v3568 = vunpack.c.h.b16 %v3284
        %v3569 = vunpack.c.l.b16 %v3285
        %v3570 = vunpack.c.h.b16 %v3285
        %v3571 = vunpack.c.l.b16 %v3286
        %v3572 = vunpack.c.h.b16 %v3286
        %v3573 = vunpack.c.l.b16 %v3287
        %v3574 = vunpack.c.h.b16 %v3287
        %v3575 = vunpack.c.l.b16 %v3288
        %v3576 = vunpack.c.h.b16 %v3288
        %v3577 = vunpack.c.l.b16 %v3289
        %v3578 = vunpack.c.h.b16 %v3289
        %v3579 = vunpack.c.l.b16 %v3290
        %v3580 = vunpack.c.h.b16 %v3290
        %v3581 = vunpack.c.l.b16 %v3291
        %v3582 = vunpack.c.h.b16 %v3291
        %v3583 = vunpack.c.l.b16 %v3292
        %v3584 = vunpack.c.h.b16 %v3292
        %v3585 = vunpack.c.l.b16 %v3293
        %v3586 = vunpack.c.h.b16 %v3293
        %v3587 = vunpack.c.l.b16 %v3294
        %v3588 = vunpack.c.h.b16 %v3294
        %v3589 = vunpack.c.l.b16 %v3295
        %v3590 = vunpack.c.h.b16 %v3295
        %v3591 = vunpack.c.l.b16 %v3296
        %v3592 = vunpack.c.h.b16 %v3296
        %v3593 = vunpack.c.l.b16 %v3297
        %v3594 = vunpack.c.h.b16 %v3297
        %v3595 = vunpack.c.l.b16 %v3298
        %v3596 = vunpack.c.h.b16 %v3298
        %v3597 = vunpack.c.l.b16 %v3299
        %v3598 = vunpack.c.h.b16 %v3299
        %v3599 = vunpack.c.l.b16 %v3300
        %v3600 = vunpack.c.h.b16 %v3300
        %v3601 = vunpack.c.l.b16 %v3301
        %v3602 = vunpack.c.h.b16 %v3301
        %v3603 = vunpack.c.l.b16 %v3302
        %v3604 = vunpack.c.h.b16 %v3302
        %v3605 = vunpack.c.l.b16 %v3303
        %v3606 = vunpack.c.h.b16 %v3303
        %v3607 = vunpack.c.l.b16 %v3304
        %v3608 = vunpack.c.h.b16 %v3304
        %v3609 = vunpack.c.l.b16 %v3305
        %v3610 = vunpack.c.h.b16 %v3305
        %v3611 = vunpack.c.l.b16 %v3306
        %v3612 = vunpack.c.h.b16 %v3306
        %v3613 = vunpack.c.l.b16 %v3307
        %v3614 = vunpack.c.h.b16 %v3307
        %v3615 = vunpack.c.l.b16 %v3308
        %v3616 = vunpack.c.h.b16 %v3308
        %v3617 = vunpack.c.l.b16 %v3309
        %v3618 = vunpack.c.h.b16 %v3309
        %v3619 = vunpack.c.l.b16 %v3310
        %v3620 = vunpack.c.h.b16 %v3310
        %v3621 = vunpack.c.l.b16 %v3311
        %v3622 = vunpack.c.h.b16 %v3311
        %v3623 = vunpack.c.l.b16 %v3312
        %v3624 = vunpack.c.h.b16 %v3312
        %v3625 = vunpack.c.l.b16 %v3313
        %v3626 = vunpack.c.h.b16 %v3313
        %v3627 = vunpack.c.l.b16 %v3314
        %v3628 = vunpack.c.h.b16 %v3314
        %v3629 = vunpack.c.l.b16 %v3315
        %v3630 = vunpack.c.h.b16 %v3315
        %v3631 = vunpack.c.l.b16 %v3316
        %v3632 = vunpack.c.h.b16 %v3316
        %v3633 = vunpack.c.l.b16 %v3317
        %v3634 = vunpack.c.h.b16 %v3317
        %v3635 = vunpack.c.l.b16 %v3318
        %v3636 = vunpack.c.h.b16 %v3318
        %v3637 = vunpack.c.l.b16 %v3319
        %v3638 = vunpack.c.h.b16 %v3319
        %v3639 = vunpack.c.l.b16 %v3320
        %v3640 = vunpack.c.h.b16 %v3320
        %v3641 = vunpack.c.l.b16 %v3321
        %v3642 = vunpack.c.h.b16 %v3321
        %v3643 = vunpack.c.l.b16 %v3322
        %v3644 = vunpack.c.h.b16 %v3322
        %v3645 = vunpack.c.l.b16 %v3323
        %v3646 = vunpack.c.h.b16 %v3323
        %v3647 = vunpack.c.l.b16 %v3324
        %v3648 = vunpack.c.h.b16 %v3324
        %v3649 = vunpack.c.l.b16 %v3325
        %v3650 = vunpack.c.h.b16 %v3325
        %v3651 = vunpack.c.l.b16 %v3326
        %v3652 = vunpack.c.h.b16 %v3326
        %v3653 = vunpack.c.l.b16 %v3327
        %v3654 = vunpack.c.h.b16 %v3327
        %v3655 = vunpack.c.l.b16 %v3328
        %v3656 = vunpack.c.h.b16 %v3328
        %v3657 = vunpack.c.l.b16 %v3329
        %v3658 = vunpack.c.h.b16 %v3329
        %v3659 = vunpack.c.l.b16 %v3330
        %v3660 = vunpack.c.h.b16 %v3330
        %v3661 = vunpack.c.l.b16 %v3331
        %v3662 = vunpack.c.h.b16 %v3331
        %v3663 = vunpack.c.l.b16 %v3332
        %v3664 = vunpack.c.h.b16 %v3332
        %v3665 = vunpack.c.l.b16 %v3333
        %v3666 = vunpack.c.h.b16 %v3333
        %v3667 = vunpack.c.l.b16 %v3334
        %v3668 = vunpack.c.h.b16 %v3334
        %v3669 = vunpack.c.l.b16 %v3335
        %v3670 = vunpack.c.h.b16 %v3335
        %v3671 = vunpack.c.l.b16 %v3336
        %v3672 = vunpack.c.h.b16 %v3336
        %v3673 = vunpack.c.l.b16 %v3337
        %v3674 = vunpack.c.h.b16 %v3337
        %v3675 = vunpack.c.l.b16 %v3338
        %v3676 = vunpack.c.h.b16 %v3338
        %v3677 = vunpack.c.l.b16 %v3339
        %v3678 = vunpack.c.h.b16 %v3339
        %v3679 = vunpack.c.l.b16 %v3340
        %v3680 = vunpack.c.h.b16 %v3340
        %v3681 = vunpack.c.l.b16 %v3341
        %v3682 = vunpack.c.h.b16 %v3341
        %v3683 = vunpack.c.l.b16 %v3342
        %v3684 = vunpack.c.h.b16 %v3342
        %v3685 = vunpack.c.l.b16 %v3343
        %v3686 = vunpack.c.h.b16 %v3343
        %v3687 = vunpack.c.l.b16 %v3344
        %v3688 = vunpack.c.h.b16 %v3344
        %v3689 = vunpack.c.l.b16 %v3345
        %v3690 = vunpack.c.h.b16 %v3345
        %v3691 = vunpack.c.l.b16 %v3346
        %v3692 = vunpack.c.h.b16 %v3346
        %v3693 = vunpack.c.l.b16 %v3347
        %v3694 = vunpack.c.h.b16 %v3347
        %v3695 = vunpack.c.l.b16 %v3348
        %v3696 = vunpack.c.h.b16 %v3348
        %v3697 = vunpack.c.l.b16 %v3349
        %v3698 = vunpack.c.h.b16 %v3349
        %v3699 = vunpack.c.l.b16 %v3350
        %v3700 = vunpack.c.h.b16 %v3350
        %v3701 = vunpack.c.l.b16 %v3351
        %v3702 = vunpack.c.h.b16 %v3351
        %v3703 = vunpack.c.l.b16 %v3352
        %v3704 = vunpack.c.h.b16 %v3352
        %v3705 = vunpack.c.l.b16 %v3353
        %v3706 = vunpack.c.h.b16 %v3353
        %v3707 = vunpack.c.l.b16 %v3354
        %v3708 = vunpack.c.h.b16 %v3354
        %v3709 = vunpack.c.l.b16 %v3355
        %v3710 = vunpack.c.h.b16 %v3355
        %v3711 = vunpack.c.l.b16 %v3356
        %v3712 = vunpack.c.h.b16 %v3356
        %v3713 = vunpack.c.l.b16 %v3357
        %v3714 = vunpack.c.h.b16 %v3357
        %v3715 = vunpack.c.l.b16 %v3358
        %v3716 = vunpack.c.h.b16 %v3358
        %v3717 = vunpack.c.l.b16 %v3359
        %v3718 = vunpack.c.h.b16 %v3359
        %v3719 = vunpack.c.l.b16 %v3360
        %v3720 = vunpack.c.h.b16 %v3360
        %v3721 = vunpack.c.l.b16 %v3361
        %v3722 = vunpack.c.h.b16 %v3361
        %v3723 = vunpack.c.l.b16 %v3362
        %v3724 = vunpack.c.h.b16 %v3362
        %v3725 = vunpack.c.l.b16 %v3363
        %v3726 = vunpack.c.h.b16 %v3363
        %v3727 = vunpack.c.l.b16 %v3364
        %v3728 = vunpack.c.h.b16 %v3364
        %v3729 = vunpack.c.l.b16 %v3365
        %v3730 = vunpack.c.h.b16 %v3365
        %v3731 = vunpack.c.l.b16 %v3366
        %v3732 = vunpack.c.h.b16 %v3366
        %v3733 = vunpack.c.l.b16 %v3367
        %v3734 = vunpack.c.h.b16 %v3367
        %v3735 = vunpack.c.l.b16 %v3368
        %v3736 = vunpack.c.h.b16 %v3368
        %v3737 = vunpack.c.l.b16 %v3369
        %v3738 = vunpack.c.h.b16 %v3369
        %v3739 = vunpack.c.l.b16 %v3370
        %v3740 = vunpack.c.h.b16 %v3370
        %v3741 = vunpack.c.l.b16 %v3371
        %v3742 = vunpack.c.h.b16 %v3371
        %v3743 = vunpack.c.l.b16 %v3372
        %v3744 = vunpack.c.h.b16 %v3372
        %v3745 = vunpack.c.l.b16 %v3373
        %v3746 = vunpack.c.h.b16 %v3373
        %v3747 = vunpack.c.l.b16 %v3374
        %v3748 = vunpack.c.h.b16 %v3374
        %v3749 = vunpack.c.l.b16 %v3375
        %v3750 = vunpack.c.h.b16 %v3375
        %v3751 = vunpack.c.l.b16 %v3376
        %v3752 = vunpack.c.h.b16 %v3376
        %v3753 = vunpack.c.l.b16 %v3377
        %v3754 = vunpack.c.h.b16 %v3377
        %v3755 = vunpack.c.l.b16 %v3378
        %v3756 = vunpack.c.h.b16 %v3378
        %v3757 = vunpack.c.l.b16 %v3379
        %v3758 = vunpack.c.h.b16 %v3379
        %v3759 = vunpack.c.l.b16 %v3380
        %v3760 = vunpack.c.h.b16 %v3380
        %v3761 = vunpack.c.l.b16 %v3381
        %v3762 = vunpack.c.h.b16 %v3381
        %v3763 = vunpack.c.l.b16 %v3382
        %v3764 = vunpack.c.h.b16 %v3382
        %v3765 = vunpack.c.l.b16 %v3383
        %v3766 = vunpack.c.h.b16 %v3383
        %v3767 = vunpack.c.l.b16 %v3384
        %v3768 = vunpack.c.h.b16 %v3384
        %v3769 = vunpack.c.l.b16 %v3385
        %v3770 = vunpack.c.h.b16 %v3385
        %v3771 = vunpack.c.l.b16 %v3386
        %v3772 = vunpack.c.h.b16 %v3386
        %v3773 = vunpack.c.l.b16 %v3387
        %v3774 = vunpack.c.h.b16 %v3387
        %v3775 = vunpack.c.l.b16 %v3388
        %v3776 = vunpack.c.h.b16 %v3388
        %v3777 = vunpack.c.l.b16 %v3389
        %v3778 = vunpack.c.h.b16 %v3389
        %v3779 = vunpack.c.l.b16 %v3390
        %v3780 = vunpack.c.h.b16 %v3390
        %v3781 = vunpack.c.l.b16 %v3391
        %v3782 = vunpack.c.h.b16 %v3391
        %v3783 = vunpack.c.l.b16 %v3392
        %v3784 = vunpack.c.h.b16 %v3392
        %v3785 = vunpack.c.l.b16 %v3393
        %v3786 = vunpack.c.h.b16 %v3393
        %v3787 = vunpack.c.l.b16 %v3394
        %v3788 = vunpack.c.h.b16 %v3394
        %v3789 = vpack.c.b16 %v3537, %v3533
        %v3790 = vpack.c.b16 %v3538, %v3534
        %v3791 = vpack.c.b16 %v3539, %v3535
        %v3792 = vpack.c.b16 %v3540, %v3536
        %v3793 = vpack.c.b16 %v3545, %v3541
        %v3794 = vpack.c.b16 %v3546, %v3542
        %v3795 = vpack.c.b16 %v3547, %v3543
        %v3796 = vpack.c.b16 %v3548, %v3544
        %v3797 = vpack.c.b16 %v3553, %v3549
        %v3798 = vpack.c.b16 %v3554, %v3550
        %v3799 = vpack.c.b16 %v3555, %v3551
        %v3800 = vpack.c.b16 %v3556, %v3552
        %v3801 = vpack.c.b16 %v3561, %v3557
        %v3802 = vpack.c.b16 %v3562, %v3558
        %v3803 = vpack.c.b16 %v3563, %v3559
        %v3804 = vpack.c.b16 %v3564, %v3560
        %v3805 = vpack.c.b16 %v3569, %v3565
        %v3806 = vpack.c.b16 %v3570, %v3566
        %v3807 = vpack.c.b16 %v3571, %v3567
        %v3808 = vpack.c.b16 %v3572, %v3568
        %v3809 = vpack.c.b16 %v3577, %v3573
        %v3810 = vpack.c.b16 %v3578, %v3574
        %v3811 = vpack.c.b16 %v3579, %v3575
        %v3812 = vpack.c.b16 %v3580, %v3576
        %v3813 = vpack.c.b16 %v3585, %v3581
        %v3814 = vpack.c.b16 %v3586, %v3582
        %v3815 = vpack.c.b16 %v3587, %v3583
        %v3816 = vpack.c.b16 %v3588, %v3584
        %v3817 = vpack.c.b16 %v3593, %v3589
        %v3818 = vpack.c.b16 %v3594, %v3590
        %v3819 = vpack.c.b16 %v3595, %v3591
        %v3820 = vpack.c.b16 %v3596, %v3592
        %v3821 = vpack.c.b16 %v3601, %v3597
        %v3822 = vpack.c.b16 %v3602, %v3598
        %v3823 = vpack.c.b16 %v3603, %v3599
        %v3824 = vpack.c.b16 %v3604, %v3600
        %v3825 = vpack.c.b16 %v3609, %v3605
        %v3826 = vpack.c.b16 %v3610, %v3606
        %v3827 = vpack.c.b16 %v3611, %v3607
        %v3828 = vpack.c.b16 %v3612, %v3608
        %v3829 = vpack.c.b16 %v3617, %v3613
        %v3830 = vpack.c.b16 %v3618, %v3614
        %v3831 = vpack.c.b16 %v3619, %v3615
        %v3832 = vpack.c.b16 %v3620, %v3616
        %v3833 = vpack.c.b16 %v3625, %v3621
        %v3834 = vpack.c.b16 %v3626, %v3622
        %v3835 = vpack.c.b16 %v3627, %v3623
        %v3836 = vpack.c.b16 %v3628, %v3624
        %v3837 = vpack.c.b16 %v3633, %v3629
        %v3838 = vpack.c.b16 %v3634, %v3630
        %v3839 = vpack.c.b16 %v3635, %v3631
        %v3840 = vpack.c.b16 %v3636, %v3632
        %v3841 = vpack.c.b16 %v3641, %v3637
        %v3842 = vpack.c.b16 %v3642, %v3638
        %v3843 = vpack.c.b16 %v3643, %v3639
        %v3844 = vpack.c.b16 %v3644, %v3640
        %v3845 = vpack.c.b16 %v3649, %v3645
        %v3846 = vpack.c.b16 %v3650, %v3646
        %v3847 = vpack.c.b16 %v3651, %v3647
        %v3848 = vpack.c.b16 %v3652, %v3648
        %v3849 = vpack.c.b16 %v3657, %v3653
        %v3850 = vpack.c.b16 %v3658, %v3654
        %v3851 = vpack.c.b16 %v3659, %v3655
        %v3852 = vpack.c.b16 %v3660, %v3656
        %v3853 = vpack.c.b16 %v3665, %v3661
        %v3854 = vpack.c.b16 %v3666, %v3662
        %v3855 = vpack.c.b16 %v3667, %v3663
        %v3856 = vpack.c.b16 %v3668, %v3664
        %v3857 = vpack.c.b16 %v3673, %v3669
        %v3858 = vpack.c.b16 %v3674, %v3670
        %v3859 = vpack.c.b16 %v3675, %v3671
        %v3860 = vpack.c.b16 %v3676, %v3672
        %v3861 = vpack.c.b16 %v3681, %v3677
        %v3862 = vpack.c.b16 %v3682, %v3678
        %v3863 = vpack.c.b16 %v3683, %v3679
        %v3864 = vpack.c.b16 %v3684, %v3680
        %v3865 = vpack.c.b16 %v3689, %v3685
        %v3866 = vpack.c.b16 %v3690, %v3686
        %v3867 = vpack.c.b16 %v3691, %v3687
        %v3868 = vpack.c.b16 %v3692, %v3688
        %v3869 = vpack.c.b16 %v3697, %v3693
        %v3870 = vpack.c.b16 %v3698, %v3694
        %v3871 = vpack.c.b16 %v3699, %v3695
        %v3872 = vpack.c.b16 %v3700, %v3696
        %v3873 = vpack.c.b16 %v3705, %v3701
        %v3874 = vpack.c.b16 %v3706, %v3702
        %v3875 = vpack.c.b16 %v3707, %v3703
        %v3876 = vpack.c.b16 %v3708, %v3704
        %v3877 = vpack.c.b16 %v3713, %v3709
        %v3878 = vpack.c.b16 %v3714, %v3710
        %v3879 = vpack.c.b16 %v3715, %v3711
        %v3880 = vpack.c.b16 %v3716, %v3712
        %v3881 = vpack.c.b16 %v3721, %v3717
        %v3882 = vpack.c.b16 %v3722, %v3718
        %v3883 = vpack.c.b16 %v3723, %v3719
        %v3884 = vpack.c.b16 %v3724, %v3720
        %v3885 = vpack.c.b16 %v3729, %v3725
        %v3886 = vpack.c.b16 %v3730, %v3726
        %v3887 = vpack.c.b16 %v3731, %v3727
        %v3888 = vpack.c.b16 %v3732, %v3728
        %v3889 = vpack.c.b16 %v3737, %v3733
        %v3890 = vpack.c.b16 %v3738, %v3734
        %v3891 = vpack.c.b16 %v3739, %v3735
        %v3892 = vpack.c.b16 %v3740, %v3736
        %v3893 = vpack.c.b16 %v3745, %v3741
        %v3894 = vpack.c.b16 %v3746, %v3742
        %v3895 = vpack.c.b16 %v3747, %v3743
        %v3896 = vpack.c.b16 %v3748, %v3744
        %v3897 = vpack.c.b16 %v3753, %v3749
        %v3898 = vpack.c.b16 %v3754, %v3750
        %v3899 = vpack.c.b16 %v3755, %v3751
        %v3900 = vpack.c.b16 %v3756, %v3752
        %v3901 = vpack.c.b16 %v3761, %v3757
        %v3902 = vpack.c.b16 %v3762, %v3758
        %v3903 = vpack.c.b16 %v3763, %v3759
        %v3904 = vpack.c.b16 %v3764, %v3760
        %v3905 = vpack.c.b16 %v3769, %v3765
        %v3906 = vpack.c.b16 %v3770, %v3766
        %v3907 = vpack.c.b16 %v3771, %v3767
        %v3908 = vpack.c.b16 %v3772, %v3768
        %v3909 = vpack.c.b16 %v3777, %v3773
        %v3910 = vpack.c.b16 %v3778, %v3774
        %v3911 = vpack.c.b16 %v3779, %v3775
        %v3912 = vpack.c.b16 %v3780, %v3776
        %v3913 = vpack.c.b16 %v3785, %v3781
        %v3914 = vpack.c.b16 %v3786, %v3782
        %v3915 = vpack.c.b16 %v3787, %v3783
        %v3916 = vpack.c.b16 %v3788, %v3784
        %4045 = vmatpush.bf16.msra.mxu0 %v3817
        %4046 = vmatpush.bf16.msra.mxu0 %v3813
        %4047 = vmatpush.bf16.msra.mxu0 %v3809
        %4048 = vmatpush.bf16.msra.mxu0 %v3805
        %4049 = vmatpush.bf16.msra.mxu0 %v3801
        %4050 = vmatpush.bf16.msra.mxu0 %v3797
        %4051 = vmatpush.bf16.msra.mxu0 %v3793
        %4052 = vmatpush.bf16.msra.mxu0 %v3789
        %4053 = vmatmul.bf16.gmra.mxu0 %v3263
        %v4054 = vpop.f32.mrf.mxu0
        %v4055 = vadd.f32 %v3397, %v4054
        %v4056 = vpop.f32.mrf.mxu0
        %v4057 = vadd.f32 %v3397, %v4056
        %4058 = vdwg.mxu0
        %4059 = vmatpush.bf16.msra.mxu0 %v3849
        %4060 = vmatpush.bf16.msra.mxu0 %v3845
        %4061 = vmatpush.bf16.msra.mxu0 %v3841
        %4062 = vmatpush.bf16.msra.mxu0 %v3837
        %4063 = vmatpush.bf16.msra.mxu0 %v3833
        %4064 = vmatpush.bf16.msra.mxu0 %v3829
        %4065 = vmatpush.bf16.msra.mxu0 %v3825
        %4066 = vmatpush.bf16.msra.mxu0 %v3821
        %4067 = vmatmul.bf16.gmra.mxu0 %v3264
        %v4068 = vpop.f32.mrf.mxu0
        %v4069 = vadd.f32 %v4055, %v4068
        %v4070 = vpop.f32.mrf.mxu0
        %v4071 = vadd.f32 %v4057, %v4070
        %4072 = vdwg.mxu0
        %4073 = vmatpush.bf16.msra.mxu0 %v3881
        %4074 = vmatpush.bf16.msra.mxu0 %v3877
        %4075 = vmatpush.bf16.msra.mxu0 %v3873
        %4076 = vmatpush.bf16.msra.mxu0 %v3869
        %4077 = vmatpush.bf16.msra.mxu0 %v3865
        %4078 = vmatpush.bf16.msra.mxu0 %v3861
        %4079 = vmatpush.bf16.msra.mxu0 %v3857
        %4080 = vmatpush.bf16.msra.mxu0 %v3853
        %4081 = vmatmul.bf16.gmra.mxu0 %v3265
        %v4082 = vpop.f32.mrf.mxu0
        %v4083 = vadd.f32 %v4069, %v4082
        %v4084 = vpop.f32.mrf.mxu0
        %v4085 = vadd.f32 %v4071, %v4084
        %4086 = vdwg.mxu0
        %4087 = vmatpush.bf16.msra.mxu0 %v3913
        %4088 = vmatpush.bf16.msra.mxu0 %v3909
        %4089 = vmatpush.bf16.msra.mxu0 %v3905
        %4090 = vmatpush.bf16.msra.mxu0 %v3901
        %4091 = vmatpush.bf16.msra.mxu0 %v3897
        %4092 = vmatpush.bf16.msra.mxu0 %v3893
        %4093 = vmatpush.bf16.msra.mxu0 %v3889
        %4094 = vmatpush.bf16.msra.mxu0 %v3885
        %4095 = vmatmul.bf16.gmra.mxu0 %v3266
        %v4096 = vpop.f32.mrf.mxu0
        %v4097 = vadd.f32 %v4083, %v4096
        %v4098 = vpop.f32.mrf.mxu0
        %v4099 = vadd.f32 %v4085, %v4098
        %4100 = vdwg.mxu0
        %4101 = vmatpush.bf16.msra.mxu0 %v3818
        %4102 = vmatpush.bf16.msra.mxu0 %v3814
        %4103 = vmatpush.bf16.msra.mxu0 %v3810
        %4104 = vmatpush.bf16.msra.mxu0 %v3806
        %4105 = vmatpush.bf16.msra.mxu0 %v3802
        %4106 = vmatpush.bf16.msra.mxu0 %v3798
        %4107 = vmatpush.bf16.msra.mxu0 %v3794
        %4108 = vmatpush.bf16.msra.mxu0 %v3790
        %4109 = vmatmul.bf16.gmra.mxu0 %v3263
        %v4110 = vpop.f32.mrf.mxu0
        %v4111 = vadd.f32 %v3398, %v4110
        %v4112 = vpop.f32.mrf.mxu0
        %v4113 = vadd.f32 %v3398, %v4112
        %4114 = vdwg.mxu0
        %4115 = vmatpush.bf16.msra.mxu0 %v3850
        %4116 = vmatpush.bf16.msra.mxu0 %v3846
        %4117 = vmatpush.bf16.msra.mxu0 %v3842
        %4118 = vmatpush.bf16.msra.mxu0 %v3838
        %4119 = vmatpush.bf16.msra.mxu0 %v3834
        %4120 = vmatpush.bf16.msra.mxu0 %v3830
        %4121 = vmatpush.bf16.msra.mxu0 %v3826
        %4122 = vmatpush.bf16.msra.mxu0 %v3822
        %4123 = vmatmul.bf16.gmra.mxu0 %v3264
        %v4124 = vpop.f32.mrf.mxu0
        %v4125 = vadd.f32 %v4111, %v4124
        %v4126 = vpop.f32.mrf.mxu0
        %v4127 = vadd.f32 %v4113, %v4126
        %4128 = vdwg.mxu0
        %4129 = vmatpush.bf16.msra.mxu0 %v3882
        %4130 = vmatpush.bf16.msra.mxu0 %v3878
        %4131 = vmatpush.bf16.msra.mxu0 %v3874
        %4132 = vmatpush.bf16.msra.mxu0 %v3870
        %4133 = vmatpush.bf16.msra.mxu0 %v3866
        %4134 = vmatpush.bf16.msra.mxu0 %v3862
        %4135 = vmatpush.bf16.msra.mxu0 %v3858
        %4136 = vmatpush.bf16.msra.mxu0 %v3854
        %4137 = vmatmul.bf16.gmra.mxu0 %v3265
        %v4138 = vpop.f32.mrf.mxu0
        %v4139 = vadd.f32 %v4125, %v4138
        %v4140 = vpop.f32.mrf.mxu0
        %v4141 = vadd.f32 %v4127, %v4140
        %4142 = vdwg.mxu0
        %4143 = vmatpush.bf16.msra.mxu0 %v3914
        %4144 = vmatpush.bf16.msra.mxu0 %v3910
        %4145 = vmatpush.bf16.msra.mxu0 %v3906
        %4146 = vmatpush.bf16.msra.mxu0 %v3902
        %4147 = vmatpush.bf16.msra.mxu0 %v3898
        %4148 = vmatpush.bf16.msra.mxu0 %v3894
        %4149 = vmatpush.bf16.msra.mxu0 %v3890
        %4150 = vmatpush.bf16.msra.mxu0 %v3886
        %4151 = vmatmul.bf16.gmra.mxu0 %v3266
        %v4152 = vpop.f32.mrf.mxu0
        %v4153 = vadd.f32 %v4139, %v4152
        %v4154 = vpop.f32.mrf.mxu0
        %v4155 = vadd.f32 %v4141, %v4154
        %4156 = vdwg.mxu0
        %4157 = vmatpush.bf16.msra.mxu0 %v3819
        %4158 = vmatpush.bf16.msra.mxu0 %v3815
        %4159 = vmatpush.bf16.msra.mxu0 %v3811
        %4160 = vmatpush.bf16.msra.mxu0 %v3807
        %4161 = vmatpush.bf16.msra.mxu0 %v3803
        %4162 = vmatpush.bf16.msra.mxu0 %v3799
        %4163 = vmatpush.bf16.msra.mxu0 %v3795
        %4164 = vmatpush.bf16.msra.mxu0 %v3791
        %4165 = vmatmul.bf16.gmra.mxu0 %v3263
        %v4166 = vpop.f32.mrf.mxu0
        %v4167 = vadd.f32 %v3399, %v4166
        %v4168 = vpop.f32.mrf.mxu0
        %v4169 = vadd.f32 %v3399, %v4168
        %4170 = vdwg.mxu0
        %4171 = vmatpush.bf16.msra.mxu0 %v3851
        %4172 = vmatpush.bf16.msra.mxu0 %v3847
        %4173 = vmatpush.bf16.msra.mxu0 %v3843
        %4174 = vmatpush.bf16.msra.mxu0 %v3839
        %4175 = vmatpush.bf16.msra.mxu0 %v3835
        %4176 = vmatpush.bf16.msra.mxu0 %v3831
        %4177 = vmatpush.bf16.msra.mxu0 %v3827
        %4178 = vmatpush.bf16.msra.mxu0 %v3823
        %4179 = vmatmul.bf16.gmra.mxu0 %v3264
        %v4180 = vpop.f32.mrf.mxu0
        %v4181 = vadd.f32 %v4167, %v4180
        %v4182 = vpop.f32.mrf.mxu0
        %v4183 = vadd.f32 %v4169, %v4182
        %4184 = vdwg.mxu0
        %4185 = vmatpush.bf16.msra.mxu0 %v3883
        %4186 = vmatpush.bf16.msra.mxu0 %v3879
        %4187 = vmatpush.bf16.msra.mxu0 %v3875
        %4188 = vmatpush.bf16.msra.mxu0 %v3871
        %4189 = vmatpush.bf16.msra.mxu0 %v3867
        %4190 = vmatpush.bf16.msra.mxu0 %v3863
        %4191 = vmatpush.bf16.msra.mxu0 %v3859
        %4192 = vmatpush.bf16.msra.mxu0 %v3855
        %4193 = vmatmul.bf16.gmra.mxu0 %v3265
        %v4194 = vpop.f32.mrf.mxu0
        %v4195 = vadd.f32 %v4181, %v4194
        %v4196 = vpop.f32.mrf.mxu0
        %v4197 = vadd.f32 %v4183, %v4196
        %4198 = vdwg.mxu0
        %4199 = vmatpush.bf16.msra.mxu0 %v3915
        %4200 = vmatpush.bf16.msra.mxu0 %v3911
        %4201 = vmatpush.bf16.msra.mxu0 %v3907
        %4202 = vmatpush.bf16.msra.mxu0 %v3903
        %4203 = vmatpush.bf16.msra.mxu0 %v3899
        %4204 = vmatpush.bf16.msra.mxu0 %v3895
        %4205 = vmatpush.bf16.msra.mxu0 %v3891
        %4206 = vmatpush.bf16.msra.mxu0 %v3887
        %4207 = vmatmul.bf16.gmra.mxu0 %v3266
        %v4208 = vpop.f32.mrf.mxu0
        %v4209 = vadd.f32 %v4195, %v4208
        %v4210 = vpop.f32.mrf.mxu0
        %v4211 = vadd.f32 %v4197, %v4210
        %4212 = vdwg.mxu0
        %4213 = vmatpush.bf16.msra.mxu0 %v3820
        %4214 = vmatpush.bf16.msra.mxu0 %v3816
        %4215 = vmatpush.bf16.msra.mxu0 %v3812
        %4216 = vmatpush.bf16.msra.mxu0 %v3808
        %4217 = vmatpush.bf16.msra.mxu0 %v3804
        %4218 = vmatpush.bf16.msra.mxu0 %v3800
        %4219 = vmatpush.bf16.msra.mxu0 %v3796
        %4220 = vmatpush.bf16.msra.mxu0 %v3792
        %4221 = vmatmul.bf16.gmra.mxu0 %v3263
        %v4222 = vpop.f32.mrf.mxu0
        %v4223 = vadd.f32 %v3400, %v4222
        %v4224 = vpop.f32.mrf.mxu0
        %v4225 = vadd.f32 %v3400, %v4224
        %4226 = vdwg.mxu0
        %4227 = vmatpush.bf16.msra.mxu0 %v3852
        %4228 = vmatpush.bf16.msra.mxu0 %v3848
        %4229 = vmatpush.bf16.msra.mxu0 %v3844
        %4230 = vmatpush.bf16.msra.mxu0 %v3840
        %4231 = vmatpush.bf16.msra.mxu0 %v3836
        %4232 = vmatpush.bf16.msra.mxu0 %v3832
        %4233 = vmatpush.bf16.msra.mxu0 %v3828
        %4234 = vmatpush.bf16.msra.mxu0 %v3824
        %4235 = vmatmul.bf16.gmra.mxu0 %v3264
        %v4236 = vpop.f32.mrf.mxu0
        %v4237 = vadd.f32 %v4223, %v4236
        %v4238 = vpop.f32.mrf.mxu0
        %v4239 = vadd.f32 %v4225, %v4238
        %4240 = vdwg.mxu0
        %4241 = vmatpush.bf16.msra.mxu0 %v3884
        %4242 = vmatpush.bf16.msra.mxu0 %v3880
        %4243 = vmatpush.bf16.msra.mxu0 %v3876
        %4244 = vmatpush.bf16.msra.mxu0 %v3872
        %4245 = vmatpush.bf16.msra.mxu0 %v3868
        %4246 = vmatpush.bf16.msra.mxu0 %v3864
        %4247 = vmatpush.bf16.msra.mxu0 %v3860
        %4248 = vmatpush.bf16.msra.mxu0 %v3856
        %4249 = vmatmul.bf16.gmra.mxu0 %v3265
        %v4250 = vpop.f32.mrf.mxu0
        %v4251 = vadd.f32 %v4237, %v4250
        %v4252 = vpop.f32.mrf.mxu0
        %v4253 = vadd.f32 %v4239, %v4252
        %4254 = vdwg.mxu0
        %4255 = vmatpush.bf16.msra.mxu0 %v3916
        %4256 = vmatpush.bf16.msra.mxu0 %v3912
        %4257 = vmatpush.bf16.msra.mxu0 %v3908
        %4258 = vmatpush.bf16.msra.mxu0 %v3904
        %4259 = vmatpush.bf16.msra.mxu0 %v3900
        %4260 = vmatpush.bf16.msra.mxu0 %v3896
        %4261 = vmatpush.bf16.msra.mxu0 %v3892
        %4262 = vmatpush.bf16.msra.mxu0 %v3888
        %4263 = vmatmul.bf16.gmra.mxu0 %v3266
        %v4264 = vpop.f32.mrf.mxu0
        %v4265 = vadd.f32 %v4251, %v4264
        %v4266 = vpop.f32.mrf.mxu0
        %v4267 = vadd.f32 %v4253, %v4266
        %4268 = vdwg.mxu0
        %v4269 = vmax.f32 %v4097, 0.0
        %v4270 = vmax.f32 %v4153, 0.0
        %v4271 = vmax.f32 %v4209, 0.0
        %v4272 = vmax.f32 %v4265, 0.0
        %v4273 = vmax.f32 %v4099, 0.0
        %v4274 = vmax.f32 %v4155, 0.0
        %v4275 = vmax.f32 %v4211, 0.0
        %v4276 = vmax.f32 %v4267, 0.0
        %v4277 = vpack.c.bf16 %v4273, %v4269
        %v4278 = vpack.c.bf16 %v4274, %v4270
        %v4279 = vpack.c.bf16 %v4275, %v4271
        %v4280 = vpack.c.bf16 %v4276, %v4272
        %v4281 = vld [vmem:[#allocation13] sm:$0xf]
        %v4282 = vld [vmem:[#allocation13 + $0x4] sm:$0xf]
        %v4283 = vld [vmem:[#allocation13 + $0x8] sm:$0xf]
        %v4284 = vld [vmem:[#allocation13 + $0xc] sm:$0xf]
        %v4285 = vld [vmem:[#allocation13 + $0x10] sm:$0xf]
        %v4286 = vld [vmem:[#allocation13 + $0x14] sm:$0xf]
        %v4287 = vld [vmem:[#allocation13 + $0x18] sm:$0xf]
        %v4288 = vld [vmem:[#allocation13 + $0x1c] sm:$0xf]
        %v4289 = vld [vmem:[#allocation13 + $0x20] sm:$0xf]
        %v4290 = vld [vmem:[#allocation13 + $0x24] sm:$0xf]
        %v4291 = vld [vmem:[#allocation13 + $0x28] sm:$0xf]
        %v4292 = vld [vmem:[#allocation13 + $0x2c] sm:$0xf]
        %v4293 = vld [vmem:[#allocation13 + $0x30] sm:$0xf]
        %v4294 = vld [vmem:[#allocation13 + $0x34] sm:$0xf]
        %v4295 = vld [vmem:[#allocation13 + $0x38] sm:$0xf]
        %v4296 = vld [vmem:[#allocation13 + $0x3c] sm:$0xf]
        %v4297 = vld [vmem:[#allocation13 + $0x40] sm:$0xf]
        %v4298 = vld [vmem:[#allocation13 + $0x44] sm:$0xf]
        %v4299 = vld [vmem:[#allocation13 + $0x48] sm:$0xf]
        %v4300 = vld [vmem:[#allocation13 + $0x4c] sm:$0xf]
        %v4301 = vld [vmem:[#allocation13 + $0x50] sm:$0xf]
        %v4302 = vld [vmem:[#allocation13 + $0x54] sm:$0xf]
        %v4303 = vld [vmem:[#allocation13 + $0x58] sm:$0xf]
        %v4304 = vld [vmem:[#allocation13 + $0x5c] sm:$0xf]
        %v4305 = vld [vmem:[#allocation13 + $0x60] sm:$0xf]
        %v4306 = vld [vmem:[#allocation13 + $0x64] sm:$0xf]
        %v4307 = vld [vmem:[#allocation13 + $0x68] sm:$0xf]
        %v4308 = vld [vmem:[#allocation13 + $0x6c] sm:$0xf]
        %v4309 = vld [vmem:[#allocation13 + $0x70] sm:$0xf]
        %v4310 = vld [vmem:[#allocation13 + $0x74] sm:$0xf]
        %v4311 = vld [vmem:[#allocation13 + $0x78] sm:$0xf]
        %v4312 = vld [vmem:[#allocation13 + $0x7c] sm:$0xf]
        %v4313 = vld [vmem:[#allocation13 + $0x80] sm:$0xf]
        %v4314 = vld [vmem:[#allocation13 + $0x84] sm:$0xf]
        %v4315 = vld [vmem:[#allocation13 + $0x88] sm:$0xf]
        %v4316 = vld [vmem:[#allocation13 + $0x8c] sm:$0xf]
        %v4317 = vld [vmem:[#allocation13 + $0x90] sm:$0xf]
        %v4318 = vld [vmem:[#allocation13 + $0x94] sm:$0xf]
        %v4319 = vld [vmem:[#allocation13 + $0x98] sm:$0xf]
        %v4320 = vld [vmem:[#allocation13 + $0x9c] sm:$0xf]
        %v4321 = vld [vmem:[#allocation13 + $0xa0] sm:$0xf]
        %v4322 = vld [vmem:[#allocation13 + $0xa4] sm:$0xf]
        %v4323 = vld [vmem:[#allocation13 + $0xa8] sm:$0xf]
        %v4324 = vld [vmem:[#allocation13 + $0xac] sm:$0xf]
        %v4325 = vld [vmem:[#allocation13 + $0xb0] sm:$0xf]
        %v4326 = vld [vmem:[#allocation13 + $0xb4] sm:$0xf]
        %v4327 = vld [vmem:[#allocation13 + $0xb8] sm:$0xf]
        %v4328 = vld [vmem:[#allocation13 + $0xbc] sm:$0xf]
        %v4329 = vld [vmem:[#allocation13 + $0xc0] sm:$0xf]
        %v4330 = vld [vmem:[#allocation13 + $0xc4] sm:$0xf]
        %v4331 = vld [vmem:[#allocation13 + $0xc8] sm:$0xf]
        %v4332 = vld [vmem:[#allocation13 + $0xcc] sm:$0xf]
        %v4333 = vld [vmem:[#allocation13 + $0xd0] sm:$0xf]
        %v4334 = vld [vmem:[#allocation13 + $0xd4] sm:$0xf]
        %v4335 = vld [vmem:[#allocation13 + $0xd8] sm:$0xf]
        %v4336 = vld [vmem:[#allocation13 + $0xdc] sm:$0xf]
        %v4337 = vld [vmem:[#allocation13 + $0xe0] sm:$0xf]
        %v4338 = vld [vmem:[#allocation13 + $0xe4] sm:$0xf]
        %v4339 = vld [vmem:[#allocation13 + $0xe8] sm:$0xf]
        %v4340 = vld [vmem:[#allocation13 + $0xec] sm:$0xf]
        %v4341 = vld [vmem:[#allocation13 + $0xf0] sm:$0xf]
        %v4342 = vld [vmem:[#allocation13 + $0xf4] sm:$0xf]
        %v4343 = vld [vmem:[#allocation13 + $0xf8] sm:$0xf]
        %v4344 = vld [vmem:[#allocation13 + $0xfc] sm:$0xf]
        %v4345 = vld [vmem:[%s8] sm:$0x1]
        %v4347 = vperm.slane %v4345, 0
        %v4413 = vunpack.c.l.b16 %v4281
        %v4414 = vunpack.c.l.b16 %v4282
        %v4415 = vunpack.c.l.b16 %v4283
        %v4416 = vunpack.c.l.b16 %v4284
        %v4417 = vunpack.c.l.b16 %v4285
        %v4418 = vunpack.c.l.b16 %v4286
        %v4419 = vunpack.c.l.b16 %v4287
        %v4420 = vunpack.c.l.b16 %v4288
        %v4421 = vunpack.c.l.b16 %v4289
        %v4422 = vunpack.c.l.b16 %v4290
        %v4423 = vunpack.c.l.b16 %v4291
        %v4424 = vunpack.c.l.b16 %v4292
        %v4425 = vunpack.c.l.b16 %v4293
        %v4426 = vunpack.c.l.b16 %v4294
        %v4427 = vunpack.c.l.b16 %v4295
        %v4428 = vunpack.c.l.b16 %v4296
        %v4429 = vunpack.c.l.b16 %v4297
        %v4430 = vunpack.c.l.b16 %v4298
        %v4431 = vunpack.c.l.b16 %v4299
        %v4432 = vunpack.c.l.b16 %v4300
        %v4433 = vunpack.c.l.b16 %v4301
        %v4434 = vunpack.c.l.b16 %v4302
        %v4435 = vunpack.c.l.b16 %v4303
        %v4436 = vunpack.c.l.b16 %v4304
        %v4437 = vunpack.c.l.b16 %v4305
        %v4438 = vunpack.c.l.b16 %v4306
        %v4439 = vunpack.c.l.b16 %v4307
        %v4440 = vunpack.c.l.b16 %v4308
        %v4441 = vunpack.c.l.b16 %v4309
        %v4442 = vunpack.c.l.b16 %v4310
        %v4443 = vunpack.c.l.b16 %v4311
        %v4444 = vunpack.c.l.b16 %v4312
        %v4445 = vunpack.c.l.b16 %v4313
        %v4446 = vunpack.c.l.b16 %v4314
        %v4447 = vunpack.c.l.b16 %v4315
        %v4448 = vunpack.c.l.b16 %v4316
        %v4449 = vunpack.c.l.b16 %v4317
        %v4450 = vunpack.c.l.b16 %v4318
        %v4451 = vunpack.c.l.b16 %v4319
        %v4452 = vunpack.c.l.b16 %v4320
        %v4453 = vunpack.c.l.b16 %v4321
        %v4454 = vunpack.c.l.b16 %v4322
        %v4455 = vunpack.c.l.b16 %v4323
        %v4456 = vunpack.c.l.b16 %v4324
        %v4457 = vunpack.c.l.b16 %v4325
        %v4458 = vunpack.c.l.b16 %v4326
        %v4459 = vunpack.c.l.b16 %v4327
        %v4460 = vunpack.c.l.b16 %v4328
        %v4461 = vunpack.c.l.b16 %v4329
        %v4462 = vunpack.c.l.b16 %v4330
        %v4463 = vunpack.c.l.b16 %v4331
        %v4464 = vunpack.c.l.b16 %v4332
        %v4465 = vunpack.c.l.b16 %v4333
        %v4466 = vunpack.c.l.b16 %v4334
        %v4467 = vunpack.c.l.b16 %v4335
        %v4468 = vunpack.c.l.b16 %v4336
        %v4469 = vunpack.c.l.b16 %v4337
        %v4470 = vunpack.c.l.b16 %v4338
        %v4471 = vunpack.c.l.b16 %v4339
        %v4472 = vunpack.c.l.b16 %v4340
        %v4473 = vunpack.c.l.b16 %v4341
        %v4474 = vunpack.c.l.b16 %v4342
        %v4475 = vunpack.c.l.b16 %v4343
        %v4476 = vunpack.c.l.b16 %v4344
        %v4477 = vpack.c.b16 %v4414, %v4413
        %v4478 = vpack.c.b16 %v4416, %v4415
        %v4479 = vpack.c.b16 %v4418, %v4417
        %v4480 = vpack.c.b16 %v4420, %v4419
        %v4481 = vpack.c.b16 %v4422, %v4421
        %v4482 = vpack.c.b16 %v4424, %v4423
        %v4483 = vpack.c.b16 %v4426, %v4425
        %v4484 = vpack.c.b16 %v4428, %v4427
        %v4485 = vpack.c.b16 %v4430, %v4429
        %v4486 = vpack.c.b16 %v4432, %v4431
        %v4487 = vpack.c.b16 %v4434, %v4433
        %v4488 = vpack.c.b16 %v4436, %v4435
        %v4489 = vpack.c.b16 %v4438, %v4437
        %v4490 = vpack.c.b16 %v4440, %v4439
        %v4491 = vpack.c.b16 %v4442, %v4441
        %v4492 = vpack.c.b16 %v4444, %v4443
        %v4493 = vpack.c.b16 %v4446, %v4445
        %v4494 = vpack.c.b16 %v4448, %v4447
        %v4495 = vpack.c.b16 %v4450, %v4449
        %v4496 = vpack.c.b16 %v4452, %v4451
        %v4497 = vpack.c.b16 %v4454, %v4453
        %v4498 = vpack.c.b16 %v4456, %v4455
        %v4499 = vpack.c.b16 %v4458, %v4457
        %v4500 = vpack.c.b16 %v4460, %v4459
        %v4501 = vpack.c.b16 %v4462, %v4461
        %v4502 = vpack.c.b16 %v4464, %v4463
        %v4503 = vpack.c.b16 %v4466, %v4465
        %v4504 = vpack.c.b16 %v4468, %v4467
        %v4505 = vpack.c.b16 %v4470, %v4469
        %v4506 = vpack.c.b16 %v4472, %v4471
        %v4507 = vpack.c.b16 %v4474, %v4473
        %v4508 = vpack.c.b16 %v4476, %v4475
        %4541 = vmatpush.bf16.msra.mxu0 %v4484
        %4542 = vmatpush.bf16.msra.mxu0 %v4483
        %4543 = vmatpush.bf16.msra.mxu0 %v4482
        %4544 = vmatpush.bf16.msra.mxu0 %v4481
        %4545 = vmatpush.bf16.msra.mxu0 %v4480
        %4546 = vmatpush.bf16.msra.mxu0 %v4479
        %4547 = vmatpush.bf16.msra.mxu0 %v4478
        %4548 = vmatpush.bf16.msra.mxu0 %v4477
        %4549 = vmatmul.bf16.gmra.mxu0 %v4277
        %v4550 = vpop.f32.mrf.mxu0
        %v4551 = vadd.f32 %v4347, %v4550
        %v4552 = vpop.f32.mrf.mxu0
        %v4553 = vadd.f32 %v4347, %v4552
        %4554 = vdwg.mxu0
        %4555 = vmatpush.bf16.msra.mxu0 %v4492
        %4556 = vmatpush.bf16.msra.mxu0 %v4491
        %4557 = vmatpush.bf16.msra.mxu0 %v4490
        %4558 = vmatpush.bf16.msra.mxu0 %v4489
        %4559 = vmatpush.bf16.msra.mxu0 %v4488
        %4560 = vmatpush.bf16.msra.mxu0 %v4487
        %4561 = vmatpush.bf16.msra.mxu0 %v4486
        %4562 = vmatpush.bf16.msra.mxu0 %v4485
        %4563 = vmatmul.bf16.gmra.mxu0 %v4278
        %v4564 = vpop.f32.mrf.mxu0
        %v4565 = vadd.f32 %v4551, %v4564
        %v4566 = vpop.f32.mrf.mxu0
        %v4567 = vadd.f32 %v4553, %v4566
        %4568 = vdwg.mxu0
        %4569 = vmatpush.bf16.msra.mxu0 %v4500
        %4570 = vmatpush.bf16.msra.mxu0 %v4499
        %4571 = vmatpush.bf16.msra.mxu0 %v4498
        %4572 = vmatpush.bf16.msra.mxu0 %v4497
        %4573 = vmatpush.bf16.msra.mxu0 %v4496
        %4574 = vmatpush.bf16.msra.mxu0 %v4495
        %4575 = vmatpush.bf16.msra.mxu0 %v4494
        %4576 = vmatpush.bf16.msra.mxu0 %v4493
        %4577 = vmatmul.bf16.gmra.mxu0 %v4279
        %v4578 = vpop.f32.mrf.mxu0
        %v4579 = vadd.f32 %v4565, %v4578
        %v4580 = vpop.f32.mrf.mxu0
        %v4581 = vadd.f32 %v4567, %v4580
        %4582 = vdwg.mxu0
        %4583 = vmatpush.bf16.msra.mxu0 %v4508
        %4584 = vmatpush.bf16.msra.mxu0 %v4507
        %4585 = vmatpush.bf16.msra.mxu0 %v4506
        %4586 = vmatpush.bf16.msra.mxu0 %v4505
        %4587 = vmatpush.bf16.msra.mxu0 %v4504
        %4588 = vmatpush.bf16.msra.mxu0 %v4503
        %4589 = vmatpush.bf16.msra.mxu0 %v4502
        %4590 = vmatpush.bf16.msra.mxu0 %v4501
        %4591 = vmatmul.bf16.gmra.mxu0 %v4280
        %v4592 = vpop.f32.mrf.mxu0
        %v4593 = vadd.f32 %v4579, %v4592
        %v4594 = vpop.f32.mrf.mxu0
        %v4595 = vadd.f32 %v4581, %v4594
        %4596 = vdwg.mxu0
        %4597 = vst [vmem:[%s448] sm:$0xff] %v4593
        %4598 = vst [vmem:[%s448 + $0x8] sm:$0xff] %v4595
        %s4599 = sand.u32 %s231, 1
        %s4600 = scalar_lea.sflag [#allocation4], %s4599
        %s4601 = sand.u32 %s231, 1
        %s4602 = smul.addr %s4601, 16
        %s4603 = scalar_lea.vmem [#allocation14], %s4602
        // Predicated region
        $region85: #{tpu_custom_call.1} parent=55 // pred_check
          %p4604 = pneg %p241
        $region86: #{tpu_custom_call.1} parent=55 // pred_check_branch
          %4606 = sbr.rel (%p4604) target = $region88
        $region87: #{tpu_custom_call.1} parent=55 // pred_region
          %s4607 = smul.u32 2, %s29
          %4609 = vsyncadd %s4600, 0
          %s4610 = smul.addr %s4607, 8
          %s4611 = scalar_lea.hbm %s9, %s4610
          %s4612 = sshll.u32 %s4603, 4
          %s4613 = int_to_ptr.vmem [resolvable:$true] %s4612
          %s4614 = sshll.u32 %s4611, 4
          %s4615 = int_to_ptr.hbm [resolvable:$true] %s4614
          %4620 = dma.vmem_to_hbm [thread:$0]  %s4613, 256, %s4615, %s4600, 128, 128, 8
        $region88: #{tpu_custom_call.1} parent=55 // pred_fallthru
          _
      $region56: #{tpu_custom_call.1} parent=5 // pred_fallthru
        _
      %p4621 = scmp.le.s32.totalorder 2, %s24
      // Predicated region
      $region89: #{tpu_custom_call.1} parent=5 // pred_check
        %p4622 = pneg %p4621
      $region90: #{tpu_custom_call.1} parent=5 // pred_check_branch
        %4624 = sbr.rel (%p4622) target = $region92
      $region91: #{tpu_custom_call.1} parent=5 // pred_region
        %s4625 = ssub.s32 %s24, 2
        // Predicated region
        $region93: #{tpu_custom_call.1} parent=91 // pred_check
          %p4626 = pneg %p247
        $region94: #{tpu_custom_call.1} parent=91 // pred_check_branch
          %4628 = sbr.rel (%p4626) target = $region96
        $region95: #{tpu_custom_call.1} parent=91 // pred_region
          %s4629 = sand.u32 %s232, 1
          %s4630 = scalar_lea.sflag [#allocation4], %s4629
          %s4631 = sand.u32 %s232, 1
          %s4632 = smul.addr %s4631, 16
          %s4633 = scalar_lea.vmem [#allocation14], %s4632
          %4635 = dma.done %s4630, 256
        $region96: #{tpu_custom_call.1} parent=91 // pred_fallthru
          _
      $region92: #{tpu_custom_call.1} parent=5 // pred_fallthru
        _
    $region6: #{tpu_custom_call.1} parent=1 // loop_footer
      %s28 = sadd.s32 1, %s24
    $region7: #{tpu_custom_call.1} parent=1 // loop_footer_branch
      %23 = sbr.rel target = $region3
    $region8: #{tpu_custom_call.1} parent=1 // loop_exit
      _
    %4636 = vsyncpa [#allocation3], 1
    %s4637 = scalar_lea.sflag [#allocation3], 1
    %4638 = vsyncpa %s4637, 1
    %4639 = vsyncpa [#allocation6], 1
    %4640 = vsyncpa [#allocation9], 1
    %4641 = vsyncpa [#allocation12], 1
    %4642 = vsyncpa [#allocation4], 1
    %s4643 = scalar_lea.sflag [#allocation4], 1
    %4644 = vsyncpa %s4643, 1

// kernel: tpu_custom_call.1
$region0: #{tpu_custom_call.1}
  #allocation0 [shape = 'u32[]', space=smem, size = 0x4, offset = 0x4, fixed_abs, tag = 'smem constant byte address 0x4 - core index']
  #allocation1 [shape = 'u32[72,128]{1,0:T(1,128)}', space=vmem, size = 0x9000, scoped, tag = 'internal scratch']
  %s0 = inlined_call_operand.hbm [shape: bf16[32,896], index: 0, kind: input, shape index: {}]
  %s1 = inlined_call_operand.hbm [shape: bf16[896,512], index: 1, kind: input, shape index: {}]
  %s2 = inlined_call_operand.hbm [shape: f32[1,512], index: 2, kind: input, shape index: {}]
  %s3 = inlined_call_operand.hbm [shape: bf16[512,512], index: 3, kind: input, shape index: {}]
  %s4 = inlined_call_operand.hbm [shape: f32[1,512], index: 4, kind: input, shape index: {}]
  %s5 = inlined_call_operand.hbm [shape: bf16[512,512], index: 5, kind: input, shape index: {}]
  %s6 = inlined_call_operand.vmem [shape: f32[1,512], index: 6, kind: input, shape index: {}]
  %s7 = inlined_call_operand.hbm [shape: bf16[512,128], index: 7, kind: input, shape index: {}]
  %s8 = inlined_call_operand.vmem [shape: f32[1,128], index: 8, kind: input, shape index: {}]
  %s9 = inlined_call_operand.hbm [shape: f32[32,128], index: 9, kind: output, shape index: {}]
  %s10 = sld [smem:[#allocation0]]
  $region97: #{tpu_custom_call.1} parent=0
    _
  %s12 = ssub.s32 1, %s10
  %s13 = scalar_select 0, %s12, %s10
  $region1: #{tpu_custom_call.1} parent=0
    #allocation2 [shape = 'u8[57344]{0}', space=vmem, size = 0xe000, scoped, tag = 'input window, operand 0']
    #allocation3 [shape = 's32[2]{0}', space=sflag, size = 0x8, scoped, tag = 'scoped memory for tpu_custom_call.1']
    #allocation4 [shape = 's32[2]{0}', space=sflag, size = 0x8, scoped, tag = 'scoped memory for tpu_custom_call.1']
    #allocation5 [shape = 'u8[917504]{0}', space=vmem, size = 0xe0000, scoped, tag = 'input window, operand 1, single buffered']
    #allocation6 [shape = 's32[1]{0}', space=sflag, size = 0x4, scoped, tag = 'scoped memory for tpu_custom_call.1']
    #allocation7 [shape = 'u8[2048]{0}', space=vmem, size = 0x800, scoped, tag = 'input window, operand 2, single buffered']
    #allocation8 [shape = 'u8[524288]{0}', space=vmem, size = 0x80000, scoped, tag = 'input window, operand 3, single buffered']
    #allocation9 [shape = 's32[1]{0}', space=sflag, size = 0x4, scoped, tag = 'scoped memory for tpu_custom_call.1']
    #allocation10 [shape = 'u8[2048]{0}', space=vmem, size = 0x800, scoped, tag = 'input window, operand 4, single buffered']
    #allocation11 [shape = 'u8[524288]{0}', space=vmem, size = 0x80000, scoped, tag = 'input window, operand 5, single buffered']
    #allocation12 [shape = 's32[1]{0}', space=sflag, size = 0x4, scoped, tag = 'scoped memory for tpu_custom_call.1']
    #allocation13 [shape = 'u8[131072]{0}', space=vmem, size = 0x20000, scoped, tag = 'input window, operand 7, single buffered']
    #allocation14 [shape = 'u8[16384]{0}', space=vmem, size = 0x4000, scoped, tag = 'output window, operand 0']
    %14 = vsyncpa [#allocation3], 0
    %s15 = scalar_lea.sflag [#allocation3], 1
    %16 = vsyncpa %s15, 0
    %17 = vsyncpa [#allocation6], 0
    %18 = vsyncpa [#allocation9], 0
    %19 = vsyncpa [#allocation12], 0
    %20 = vsyncpa [#allocation4], 0
    %s21 = scalar_lea.sflag [#allocation4], 1
    %22 = vsyncpa %s21, 0
    loop: start=0, step=1, limit=4
    $region2: #{tpu_custom_call.1} parent=1 // loop_pre_header
      _
    $region3: #{tpu_custom_call.1} parent=1 // loop_header
      %s24 = sphi 0, %s28
      %p25 = scmp.ge.s32.totalorder %s24, 4
      %s34 = sphi 0, %s36
      %s37 = sphi 0, %s34
      %s38 = sphi 0, %s37
      %s54 = sphi 0, %s38
      %s58 = sphi 0, %s58
      %s60 = sphi 0, %s58
      %s61 = sphi 0, %s60
      %s75 = sphi 0, %s61
      %s79 = sphi 0, %s79
      %s81 = sphi 0, %s79
      %s82 = sphi 0, %s81
      %s96 = sphi 0, %s82
      %s100 = sphi 0, %s100
      %s102 = sphi 0, %s100
      %s103 = sphi 0, %s102
      %s117 = sphi 0, %s103
      %s121 = sphi 0, %s121
      %s123 = sphi 0, %s121
      %s124 = sphi 0, %s123
      %s138 = sphi 0, %s124
      %s142 = sphi 0, %s142
      %s144 = sphi 0, %s142
      %s145 = sphi 0, %s144
      %s159 = sphi 0, %s145
      %s163 = sphi 0, %s163
      %s165 = sphi 0, %s163
      %s166 = sphi 0, %s165
      %s180 = sphi 0, %s166
      %s184 = sphi 0, %s184
      %s186 = sphi 0, %s184
      %s187 = sphi 0, %s186
      %s201 = sphi 0, %s187
      %s205 = sphi 0, %s205
      %s207 = sphi 0, %s205
      %s208 = sphi 0, %s207
      %s222 = sphi 0, %s208
      %s228 = sphi 0, %s230
      %s231 = sphi 0, %s228
      %s232 = sphi 0, %s231
      %s248 = sphi 0, %s232
    $region4: #{tpu_custom_call.1} parent=1 // loop_header_branch
      %27 = sbr.rel (%p25) target = $region8
    $region5: #{tpu_custom_call.1} parent=1 // loop_body
      %s29 = ssub.s32 %s24, 1
      %s30 = ssub.s32 %s24, 2
      %s31 = sadd.s32 %s24, 1
      %s32 = ssub.s32 %s24, %s31
      %p33 = scmp.eq.s32.totalorder %s32, 0
      %s35 = sadd.s32 %s34, 1
      %s36 = scalar_select %p33, %s34, %s35
      %p39 = pneg %p33
      %p40 = scmp.eq.s32.totalorder %s24, 1
      %p41 = por %p39, %p40
      %p42 = scmp.ne.s32.totalorder %s34, %s37
      %p43 = scmp.eq.s32.totalorder %s24, 0
      %p44 = por %p42, %p43
      %p45 = scmp.ne.s32.totalorder %s34, %s37
      %p46 = scmp.eq.s32.totalorder %s29, 1
      %p47 = por %p45, %p46
      %p48 = scmp.ne.s32.totalorder %s37, %s38
      %p49 = scmp.eq.s32.totalorder %s29, 0
      %p50 = por %p48, %p49
      %p51 = scmp.ne.s32.totalorder %s37, %s38
      %p52 = scmp.eq.s32.totalorder %s30, 1
      %p53 = por %p51, %p52
      %p55 = scmp.ne.s32.totalorder %s38, %s54
      %p56 = scmp.eq.s32.totalorder %s30, 0
      %p57 = por %p55, %p56
      %s59 = sadd.s32 %s58, 1
      %p62 = scmp.eq.s32.totalorder %s24, 1
      %p63 = scmp.ne.s32.totalorder %s58, %s60
      %p64 = scmp.eq.s32.totalorder %s24, 0
      %p65 = por %p63, %p64
      %p66 = scmp.ne.s32.totalorder %s58, %s60
      %p67 = scmp.eq.s32.totalorder %s29, 1
      %p68 = por %p66, %p67
      %p69 = scmp.ne.s32.totalorder %s60, %s61
      %p70 = scmp.eq.s32.totalorder %s29, 0
      %p71 = por %p69, %p70
      %p72 = scmp.ne.s32.totalorder %s60, %s61
      %p73 = scmp.eq.s32.totalorder %s30, 1
      %p74 = por %p72, %p73
      %p76 = scmp.ne.s32.totalorder %s61, %s75
      %p77 = scmp.eq.s32.totalorder %s30, 0
      %p78 = por %p76, %p77
      %s80 = sadd.s32 %s79, 1
      %p83 = scmp.eq.s32.totalorder %s24, 1
      %p84 = scmp.ne.s32.totalorder %s79, %s81
      %p85 = scmp.eq.s32.totalorder %s24, 0
      %p86 = por %p84, %p85
      %p87 = scmp.ne.s32.totalorder %s79, %s81
      %p88 = scmp.eq.s32.totalorder %s29, 1
      %p89 = por %p87, %p88
      %p90 = scmp.ne.s32.totalorder %s81, %s82
      %p91 = scmp.eq.s32.totalorder %s29, 0
      %p92 = por %p90, %p91
      %p93 = scmp.ne.s32.totalorder %s81, %s82
      %p94 = scmp.eq.s32.totalorder %s30, 1
      %p95 = por %p93, %p94
      %p97 = scmp.ne.s32.totalorder %s82, %s96
      %p98 = scmp.eq.s32.totalorder %s30, 0
      %p99 = por %p97, %p98
      %s101 = sadd.s32 %s100, 1
      %p104 = scmp.eq.s32.totalorder %s24, 1
      %p105 = scmp.ne.s32.totalorder %s100, %s102
      %p106 = scmp.eq.s32.totalorder %s24, 0
      %p107 = por %p105, %p106
      %p108 = scmp.ne.s32.totalorder %s100, %s102
      %p109 = scmp.eq.s32.totalorder %s29, 1
      %p110 = por %p108, %p109
      %p111 = scmp.ne.s32.totalorder %s102, %s103
      %p112 = scmp.eq.s32.totalorder %s29, 0
      %p113 = por %p111, %p112
      %p114 = scmp.ne.s32.totalorder %s102, %s103
      %p115 = scmp.eq.s32.totalorder %s30, 1
      %p116 = por %p114, %p115
      %p118 = scmp.ne.s32.totalorder %s103, %s117
      %p119 = scmp.eq.s32.totalorder %s30, 0
      %p120 = por %p118, %p119
      %s122 = sadd.s32 %s121, 1
      %p125 = scmp.eq.s32.totalorder %s24, 1
      %p126 = scmp.ne.s32.totalorder %s121, %s123
      %p127 = scmp.eq.s32.totalorder %s24, 0
      %p128 = por %p126, %p127
      %p129 = scmp.ne.s32.totalorder %s121, %s123
      %p130 = scmp.eq.s32.totalorder %s29, 1
      %p131 = por %p129, %p130
      %p132 = scmp.ne.s32.totalorder %s123, %s124
      %p133 = scmp.eq.s32.totalorder %s29, 0
      %p134 = por %p132, %p133
      %p135 = scmp.ne.s32.totalorder %s123, %s124
      %p136 = scmp.eq.s32.totalorder %s30, 1
      %p137 = por %p135, %p136
      %p139 = scmp.ne.s32.totalorder %s124, %s138
      %p140 = scmp.eq.s32.totalorder %s30, 0
      %p141 = por %p139, %p140
      %s143 = sadd.s32 %s142, 1
      %p146 = scmp.eq.s32.totalorder %s24, 1
      %p147 = scmp.ne.s32.totalorder %s142, %s144
      %p148 = scmp.eq.s32.totalorder %s24, 0
      %p149 = por %p147, %p148
      %p150 = scmp.ne.s32.totalorder %s142, %s144
      %p151 = scmp.eq.s32.totalorder %s29, 1
      %p152 = por %p150, %p151
      %p153 = scmp.ne.s32.totalorder %s144, %s145
      %p154 = scmp.eq.s32.totalorder %s29, 0
      %p155 = por %p153, %p154
      %p156 = scmp.ne.s32.totalorder %s144, %s145
      %p157 = scmp.eq.s32.totalorder %s30, 1
      %p158 = por %p156, %p157
      %p160 = scmp.ne.s32.totalorder %s145, %s159
      %p161 = scmp.eq.s32.totalorder %s30, 0
      %p162 = por %p160, %p161
      %s164 = sadd.s32 %s163, 1
      %p167 = scmp.eq.s32.totalorder %s24, 1
      %p168 = scmp.ne.s32.totalorder %s163, %s165
      %p169 = scmp.eq.s32.totalorder %s24, 0
      %p170 = por %p168, %p169
      %p171 = scmp.ne.s32.totalorder %s163, %s165
      %p172 = scmp.eq.s32.totalorder %s29, 1
      %p173 = por %p171, %p172
      %p174 = scmp.ne.s32.totalorder %s165, %s166
      %p175 = scmp.eq.s32.totalorder %s29, 0
      %p176 = por %p174, %p175
      %p177 = scmp.ne.s32.totalorder %s165, %s166
      %p178 = scmp.eq.s32.totalorder %s30, 1
      %p179 = por %p177, %p178
      %p181 = scmp.ne.s32.totalorder %s166, %s180
      %p182 = scmp.eq.s32.totalorder %s30, 0
      %p183 = por %p181, %p182
      %s185 = sadd.s32 %s184, 1
      %p188 = scmp.eq.s32.totalorder %s24, 1
      %p189 = scmp.ne.s32.totalorder %s184, %s186
      %p190 = scmp.eq.s32.totalorder %s24, 0
      %p191 = por %p189, %p190
      %p192 = scmp.ne.s32.totalorder %s184, %s186
      %p193 = scmp.eq.s32.totalorder %s29, 1
      %p194 = por %p192, %p193
      %p195 = scmp.ne.s32.totalorder %s186, %s187
      %p196 = scmp.eq.s32.totalorder %s29, 0
      %p197 = por %p195, %p196
      %p198 = scmp.ne.s32.totalorder %s186, %s187
      %p199 = scmp.eq.s32.totalorder %s30, 1
      %p200 = por %p198, %p199
      %p202 = scmp.ne.s32.totalorder %s187, %s201
      %p203 = scmp.eq.s32.totalorder %s30, 0
      %p204 = por %p202, %p203
      %s206 = sadd.s32 %s205, 1
      %p209 = scmp.eq.s32.totalorder %s24, 1
      %p210 = scmp.ne.s32.totalorder %s205, %s207
      %p211 = scmp.eq.s32.totalorder %s24, 0
      %p212 = por %p210, %p211
      %p213 = scmp.ne.s32.totalorder %s205, %s207
      %p214 = scmp.eq.s32.totalorder %s29, 1
      %p215 = por %p213, %p214
      %p216 = scmp.ne.s32.totalorder %s207, %s208
      %p217 = scmp.eq.s32.totalorder %s29, 0
      %p218 = por %p216, %p217
      %p219 = scmp.ne.s32.totalorder %s207, %s208
      %p220 = scmp.eq.s32.totalorder %s30, 1
      %p221 = por %p219, %p220
      %p223 = scmp.ne.s32.totalorder %s208, %s222
      %p224 = scmp.eq.s32.totalorder %s30, 0
      %p225 = por %p223, %p224
      %s226 = ssub.s32 %s24, %s31
      %p227 = scmp.eq.s32.totalorder %s226, 0
      %s229 = sadd.s32 %s228, 1
      %s230 = scalar_select %p227, %s228, %s229
      %p233 = pneg %p227
      %p234 = scmp.eq.s32.totalorder %s24, 1
      %p235 = por %p233, %p234
      %p236 = scmp.ne.s32.totalorder %s228, %s231
      %p237 = scmp.eq.s32.totalorder %s24, 0
      %p238 = por %p236, %p237
      %p239 = scmp.ne.s32.totalorder %s228, %s231
      %p240 = scmp.eq.s32.totalorder %s29, 1
      %p241 = por %p239, %p240
      %p242 = scmp.ne.s32.totalorder %s231, %s232
      %p243 = scmp.eq.s32.totalorder %s29, 0
      %p244 = por %p242, %p243
      %p245 = scmp.ne.s32.totalorder %s231, %s232
      %p246 = scmp.eq.s32.totalorder %s30, 1
      %p247 = por %p245, %p246
      %p249 = scmp.ne.s32.totalorder %s232, %s248
      %p250 = scmp.eq.s32.totalorder %s30, 0
      %p251 = por %p249, %p250
      %p252 = scmp.le.s32.totalorder 1, %s24
      %p253 = scmp.lt.s32.totalorder %s24, 3
      %p254 = pnand %p252, %p253
      %p255 = pneg %p254
      // Predicated region
      $region9: #{tpu_custom_call.1} parent=5 // pred_check
        _
      $region10: #{tpu_custom_call.1} parent=5 // pred_check_branch
        %257 = sbr.rel (%p254) target = $region12
      $region11: #{tpu_custom_call.1} parent=5 // pred_region
        %s258 = ssub.s32 %s24, 1
        // Predicated region
        $region13: #{tpu_custom_call.1} parent=11 // pred_check
          %p259 = pneg %p71
        $region14: #{tpu_custom_call.1} parent=11 // pred_check_branch
          %261 = sbr.rel (%p259) target = $region16
        $region15: #{tpu_custom_call.1} parent=11 // pred_region
          %263 = vsyncadd [#allocation6], 0
          %s264 = sshll.u32 %s1, 4
          %s265 = int_to_ptr.hbm [resolvable:$true] %s264
          %s266 = sshll.u32 [#allocation5], 4
          %s267 = int_to_ptr.vmem [resolvable:$true] %s266
          %272 = dma.hbm_to_vmem [thread:$0]  %s265, 28672, %s267, [#allocation6], 256, 256, 16
        $region16: #{tpu_custom_call.1} parent=11 // pred_fallthru
          _
        // Predicated region
        $region17: #{tpu_custom_call.1} parent=11 // pred_check
          %p273 = pneg %p92
        $region18: #{tpu_custom_call.1} parent=11 // pred_check_branch
          %275 = sbr.rel (%p273) target = $region20
        $region19: #{tpu_custom_call.1} parent=11 // pred_region
          %277 = vsyncadd [#allocation6], 0
          %s279 = sshll.u32 %s2, 4
          %s280 = int_to_ptr.hbm [resolvable:$true] %s279
          %s281 = sshll.u32 [#allocation7], 4
          %s282 = int_to_ptr.vmem [resolvable:$true] %s281
          %284 = dma.hbm_to_vmem [thread:$0]  %s280, 64, %s282, [#allocation6]
        $region20: #{tpu_custom_call.1} parent=11 // pred_fallthru
          _
        // Predicated region
        $region21: #{tpu_custom_call.1} parent=11 // pred_check
          %p285 = pneg %p113
        $region22: #{tpu_custom_call.1} parent=11 // pred_check_branch
          %287 = sbr.rel (%p285) target = $region24
        $region23: #{tpu_custom_call.1} parent=11 // pred_region
          %289 = vsyncadd [#allocation9], 0
          %s290 = sshll.u32 %s3, 4
          %s291 = int_to_ptr.hbm [resolvable:$true] %s290
          %s292 = sshll.u32 [#allocation8], 4
          %s293 = int_to_ptr.vmem [resolvable:$true] %s292
          %298 = dma.hbm_to_vmem [thread:$0]  %s291, 16384, %s293, [#allocation9], 256, 256, 16
        $region24: #{tpu_custom_call.1} parent=11 // pred_fallthru
          _
        // Predicated region
        $region25: #{tpu_custom_call.1} parent=11 // pred_check
          %p299 = pneg %p134
        $region26: #{tpu_custom_call.1} parent=11 // pred_check_branch
          %301 = sbr.rel (%p299) target = $region28
        $region27: #{tpu_custom_call.1} parent=11 // pred_region
          %303 = vsyncadd [#allocation9], 0
          %s305 = sshll.u32 %s4, 4
          %s306 = int_to_ptr.hbm [resolvable:$true] %s305
          %s307 = sshll.u32 [#allocation10], 4
          %s308 = int_to_ptr.vmem [resolvable:$true] %s307
          %310 = dma.hbm_to_vmem [thread:$0]  %s306, 64, %s308, [#allocation9]
        $region28: #{tpu_custom_call.1} parent=11 // pred_fallthru
          _
        // Predicated region
        $region29: #{tpu_custom_call.1} parent=11 // pred_check
          %p311 = pneg %p155
        $region30: #{tpu_custom_call.1} parent=11 // pred_check_branch
          %313 = sbr.rel (%p311) target = $region32
        $region31: #{tpu_custom_call.1} parent=11 // pred_region
          %315 = vsyncadd [#allocation12], 0
          %s316 = sshll.u32 %s5, 4
          %s317 = int_to_ptr.hbm [resolvable:$true] %s316
          %s318 = sshll.u32 [#allocation11], 4
          %s319 = int_to_ptr.vmem [resolvable:$true] %s318
          %324 = dma.hbm_to_vmem [thread:$0]  %s317, 16384, %s319, [#allocation12], 256, 256, 16
        $region32: #{tpu_custom_call.1} parent=11 // pred_fallthru
          _
        // Predicated region
        $region33: #{tpu_custom_call.1} parent=11 // pred_check
          %p325 = pneg %p176
        $region34: #{tpu_custom_call.1} parent=11 // pred_check_branch
          %327 = sbr.rel (%p325) target = $region36
        $region35: #{tpu_custom_call.1} parent=11 // pred_region
          _
        $region36: #{tpu_custom_call.1} parent=11 // pred_fallthru
          _
        // Predicated region
        $region37: #{tpu_custom_call.1} parent=11 // pred_check
          %p328 = pneg %p197
        $region38: #{tpu_custom_call.1} parent=11 // pred_check_branch
          %330 = sbr.rel (%p328) target = $region40
        $region39: #{tpu_custom_call.1} parent=11 // pred_region
          %332 = vsyncadd [#allocation12], 0
          %s333 = sshll.u32 %s7, 4
          %s334 = int_to_ptr.hbm [resolvable:$true] %s333
          %s335 = sshll.u32 [#allocation13], 4
          %s336 = int_to_ptr.vmem [resolvable:$true] %s335
          %341 = dma.hbm_to_vmem [thread:$0]  %s334, 4096, %s336, [#allocation12], 64, 64, 4
        $region40: #{tpu_custom_call.1} parent=11 // pred_fallthru
          _
        // Predicated region
        $region41: #{tpu_custom_call.1} parent=11 // pred_check
          %p342 = pneg %p218
        $region42: #{tpu_custom_call.1} parent=11 // pred_check_branch
          %344 = sbr.rel (%p342) target = $region44
        $region43: #{tpu_custom_call.1} parent=11 // pred_region
          _
        $region44: #{tpu_custom_call.1} parent=11 // pred_fallthru
          _
      $region12: #{tpu_custom_call.1} parent=5 // pred_fallthru
        _
      %p345 = scmp.lt.s32.totalorder %s24, 2
      // Predicated region
      $region45: #{tpu_custom_call.1} parent=5 // pred_check
        %p346 = pneg %p345
      $region46: #{tpu_custom_call.1} parent=5 // pred_check_branch
        %348 = sbr.rel (%p346) target = $region48
      $region47: #{tpu_custom_call.1} parent=5 // pred_region
        // Predicated region
        $region49: #{tpu_custom_call.1} parent=47 // pred_check
          %p349 = pneg %p44
        $region50: #{tpu_custom_call.1} parent=47 // pred_check_branch
          %351 = sbr.rel (%p349) target = $region52
        $region51: #{tpu_custom_call.1} parent=47 // pred_region
          %s352 = sand.u32 %s34, 1
          %s353 = scalar_lea.sflag [#allocation3], %s352
          %s354 = sand.u32 %s34, 1
          %s355 = smul.addr %s354, 56
          %s356 = scalar_lea.vmem [#allocation2], %s355
          %s357 = smul.u32 2, %s24
          %359 = vsyncadd %s353, 0
          %s360 = smul.addr %s357, 7
          %s361 = smul.addr %s360, 4
          %s362 = scalar_lea.hbm %s0, %s361
          %s363 = sshll.u32 %s362, 4
          %s364 = int_to_ptr.hbm [resolvable:$true] %s363
          %s365 = sshll.u32 %s356, 4
          %s366 = int_to_ptr.vmem [resolvable:$true] %s365
          %371 = dma.hbm_to_vmem [thread:$0]  %s364, 896, %s366, %s353, 448, 448, 28
        $region52: #{tpu_custom_call.1} parent=47 // pred_fallthru
          _
      $region48: #{tpu_custom_call.1} parent=5 // pred_fallthru
        _
      %p372 = scmp.le.s32.totalorder 1, %s24
      %p373 = scmp.lt.s32.totalorder %s24, 3
      %p374 = pnand %p372, %p373
      %p375 = pneg %p374
      // Predicated region
      $region53: #{tpu_custom_call.1} parent=5 // pred_check
        _
      $region54: #{tpu_custom_call.1} parent=5 // pred_check_branch
        %377 = sbr.rel (%p374) target = $region56
      $region55: #{tpu_custom_call.1} parent=5 // pred_region
        %s378 = ssub.s32 %s24, 1
        %s379 = sand.u32 %s37, 1
        %s380 = scalar_lea.sflag [#allocation3], %s379
        %s381 = sand.u32 %s37, 1
        %s382 = smul.addr %s381, 56
        %s383 = scalar_lea.vmem [#allocation2], %s382
        // Predicated region
        $region57: #{tpu_custom_call.1} parent=55 // pred_check
          %p384 = pneg %p50
        $region58: #{tpu_custom_call.1} parent=55 // pred_check_branch
          %386 = sbr.rel (%p384) target = $region60
        $region59: #{tpu_custom_call.1} parent=55 // pred_region
          %388 = dma.done %s380, 896
        $region60: #{tpu_custom_call.1} parent=55 // pred_fallthru
          _
        // Predicated region
        $region61: #{tpu_custom_call.1} parent=55 // pred_check
          %p389 = pneg %p71
        $region62: #{tpu_custom_call.1} parent=55 // pred_check_branch
          %391 = sbr.rel (%p389) target = $region64
        $region63: #{tpu_custom_call.1} parent=55 // pred_region
          %393 = dma.done [#allocation6], 28672
        $region64: #{tpu_custom_call.1} parent=55 // pred_fallthru
          _
        // Predicated region
        $region65: #{tpu_custom_call.1} parent=55 // pred_check
          %p394 = pneg %p92
        $region66: #{tpu_custom_call.1} parent=55 // pred_check_branch
          %396 = sbr.rel (%p394) target = $region68
        $region67: #{tpu_custom_call.1} parent=55 // pred_region
          %398 = dma.done [#allocation6], 64
        $region68: #{tpu_custom_call.1} parent=55 // pred_fallthru
          _
        // Predicated region
        $region69: #{tpu_custom_call.1} parent=55 // pred_check
          %p399 = pneg %p113
        $region70: #{tpu_custom_call.1} parent=55 // pred_check_branch
          %401 = sbr.rel (%p399) target = $region72
        $region71: #{tpu_custom_call.1} parent=55 // pred_region
          %403 = dma.done [#allocation9], 16384
        $region72: #{tpu_custom_call.1} parent=55 // pred_fallthru
          _
        // Predicated region
        $region73: #{tpu_custom_call.1} parent=55 // pred_check
          %p404 = pneg %p134
        $region74: #{tpu_custom_call.1} parent=55 // pred_check_branch
          %406 = sbr.rel (%p404) target = $region76
        $region75: #{tpu_custom_call.1} parent=55 // pred_region
          %408 = dma.done [#allocation9], 64
        $region76: #{tpu_custom_call.1} parent=55 // pred_fallthru
          _
        // Predicated region
        $region77: #{tpu_custom_call.1} parent=55 // pred_check
          %p409 = pneg %p155
        $region78: #{tpu_custom_call.1} parent=55 // pred_check_branch
          %411 = sbr.rel (%p409) target = $region80
        $region79: #{tpu_custom_call.1} parent=55 // pred_region
          %413 = dma.done [#allocation12], 16384
        $region80: #{tpu_custom_call.1} parent=55 // pred_fallthru
          _
        // Predicated region
        $region81: #{tpu_custom_call.1} parent=55 // pred_check
          %p414 = pneg %p197
        $region82: #{tpu_custom_call.1} parent=55 // pred_check_branch
          %416 = sbr.rel (%p414) target = $region84
        $region83: #{tpu_custom_call.1} parent=55 // pred_region
          %418 = dma.done [#allocation12], 4096
        $region84: #{tpu_custom_call.1} parent=55 // pred_fallthru
          _
        %s419 = sand.u32 %s37, 1
        %s420 = scalar_lea.sflag [#allocation3], %s419
        %s421 = sand.u32 %s37, 1
        %s422 = smul.addr %s421, 56
        %s423 = scalar_lea.vmem [#allocation2], %s422
        %p424 = pneg %p50
        %p425 = pneg %p47
        %p426 = pneg %p71
        %p427 = pneg %p68
        %p428 = pneg %p92
        %p429 = pneg %p89
        %p430 = pneg %p113
        %p431 = pneg %p110
        %p432 = pneg %p134
        %p433 = pneg %p131
        %p434 = pneg %p155
        %p435 = pneg %p152
        %p436 = pneg %p176
        %p437 = pneg %p173
        %p438 = pneg %p197
        %p439 = pneg %p194
        %p440 = pneg %p218
        %p441 = pneg %p215
        %p442 = pneg %p244
        %p443 = pneg %p241
        %s444 = sand.u32 %s231, 1
        %s445 = scalar_lea.sflag [#allocation4], %s444
        %s446 = sand.u32 %s231, 1
        %s447 = smul.addr %s446, 16
        %s448 = scalar_lea.vmem [#allocation14], %s447
        %s449 = smul.u32 2, %s29
        %s450 = smul.u32 2, %s29
        %v451 = vld [vmem:[%s383] sm:$0xff]
        %v452 = vld [vmem:[%s383 + $0x8] sm:$0xff]
        %v453 = vld [vmem:[%s383 + $0x10] sm:$0xff]
        %v454 = vld [vmem:[%s383 + $0x18] sm:$0xf]
        %v455 = vld [vmem:[%s383 + $0x1c] sm:$0xff]
        %v456 = vld [vmem:[%s383 + $0x24] sm:$0xff]
        %v457 = vld [vmem:[%s383 + $0x2c] sm:$0xff]
        %v458 = vld [vmem:[%s383 + $0x34] sm:$0xf]
        %v459 = vld [vmem:[#allocation5] sm:$0xff]
        %v460 = vld [vmem:[#allocation5 + $0x8] sm:$0xff]
        %v461 = vld [vmem:[#allocation5 + $0x10] sm:$0xff]
        %v462 = vld [vmem:[#allocation5 + $0x18] sm:$0xff]
        %v463 = vld [vmem:[#allocation5 + $0x20] sm:$0xff]
        %v464 = vld [vmem:[#allocation5 + $0x28] sm:$0xff]
        %v465 = vld [vmem:[#allocation5 + $0x30] sm:$0xff]
        %v466 = vld [vmem:[#allocation5 + $0x38] sm:$0xff]
        %v467 = vld [vmem:[#allocation5 + $0x40] sm:$0xff]
        %v468 = vld [vmem:[#allocation5 + $0x48] sm:$0xff]
        %v469 = vld [vmem:[#allocation5 + $0x50] sm:$0xff]
        %v470 = vld [vmem:[#allocation5 + $0x58] sm:$0xff]
        %v471 = vld [vmem:[#allocation5 + $0x60] sm:$0xff]
        %v472 = vld [vmem:[#allocation5 + $0x68] sm:$0xff]
        %v473 = vld [vmem:[#allocation5 + $0x70] sm:$0xff]
        %v474 = vld [vmem:[#allocation5 + $0x78] sm:$0xff]
        %v475 = vld [vmem:[#allocation5 + $0x80] sm:$0xff]
        %v476 = vld [vmem:[#allocation5 + $0x88] sm:$0xff]
        %v477 = vld [vmem:[#allocation5 + $0x90] sm:$0xff]
        %v478 = vld [vmem:[#allocation5 + $0x98] sm:$0xff]
        %v479 = vld [vmem:[#allocation5 + $0xa0] sm:$0xff]
        %v480 = vld [vmem:[#allocation5 + $0xa8] sm:$0xff]
        %v481 = vld [vmem:[#allocation5 + $0xb0] sm:$0xff]
        %v482 = vld [vmem:[#allocation5 + $0xb8] sm:$0xff]
        %v483 = vld [vmem:[#allocation5 + $0xc0] sm:$0xff]
        %v484 = vld [vmem:[#allocation5 + $0xc8] sm:$0xff]
        %v485 = vld [vmem:[#allocation5 + $0xd0] sm:$0xff]
        %v486 = vld [vmem:[#allocation5 + $0xd8] sm:$0xff]
        %v487 = vld [vmem:[#allocation5 + $0xe0] sm:$0xff]
        %v488 = vld [vmem:[#allocation5 + $0xe8] sm:$0xff]
        %v489 = vld [vmem:[#allocation5 + $0xf0] sm:$0xff]
        %v490 = vld [vmem:[#allocation5 + $0xf8] sm:$0xff]
        %v491 = vld [vmem:[#allocation5 + $0x100] sm:$0xff]
        %v492 = vld [vmem:[#allocation5 + $0x108] sm:$0xff]
        %v493 = vld [vmem:[#allocation5 + $0x110] sm:$0xff]
        %v494 = vld [vmem:[#allocation5 + $0x118] sm:$0xff]
        %v495 = vld [vmem:[#allocation5 + $0x120] sm:$0xff]
        %v496 = vld [vmem:[#allocation5 + $0x128] sm:$0xff]
        %v497 = vld [vmem:[#allocation5 + $0x130] sm:$0xff]
        %v498 = vld [vmem:[#allocation5 + $0x138] sm:$0xff]
        %v499 = vld [vmem:[#allocation5 + $0x140] sm:$0xff]
        %v500 = vld [vmem:[#allocation5 + $0x148] sm:$0xff]
        %v501 = vld [vmem:[#allocation5 + $0x150] sm:$0xff]
        %v502 = vld [vmem:[#allocation5 + $0x158] sm:$0xff]
        %v503 = vld [vmem:[#allocation5 + $0x160] sm:$0xff]
        %v504 = vld [vmem:[#allocation5 + $0x168] sm:$0xff]
        %v505 = vld [vmem:[#allocation5 + $0x170] sm:$0xff]
        %v506 = vld [vmem:[#allocation5 + $0x178] sm:$0xff]
        %v507 = vld [vmem:[#allocation5 + $0x180] sm:$0xff]
        %v508 = vld [vmem:[#allocation5 + $0x188] sm:$0xff]
        %v509 = vld [vmem:[#allocation5 + $0x190] sm:$0xff]
        %v510 = vld [vmem:[#allocation5 + $0x198] sm:$0xff]
        %v511 = vld [vmem:[#allocation5 + $0x1a0] sm:$0xff]
        %v512 = vld [vmem:[#allocation5 + $0x1a8] sm:$0xff]
        %v513 = vld [vmem:[#allocation5 + $0x1b0] sm:$0xff]
        %v514 = vld [vmem:[#allocation5 + $0x1b8] sm:$0xff]
        %v515 = vld [vmem:[#allocation5 + $0x1c0] sm:$0xff]
        %v516 = vld [vmem:[#allocation5 + $0x1c8] sm:$0xff]
        %v517 = vld [vmem:[#allocation5 + $0x1d0] sm:$0xff]
        %v518 = vld [vmem:[#allocation5 + $0x1d8] sm:$0xff]
        %v519 = vld [vmem:[#allocation5 + $0x1e0] sm:$0xff]
        %v520 = vld [vmem:[#allocation5 + $0x1e8] sm:$0xff]
        %v521 = vld [vmem:[#allocation5 + $0x1f0] sm:$0xff]
        %v522 = vld [vmem:[#allocation5 + $0x1f8] sm:$0xff]
        %v523 = vld [vmem:[#allocation5 + $0x200] sm:$0xff]
        %v524 = vld [vmem:[#allocation5 + $0x208] sm:$0xff]
        %v525 = vld [vmem:[#allocation5 + $0x210] sm:$0xff]
        %v526 = vld [vmem:[#allocation5 + $0x218] sm:$0xff]
        %v527 = vld [vmem:[#allocation5 + $0x220] sm:$0xff]
        %v528 = vld [vmem:[#allocation5 + $0x228] sm:$0xff]
        %v529 = vld [vmem:[#allocation5 + $0x230] sm:$0xff]
        %v530 = vld [vmem:[#allocation5 + $0x238] sm:$0xff]
        %v531 = vld [vmem:[#allocation5 + $0x240] sm:$0xff]
        %v532 = vld [vmem:[#allocation5 + $0x248] sm:$0xff]
        %v533 = vld [vmem:[#allocation5 + $0x250] sm:$0xff]
        %v534 = vld [vmem:[#allocation5 + $0x258] sm:$0xff]
        %v535 = vld [vmem:[#allocation5 + $0x260] sm:$0xff]
        %v536 = vld [vmem:[#allocation5 + $0x268] sm:$0xff]
        %v537 = vld [vmem:[#allocation5 + $0x270] sm:$0xff]
        %v538 = vld [vmem:[#allocation5 + $0x278] sm:$0xff]
        %v539 = vld [vmem:[#allocation5 + $0x280] sm:$0xff]
        %v540 = vld [vmem:[#allocation5 + $0x288] sm:$0xff]
        %v541 = vld [vmem:[#allocation5 + $0x290] sm:$0xff]
        %v542 = vld [vmem:[#allocation5 + $0x298] sm:$0xff]
        %v543 = vld [vmem:[#allocation5 + $0x2a0] sm:$0xff]
        %v544 = vld [vmem:[#allocation5 + $0x2a8] sm:$0xff]
        %v545 = vld [vmem:[#allocation5 + $0x2b0] sm:$0xff]
        %v546 = vld [vmem:[#allocation5 + $0x2b8] sm:$0xff]
        %v547 = vld [vmem:[#allocation5 + $0x2c0] sm:$0xff]
        %v548 = vld [vmem:[#allocation5 + $0x2c8] sm:$0xff]
        %v549 = vld [vmem:[#allocation5 + $0x2d0] sm:$0xff]
        %v550 = vld [vmem:[#allocation5 + $0x2d8] sm:$0xff]
        %v551 = vld [vmem:[#allocation5 + $0x2e0] sm:$0xff]
        %v552 = vld [vmem:[#allocation5 + $0x2e8] sm:$0xff]
        %v553 = vld [vmem:[#allocation5 + $0x2f0] sm:$0xff]
        %v554 = vld [vmem:[#allocation5 + $0x2f8] sm:$0xff]
        %v555 = vld [vmem:[#allocation5 + $0x300] sm:$0xff]
        %v556 = vld [vmem:[#allocation5 + $0x308] sm:$0xff]
        %v557 = vld [vmem:[#allocation5 + $0x310] sm:$0xff]
        %v558 = vld [vmem:[#allocation5 + $0x318] sm:$0xff]
        %v559 = vld [vmem:[#allocation5 + $0x320] sm:$0xff]
        %v560 = vld [vmem:[#allocation5 + $0x328] sm:$0xff]
        %v561 = vld [vmem:[#allocation5 + $0x330] sm:$0xff]
        %v562 = vld [vmem:[#allocation5 + $0x338] sm:$0xff]
        %v563 = vld [vmem:[#allocation5 + $0x340] sm:$0xff]
        %v564 = vld [vmem:[#allocation5 + $0x348] sm:$0xff]
        %v565 = vld [vmem:[#allocation5 + $0x350] sm:$0xff]
        %v566 = vld [vmem:[#allocation5 + $0x358] sm:$0xff]
        %v567 = vld [vmem:[#allocation5 + $0x360] sm:$0xff]
        %v568 = vld [vmem:[#allocation5 + $0x368] sm:$0xff]
        %v569 = vld [vmem:[#allocation5 + $0x370] sm:$0xff]
        %v570 = vld [vmem:[#allocation5 + $0x378] sm:$0xff]
        %v571 = vld [vmem:[#allocation5 + $0x380] sm:$0xff]
        %v572 = vld [vmem:[#allocation5 + $0x388] sm:$0xff]
        %v573 = vld [vmem:[#allocation5 + $0x390] sm:$0xff]
        %v574 = vld [vmem:[#allocation5 + $0x398] sm:$0xff]
        %v575 = vld [vmem:[#allocation5 + $0x3a0] sm:$0xff]
        %v576 = vld [vmem:[#allocation5 + $0x3a8] sm:$0xff]
        %v577 = vld [vmem:[#allocation5 + $0x3b0] sm:$0xff]
        %v578 = vld [vmem:[#allocation5 + $0x3b8] sm:$0xff]
        %v579 = vld [vmem:[#allocation5 + $0x3c0] sm:$0xff]
        %v580 = vld [vmem:[#allocation5 + $0x3c8] sm:$0xff]
        %v581 = vld [vmem:[#allocation5 + $0x3d0] sm:$0xff]
        %v582 = vld [vmem:[#allocation5 + $0x3d8] sm:$0xff]
        %v583 = vld [vmem:[#allocation5 + $0x3e0] sm:$0xff]
        %v584 = vld [vmem:[#allocation5 + $0x3e8] sm:$0xff]
        %v585 = vld [vmem:[#allocation5 + $0x3f0] sm:$0xff]
        %v586 = vld [vmem:[#allocation5 + $0x3f8] sm:$0xff]
        %v587 = vld [vmem:[#allocation5 + $0x400] sm:$0xff]
        %v588 = vld [vmem:[#allocation5 + $0x408] sm:$0xff]
        %v589 = vld [vmem:[#allocation5 + $0x410] sm:$0xff]
        %v590 = vld [vmem:[#allocation5 + $0x418] sm:$0xff]
        %v591 = vld [vmem:[#allocation5 + $0x420] sm:$0xff]
        %v592 = vld [vmem:[#allocation5 + $0x428] sm:$0xff]
        %v593 = vld [vmem:[#allocation5 + $0x430] sm:$0xff]
        %v594 = vld [vmem:[#allocation5 + $0x438] sm:$0xff]
        %v595 = vld [vmem:[#allocation5 + $0x440] sm:$0xff]
        %v596 = vld [vmem:[#allocation5 + $0x448] sm:$0xff]
        %v597 = vld [vmem:[#allocation5 + $0x450] sm:$0xff]
        %v598 = vld [vmem:[#allocation5 + $0x458] sm:$0xff]
        %v599 = vld [vmem:[#allocation5 + $0x460] sm:$0xff]
        %v600 = vld [vmem:[#allocation5 + $0x468] sm:$0xff]
        %v601 = vld [vmem:[#allocation5 + $0x470] sm:$0xff]
        %v602 = vld [vmem:[#allocation5 + $0x478] sm:$0xff]
        %v603 = vld [vmem:[#allocation5 + $0x480] sm:$0xff]
        %v604 = vld [vmem:[#allocation5 + $0x488] sm:$0xff]
        %v605 = vld [vmem:[#allocation5 + $0x490] sm:$0xff]
        %v606 = vld [vmem:[#allocation5 + $0x498] sm:$0xff]
        %v607 = vld [vmem:[#allocation5 + $0x4a0] sm:$0xff]
        %v608 = vld [vmem:[#allocation5 + $0x4a8] sm:$0xff]
        %v609 = vld [vmem:[#allocation5 + $0x4b0] sm:$0xff]
        %v610 = vld [vmem:[#allocation5 + $0x4b8] sm:$0xff]
        %v611 = vld [vmem:[#allocation5 + $0x4c0] sm:$0xff]
        %v612 = vld [vmem:[#allocation5 + $0x4c8] sm:$0xff]
        %v613 = vld [vmem:[#allocation5 + $0x4d0] sm:$0xff]
        %v614 = vld [vmem:[#allocation5 + $0x4d8] sm:$0xff]
        %v615 = vld [vmem:[#allocation5 + $0x4e0] sm:$0xff]
        %v616 = vld [vmem:[#allocation5 + $0x4e8] sm:$0xff]
        %v617 = vld [vmem:[#allocation5 + $0x4f0] sm:$0xff]
        %v618 = vld [vmem:[#allocation5 + $0x4f8] sm:$0xff]
        %v619 = vld [vmem:[#allocation5 + $0x500] sm:$0xff]
        %v620 = vld [vmem:[#allocation5 + $0x508] sm:$0xff]
        %v621 = vld [vmem:[#allocation5 + $0x510] sm:$0xff]
        %v622 = vld [vmem:[#allocation5 + $0x518] sm:$0xff]
        %v623 = vld [vmem:[#allocation5 + $0x520] sm:$0xff]
        %v624 = vld [vmem:[#allocation5 + $0x528] sm:$0xff]
        %v625 = vld [vmem:[#allocation5 + $0x530] sm:$0xff]
        %v626 = vld [vmem:[#allocation5 + $0x538] sm:$0xff]
        %v627 = vld [vmem:[#allocation5 + $0x540] sm:$0xff]
        %v628 = vld [vmem:[#allocation5 + $0x548] sm:$0xff]
        %v629 = vld [vmem:[#allocation5 + $0x550] sm:$0xff]
        %v630 = vld [vmem:[#allocation5 + $0x558] sm:$0xff]
        %v631 = vld [vmem:[#allocation5 + $0x560] sm:$0xff]
        %v632 = vld [vmem:[#allocation5 + $0x568] sm:$0xff]
        %v633 = vld [vmem:[#allocation5 + $0x570] sm:$0xff]
        %v634 = vld [vmem:[#allocation5 + $0x578] sm:$0xff]
        %v635 = vld [vmem:[#allocation5 + $0x580] sm:$0xff]
        %v636 = vld [vmem:[#allocation5 + $0x588] sm:$0xff]
        %v637 = vld [vmem:[#allocation5 + $0x590] sm:$0xff]
        %v638 = vld [vmem:[#allocation5 + $0x598] sm:$0xff]
        %v639 = vld [vmem:[#allocation5 + $0x5a0] sm:$0xff]
        %v640 = vld [vmem:[#allocation5 + $0x5a8] sm:$0xff]
        %v641 = vld [vmem:[#allocation5 + $0x5b0] sm:$0xff]
        %v642 = vld [vmem:[#allocation5 + $0x5b8] sm:$0xff]
        %v643 = vld [vmem:[#allocation5 + $0x5c0] sm:$0xff]
        %v644 = vld [vmem:[#allocation5 + $0x5c8] sm:$0xff]
        %v645 = vld [vmem:[#allocation5 + $0x5d0] sm:$0xff]
        %v646 = vld [vmem:[#allocation5 + $0x5d8] sm:$0xff]
        %v647 = vld [vmem:[#allocation5 + $0x5e0] sm:$0xff]
        %v648 = vld [vmem:[#allocation5 + $0x5e8] sm:$0xff]
        %v649 = vld [vmem:[#allocation5 + $0x5f0] sm:$0xff]
        %v650 = vld [vmem:[#allocation5 + $0x5f8] sm:$0xff]
        %v651 = vld [vmem:[#allocation5 + $0x600] sm:$0xff]
        %v652 = vld [vmem:[#allocation5 + $0x608] sm:$0xff]
        %v653 = vld [vmem:[#allocation5 + $0x610] sm:$0xff]
        %v654 = vld [vmem:[#allocation5 + $0x618] sm:$0xff]
        %v655 = vld [vmem:[#allocation5 + $0x620] sm:$0xff]
        %v656 = vld [vmem:[#allocation5 + $0x628] sm:$0xff]
        %v657 = vld [vmem:[#allocation5 + $0x630] sm:$0xff]
        %v658 = vld [vmem:[#allocation5 + $0x638] sm:$0xff]
        %v659 = vld [vmem:[#allocation5 + $0x640] sm:$0xff]
        %v660 = vld [vmem:[#allocation5 + $0x648] sm:$0xff]
        %v661 = vld [vmem:[#allocation5 + $0x650] sm:$0xff]
        %v662 = vld [vmem:[#allocation5 + $0x658] sm:$0xff]
        %v663 = vld [vmem:[#allocation5 + $0x660] sm:$0xff]
        %v664 = vld [vmem:[#allocation5 + $0x668] sm:$0xff]
        %v665 = vld [vmem:[#allocation5 + $0x670] sm:$0xff]
        %v666 = vld [vmem:[#allocation5 + $0x678] sm:$0xff]
        %v667 = vld [vmem:[#allocation5 + $0x680] sm:$0xff]
        %v668 = vld [vmem:[#allocation5 + $0x688] sm:$0xff]
        %v669 = vld [vmem:[#allocation5 + $0x690] sm:$0xff]
        %v670 = vld [vmem:[#allocation5 + $0x698] sm:$0xff]
        %v671 = vld [vmem:[#allocation5 + $0x6a0] sm:$0xff]
        %v672 = vld [vmem:[#allocation5 + $0x6a8] sm:$0xff]
        %v673 = vld [vmem:[#allocation5 + $0x6b0] sm:$0xff]
        %v674 = vld [vmem:[#allocation5 + $0x6b8] sm:$0xff]
        %v675 = vld [vmem:[#allocation5 + $0x6c0] sm:$0xff]
        %v676 = vld [vmem:[#allocation5 + $0x6c8] sm:$0xff]
        %v677 = vld [vmem:[#allocation5 + $0x6d0] sm:$0xff]
        %v678 = vld [vmem:[#allocation5 + $0x6d8] sm:$0xff]
        %v679 = vld [vmem:[#allocation5 + $0x6e0] sm:$0xff]
        %v680 = vld [vmem:[#allocation5 + $0x6e8] sm:$0xff]
        %v681 = vld [vmem:[#allocation5 + $0x6f0] sm:$0xff]
        %v682 = vld [vmem:[#allocation5 + $0x6f8] sm:$0xff]
        %v683 = vld [vmem:[#allocation7] sm:$0xf]
        %v685 = vperm.slane %v683, 0
        %v686 = vperm.slane %v683, 1
        %v687 = vperm.slane %v683, 2
        %v688 = vperm.slane %v683, 3
        %v701 = vunpack.c.l.b16 %v451
        %v702 = vunpack.c.h.b16 %v451
        %v703 = vunpack.c.l.b16 %v452
        %v704 = vunpack.c.h.b16 %v452
        %v705 = vunpack.c.l.b16 %v453
        %v706 = vunpack.c.h.b16 %v453
        %v707 = vunpack.c.l.b16 %v454
        %v708 = vunpack.c.l.b16 %v455
        %v709 = vunpack.c.h.b16 %v455
        %v710 = vunpack.c.l.b16 %v456
        %v711 = vunpack.c.h.b16 %v456
        %v712 = vunpack.c.l.b16 %v457
        %v713 = vunpack.c.h.b16 %v457
        %v714 = vunpack.c.l.b16 %v458
        %v715 = vpack.c.b16 %v708, %v701
        %v716 = vpack.c.b16 %v709, %v702
        %v717 = vpack.c.b16 %v710, %v703
        %v718 = vpack.c.b16 %v711, %v704
        %v719 = vpack.c.b16 %v712, %v705
        %v720 = vpack.c.b16 %v713, %v706
        %v721 = vpack.c.b16 %v714, %v707
        %v953 = vunpack.c.l.b16 %v459
        %v954 = vunpack.c.h.b16 %v459
        %v955 = vunpack.c.l.b16 %v460
        %v956 = vunpack.c.h.b16 %v460
        %v957 = vunpack.c.l.b16 %v461
        %v958 = vunpack.c.h.b16 %v461
        %v959 = vunpack.c.l.b16 %v462
        %v960 = vunpack.c.h.b16 %v462
        %v961 = vunpack.c.l.b16 %v463
        %v962 = vunpack.c.h.b16 %v463
        %v963 = vunpack.c.l.b16 %v464
        %v964 = vunpack.c.h.b16 %v464
        %v965 = vunpack.c.l.b16 %v465
        %v966 = vunpack.c.h.b16 %v465
        %v967 = vunpack.c.l.b16 %v466
        %v968 = vunpack.c.h.b16 %v466
        %v969 = vunpack.c.l.b16 %v467
        %v970 = vunpack.c.h.b16 %v467
        %v971 = vunpack.c.l.b16 %v468
        %v972 = vunpack.c.h.b16 %v468
        %v973 = vunpack.c.l.b16 %v469
        %v974 = vunpack.c.h.b16 %v469
        %v975 = vunpack.c.l.b16 %v470
        %v976 = vunpack.c.h.b16 %v470
        %v977 = vunpack.c.l.b16 %v471
        %v978 = vunpack.c.h.b16 %v471
        %v979 = vunpack.c.l.b16 %v472
        %v980 = vunpack.c.h.b16 %v472
        %v981 = vunpack.c.l.b16 %v473
        %v982 = vunpack.c.h.b16 %v473
        %v983 = vunpack.c.l.b16 %v474
        %v984 = vunpack.c.h.b16 %v474
        %v985 = vunpack.c.l.b16 %v475
        %v986 = vunpack.c.h.b16 %v475
        %v987 = vunpack.c.l.b16 %v476
        %v988 = vunpack.c.h.b16 %v476
        %v989 = vunpack.c.l.b16 %v477
        %v990 = vunpack.c.h.b16 %v477
        %v991 = vunpack.c.l.b16 %v478
        %v992 = vunpack.c.h.b16 %v478
        %v993 = vunpack.c.l.b16 %v479
        %v994 = vunpack.c.h.b16 %v479
        %v995 = vunpack.c.l.b16 %v480
        %v996 = vunpack.c.h.b16 %v480
        %v997 = vunpack.c.l.b16 %v481
        %v998 = vunpack.c.h.b16 %v481
        %v999 = vunpack.c.l.b16 %v482
        %v1000 = vunpack.c.h.b16 %v482
        %v1001 = vunpack.c.l.b16 %v483
        %v1002 = vunpack.c.h.b16 %v483
        %v1003 = vunpack.c.l.b16 %v484
        %v1004 = vunpack.c.h.b16 %v484
        %v1005 = vunpack.c.l.b16 %v485
        %v1006 = vunpack.c.h.b16 %v485
        %v1007 = vunpack.c.l.b16 %v486
        %v1008 = vunpack.c.h.b16 %v486
        %v1009 = vunpack.c.l.b16 %v487
        %v1010 = vunpack.c.h.b16 %v487
        %v1011 = vunpack.c.l.b16 %v488
        %v1012 = vunpack.c.h.b16 %v488
        %v1013 = vunpack.c.l.b16 %v489
        %v1014 = vunpack.c.h.b16 %v489
        %v1015 = vunpack.c.l.b16 %v490
        %v1016 = vunpack.c.h.b16 %v490
        %v1017 = vunpack.c.l.b16 %v491
        %v1018 = vunpack.c.h.b16 %v491
        %v1019 = vunpack.c.l.b16 %v492
        %v1020 = vunpack.c.h.b16 %v492
        %v1021 = vunpack.c.l.b16 %v493
        %v1022 = vunpack.c.h.b16 %v493
        %v1023 = vunpack.c.l.b16 %v494
        %v1024 = vunpack.c.h.b16 %v494
        %v1025 = vunpack.c.l.b16 %v495
        %v1026 = vunpack.c.h.b16 %v495
        %v1027 = vunpack.c.l.b16 %v496
        %v1028 = vunpack.c.h.b16 %v496
        %v1029 = vunpack.c.l.b16 %v497
        %v1030 = vunpack.c.h.b16 %v497
        %v1031 = vunpack.c.l.b16 %v498
        %v1032 = vunpack.c.h.b16 %v498
        %v1033 = vunpack.c.l.b16 %v499
        %v1034 = vunpack.c.h.b16 %v499
        %v1035 = vunpack.c.l.b16 %v500
        %v1036 = vunpack.c.h.b16 %v500
        %v1037 = vunpack.c.l.b16 %v501
        %v1038 = vunpack.c.h.b16 %v501
        %v1039 = vunpack.c.l.b16 %v502
        %v1040 = vunpack.c.h.b16 %v502
        %v1041 = vunpack.c.l.b16 %v503
        %v1042 = vunpack.c.h.b16 %v503
        %v1043 = vunpack.c.l.b16 %v504
        %v1044 = vunpack.c.h.b16 %v504
        %v1045 = vunpack.c.l.b16 %v505
        %v1046 = vunpack.c.h.b16 %v505
        %v1047 = vunpack.c.l.b16 %v506
        %v1048 = vunpack.c.h.b16 %v506
        %v1049 = vunpack.c.l.b16 %v507
        %v1050 = vunpack.c.h.b16 %v507
        %v1051 = vunpack.c.l.b16 %v508
        %v1052 = vunpack.c.h.b16 %v508
        %v1053 = vunpack.c.l.b16 %v509
        %v1054 = vunpack.c.h.b16 %v509
        %v1055 = vunpack.c.l.b16 %v510
        %v1056 = vunpack.c.h.b16 %v510
        %v1057 = vunpack.c.l.b16 %v511
        %v1058 = vunpack.c.h.b16 %v511
        %v1059 = vunpack.c.l.b16 %v512
        %v1060 = vunpack.c.h.b16 %v512
        %v1061 = vunpack.c.l.b16 %v513
        %v1062 = vunpack.c.h.b16 %v513
        %v1063 = vunpack.c.l.b16 %v514
        %v1064 = vunpack.c.h.b16 %v514
        %v1065 = vunpack.c.l.b16 %v515
        %v1066 = vunpack.c.h.b16 %v515
        %v1067 = vunpack.c.l.b16 %v516
        %v1068 = vunpack.c.h.b16 %v516
        %v1069 = vunpack.c.l.b16 %v517
        %v1070 = vunpack.c.h.b16 %v517
        %v1071 = vunpack.c.l.b16 %v518
        %v1072 = vunpack.c.h.b16 %v518
        %v1073 = vunpack.c.l.b16 %v519
        %v1074 = vunpack.c.h.b16 %v519
        %v1075 = vunpack.c.l.b16 %v520
        %v1076 = vunpack.c.h.b16 %v520
        %v1077 = vunpack.c.l.b16 %v521
        %v1078 = vunpack.c.h.b16 %v521
        %v1079 = vunpack.c.l.b16 %v522
        %v1080 = vunpack.c.h.b16 %v522
        %v1081 = vunpack.c.l.b16 %v523
        %v1082 = vunpack.c.h.b16 %v523
        %v1083 = vunpack.c.l.b16 %v524
        %v1084 = vunpack.c.h.b16 %v524
        %v1085 = vunpack.c.l.b16 %v525
        %v1086 = vunpack.c.h.b16 %v525
        %v1087 = vunpack.c.l.b16 %v526
        %v1088 = vunpack.c.h.b16 %v526
        %v1089 = vunpack.c.l.b16 %v527
        %v1090 = vunpack.c.h.b16 %v527
        %v1091 = vunpack.c.l.b16 %v528
        %v1092 = vunpack.c.h.b16 %v528
        %v1093 = vunpack.c.l.b16 %v529
        %v1094 = vunpack.c.h.b16 %v529
        %v1095 = vunpack.c.l.b16 %v530
        %v1096 = vunpack.c.h.b16 %v530
        %v1097 = vunpack.c.l.b16 %v531
        %v1098 = vunpack.c.h.b16 %v531
        %v1099 = vunpack.c.l.b16 %v532
        %v1100 = vunpack.c.h.b16 %v532
        %v1101 = vunpack.c.l.b16 %v533
        %v1102 = vunpack.c.h.b16 %v533
        %v1103 = vunpack.c.l.b16 %v534
        %v1104 = vunpack.c.h.b16 %v534
        %v1105 = vunpack.c.l.b16 %v535
        %v1106 = vunpack.c.h.b16 %v535
        %v1107 = vunpack.c.l.b16 %v536
        %v1108 = vunpack.c.h.b16 %v536
        %v1109 = vunpack.c.l.b16 %v537
        %v1110 = vunpack.c.h.b16 %v537
        %v1111 = vunpack.c.l.b16 %v538
        %v1112 = vunpack.c.h.b16 %v538
        %v1113 = vunpack.c.l.b16 %v539
        %v1114 = vunpack.c.h.b16 %v539
        %v1115 = vunpack.c.l.b16 %v540
        %v1116 = vunpack.c.h.b16 %v540
        %v1117 = vunpack.c.l.b16 %v541
        %v1118 = vunpack.c.h.b16 %v541
        %v1119 = vunpack.c.l.b16 %v542
        %v1120 = vunpack.c.h.b16 %v542
        %v1121 = vunpack.c.l.b16 %v543
        %v1122 = vunpack.c.h.b16 %v543
        %v1123 = vunpack.c.l.b16 %v544
        %v1124 = vunpack.c.h.b16 %v544
        %v1125 = vunpack.c.l.b16 %v545
        %v1126 = vunpack.c.h.b16 %v545
        %v1127 = vunpack.c.l.b16 %v546
        %v1128 = vunpack.c.h.b16 %v546
        %v1129 = vunpack.c.l.b16 %v547
        %v1130 = vunpack.c.h.b16 %v547
        %v1131 = vunpack.c.l.b16 %v548
        %v1132 = vunpack.c.h.b16 %v548
        %v1133 = vunpack.c.l.b16 %v549
        %v1134 = vunpack.c.h.b16 %v549
        %v1135 = vunpack.c.l.b16 %v550
        %v1136 = vunpack.c.h.b16 %v550
        %v1137 = vunpack.c.l.b16 %v551
        %v1138 = vunpack.c.h.b16 %v551
        %v1139 = vunpack.c.l.b16 %v552
        %v1140 = vunpack.c.h.b16 %v552
        %v1141 = vunpack.c.l.b16 %v553
        %v1142 = vunpack.c.h.b16 %v553
        %v1143 = vunpack.c.l.b16 %v554
        %v1144 = vunpack.c.h.b16 %v554
        %v1145 = vunpack.c.l.b16 %v555
        %v1146 = vunpack.c.h.b16 %v555
        %v1147 = vunpack.c.l.b16 %v556
        %v1148 = vunpack.c.h.b16 %v556
        %v1149 = vunpack.c.l.b16 %v557
        %v1150 = vunpack.c.h.b16 %v557
        %v1151 = vunpack.c.l.b16 %v558
        %v1152 = vunpack.c.h.b16 %v558
        %v1153 = vunpack.c.l.b16 %v559
        %v1154 = vunpack.c.h.b16 %v559
        %v1155 = vunpack.c.l.b16 %v560
        %v1156 = vunpack.c.h.b16 %v560
        %v1157 = vunpack.c.l.b16 %v561
        %v1158 = vunpack.c.h.b16 %v561
        %v1159 = vunpack.c.l.b16 %v562
        %v1160 = vunpack.c.h.b16 %v562
        %v1161 = vunpack.c.l.b16 %v563
        %v1162 = vunpack.c.h.b16 %v563
        %v1163 = vunpack.c.l.b16 %v564
        %v1164 = vunpack.c.h.b16 %v564
        %v1165 = vunpack.c.l.b16 %v565
        %v1166 = vunpack.c.h.b16 %v565
        %v1167 = vunpack.c.l.b16 %v566
        %v1168 = vunpack.c.h.b16 %v566
        %v1169 = vunpack.c.l.b16 %v567
        %v1170 = vunpack.c.h.b16 %v567
        %v1171 = vunpack.c.l.b16 %v568
        %v1172 = vunpack.c.h.b16 %v568
        %v1173 = vunpack.c.l.b16 %v569
        %v1174 = vunpack.c.h.b16 %v569
        %v1175 = vunpack.c.l.b16 %v570
        %v1176 = vunpack.c.h.b16 %v570
        %v1177 = vunpack.c.l.b16 %v571
        %v1178 = vunpack.c.h.b16 %v571
        %v1179 = vunpack.c.l.b16 %v572
        %v1180 = vunpack.c.h.b16 %v572
        %v1181 = vunpack.c.l.b16 %v573
        %v1182 = vunpack.c.h.b16 %v573
        %v1183 = vunpack.c.l.b16 %v574
        %v1184 = vunpack.c.h.b16 %v574
        %v1185 = vunpack.c.l.b16 %v575
        %v1186 = vunpack.c.h.b16 %v575
        %v1187 = vunpack.c.l.b16 %v576
        %v1188 = vunpack.c.h.b16 %v576
        %v1189 = vunpack.c.l.b16 %v577
        %v1190 = vunpack.c.h.b16 %v577
        %v1191 = vunpack.c.l.b16 %v578
        %v1192 = vunpack.c.h.b16 %v578
        %v1193 = vunpack.c.l.b16 %v579
        %v1194 = vunpack.c.h.b16 %v579
        %v1195 = vunpack.c.l.b16 %v580
        %v1196 = vunpack.c.h.b16 %v580
        %v1197 = vunpack.c.l.b16 %v581
        %v1198 = vunpack.c.h.b16 %v581
        %v1199 = vunpack.c.l.b16 %v582
        %v1200 = vunpack.c.h.b16 %v582
        %v1201 = vunpack.c.l.b16 %v583
        %v1202 = vunpack.c.h.b16 %v583
        %v1203 = vunpack.c.l.b16 %v584
        %v1204 = vunpack.c.h.b16 %v584
        %v1205 = vunpack.c.l.b16 %v585
        %v1206 = vunpack.c.h.b16 %v585
        %v1207 = vunpack.c.l.b16 %v586
        %v1208 = vunpack.c.h.b16 %v586
        %v1209 = vunpack.c.l.b16 %v587
        %v1210 = vunpack.c.h.b16 %v587
        %v1211 = vunpack.c.l.b16 %v588
        %v1212 = vunpack.c.h.b16 %v588
        %v1213 = vunpack.c.l.b16 %v589
        %v1214 = vunpack.c.h.b16 %v589
        %v1215 = vunpack.c.l.b16 %v590
        %v1216 = vunpack.c.h.b16 %v590
        %v1217 = vunpack.c.l.b16 %v591
        %v1218 = vunpack.c.h.b16 %v591
        %v1219 = vunpack.c.l.b16 %v592
        %v1220 = vunpack.c.h.b16 %v592
        %v1221 = vunpack.c.l.b16 %v593
        %v1222 = vunpack.c.h.b16 %v593
        %v1223 = vunpack.c.l.b16 %v594
        %v1224 = vunpack.c.h.b16 %v594
        %v1225 = vunpack.c.l.b16 %v595
        %v1226 = vunpack.c.h.b16 %v595
        %v1227 = vunpack.c.l.b16 %v596
        %v1228 = vunpack.c.h.b16 %v596
        %v1229 = vunpack.c.l.b16 %v597
        %v1230 = vunpack.c.h.b16 %v597
        %v1231 = vunpack.c.l.b16 %v598
        %v1232 = vunpack.c.h.b16 %v598
        %v1233 = vunpack.c.l.b16 %v599
        %v1234 = vunpack.c.h.b16 %v599
        %v1235 = vunpack.c.l.b16 %v600
        %v1236 = vunpack.c.h.b16 %v600
        %v1237 = vunpack.c.l.b16 %v601
        %v1238 = vunpack.c.h.b16 %v601
        %v1239 = vunpack.c.l.b16 %v602
        %v1240 = vunpack.c.h.b16 %v602
        %v1241 = vunpack.c.l.b16 %v603
        %v1242 = vunpack.c.h.b16 %v603
        %v1243 = vunpack.c.l.b16 %v604
        %v1244 = vunpack.c.h.b16 %v604
        %v1245 = vunpack.c.l.b16 %v605
        %v1246 = vunpack.c.h.b16 %v605
        %v1247 = vunpack.c.l.b16 %v606
        %v1248 = vunpack.c.h.b16 %v606
        %v1249 = vunpack.c.l.b16 %v607
        %v1250 = vunpack.c.h.b16 %v607
        %v1251 = vunpack.c.l.b16 %v608
        %v1252 = vunpack.c.h.b16 %v608
        %v1253 = vunpack.c.l.b16 %v609
        %v1254 = vunpack.c.h.b16 %v609
        %v1255 = vunpack.c.l.b16 %v610
        %v1256 = vunpack.c.h.b16 %v610
        %v1257 = vunpack.c.l.b16 %v611
        %v1258 = vunpack.c.h.b16 %v611
        %v1259 = vunpack.c.l.b16 %v612
        %v1260 = vunpack.c.h.b16 %v612
        %v1261 = vunpack.c.l.b16 %v613
        %v1262 = vunpack.c.h.b16 %v613
        %v1263 = vunpack.c.l.b16 %v614
        %v1264 = vunpack.c.h.b16 %v614
        %v1265 = vunpack.c.l.b16 %v615
        %v1266 = vunpack.c.h.b16 %v615
        %v1267 = vunpack.c.l.b16 %v616
        %v1268 = vunpack.c.h.b16 %v616
        %v1269 = vunpack.c.l.b16 %v617
        %v1270 = vunpack.c.h.b16 %v617
        %v1271 = vunpack.c.l.b16 %v618
        %v1272 = vunpack.c.h.b16 %v618
        %v1273 = vunpack.c.l.b16 %v619
        %v1274 = vunpack.c.h.b16 %v619
        %v1275 = vunpack.c.l.b16 %v620
        %v1276 = vunpack.c.h.b16 %v620
        %v1277 = vunpack.c.l.b16 %v621
        %v1278 = vunpack.c.h.b16 %v621
        %v1279 = vunpack.c.l.b16 %v622
        %v1280 = vunpack.c.h.b16 %v622
        %v1281 = vunpack.c.l.b16 %v623
        %v1282 = vunpack.c.h.b16 %v623
        %v1283 = vunpack.c.l.b16 %v624
        %v1284 = vunpack.c.h.b16 %v624
        %v1285 = vunpack.c.l.b16 %v625
        %v1286 = vunpack.c.h.b16 %v625
        %v1287 = vunpack.c.l.b16 %v626
        %v1288 = vunpack.c.h.b16 %v626
        %v1289 = vunpack.c.l.b16 %v627
        %v1290 = vunpack.c.h.b16 %v627
        %v1291 = vunpack.c.l.b16 %v628
        %v1292 = vunpack.c.h.b16 %v628
        %v1293 = vunpack.c.l.b16 %v629
        %v1294 = vunpack.c.h.b16 %v629
        %v1295 = vunpack.c.l.b16 %v630
        %v1296 = vunpack.c.h.b16 %v630
        %v1297 = vunpack.c.l.b16 %v631
        %v1298 = vunpack.c.h.b16 %v631
        %v1299 = vunpack.c.l.b16 %v632
        %v1300 = vunpack.c.h.b16 %v632
        %v1301 = vunpack.c.l.b16 %v633
        %v1302 = vunpack.c.h.b16 %v633
        %v1303 = vunpack.c.l.b16 %v634
        %v1304 = vunpack.c.h.b16 %v634
        %v1305 = vunpack.c.l.b16 %v635
        %v1306 = vunpack.c.h.b16 %v635
        %v1307 = vunpack.c.l.b16 %v636
        %v1308 = vunpack.c.h.b16 %v636
        %v1309 = vunpack.c.l.b16 %v637
        %v1310 = vunpack.c.h.b16 %v637
        %v1311 = vunpack.c.l.b16 %v638
        %v1312 = vunpack.c.h.b16 %v638
        %v1313 = vunpack.c.l.b16 %v639
        %v1314 = vunpack.c.h.b16 %v639
        %v1315 = vunpack.c.l.b16 %v640
        %v1316 = vunpack.c.h.b16 %v640
        %v1317 = vunpack.c.l.b16 %v641
        %v1318 = vunpack.c.h.b16 %v641
        %v1319 = vunpack.c.l.b16 %v642
        %v1320 = vunpack.c.h.b16 %v642
        %v1321 = vunpack.c.l.b16 %v643
        %v1322 = vunpack.c.h.b16 %v643
        %v1323 = vunpack.c.l.b16 %v644
        %v1324 = vunpack.c.h.b16 %v644
        %v1325 = vunpack.c.l.b16 %v645
        %v1326 = vunpack.c.h.b16 %v645
        %v1327 = vunpack.c.l.b16 %v646
        %v1328 = vunpack.c.h.b16 %v646
        %v1329 = vunpack.c.l.b16 %v647
        %v1330 = vunpack.c.h.b16 %v647
        %v1331 = vunpack.c.l.b16 %v648
        %v1332 = vunpack.c.h.b16 %v648
        %v1333 = vunpack.c.l.b16 %v649
        %v1334 = vunpack.c.h.b16 %v649
        %v1335 = vunpack.c.l.b16 %v650
        %v1336 = vunpack.c.h.b16 %v650
        %v1337 = vunpack.c.l.b16 %v651
        %v1338 = vunpack.c.h.b16 %v651
        %v1339 = vunpack.c.l.b16 %v652
        %v1340 = vunpack.c.h.b16 %v652
        %v1341 = vunpack.c.l.b16 %v653
        %v1342 = vunpack.c.h.b16 %v653
        %v1343 = vunpack.c.l.b16 %v654
        %v1344 = vunpack.c.h.b16 %v654
        %v1345 = vunpack.c.l.b16 %v655
        %v1346 = vunpack.c.h.b16 %v655
        %v1347 = vunpack.c.l.b16 %v656
        %v1348 = vunpack.c.h.b16 %v656
        %v1349 = vunpack.c.l.b16 %v657
        %v1350 = vunpack.c.h.b16 %v657
        %v1351 = vunpack.c.l.b16 %v658
        %v1352 = vunpack.c.h.b16 %v658
        %v1353 = vunpack.c.l.b16 %v659
        %v1354 = vunpack.c.h.b16 %v659
        %v1355 = vunpack.c.l.b16 %v660
        %v1356 = vunpack.c.h.b16 %v660
        %v1357 = vunpack.c.l.b16 %v661
        %v1358 = vunpack.c.h.b16 %v661
        %v1359 = vunpack.c.l.b16 %v662
        %v1360 = vunpack.c.h.b16 %v662
        %v1361 = vunpack.c.l.b16 %v663
        %v1362 = vunpack.c.h.b16 %v663
        %v1363 = vunpack.c.l.b16 %v664
        %v1364 = vunpack.c.h.b16 %v664
        %v1365 = vunpack.c.l.b16 %v665
        %v1366 = vunpack.c.h.b16 %v665
        %v1367 = vunpack.c.l.b16 %v666
        %v1368 = vunpack.c.h.b16 %v666
        %v1369 = vunpack.c.l.b16 %v667
        %v1370 = vunpack.c.h.b16 %v667
        %v1371 = vunpack.c.l.b16 %v668
        %v1372 = vunpack.c.h.b16 %v668
        %v1373 = vunpack.c.l.b16 %v669
        %v1374 = vunpack.c.h.b16 %v669
        %v1375 = vunpack.c.l.b16 %v670
        %v1376 = vunpack.c.h.b16 %v670
        %v1377 = vunpack.c.l.b16 %v671
        %v1378 = vunpack.c.h.b16 %v671
        %v1379 = vunpack.c.l.b16 %v672
        %v1380 = vunpack.c.h.b16 %v672
        %v1381 = vunpack.c.l.b16 %v673
        %v1382 = vunpack.c.h.b16 %v673
        %v1383 = vunpack.c.l.b16 %v674
        %v1384 = vunpack.c.h.b16 %v674
        %v1385 = vunpack.c.l.b16 %v675
        %v1386 = vunpack.c.h.b16 %v675
        %v1387 = vunpack.c.l.b16 %v676
        %v1388 = vunpack.c.h.b16 %v676
        %v1389 = vunpack.c.l.b16 %v677
        %v1390 = vunpack.c.h.b16 %v677
        %v1391 = vunpack.c.l.b16 %v678
        %v1392 = vunpack.c.h.b16 %v678
        %v1393 = vunpack.c.l.b16 %v679
        %v1394 = vunpack.c.h.b16 %v679
        %v1395 = vunpack.c.l.b16 %v680
        %v1396 = vunpack.c.h.b16 %v680
        %v1397 = vunpack.c.l.b16 %v681
        %v1398 = vunpack.c.h.b16 %v681
        %v1399 = vunpack.c.l.b16 %v682
        %v1400 = vunpack.c.h.b16 %v682
        %v1401 = vpack.c.b16 %v957, %v953
        %v1402 = vpack.c.b16 %v958, %v954
        %v1403 = vpack.c.b16 %v959, %v955
        %v1404 = vpack.c.b16 %v960, %v956
        %v1405 = vpack.c.b16 %v965, %v961
        %v1406 = vpack.c.b16 %v966, %v962
        %v1407 = vpack.c.b16 %v967, %v963
        %v1408 = vpack.c.b16 %v968, %v964
        %v1409 = vpack.c.b16 %v973, %v969
        %v1410 = vpack.c.b16 %v974, %v970
        %v1411 = vpack.c.b16 %v975, %v971
        %v1412 = vpack.c.b16 %v976, %v972
        %v1413 = vpack.c.b16 %v981, %v977
        %v1414 = vpack.c.b16 %v982, %v978
        %v1415 = vpack.c.b16 %v983, %v979
        %v1416 = vpack.c.b16 %v984, %v980
        %v1417 = vpack.c.b16 %v989, %v985
        %v1418 = vpack.c.b16 %v990, %v986
        %v1419 = vpack.c.b16 %v991, %v987
        %v1420 = vpack.c.b16 %v992, %v988
        %v1421 = vpack.c.b16 %v997, %v993
        %v1422 = vpack.c.b16 %v998, %v994
        %v1423 = vpack.c.b16 %v999, %v995
        %v1424 = vpack.c.b16 %v1000, %v996
        %v1425 = vpack.c.b16 %v1005, %v1001
        %v1426 = vpack.c.b16 %v1006, %v1002
        %v1427 = vpack.c.b16 %v1007, %v1003
        %v1428 = vpack.c.b16 %v1008, %v1004
        %v1429 = vpack.c.b16 %v1013, %v1009
        %v1430 = vpack.c.b16 %v1014, %v1010
        %v1431 = vpack.c.b16 %v1015, %v1011
        %v1432 = vpack.c.b16 %v1016, %v1012
        %v1433 = vpack.c.b16 %v1021, %v1017
        %v1434 = vpack.c.b16 %v1022, %v1018
        %v1435 = vpack.c.b16 %v1023, %v1019
        %v1436 = vpack.c.b16 %v1024, %v1020
        %v1437 = vpack.c.b16 %v1029, %v1025
        %v1438 = vpack.c.b16 %v1030, %v1026
        %v1439 = vpack.c.b16 %v1031, %v1027
        %v1440 = vpack.c.b16 %v1032, %v1028
        %v1441 = vpack.c.b16 %v1037, %v1033
        %v1442 = vpack.c.b16 %v1038, %v1034
        %v1443 = vpack.c.b16 %v1039, %v1035
        %v1444 = vpack.c.b16 %v1040, %v1036
        %v1445 = vpack.c.b16 %v1045, %v1041
        %v1446 = vpack.c.b16 %v1046, %v1042
        %v1447 = vpack.c.b16 %v1047, %v1043
        %v1448 = vpack.c.b16 %v1048, %v1044
        %v1449 = vpack.c.b16 %v1053, %v1049
        %v1450 = vpack.c.b16 %v1054, %v1050
        %v1451 = vpack.c.b16 %v1055, %v1051
        %v1452 = vpack.c.b16 %v1056, %v1052
        %v1453 = vpack.c.b16 %v1061, %v1057
        %v1454 = vpack.c.b16 %v1062, %v1058
        %v1455 = vpack.c.b16 %v1063, %v1059
        %v1456 = vpack.c.b16 %v1064, %v1060
        %v1457 = vpack.c.b16 %v1069, %v1065
        %v1458 = vpack.c.b16 %v1070, %v1066
        %v1459 = vpack.c.b16 %v1071, %v1067
        %v1460 = vpack.c.b16 %v1072, %v1068
        %v1461 = vpack.c.b16 %v1077, %v1073
        %v1462 = vpack.c.b16 %v1078, %v1074
        %v1463 = vpack.c.b16 %v1079, %v1075
        %v1464 = vpack.c.b16 %v1080, %v1076
        %v1465 = vpack.c.b16 %v1085, %v1081
        %v1466 = vpack.c.b16 %v1086, %v1082
        %v1467 = vpack.c.b16 %v1087, %v1083
        %v1468 = vpack.c.b16 %v1088, %v1084
        %v1469 = vpack.c.b16 %v1093, %v1089
        %v1470 = vpack.c.b16 %v1094, %v1090
        %v1471 = vpack.c.b16 %v1095, %v1091
        %v1472 = vpack.c.b16 %v1096, %v1092
        %v1473 = vpack.c.b16 %v1101, %v1097
        %v1474 = vpack.c.b16 %v1102, %v1098
        %v1475 = vpack.c.b16 %v1103, %v1099
        %v1476 = vpack.c.b16 %v1104, %v1100
        %v1477 = vpack.c.b16 %v1109, %v1105
        %v1478 = vpack.c.b16 %v1110, %v1106
        %v1479 = vpack.c.b16 %v1111, %v1107
        %v1480 = vpack.c.b16 %v1112, %v1108
        %v1481 = vpack.c.b16 %v1117, %v1113
        %v1482 = vpack.c.b16 %v1118, %v1114
        %v1483 = vpack.c.b16 %v1119, %v1115
        %v1484 = vpack.c.b16 %v1120, %v1116
        %v1485 = vpack.c.b16 %v1125, %v1121
        %v1486 = vpack.c.b16 %v1126, %v1122
        %v1487 = vpack.c.b16 %v1127, %v1123
        %v1488 = vpack.c.b16 %v1128, %v1124
        %v1489 = vpack.c.b16 %v1133, %v1129
        %v1490 = vpack.c.b16 %v1134, %v1130
        %v1491 = vpack.c.b16 %v1135, %v1131
        %v1492 = vpack.c.b16 %v1136, %v1132
        %v1493 = vpack.c.b16 %v1141, %v1137
        %v1494 = vpack.c.b16 %v1142, %v1138
        %v1495 = vpack.c.b16 %v1143, %v1139
        %v1496 = vpack.c.b16 %v1144, %v1140
        %v1497 = vpack.c.b16 %v1149, %v1145
        %v1498 = vpack.c.b16 %v1150, %v1146
        %v1499 = vpack.c.b16 %v1151, %v1147
        %v1500 = vpack.c.b16 %v1152, %v1148
        %v1501 = vpack.c.b16 %v1157, %v1153
        %v1502 = vpack.c.b16 %v1158, %v1154
        %v1503 = vpack.c.b16 %v1159, %v1155
        %v1504 = vpack.c.b16 %v1160, %v1156
        %v1505 = vpack.c.b16 %v1165, %v1161
        %v1506 = vpack.c.b16 %v1166, %v1162
        %v1507 = vpack.c.b16 %v1167, %v1163
        %v1508 = vpack.c.b16 %v1168, %v1164
        %v1509 = vpack.c.b16 %v1173, %v1169
        %v1510 = vpack.c.b16 %v1174, %v1170
        %v1511 = vpack.c.b16 %v1175, %v1171
        %v1512 = vpack.c.b16 %v1176, %v1172
        %v1513 = vpack.c.b16 %v1181, %v1177
        %v1514 = vpack.c.b16 %v1182, %v1178
        %v1515 = vpack.c.b16 %v1183, %v1179
        %v1516 = vpack.c.b16 %v1184, %v1180
        %v1517 = vpack.c.b16 %v1189, %v1185
        %v1518 = vpack.c.b16 %v1190, %v1186
        %v1519 = vpack.c.b16 %v1191, %v1187
        %v1520 = vpack.c.b16 %v1192, %v1188
        %v1521 = vpack.c.b16 %v1197, %v1193
        %v1522 = vpack.c.b16 %v1198, %v1194
        %v1523 = vpack.c.b16 %v1199, %v1195
        %v1524 = vpack.c.b16 %v1200, %v1196
        %v1525 = vpack.c.b16 %v1205, %v1201
        %v1526 = vpack.c.b16 %v1206, %v1202
        %v1527 = vpack.c.b16 %v1207, %v1203
        %v1528 = vpack.c.b16 %v1208, %v1204
        %v1529 = vpack.c.b16 %v1213, %v1209
        %v1530 = vpack.c.b16 %v1214, %v1210
        %v1531 = vpack.c.b16 %v1215, %v1211
        %v1532 = vpack.c.b16 %v1216, %v1212
        %v1533 = vpack.c.b16 %v1221, %v1217
        %v1534 = vpack.c.b16 %v1222, %v1218
        %v1535 = vpack.c.b16 %v1223, %v1219
        %v1536 = vpack.c.b16 %v1224, %v1220
        %v1537 = vpack.c.b16 %v1229, %v1225
        %v1538 = vpack.c.b16 %v1230, %v1226
        %v1539 = vpack.c.b16 %v1231, %v1227
        %v1540 = vpack.c.b16 %v1232, %v1228
        %v1541 = vpack.c.b16 %v1237, %v1233
        %v1542 = vpack.c.b16 %v1238, %v1234
        %v1543 = vpack.c.b16 %v1239, %v1235
        %v1544 = vpack.c.b16 %v1240, %v1236
        %v1545 = vpack.c.b16 %v1245, %v1241
        %v1546 = vpack.c.b16 %v1246, %v1242
        %v1547 = vpack.c.b16 %v1247, %v1243
        %v1548 = vpack.c.b16 %v1248, %v1244
        %v1549 = vpack.c.b16 %v1253, %v1249
        %v1550 = vpack.c.b16 %v1254, %v1250
        %v1551 = vpack.c.b16 %v1255, %v1251
        %v1552 = vpack.c.b16 %v1256, %v1252
        %v1553 = vpack.c.b16 %v1261, %v1257
        %v1554 = vpack.c.b16 %v1262, %v1258
        %v1555 = vpack.c.b16 %v1263, %v1259
        %v1556 = vpack.c.b16 %v1264, %v1260
        %v1557 = vpack.c.b16 %v1269, %v1265
        %v1558 = vpack.c.b16 %v1270, %v1266
        %v1559 = vpack.c.b16 %v1271, %v1267
        %v1560 = vpack.c.b16 %v1272, %v1268
        %v1561 = vpack.c.b16 %v1277, %v1273
        %v1562 = vpack.c.b16 %v1278, %v1274
        %v1563 = vpack.c.b16 %v1279, %v1275
        %v1564 = vpack.c.b16 %v1280, %v1276
        %v1565 = vpack.c.b16 %v1285, %v1281
        %v1566 = vpack.c.b16 %v1286, %v1282
        %v1567 = vpack.c.b16 %v1287, %v1283
        %v1568 = vpack.c.b16 %v1288, %v1284
        %v1569 = vpack.c.b16 %v1293, %v1289
        %v1570 = vpack.c.b16 %v1294, %v1290
        %v1571 = vpack.c.b16 %v1295, %v1291
        %v1572 = vpack.c.b16 %v1296, %v1292
        %v1573 = vpack.c.b16 %v1301, %v1297
        %v1574 = vpack.c.b16 %v1302, %v1298
        %v1575 = vpack.c.b16 %v1303, %v1299
        %v1576 = vpack.c.b16 %v1304, %v1300
        %v1577 = vpack.c.b16 %v1309, %v1305
        %v1578 = vpack.c.b16 %v1310, %v1306
        %v1579 = vpack.c.b16 %v1311, %v1307
        %v1580 = vpack.c.b16 %v1312, %v1308
        %v1581 = vpack.c.b16 %v1317, %v1313
        %v1582 = vpack.c.b16 %v1318, %v1314
        %v1583 = vpack.c.b16 %v1319, %v1315
        %v1584 = vpack.c.b16 %v1320, %v1316
        %v1585 = vpack.c.b16 %v1325, %v1321
        %v1586 = vpack.c.b16 %v1326, %v1322
        %v1587 = vpack.c.b16 %v1327, %v1323
        %v1588 = vpack.c.b16 %v1328, %v1324
        %v1589 = vpack.c.b16 %v1333, %v1329
        %v1590 = vpack.c.b16 %v1334, %v1330
        %v1591 = vpack.c.b16 %v1335, %v1331
        %v1592 = vpack.c.b16 %v1336, %v1332
        %v1593 = vpack.c.b16 %v1341, %v1337
        %v1594 = vpack.c.b16 %v1342, %v1338
        %v1595 = vpack.c.b16 %v1343, %v1339
        %v1596 = vpack.c.b16 %v1344, %v1340
        %v1597 = vpack.c.b16 %v1349, %v1345
        %v1598 = vpack.c.b16 %v1350, %v1346
        %v1599 = vpack.c.b16 %v1351, %v1347
        %v1600 = vpack.c.b16 %v1352, %v1348
        %v1601 = vpack.c.b16 %v1357, %v1353
        %v1602 = vpack.c.b16 %v1358, %v1354
        %v1603 = vpack.c.b16 %v1359, %v1355
        %v1604 = vpack.c.b16 %v1360, %v1356
        %v1605 = vpack.c.b16 %v1365, %v1361
        %v1606 = vpack.c.b16 %v1366, %v1362
        %v1607 = vpack.c.b16 %v1367, %v1363
        %v1608 = vpack.c.b16 %v1368, %v1364
        %v1609 = vpack.c.b16 %v1373, %v1369
        %v1610 = vpack.c.b16 %v1374, %v1370
        %v1611 = vpack.c.b16 %v1375, %v1371
        %v1612 = vpack.c.b16 %v1376, %v1372
        %v1613 = vpack.c.b16 %v1381, %v1377
        %v1614 = vpack.c.b16 %v1382, %v1378
        %v1615 = vpack.c.b16 %v1383, %v1379
        %v1616 = vpack.c.b16 %v1384, %v1380
        %v1617 = vpack.c.b16 %v1389, %v1385
        %v1618 = vpack.c.b16 %v1390, %v1386
        %v1619 = vpack.c.b16 %v1391, %v1387
        %v1620 = vpack.c.b16 %v1392, %v1388
        %v1621 = vpack.c.b16 %v1397, %v1393
        %v1622 = vpack.c.b16 %v1398, %v1394
        %v1623 = vpack.c.b16 %v1399, %v1395
        %v1624 = vpack.c.b16 %v1400, %v1396
        %1849 = vmatpush.bf16.msra.mxu0 %v1429
        %1850 = vmatpush.bf16.msra.mxu0 %v1425
        %1851 = vmatpush.bf16.msra.mxu0 %v1421
        %1852 = vmatpush.bf16.msra.mxu0 %v1417
        %1853 = vmatpush.bf16.msra.mxu0 %v1413
        %1854 = vmatpush.bf16.msra.mxu0 %v1409
        %1855 = vmatpush.bf16.msra.mxu0 %v1405
        %1856 = vmatpush.bf16.msra.mxu0 %v1401
        %1857 = vmatmul.bf16.gmra.mxu0 %v715
        %v1858 = vpop.f32.mrf.mxu0
        %v1859 = vadd.f32 %v685, %v1858
        %v1860 = vpop.f32.mrf.mxu0
        %v1861 = vadd.f32 %v685, %v1860
        %1862 = vdwg.mxu0
        %1863 = vmatpush.bf16.msra.mxu0 %v1461
        %1864 = vmatpush.bf16.msra.mxu0 %v1457
        %1865 = vmatpush.bf16.msra.mxu0 %v1453
        %1866 = vmatpush.bf16.msra.mxu0 %v1449
        %1867 = vmatpush.bf16.msra.mxu0 %v1445
        %1868 = vmatpush.bf16.msra.mxu0 %v1441
        %1869 = vmatpush.bf16.msra.mxu0 %v1437
        %1870 = vmatpush.bf16.msra.mxu0 %v1433
        %1871 = vmatmul.bf16.gmra.mxu0 %v716
        %v1872 = vpop.f32.mrf.mxu0
        %v1873 = vadd.f32 %v1859, %v1872
        %v1874 = vpop.f32.mrf.mxu0
        %v1875 = vadd.f32 %v1861, %v1874
        %1876 = vdwg.mxu0
        %1877 = vmatpush.bf16.msra.mxu0 %v1493
        %1878 = vmatpush.bf16.msra.mxu0 %v1489
        %1879 = vmatpush.bf16.msra.mxu0 %v1485
        %1880 = vmatpush.bf16.msra.mxu0 %v1481
        %1881 = vmatpush.bf16.msra.mxu0 %v1477
        %1882 = vmatpush.bf16.msra.mxu0 %v1473
        %1883 = vmatpush.bf16.msra.mxu0 %v1469
        %1884 = vmatpush.bf16.msra.mxu0 %v1465
        %1885 = vmatmul.bf16.gmra.mxu0 %v717
        %v1886 = vpop.f32.mrf.mxu0
        %v1887 = vadd.f32 %v1873, %v1886
        %v1888 = vpop.f32.mrf.mxu0
        %v1889 = vadd.f32 %v1875, %v1888
        %1890 = vdwg.mxu0
        %1891 = vmatpush.bf16.msra.mxu0 %v1525
        %1892 = vmatpush.bf16.msra.mxu0 %v1521
        %1893 = vmatpush.bf16.msra.mxu0 %v1517
        %1894 = vmatpush.bf16.msra.mxu0 %v1513
        %1895 = vmatpush.bf16.msra.mxu0 %v1509
        %1896 = vmatpush.bf16.msra.mxu0 %v1505
        %1897 = vmatpush.bf16.msra.mxu0 %v1501
        %1898 = vmatpush.bf16.msra.mxu0 %v1497
        %1899 = vmatmul.bf16.gmra.mxu0 %v718
        %v1900 = vpop.f32.mrf.mxu0
        %v1901 = vadd.f32 %v1887, %v1900
        %v1902 = vpop.f32.mrf.mxu0
        %v1903 = vadd.f32 %v1889, %v1902
        %1904 = vdwg.mxu0
        %1905 = vmatpush.bf16.msra.mxu0 %v1557
        %1906 = vmatpush.bf16.msra.mxu0 %v1553
        %1907 = vmatpush.bf16.msra.mxu0 %v1549
        %1908 = vmatpush.bf16.msra.mxu0 %v1545
        %1909 = vmatpush.bf16.msra.mxu0 %v1541
        %1910 = vmatpush.bf16.msra.mxu0 %v1537
        %1911 = vmatpush.bf16.msra.mxu0 %v1533
        %1912 = vmatpush.bf16.msra.mxu0 %v1529
        %1913 = vmatmul.bf16.gmra.mxu0 %v719
        %v1914 = vpop.f32.mrf.mxu0
        %v1915 = vadd.f32 %v1901, %v1914
        %v1916 = vpop.f32.mrf.mxu0
        %v1917 = vadd.f32 %v1903, %v1916
        %1918 = vdwg.mxu0
        %1919 = vmatpush.bf16.msra.mxu0 %v1589
        %1920 = vmatpush.bf16.msra.mxu0 %v1585
        %1921 = vmatpush.bf16.msra.mxu0 %v1581
        %1922 = vmatpush.bf16.msra.mxu0 %v1577
        %1923 = vmatpush.bf16.msra.mxu0 %v1573
        %1924 = vmatpush.bf16.msra.mxu0 %v1569
        %1925 = vmatpush.bf16.msra.mxu0 %v1565
        %1926 = vmatpush.bf16.msra.mxu0 %v1561
        %1927 = vmatmul.bf16.gmra.mxu0 %v720
        %v1928 = vpop.f32.mrf.mxu0
        %v1929 = vadd.f32 %v1915, %v1928
        %v1930 = vpop.f32.mrf.mxu0
        %v1931 = vadd.f32 %v1917, %v1930
        %1932 = vdwg.mxu0
        %1933 = vmatpush.bf16.msra.mxu0 %v1621
        %1934 = vmatpush.bf16.msra.mxu0 %v1617
        %1935 = vmatpush.bf16.msra.mxu0 %v1613
        %1936 = vmatpush.bf16.msra.mxu0 %v1609
        %1937 = vmatpush.bf16.msra.mxu0 %v1605
        %1938 = vmatpush.bf16.msra.mxu0 %v1601
        %1939 = vmatpush.bf16.msra.mxu0 %v1597
        %1940 = vmatpush.bf16.msra.mxu0 %v1593
        %1941 = vmatmul.bf16.gmra.mxu0 %v721
        %v1942 = vpop.f32.mrf.mxu0
        %v1943 = vadd.f32 %v1929, %v1942
        %v1944 = vpop.f32.mrf.mxu0
        %v1945 = vadd.f32 %v1931, %v1944
        %1946 = vdwg.mxu0
        %1947 = vmatpush.bf16.msra.mxu0 %v1430
        %1948 = vmatpush.bf16.msra.mxu0 %v1426
        %1949 = vmatpush.bf16.msra.mxu0 %v1422
        %1950 = vmatpush.bf16.msra.mxu0 %v1418
        %1951 = vmatpush.bf16.msra.mxu0 %v1414
        %1952 = vmatpush.bf16.msra.mxu0 %v1410
        %1953 = vmatpush.bf16.msra.mxu0 %v1406
        %1954 = vmatpush.bf16.msra.mxu0 %v1402
        %1955 = vmatmul.bf16.gmra.mxu0 %v715
        %v1956 = vpop.f32.mrf.mxu0
        %v1957 = vadd.f32 %v686, %v1956
        %v1958 = vpop.f32.mrf.mxu0
        %v1959 = vadd.f32 %v686, %v1958
        %1960 = vdwg.mxu0
        %1961 = vmatpush.bf16.msra.mxu0 %v1462
        %1962 = vmatpush.bf16.msra.mxu0 %v1458
        %1963 = vmatpush.bf16.msra.mxu0 %v1454
        %1964 = vmatpush.bf16.msra.mxu0 %v1450
        %1965 = vmatpush.bf16.msra.mxu0 %v1446
        %1966 = vmatpush.bf16.msra.mxu0 %v1442
        %1967 = vmatpush.bf16.msra.mxu0 %v1438
        %1968 = vmatpush.bf16.msra.mxu0 %v1434
        %1969 = vmatmul.bf16.gmra.mxu0 %v716
        %v1970 = vpop.f32.mrf.mxu0
        %v1971 = vadd.f32 %v1957, %v1970
        %v1972 = vpop.f32.mrf.mxu0
        %v1973 = vadd.f32 %v1959, %v1972
        %1974 = vdwg.mxu0
        %1975 = vmatpush.bf16.msra.mxu0 %v1494
        %1976 = vmatpush.bf16.msra.mxu0 %v1490
        %1977 = vmatpush.bf16.msra.mxu0 %v1486
        %1978 = vmatpush.bf16.msra.mxu0 %v1482
        %1979 = vmatpush.bf16.msra.mxu0 %v1478
        %1980 = vmatpush.bf16.msra.mxu0 %v1474
        %1981 = vmatpush.bf16.msra.mxu0 %v1470
        %1982 = vmatpush.bf16.msra.mxu0 %v1466
        %1983 = vmatmul.bf16.gmra.mxu0 %v717
        %v1984 = vpop.f32.mrf.mxu0
        %v1985 = vadd.f32 %v1971, %v1984
        %v1986 = vpop.f32.mrf.mxu0
        %v1987 = vadd.f32 %v1973, %v1986
        %1988 = vdwg.mxu0
        %1989 = vmatpush.bf16.msra.mxu0 %v1526
        %1990 = vmatpush.bf16.msra.mxu0 %v1522
        %1991 = vmatpush.bf16.msra.mxu0 %v1518
        %1992 = vmatpush.bf16.msra.mxu0 %v1514
        %1993 = vmatpush.bf16.msra.mxu0 %v1510
        %1994 = vmatpush.bf16.msra.mxu0 %v1506
        %1995 = vmatpush.bf16.msra.mxu0 %v1502
        %1996 = vmatpush.bf16.msra.mxu0 %v1498
        %1997 = vmatmul.bf16.gmra.mxu0 %v718
        %v1998 = vpop.f32.mrf.mxu0
        %v1999 = vadd.f32 %v1985, %v1998
        %v2000 = vpop.f32.mrf.mxu0
        %v2001 = vadd.f32 %v1987, %v2000
        %2002 = vdwg.mxu0
        %2003 = vmatpush.bf16.msra.mxu0 %v1558
        %2004 = vmatpush.bf16.msra.mxu0 %v1554
        %2005 = vmatpush.bf16.msra.mxu0 %v1550
        %2006 = vmatpush.bf16.msra.mxu0 %v1546
        %2007 = vmatpush.bf16.msra.mxu0 %v1542
        %2008 = vmatpush.bf16.msra.mxu0 %v1538
        %2009 = vmatpush.bf16.msra.mxu0 %v1534
        %2010 = vmatpush.bf16.msra.mxu0 %v1530
        %2011 = vmatmul.bf16.gmra.mxu0 %v719
        %v2012 = vpop.f32.mrf.mxu0
        %v2013 = vadd.f32 %v1999, %v2012
        %v2014 = vpop.f32.mrf.mxu0
        %v2015 = vadd.f32 %v2001, %v2014
        %2016 = vdwg.mxu0
        %2017 = vmatpush.bf16.msra.mxu0 %v1590
        %2018 = vmatpush.bf16.msra.mxu0 %v1586
        %2019 = vmatpush.bf16.msra.mxu0 %v1582
        %2020 = vmatpush.bf16.msra.mxu0 %v1578
        %2021 = vmatpush.bf16.msra.mxu0 %v1574
        %2022 = vmatpush.bf16.msra.mxu0 %v1570
        %2023 = vmatpush.bf16.msra.mxu0 %v1566
        %2024 = vmatpush.bf16.msra.mxu0 %v1562
        %2025 = vmatmul.bf16.gmra.mxu0 %v720
        %v2026 = vpop.f32.mrf.mxu0
        %v2027 = vadd.f32 %v2013, %v2026
        %v2028 = vpop.f32.mrf.mxu0
        %v2029 = vadd.f32 %v2015, %v2028
        %2030 = vdwg.mxu0
        %2031 = vmatpush.bf16.msra.mxu0 %v1622
        %2032 = vmatpush.bf16.msra.mxu0 %v1618
        %2033 = vmatpush.bf16.msra.mxu0 %v1614
        %2034 = vmatpush.bf16.msra.mxu0 %v1610
        %2035 = vmatpush.bf16.msra.mxu0 %v1606
        %2036 = vmatpush.bf16.msra.mxu0 %v1602
        %2037 = vmatpush.bf16.msra.mxu0 %v1598
        %2038 = vmatpush.bf16.msra.mxu0 %v1594
        %2039 = vmatmul.bf16.gmra.mxu0 %v721
        %v2040 = vpop.f32.mrf.mxu0
        %v2041 = vadd.f32 %v2027, %v2040
        %v2042 = vpop.f32.mrf.mxu0
        %v2043 = vadd.f32 %v2029, %v2042
        %2044 = vdwg.mxu0
        %2045 = vmatpush.bf16.msra.mxu0 %v1431
        %2046 = vmatpush.bf16.msra.mxu0 %v1427
        %2047 = vmatpush.bf16.msra.mxu0 %v1423
        %2048 = vmatpush.bf16.msra.mxu0 %v1419
        %2049 = vmatpush.bf16.msra.mxu0 %v1415
        %2050 = vmatpush.bf16.msra.mxu0 %v1411
        %2051 = vmatpush.bf16.msra.mxu0 %v1407
        %2052 = vmatpush.bf16.msra.mxu0 %v1403
        %2053 = vmatmul.bf16.gmra.mxu0 %v715
        %v2054 = vpop.f32.mrf.mxu0
        %v2055 = vadd.f32 %v687, %v2054
        %v2056 = vpop.f32.mrf.mxu0
        %v2057 = vadd.f32 %v687, %v2056
        %2058 = vdwg.mxu0
        %2059 = vmatpush.bf16.msra.mxu0 %v1463
        %2060 = vmatpush.bf16.msra.mxu0 %v1459
        %2061 = vmatpush.bf16.msra.mxu0 %v1455
        %2062 = vmatpush.bf16.msra.mxu0 %v1451
        %2063 = vmatpush.bf16.msra.mxu0 %v1447
        %2064 = vmatpush.bf16.msra.mxu0 %v1443
        %2065 = vmatpush.bf16.msra.mxu0 %v1439
        %2066 = vmatpush.bf16.msra.mxu0 %v1435
        %2067 = vmatmul.bf16.gmra.mxu0 %v716
        %v2068 = vpop.f32.mrf.mxu0
        %v2069 = vadd.f32 %v2055, %v2068
        %v2070 = vpop.f32.mrf.mxu0
        %v2071 = vadd.f32 %v2057, %v2070
        %2072 = vdwg.mxu0
        %2073 = vmatpush.bf16.msra.mxu0 %v1495
        %2074 = vmatpush.bf16.msra.mxu0 %v1491
        %2075 = vmatpush.bf16.msra.mxu0 %v1487
        %2076 = vmatpush.bf16.msra.mxu0 %v1483
        %2077 = vmatpush.bf16.msra.mxu0 %v1479
        %2078 = vmatpush.bf16.msra.mxu0 %v1475
        %2079 = vmatpush.bf16.msra.mxu0 %v1471
        %2080 = vmatpush.bf16.msra.mxu0 %v1467
        %2081 = vmatmul.bf16.gmra.mxu0 %v717
        %v2082 = vpop.f32.mrf.mxu0
        %v2083 = vadd.f32 %v2069, %v2082
        %v2084 = vpop.f32.mrf.mxu0
        %v2085 = vadd.f32 %v2071, %v2084
        %2086 = vdwg.mxu0
        %2087 = vmatpush.bf16.msra.mxu0 %v1527
        %2088 = vmatpush.bf16.msra.mxu0 %v1523
        %2089 = vmatpush.bf16.msra.mxu0 %v1519
        %2090 = vmatpush.bf16.msra.mxu0 %v1515
        %2091 = vmatpush.bf16.msra.mxu0 %v1511
        %2092 = vmatpush.bf16.msra.mxu0 %v1507
        %2093 = vmatpush.bf16.msra.mxu0 %v1503
        %2094 = vmatpush.bf16.msra.mxu0 %v1499
        %2095 = vmatmul.bf16.gmra.mxu0 %v718
        %v2096 = vpop.f32.mrf.mxu0
        %v2097 = vadd.f32 %v2083, %v2096
        %v2098 = vpop.f32.mrf.mxu0
        %v2099 = vadd.f32 %v2085, %v2098
        %2100 = vdwg.mxu0
        %2101 = vmatpush.bf16.msra.mxu0 %v1559
        %2102 = vmatpush.bf16.msra.mxu0 %v1555
        %2103 = vmatpush.bf16.msra.mxu0 %v1551
        %2104 = vmatpush.bf16.msra.mxu0 %v1547
        %2105 = vmatpush.bf16.msra.mxu0 %v1543
        %2106 = vmatpush.bf16.msra.mxu0 %v1539
        %2107 = vmatpush.bf16.msra.mxu0 %v1535
        %2108 = vmatpush.bf16.msra.mxu0 %v1531
        %2109 = vmatmul.bf16.gmra.mxu0 %v719
        %v2110 = vpop.f32.mrf.mxu0
        %v2111 = vadd.f32 %v2097, %v2110
        %v2112 = vpop.f32.mrf.mxu0
        %v2113 = vadd.f32 %v2099, %v2112
        %2114 = vdwg.mxu0
        %2115 = vmatpush.bf16.msra.mxu0 %v1591
        %2116 = vmatpush.bf16.msra.mxu0 %v1587
        %2117 = vmatpush.bf16.msra.mxu0 %v1583
        %2118 = vmatpush.bf16.msra.mxu0 %v1579
        %2119 = vmatpush.bf16.msra.mxu0 %v1575
        %2120 = vmatpush.bf16.msra.mxu0 %v1571
        %2121 = vmatpush.bf16.msra.mxu0 %v1567
        %2122 = vmatpush.bf16.msra.mxu0 %v1563
        %2123 = vmatmul.bf16.gmra.mxu0 %v720
        %v2124 = vpop.f32.mrf.mxu0
        %v2125 = vadd.f32 %v2111, %v2124
        %v2126 = vpop.f32.mrf.mxu0
        %v2127 = vadd.f32 %v2113, %v2126
        %2128 = vdwg.mxu0
        %2129 = vmatpush.bf16.msra.mxu0 %v1623
        %2130 = vmatpush.bf16.msra.mxu0 %v1619
        %2131 = vmatpush.bf16.msra.mxu0 %v1615
        %2132 = vmatpush.bf16.msra.mxu0 %v1611
        %2133 = vmatpush.bf16.msra.mxu0 %v1607
        %2134 = vmatpush.bf16.msra.mxu0 %v1603
        %2135 = vmatpush.bf16.msra.mxu0 %v1599
        %2136 = vmatpush.bf16.msra.mxu0 %v1595
        %2137 = vmatmul.bf16.gmra.mxu0 %v721
        %v2138 = vpop.f32.mrf.mxu0
        %v2139 = vadd.f32 %v2125, %v2138
        %v2140 = vpop.f32.mrf.mxu0
        %v2141 = vadd.f32 %v2127, %v2140
        %2142 = vdwg.mxu0
        %2143 = vmatpush.bf16.msra.mxu0 %v1432
        %2144 = vmatpush.bf16.msra.mxu0 %v1428
        %2145 = vmatpush.bf16.msra.mxu0 %v1424
        %2146 = vmatpush.bf16.msra.mxu0 %v1420
        %2147 = vmatpush.bf16.msra.mxu0 %v1416
        %2148 = vmatpush.bf16.msra.mxu0 %v1412
        %2149 = vmatpush.bf16.msra.mxu0 %v1408
        %2150 = vmatpush.bf16.msra.mxu0 %v1404
        %2151 = vmatmul.bf16.gmra.mxu0 %v715
        %v2152 = vpop.f32.mrf.mxu0
        %v2153 = vadd.f32 %v688, %v2152
        %v2154 = vpop.f32.mrf.mxu0
        %v2155 = vadd.f32 %v688, %v2154
        %2156 = vdwg.mxu0
        %2157 = vmatpush.bf16.msra.mxu0 %v1464
        %2158 = vmatpush.bf16.msra.mxu0 %v1460
        %2159 = vmatpush.bf16.msra.mxu0 %v1456
        %2160 = vmatpush.bf16.msra.mxu0 %v1452
        %2161 = vmatpush.bf16.msra.mxu0 %v1448
        %2162 = vmatpush.bf16.msra.mxu0 %v1444
        %2163 = vmatpush.bf16.msra.mxu0 %v1440
        %2164 = vmatpush.bf16.msra.mxu0 %v1436
        %2165 = vmatmul.bf16.gmra.mxu0 %v716
        %v2166 = vpop.f32.mrf.mxu0
        %v2167 = vadd.f32 %v2153, %v2166
        %v2168 = vpop.f32.mrf.mxu0
        %v2169 = vadd.f32 %v2155, %v2168
        %2170 = vdwg.mxu0
        %2171 = vmatpush.bf16.msra.mxu0 %v1496
        %2172 = vmatpush.bf16.msra.mxu0 %v1492
        %2173 = vmatpush.bf16.msra.mxu0 %v1488
        %2174 = vmatpush.bf16.msra.mxu0 %v1484
        %2175 = vmatpush.bf16.msra.mxu0 %v1480
        %2176 = vmatpush.bf16.msra.mxu0 %v1476
        %2177 = vmatpush.bf16.msra.mxu0 %v1472
        %2178 = vmatpush.bf16.msra.mxu0 %v1468
        %2179 = vmatmul.bf16.gmra.mxu0 %v717
        %v2180 = vpop.f32.mrf.mxu0
        %v2181 = vadd.f32 %v2167, %v2180
        %v2182 = vpop.f32.mrf.mxu0
        %v2183 = vadd.f32 %v2169, %v2182
        %2184 = vdwg.mxu0
        %2185 = vmatpush.bf16.msra.mxu0 %v1528
        %2186 = vmatpush.bf16.msra.mxu0 %v1524
        %2187 = vmatpush.bf16.msra.mxu0 %v1520
        %2188 = vmatpush.bf16.msra.mxu0 %v1516
        %2189 = vmatpush.bf16.msra.mxu0 %v1512
        %2190 = vmatpush.bf16.msra.mxu0 %v1508
        %2191 = vmatpush.bf16.msra.mxu0 %v1504
        %2192 = vmatpush.bf16.msra.mxu0 %v1500
        %2193 = vmatmul.bf16.gmra.mxu0 %v718
        %v2194 = vpop.f32.mrf.mxu0
        %v2195 = vadd.f32 %v2181, %v2194
        %v2196 = vpop.f32.mrf.mxu0
        %v2197 = vadd.f32 %v2183, %v2196
        %2198 = vdwg.mxu0
        %2199 = vmatpush.bf16.msra.mxu0 %v1560
        %2200 = vmatpush.bf16.msra.mxu0 %v1556
        %2201 = vmatpush.bf16.msra.mxu0 %v1552
        %2202 = vmatpush.bf16.msra.mxu0 %v1548
        %2203 = vmatpush.bf16.msra.mxu0 %v1544
        %2204 = vmatpush.bf16.msra.mxu0 %v1540
        %2205 = vmatpush.bf16.msra.mxu0 %v1536
        %2206 = vmatpush.bf16.msra.mxu0 %v1532
        %2207 = vmatmul.bf16.gmra.mxu0 %v719
        %v2208 = vpop.f32.mrf.mxu0
        %v2209 = vadd.f32 %v2195, %v2208
        %v2210 = vpop.f32.mrf.mxu0
        %v2211 = vadd.f32 %v2197, %v2210
        %2212 = vdwg.mxu0
        %2213 = vmatpush.bf16.msra.mxu0 %v1592
        %2214 = vmatpush.bf16.msra.mxu0 %v1588
        %2215 = vmatpush.bf16.msra.mxu0 %v1584
        %2216 = vmatpush.bf16.msra.mxu0 %v1580
        %2217 = vmatpush.bf16.msra.mxu0 %v1576
        %2218 = vmatpush.bf16.msra.mxu0 %v1572
        %2219 = vmatpush.bf16.msra.mxu0 %v1568
        %2220 = vmatpush.bf16.msra.mxu0 %v1564
        %2221 = vmatmul.bf16.gmra.mxu0 %v720
        %v2222 = vpop.f32.mrf.mxu0
        %v2223 = vadd.f32 %v2209, %v2222
        %v2224 = vpop.f32.mrf.mxu0
        %v2225 = vadd.f32 %v2211, %v2224
        %2226 = vdwg.mxu0
        %2227 = vmatpush.bf16.msra.mxu0 %v1624
        %2228 = vmatpush.bf16.msra.mxu0 %v1620
        %2229 = vmatpush.bf16.msra.mxu0 %v1616
        %2230 = vmatpush.bf16.msra.mxu0 %v1612
        %2231 = vmatpush.bf16.msra.mxu0 %v1608
        %2232 = vmatpush.bf16.msra.mxu0 %v1604
        %2233 = vmatpush.bf16.msra.mxu0 %v1600
        %2234 = vmatpush.bf16.msra.mxu0 %v1596
        %2235 = vmatmul.bf16.gmra.mxu0 %v721
        %v2236 = vpop.f32.mrf.mxu0
        %v2237 = vadd.f32 %v2223, %v2236
        %v2238 = vpop.f32.mrf.mxu0
        %v2239 = vadd.f32 %v2225, %v2238
        %2240 = vdwg.mxu0
        %v2241 = vmax.f32 %v1943, 0.0
        %v2242 = vmax.f32 %v2041, 0.0
        %v2243 = vmax.f32 %v2139, 0.0
        %v2244 = vmax.f32 %v2237, 0.0
        %v2245 = vmax.f32 %v1945, 0.0
        %v2246 = vmax.f32 %v2043, 0.0
        %v2247 = vmax.f32 %v2141, 0.0
        %v2248 = vmax.f32 %v2239, 0.0
        %v2249 = vpack.c.bf16 %v2245, %v2241
        %v2250 = vpack.c.bf16 %v2246, %v2242
        %v2251 = vpack.c.bf16 %v2247, %v2243
        %v2252 = vpack.c.bf16 %v2248, %v2244
        %v2253 = vld [vmem:[#allocation8] sm:$0xff]
        %v2254 = vld [vmem:[#allocation8 + $0x8] sm:$0xff]
        %v2255 = vld [vmem:[#allocation8 + $0x10] sm:$0xff]
        %v2256 = vld [vmem:[#allocation8 + $0x18] sm:$0xff]
        %v2257 = vld [vmem:[#allocation8 + $0x20] sm:$0xff]
        %v2258 = vld [vmem:[#allocation8 + $0x28] sm:$0xff]
        %v2259 = vld [vmem:[#allocation8 + $0x30] sm:$0xff]
        %v2260 = vld [vmem:[#allocation8 + $0x38] sm:$0xff]
        %v2261 = vld [vmem:[#allocation8 + $0x40] sm:$0xff]
        %v2262 = vld [vmem:[#allocation8 + $0x48] sm:$0xff]
        %v2263 = vld [vmem:[#allocation8 + $0x50] sm:$0xff]
        %v2264 = vld [vmem:[#allocation8 + $0x58] sm:$0xff]
        %v2265 = vld [vmem:[#allocation8 + $0x60] sm:$0xff]
        %v2266 = vld [vmem:[#allocation8 + $0x68] sm:$0xff]
        %v2267 = vld [vmem:[#allocation8 + $0x70] sm:$0xff]
        %v2268 = vld [vmem:[#allocation8 + $0x78] sm:$0xff]
        %v2269 = vld [vmem:[#allocation8 + $0x80] sm:$0xff]
        %v2270 = vld [vmem:[#allocation8 + $0x88] sm:$0xff]
        %v2271 = vld [vmem:[#allocation8 + $0x90] sm:$0xff]
        %v2272 = vld [vmem:[#allocation8 + $0x98] sm:$0xff]
        %v2273 = vld [vmem:[#allocation8 + $0xa0] sm:$0xff]
        %v2274 = vld [vmem:[#allocation8 + $0xa8] sm:$0xff]
        %v2275 = vld [vmem:[#allocation8 + $0xb0] sm:$0xff]
        %v2276 = vld [vmem:[#allocation8 + $0xb8] sm:$0xff]
        %v2277 = vld [vmem:[#allocation8 + $0xc0] sm:$0xff]
        %v2278 = vld [vmem:[#allocation8 + $0xc8] sm:$0xff]
        %v2279 = vld [vmem:[#allocation8 + $0xd0] sm:$0xff]
        %v2280 = vld [vmem:[#allocation8 + $0xd8] sm:$0xff]
        %v2281 = vld [vmem:[#allocation8 + $0xe0] sm:$0xff]
        %v2282 = vld [vmem:[#allocation8 + $0xe8] sm:$0xff]
        %v2283 = vld [vmem:[#allocation8 + $0xf0] sm:$0xff]
        %v2284 = vld [vmem:[#allocation8 + $0xf8] sm:$0xff]
        %v2285 = vld [vmem:[#allocation8 + $0x100] sm:$0xff]
        %v2286 = vld [vmem:[#allocation8 + $0x108] sm:$0xff]
        %v2287 = vld [vmem:[#allocation8 + $0x110] sm:$0xff]
        %v2288 = vld [vmem:[#allocation8 + $0x118] sm:$0xff]
        %v2289 = vld [vmem:[#allocation8 + $0x120] sm:$0xff]
        %v2290 = vld [vmem:[#allocation8 + $0x128] sm:$0xff]
        %v2291 = vld [vmem:[#allocation8 + $0x130] sm:$0xff]
        %v2292 = vld [vmem:[#allocation8 + $0x138] sm:$0xff]
        %v2293 = vld [vmem:[#allocation8 + $0x140] sm:$0xff]
        %v2294 = vld [vmem:[#allocation8 + $0x148] sm:$0xff]
        %v2295 = vld [vmem:[#allocation8 + $0x150] sm:$0xff]
        %v2296 = vld [vmem:[#allocation8 + $0x158] sm:$0xff]
        %v2297 = vld [vmem:[#allocation8 + $0x160] sm:$0xff]
        %v2298 = vld [vmem:[#allocation8 + $0x168] sm:$0xff]
        %v2299 = vld [vmem:[#allocation8 + $0x170] sm:$0xff]
        %v2300 = vld [vmem:[#allocation8 + $0x178] sm:$0xff]
        %v2301 = vld [vmem:[#allocation8 + $0x180] sm:$0xff]
        %v2302 = vld [vmem:[#allocation8 + $0x188] sm:$0xff]
        %v2303 = vld [vmem:[#allocation8 + $0x190] sm:$0xff]
        %v2304 = vld [vmem:[#allocation8 + $0x198] sm:$0xff]
        %v2305 = vld [vmem:[#allocation8 + $0x1a0] sm:$0xff]
        %v2306 = vld [vmem:[#allocation8 + $0x1a8] sm:$0xff]
        %v2307 = vld [vmem:[#allocation8 + $0x1b0] sm:$0xff]
        %v2308 = vld [vmem:[#allocation8 + $0x1b8] sm:$0xff]
        %v2309 = vld [vmem:[#allocation8 + $0x1c0] sm:$0xff]
        %v2310 = vld [vmem:[#allocation8 + $0x1c8] sm:$0xff]
        %v2311 = vld [vmem:[#allocation8 + $0x1d0] sm:$0xff]
        %v2312 = vld [vmem:[#allocation8 + $0x1d8] sm:$0xff]
        %v2313 = vld [vmem:[#allocation8 + $0x1e0] sm:$0xff]
        %v2314 = vld [vmem:[#allocation8 + $0x1e8] sm:$0xff]
        %v2315 = vld [vmem:[#allocation8 + $0x1f0] sm:$0xff]
        %v2316 = vld [vmem:[#allocation8 + $0x1f8] sm:$0xff]
        %v2317 = vld [vmem:[#allocation8 + $0x200] sm:$0xff]
        %v2318 = vld [vmem:[#allocation8 + $0x208] sm:$0xff]
        %v2319 = vld [vmem:[#allocation8 + $0x210] sm:$0xff]
        %v2320 = vld [vmem:[#allocation8 + $0x218] sm:$0xff]
        %v2321 = vld [vmem:[#allocation8 + $0x220] sm:$0xff]
        %v2322 = vld [vmem:[#allocation8 + $0x228] sm:$0xff]
        %v2323 = vld [vmem:[#allocation8 + $0x230] sm:$0xff]
        %v2324 = vld [vmem:[#allocation8 + $0x238] sm:$0xff]
        %v2325 = vld [vmem:[#allocation8 + $0x240] sm:$0xff]
        %v2326 = vld [vmem:[#allocation8 + $0x248] sm:$0xff]
        %v2327 = vld [vmem:[#allocation8 + $0x250] sm:$0xff]
        %v2328 = vld [vmem:[#allocation8 + $0x258] sm:$0xff]
        %v2329 = vld [vmem:[#allocation8 + $0x260] sm:$0xff]
        %v2330 = vld [vmem:[#allocation8 + $0x268] sm:$0xff]
        %v2331 = vld [vmem:[#allocation8 + $0x270] sm:$0xff]
        %v2332 = vld [vmem:[#allocation8 + $0x278] sm:$0xff]
        %v2333 = vld [vmem:[#allocation8 + $0x280] sm:$0xff]
        %v2334 = vld [vmem:[#allocation8 + $0x288] sm:$0xff]
        %v2335 = vld [vmem:[#allocation8 + $0x290] sm:$0xff]
        %v2336 = vld [vmem:[#allocation8 + $0x298] sm:$0xff]
        %v2337 = vld [vmem:[#allocation8 + $0x2a0] sm:$0xff]
        %v2338 = vld [vmem:[#allocation8 + $0x2a8] sm:$0xff]
        %v2339 = vld [vmem:[#allocation8 + $0x2b0] sm:$0xff]
        %v2340 = vld [vmem:[#allocation8 + $0x2b8] sm:$0xff]
        %v2341 = vld [vmem:[#allocation8 + $0x2c0] sm:$0xff]
        %v2342 = vld [vmem:[#allocation8 + $0x2c8] sm:$0xff]
        %v2343 = vld [vmem:[#allocation8 + $0x2d0] sm:$0xff]
        %v2344 = vld [vmem:[#allocation8 + $0x2d8] sm:$0xff]
        %v2345 = vld [vmem:[#allocation8 + $0x2e0] sm:$0xff]
        %v2346 = vld [vmem:[#allocation8 + $0x2e8] sm:$0xff]
        %v2347 = vld [vmem:[#allocation8 + $0x2f0] sm:$0xff]
        %v2348 = vld [vmem:[#allocation8 + $0x2f8] sm:$0xff]
        %v2349 = vld [vmem:[#allocation8 + $0x300] sm:$0xff]
        %v2350 = vld [vmem:[#allocation8 + $0x308] sm:$0xff]
        %v2351 = vld [vmem:[#allocation8 + $0x310] sm:$0xff]
        %v2352 = vld [vmem:[#allocation8 + $0x318] sm:$0xff]
        %v2353 = vld [vmem:[#allocation8 + $0x320] sm:$0xff]
        %v2354 = vld [vmem:[#allocation8 + $0x328] sm:$0xff]
        %v2355 = vld [vmem:[#allocation8 + $0x330] sm:$0xff]
        %v2356 = vld [vmem:[#allocation8 + $0x338] sm:$0xff]
        %v2357 = vld [vmem:[#allocation8 + $0x340] sm:$0xff]
        %v2358 = vld [vmem:[#allocation8 + $0x348] sm:$0xff]
        %v2359 = vld [vmem:[#allocation8 + $0x350] sm:$0xff]
        %v2360 = vld [vmem:[#allocation8 + $0x358] sm:$0xff]
        %v2361 = vld [vmem:[#allocation8 + $0x360] sm:$0xff]
        %v2362 = vld [vmem:[#allocation8 + $0x368] sm:$0xff]
        %v2363 = vld [vmem:[#allocation8 + $0x370] sm:$0xff]
        %v2364 = vld [vmem:[#allocation8 + $0x378] sm:$0xff]
        %v2365 = vld [vmem:[#allocation8 + $0x380] sm:$0xff]
        %v2366 = vld [vmem:[#allocation8 + $0x388] sm:$0xff]
        %v2367 = vld [vmem:[#allocation8 + $0x390] sm:$0xff]
        %v2368 = vld [vmem:[#allocation8 + $0x398] sm:$0xff]
        %v2369 = vld [vmem:[#allocation8 + $0x3a0] sm:$0xff]
        %v2370 = vld [vmem:[#allocation8 + $0x3a8] sm:$0xff]
        %v2371 = vld [vmem:[#allocation8 + $0x3b0] sm:$0xff]
        %v2372 = vld [vmem:[#allocation8 + $0x3b8] sm:$0xff]
        %v2373 = vld [vmem:[#allocation8 + $0x3c0] sm:$0xff]
        %v2374 = vld [vmem:[#allocation8 + $0x3c8] sm:$0xff]
        %v2375 = vld [vmem:[#allocation8 + $0x3d0] sm:$0xff]
        %v2376 = vld [vmem:[#allocation8 + $0x3d8] sm:$0xff]
        %v2377 = vld [vmem:[#allocation8 + $0x3e0] sm:$0xff]
        %v2378 = vld [vmem:[#allocation8 + $0x3e8] sm:$0xff]
        %v2379 = vld [vmem:[#allocation8 + $0x3f0] sm:$0xff]
        %v2380 = vld [vmem:[#allocation8 + $0x3f8] sm:$0xff]
        %v2381 = vld [vmem:[#allocation10] sm:$0xf]
        %v2383 = vperm.slane %v2381, 0
        %v2384 = vperm.slane %v2381, 1
        %v2385 = vperm.slane %v2381, 2
        %v2386 = vperm.slane %v2381, 3
        %v2519 = vunpack.c.l.b16 %v2253
        %v2520 = vunpack.c.h.b16 %v2253
        %v2521 = vunpack.c.l.b16 %v2254
        %v2522 = vunpack.c.h.b16 %v2254
        %v2523 = vunpack.c.l.b16 %v2255
        %v2524 = vunpack.c.h.b16 %v2255
        %v2525 = vunpack.c.l.b16 %v2256
        %v2526 = vunpack.c.h.b16 %v2256
        %v2527 = vunpack.c.l.b16 %v2257
        %v2528 = vunpack.c.h.b16 %v2257
        %v2529 = vunpack.c.l.b16 %v2258
        %v2530 = vunpack.c.h.b16 %v2258
        %v2531 = vunpack.c.l.b16 %v2259
        %v2532 = vunpack.c.h.b16 %v2259
        %v2533 = vunpack.c.l.b16 %v2260
        %v2534 = vunpack.c.h.b16 %v2260
        %v2535 = vunpack.c.l.b16 %v2261
        %v2536 = vunpack.c.h.b16 %v2261
        %v2537 = vunpack.c.l.b16 %v2262
        %v2538 = vunpack.c.h.b16 %v2262
        %v2539 = vunpack.c.l.b16 %v2263
        %v2540 = vunpack.c.h.b16 %v2263
        %v2541 = vunpack.c.l.b16 %v2264
        %v2542 = vunpack.c.h.b16 %v2264
        %v2543 = vunpack.c.l.b16 %v2265
        %v2544 = vunpack.c.h.b16 %v2265
        %v2545 = vunpack.c.l.b16 %v2266
        %v2546 = vunpack.c.h.b16 %v2266
        %v2547 = vunpack.c.l.b16 %v2267
        %v2548 = vunpack.c.h.b16 %v2267
        %v2549 = vunpack.c.l.b16 %v2268
        %v2550 = vunpack.c.h.b16 %v2268
        %v2551 = vunpack.c.l.b16 %v2269
        %v2552 = vunpack.c.h.b16 %v2269
        %v2553 = vunpack.c.l.b16 %v2270
        %v2554 = vunpack.c.h.b16 %v2270
        %v2555 = vunpack.c.l.b16 %v2271
        %v2556 = vunpack.c.h.b16 %v2271
        %v2557 = vunpack.c.l.b16 %v2272
        %v2558 = vunpack.c.h.b16 %v2272
        %v2559 = vunpack.c.l.b16 %v2273
        %v2560 = vunpack.c.h.b16 %v2273
        %v2561 = vunpack.c.l.b16 %v2274
        %v2562 = vunpack.c.h.b16 %v2274
        %v2563 = vunpack.c.l.b16 %v2275
        %v2564 = vunpack.c.h.b16 %v2275
        %v2565 = vunpack.c.l.b16 %v2276
        %v2566 = vunpack.c.h.b16 %v2276
        %v2567 = vunpack.c.l.b16 %v2277
        %v2568 = vunpack.c.h.b16 %v2277
        %v2569 = vunpack.c.l.b16 %v2278
        %v2570 = vunpack.c.h.b16 %v2278
        %v2571 = vunpack.c.l.b16 %v2279
        %v2572 = vunpack.c.h.b16 %v2279
        %v2573 = vunpack.c.l.b16 %v2280
        %v2574 = vunpack.c.h.b16 %v2280
        %v2575 = vunpack.c.l.b16 %v2281
        %v2576 = vunpack.c.h.b16 %v2281
        %v2577 = vunpack.c.l.b16 %v2282
        %v2578 = vunpack.c.h.b16 %v2282
        %v2579 = vunpack.c.l.b16 %v2283
        %v2580 = vunpack.c.h.b16 %v2283
        %v2581 = vunpack.c.l.b16 %v2284
        %v2582 = vunpack.c.h.b16 %v2284
        %v2583 = vunpack.c.l.b16 %v2285
        %v2584 = vunpack.c.h.b16 %v2285
        %v2585 = vunpack.c.l.b16 %v2286
        %v2586 = vunpack.c.h.b16 %v2286
        %v2587 = vunpack.c.l.b16 %v2287
        %v2588 = vunpack.c.h.b16 %v2287
        %v2589 = vunpack.c.l.b16 %v2288
        %v2590 = vunpack.c.h.b16 %v2288
        %v2591 = vunpack.c.l.b16 %v2289
        %v2592 = vunpack.c.h.b16 %v2289
        %v2593 = vunpack.c.l.b16 %v2290
        %v2594 = vunpack.c.h.b16 %v2290
        %v2595 = vunpack.c.l.b16 %v2291
        %v2596 = vunpack.c.h.b16 %v2291
        %v2597 = vunpack.c.l.b16 %v2292
        %v2598 = vunpack.c.h.b16 %v2292
        %v2599 = vunpack.c.l.b16 %v2293
        %v2600 = vunpack.c.h.b16 %v2293
        %v2601 = vunpack.c.l.b16 %v2294
        %v2602 = vunpack.c.h.b16 %v2294
        %v2603 = vunpack.c.l.b16 %v2295
        %v2604 = vunpack.c.h.b16 %v2295
        %v2605 = vunpack.c.l.b16 %v2296
        %v2606 = vunpack.c.h.b16 %v2296
        %v2607 = vunpack.c.l.b16 %v2297
        %v2608 = vunpack.c.h.b16 %v2297
        %v2609 = vunpack.c.l.b16 %v2298
        %v2610 = vunpack.c.h.b16 %v2298
        %v2611 = vunpack.c.l.b16 %v2299
        %v2612 = vunpack.c.h.b16 %v2299
        %v2613 = vunpack.c.l.b16 %v2300
        %v2614 = vunpack.c.h.b16 %v2300
        %v2615 = vunpack.c.l.b16 %v2301
        %v2616 = vunpack.c.h.b16 %v2301
        %v2617 = vunpack.c.l.b16 %v2302
        %v2618 = vunpack.c.h.b16 %v2302
        %v2619 = vunpack.c.l.b16 %v2303
        %v2620 = vunpack.c.h.b16 %v2303
        %v2621 = vunpack.c.l.b16 %v2304
        %v2622 = vunpack.c.h.b16 %v2304
        %v2623 = vunpack.c.l.b16 %v2305
        %v2624 = vunpack.c.h.b16 %v2305
        %v2625 = vunpack.c.l.b16 %v2306
        %v2626 = vunpack.c.h.b16 %v2306
        %v2627 = vunpack.c.l.b16 %v2307
        %v2628 = vunpack.c.h.b16 %v2307
        %v2629 = vunpack.c.l.b16 %v2308
        %v2630 = vunpack.c.h.b16 %v2308
        %v2631 = vunpack.c.l.b16 %v2309
        %v2632 = vunpack.c.h.b16 %v2309
        %v2633 = vunpack.c.l.b16 %v2310
        %v2634 = vunpack.c.h.b16 %v2310
        %v2635 = vunpack.c.l.b16 %v2311
        %v2636 = vunpack.c.h.b16 %v2311
        %v2637 = vunpack.c.l.b16 %v2312
        %v2638 = vunpack.c.h.b16 %v2312
        %v2639 = vunpack.c.l.b16 %v2313
        %v2640 = vunpack.c.h.b16 %v2313
        %v2641 = vunpack.c.l.b16 %v2314
        %v2642 = vunpack.c.h.b16 %v2314
        %v2643 = vunpack.c.l.b16 %v2315
        %v2644 = vunpack.c.h.b16 %v2315
        %v2645 = vunpack.c.l.b16 %v2316
        %v2646 = vunpack.c.h.b16 %v2316
        %v2647 = vunpack.c.l.b16 %v2317
        %v2648 = vunpack.c.h.b16 %v2317
        %v2649 = vunpack.c.l.b16 %v2318
        %v2650 = vunpack.c.h.b16 %v2318
        %v2651 = vunpack.c.l.b16 %v2319
        %v2652 = vunpack.c.h.b16 %v2319
        %v2653 = vunpack.c.l.b16 %v2320
        %v2654 = vunpack.c.h.b16 %v2320
        %v2655 = vunpack.c.l.b16 %v2321
        %v2656 = vunpack.c.h.b16 %v2321
        %v2657 = vunpack.c.l.b16 %v2322
        %v2658 = vunpack.c.h.b16 %v2322
        %v2659 = vunpack.c.l.b16 %v2323
        %v2660 = vunpack.c.h.b16 %v2323
        %v2661 = vunpack.c.l.b16 %v2324
        %v2662 = vunpack.c.h.b16 %v2324
        %v2663 = vunpack.c.l.b16 %v2325
        %v2664 = vunpack.c.h.b16 %v2325
        %v2665 = vunpack.c.l.b16 %v2326
        %v2666 = vunpack.c.h.b16 %v2326
        %v2667 = vunpack.c.l.b16 %v2327
        %v2668 = vunpack.c.h.b16 %v2327
        %v2669 = vunpack.c.l.b16 %v2328
        %v2670 = vunpack.c.h.b16 %v2328
        %v2671 = vunpack.c.l.b16 %v2329
        %v2672 = vunpack.c.h.b16 %v2329
        %v2673 = vunpack.c.l.b16 %v2330
        %v2674 = vunpack.c.h.b16 %v2330
        %v2675 = vunpack.c.l.b16 %v2331
        %v2676 = vunpack.c.h.b16 %v2331
        %v2677 = vunpack.c.l.b16 %v2332
        %v2678 = vunpack.c.h.b16 %v2332
        %v2679 = vunpack.c.l.b16 %v2333
        %v2680 = vunpack.c.h.b16 %v2333
        %v2681 = vunpack.c.l.b16 %v2334
        %v2682 = vunpack.c.h.b16 %v2334
        %v2683 = vunpack.c.l.b16 %v2335
        %v2684 = vunpack.c.h.b16 %v2335
        %v2685 = vunpack.c.l.b16 %v2336
        %v2686 = vunpack.c.h.b16 %v2336
        %v2687 = vunpack.c.l.b16 %v2337
        %v2688 = vunpack.c.h.b16 %v2337
        %v2689 = vunpack.c.l.b16 %v2338
        %v2690 = vunpack.c.h.b16 %v2338
        %v2691 = vunpack.c.l.b16 %v2339
        %v2692 = vunpack.c.h.b16 %v2339
        %v2693 = vunpack.c.l.b16 %v2340
        %v2694 = vunpack.c.h.b16 %v2340
        %v2695 = vunpack.c.l.b16 %v2341
        %v2696 = vunpack.c.h.b16 %v2341
        %v2697 = vunpack.c.l.b16 %v2342
        %v2698 = vunpack.c.h.b16 %v2342
        %v2699 = vunpack.c.l.b16 %v2343
        %v2700 = vunpack.c.h.b16 %v2343
        %v2701 = vunpack.c.l.b16 %v2344
        %v2702 = vunpack.c.h.b16 %v2344
        %v2703 = vunpack.c.l.b16 %v2345
        %v2704 = vunpack.c.h.b16 %v2345
        %v2705 = vunpack.c.l.b16 %v2346
        %v2706 = vunpack.c.h.b16 %v2346
        %v2707 = vunpack.c.l.b16 %v2347
        %v2708 = vunpack.c.h.b16 %v2347
        %v2709 = vunpack.c.l.b16 %v2348
        %v2710 = vunpack.c.h.b16 %v2348
        %v2711 = vunpack.c.l.b16 %v2349
        %v2712 = vunpack.c.h.b16 %v2349
        %v2713 = vunpack.c.l.b16 %v2350
        %v2714 = vunpack.c.h.b16 %v2350
        %v2715 = vunpack.c.l.b16 %v2351
        %v2716 = vunpack.c.h.b16 %v2351
        %v2717 = vunpack.c.l.b16 %v2352
        %v2718 = vunpack.c.h.b16 %v2352
        %v2719 = vunpack.c.l.b16 %v2353
        %v2720 = vunpack.c.h.b16 %v2353
        %v2721 = vunpack.c.l.b16 %v2354
        %v2722 = vunpack.c.h.b16 %v2354
        %v2723 = vunpack.c.l.b16 %v2355
        %v2724 = vunpack.c.h.b16 %v2355
        %v2725 = vunpack.c.l.b16 %v2356
        %v2726 = vunpack.c.h.b16 %v2356
        %v2727 = vunpack.c.l.b16 %v2357
        %v2728 = vunpack.c.h.b16 %v2357
        %v2729 = vunpack.c.l.b16 %v2358
        %v2730 = vunpack.c.h.b16 %v2358
        %v2731 = vunpack.c.l.b16 %v2359
        %v2732 = vunpack.c.h.b16 %v2359
        %v2733 = vunpack.c.l.b16 %v2360
        %v2734 = vunpack.c.h.b16 %v2360
        %v2735 = vunpack.c.l.b16 %v2361
        %v2736 = vunpack.c.h.b16 %v2361
        %v2737 = vunpack.c.l.b16 %v2362
        %v2738 = vunpack.c.h.b16 %v2362
        %v2739 = vunpack.c.l.b16 %v2363
        %v2740 = vunpack.c.h.b16 %v2363
        %v2741 = vunpack.c.l.b16 %v2364
        %v2742 = vunpack.c.h.b16 %v2364
        %v2743 = vunpack.c.l.b16 %v2365
        %v2744 = vunpack.c.h.b16 %v2365
        %v2745 = vunpack.c.l.b16 %v2366
        %v2746 = vunpack.c.h.b16 %v2366
        %v2747 = vunpack.c.l.b16 %v2367
        %v2748 = vunpack.c.h.b16 %v2367
        %v2749 = vunpack.c.l.b16 %v2368
        %v2750 = vunpack.c.h.b16 %v2368
        %v2751 = vunpack.c.l.b16 %v2369
        %v2752 = vunpack.c.h.b16 %v2369
        %v2753 = vunpack.c.l.b16 %v2370
        %v2754 = vunpack.c.h.b16 %v2370
        %v2755 = vunpack.c.l.b16 %v2371
        %v2756 = vunpack.c.h.b16 %v2371
        %v2757 = vunpack.c.l.b16 %v2372
        %v2758 = vunpack.c.h.b16 %v2372
        %v2759 = vunpack.c.l.b16 %v2373
        %v2760 = vunpack.c.h.b16 %v2373
        %v2761 = vunpack.c.l.b16 %v2374
        %v2762 = vunpack.c.h.b16 %v2374
        %v2763 = vunpack.c.l.b16 %v2375
        %v2764 = vunpack.c.h.b16 %v2375
        %v2765 = vunpack.c.l.b16 %v2376
        %v2766 = vunpack.c.h.b16 %v2376
        %v2767 = vunpack.c.l.b16 %v2377
        %v2768 = vunpack.c.h.b16 %v2377
        %v2769 = vunpack.c.l.b16 %v2378
        %v2770 = vunpack.c.h.b16 %v2378
        %v2771 = vunpack.c.l.b16 %v2379
        %v2772 = vunpack.c.h.b16 %v2379
        %v2773 = vunpack.c.l.b16 %v2380
        %v2774 = vunpack.c.h.b16 %v2380
        %v2775 = vpack.c.b16 %v2523, %v2519
        %v2776 = vpack.c.b16 %v2524, %v2520
        %v2777 = vpack.c.b16 %v2525, %v2521
        %v2778 = vpack.c.b16 %v2526, %v2522
        %v2779 = vpack.c.b16 %v2531, %v2527
        %v2780 = vpack.c.b16 %v2532, %v2528
        %v2781 = vpack.c.b16 %v2533, %v2529
        %v2782 = vpack.c.b16 %v2534, %v2530
        %v2783 = vpack.c.b16 %v2539, %v2535
        %v2784 = vpack.c.b16 %v2540, %v2536
        %v2785 = vpack.c.b16 %v2541, %v2537
        %v2786 = vpack.c.b16 %v2542, %v2538
        %v2787 = vpack.c.b16 %v2547, %v2543
        %v2788 = vpack.c.b16 %v2548, %v2544
        %v2789 = vpack.c.b16 %v2549, %v2545
        %v2790 = vpack.c.b16 %v2550, %v2546
        %v2791 = vpack.c.b16 %v2555, %v2551
        %v2792 = vpack.c.b16 %v2556, %v2552
        %v2793 = vpack.c.b16 %v2557, %v2553
        %v2794 = vpack.c.b16 %v2558, %v2554
        %v2795 = vpack.c.b16 %v2563, %v2559
        %v2796 = vpack.c.b16 %v2564, %v2560
        %v2797 = vpack.c.b16 %v2565, %v2561
        %v2798 = vpack.c.b16 %v2566, %v2562
        %v2799 = vpack.c.b16 %v2571, %v2567
        %v2800 = vpack.c.b16 %v2572, %v2568
        %v2801 = vpack.c.b16 %v2573, %v2569
        %v2802 = vpack.c.b16 %v2574, %v2570
        %v2803 = vpack.c.b16 %v2579, %v2575
        %v2804 = vpack.c.b16 %v2580, %v2576
        %v2805 = vpack.c.b16 %v2581, %v2577
        %v2806 = vpack.c.b16 %v2582, %v2578
        %v2807 = vpack.c.b16 %v2587, %v2583
        %v2808 = vpack.c.b16 %v2588, %v2584
        %v2809 = vpack.c.b16 %v2589, %v2585
        %v2810 = vpack.c.b16 %v2590, %v2586
        %v2811 = vpack.c.b16 %v2595, %v2591
        %v2812 = vpack.c.b16 %v2596, %v2592
        %v2813 = vpack.c.b16 %v2597, %v2593
        %v2814 = vpack.c.b16 %v2598, %v2594
        %v2815 = vpack.c.b16 %v2603, %v2599
        %v2816 = vpack.c.b16 %v2604, %v2600
        %v2817 = vpack.c.b16 %v2605, %v2601
        %v2818 = vpack.c.b16 %v2606, %v2602
        %v2819 = vpack.c.b16 %v2611, %v2607
        %v2820 = vpack.c.b16 %v2612, %v2608
        %v2821 = vpack.c.b16 %v2613, %v2609
        %v2822 = vpack.c.b16 %v2614, %v2610
        %v2823 = vpack.c.b16 %v2619, %v2615
        %v2824 = vpack.c.b16 %v2620, %v2616
        %v2825 = vpack.c.b16 %v2621, %v2617
        %v2826 = vpack.c.b16 %v2622, %v2618
        %v2827 = vpack.c.b16 %v2627, %v2623
        %v2828 = vpack.c.b16 %v2628, %v2624
        %v2829 = vpack.c.b16 %v2629, %v2625
        %v2830 = vpack.c.b16 %v2630, %v2626
        %v2831 = vpack.c.b16 %v2635, %v2631
        %v2832 = vpack.c.b16 %v2636, %v2632
        %v2833 = vpack.c.b16 %v2637, %v2633
        %v2834 = vpack.c.b16 %v2638, %v2634
        %v2835 = vpack.c.b16 %v2643, %v2639
        %v2836 = vpack.c.b16 %v2644, %v2640
        %v2837 = vpack.c.b16 %v2645, %v2641
        %v2838 = vpack.c.b16 %v2646, %v2642
        %v2839 = vpack.c.b16 %v2651, %v2647
        %v2840 = vpack.c.b16 %v2652, %v2648
        %v2841 = vpack.c.b16 %v2653, %v2649
        %v2842 = vpack.c.b16 %v2654, %v2650
        %v2843 = vpack.c.b16 %v2659, %v2655
        %v2844 = vpack.c.b16 %v2660, %v2656
        %v2845 = vpack.c.b16 %v2661, %v2657
        %v2846 = vpack.c.b16 %v2662, %v2658
        %v2847 = vpack.c.b16 %v2667, %v2663
        %v2848 = vpack.c.b16 %v2668, %v2664
        %v2849 = vpack.c.b16 %v2669, %v2665
        %v2850 = vpack.c.b16 %v2670, %v2666
        %v2851 = vpack.c.b16 %v2675, %v2671
        %v2852 = vpack.c.b16 %v2676, %v2672
        %v2853 = vpack.c.b16 %v2677, %v2673
        %v2854 = vpack.c.b16 %v2678, %v2674
        %v2855 = vpack.c.b16 %v2683, %v2679
        %v2856 = vpack.c.b16 %v2684, %v2680
        %v2857 = vpack.c.b16 %v2685, %v2681
        %v2858 = vpack.c.b16 %v2686, %v2682
        %v2859 = vpack.c.b16 %v2691, %v2687
        %v2860 = vpack.c.b16 %v2692, %v2688
        %v2861 = vpack.c.b16 %v2693, %v2689
        %v2862 = vpack.c.b16 %v2694, %v2690
        %v2863 = vpack.c.b16 %v2699, %v2695
        %v2864 = vpack.c.b16 %v2700, %v2696
        %v2865 = vpack.c.b16 %v2701, %v2697
        %v2866 = vpack.c.b16 %v2702, %v2698
        %v2867 = vpack.c.b16 %v2707, %v2703
        %v2868 = vpack.c.b16 %v2708, %v2704
        %v2869 = vpack.c.b16 %v2709, %v2705
        %v2870 = vpack.c.b16 %v2710, %v2706
        %v2871 = vpack.c.b16 %v2715, %v2711
        %v2872 = vpack.c.b16 %v2716, %v2712
        %v2873 = vpack.c.b16 %v2717, %v2713
        %v2874 = vpack.c.b16 %v2718, %v2714
        %v2875 = vpack.c.b16 %v2723, %v2719
        %v2876 = vpack.c.b16 %v2724, %v2720
        %v2877 = vpack.c.b16 %v2725, %v2721
        %v2878 = vpack.c.b16 %v2726, %v2722
        %v2879 = vpack.c.b16 %v2731, %v2727
        %v2880 = vpack.c.b16 %v2732, %v2728
        %v2881 = vpack.c.b16 %v2733, %v2729
        %v2882 = vpack.c.b16 %v2734, %v2730
        %v2883 = vpack.c.b16 %v2739, %v2735
        %v2884 = vpack.c.b16 %v2740, %v2736
        %v2885 = vpack.c.b16 %v2741, %v2737
        %v2886 = vpack.c.b16 %v2742, %v2738
        %v2887 = vpack.c.b16 %v2747, %v2743
        %v2888 = vpack.c.b16 %v2748, %v2744
        %v2889 = vpack.c.b16 %v2749, %v2745
        %v2890 = vpack.c.b16 %v2750, %v2746
        %v2891 = vpack.c.b16 %v2755, %v2751
        %v2892 = vpack.c.b16 %v2756, %v2752
        %v2893 = vpack.c.b16 %v2757, %v2753
        %v2894 = vpack.c.b16 %v2758, %v2754
        %v2895 = vpack.c.b16 %v2763, %v2759
        %v2896 = vpack.c.b16 %v2764, %v2760
        %v2897 = vpack.c.b16 %v2765, %v2761
        %v2898 = vpack.c.b16 %v2766, %v2762
        %v2899 = vpack.c.b16 %v2771, %v2767
        %v2900 = vpack.c.b16 %v2772, %v2768
        %v2901 = vpack.c.b16 %v2773, %v2769
        %v2902 = vpack.c.b16 %v2774, %v2770
        %3031 = vmatpush.bf16.msra.mxu0 %v2803
        %3032 = vmatpush.bf16.msra.mxu0 %v2799
        %3033 = vmatpush.bf16.msra.mxu0 %v2795
        %3034 = vmatpush.bf16.msra.mxu0 %v2791
        %3035 = vmatpush.bf16.msra.mxu0 %v2787
        %3036 = vmatpush.bf16.msra.mxu0 %v2783
        %3037 = vmatpush.bf16.msra.mxu0 %v2779
        %3038 = vmatpush.bf16.msra.mxu0 %v2775
        %3039 = vmatmul.bf16.gmra.mxu0 %v2249
        %v3040 = vpop.f32.mrf.mxu0
        %v3041 = vadd.f32 %v2383, %v3040
        %v3042 = vpop.f32.mrf.mxu0
        %v3043 = vadd.f32 %v2383, %v3042
        %3044 = vdwg.mxu0
        %3045 = vmatpush.bf16.msra.mxu0 %v2835
        %3046 = vmatpush.bf16.msra.mxu0 %v2831
        %3047 = vmatpush.bf16.msra.mxu0 %v2827
        %3048 = vmatpush.bf16.msra.mxu0 %v2823
        %3049 = vmatpush.bf16.msra.mxu0 %v2819
        %3050 = vmatpush.bf16.msra.mxu0 %v2815
        %3051 = vmatpush.bf16.msra.mxu0 %v2811
        %3052 = vmatpush.bf16.msra.mxu0 %v2807
        %3053 = vmatmul.bf16.gmra.mxu0 %v2250
        %v3054 = vpop.f32.mrf.mxu0
        %v3055 = vadd.f32 %v3041, %v3054
        %v3056 = vpop.f32.mrf.mxu0
        %v3057 = vadd.f32 %v3043, %v3056
        %3058 = vdwg.mxu0
        %3059 = vmatpush.bf16.msra.mxu0 %v2867
        %3060 = vmatpush.bf16.msra.mxu0 %v2863
        %3061 = vmatpush.bf16.msra.mxu0 %v2859
        %3062 = vmatpush.bf16.msra.mxu0 %v2855
        %3063 = vmatpush.bf16.msra.mxu0 %v2851
        %3064 = vmatpush.bf16.msra.mxu0 %v2847
        %3065 = vmatpush.bf16.msra.mxu0 %v2843
        %3066 = vmatpush.bf16.msra.mxu0 %v2839
        %3067 = vmatmul.bf16.gmra.mxu0 %v2251
        %v3068 = vpop.f32.mrf.mxu0
        %v3069 = vadd.f32 %v3055, %v3068
        %v3070 = vpop.f32.mrf.mxu0
        %v3071 = vadd.f32 %v3057, %v3070
        %3072 = vdwg.mxu0
        %3073 = vmatpush.bf16.msra.mxu0 %v2899
        %3074 = vmatpush.bf16.msra.mxu0 %v2895
        %3075 = vmatpush.bf16.msra.mxu0 %v2891
        %3076 = vmatpush.bf16.msra.mxu0 %v2887
        %3077 = vmatpush.bf16.msra.mxu0 %v2883
        %3078 = vmatpush.bf16.msra.mxu0 %v2879
        %3079 = vmatpush.bf16.msra.mxu0 %v2875
        %3080 = vmatpush.bf16.msra.mxu0 %v2871
        %3081 = vmatmul.bf16.gmra.mxu0 %v2252
        %v3082 = vpop.f32.mrf.mxu0
        %v3083 = vadd.f32 %v3069, %v3082
        %v3084 = vpop.f32.mrf.mxu0
        %v3085 = vadd.f32 %v3071, %v3084
        %3086 = vdwg.mxu0
        %3087 = vmatpush.bf16.msra.mxu0 %v2804
        %3088 = vmatpush.bf16.msra.mxu0 %v2800
        %3089 = vmatpush.bf16.msra.mxu0 %v2796
        %3090 = vmatpush.bf16.msra.mxu0 %v2792
        %3091 = vmatpush.bf16.msra.mxu0 %v2788
        %3092 = vmatpush.bf16.msra.mxu0 %v2784
        %3093 = vmatpush.bf16.msra.mxu0 %v2780
        %3094 = vmatpush.bf16.msra.mxu0 %v2776
        %3095 = vmatmul.bf16.gmra.mxu0 %v2249
        %v3096 = vpop.f32.mrf.mxu0
        %v3097 = vadd.f32 %v2384, %v3096
        %v3098 = vpop.f32.mrf.mxu0
        %v3099 = vadd.f32 %v2384, %v3098
        %3100 = vdwg.mxu0
        %3101 = vmatpush.bf16.msra.mxu0 %v2836
        %3102 = vmatpush.bf16.msra.mxu0 %v2832
        %3103 = vmatpush.bf16.msra.mxu0 %v2828
        %3104 = vmatpush.bf16.msra.mxu0 %v2824
        %3105 = vmatpush.bf16.msra.mxu0 %v2820
        %3106 = vmatpush.bf16.msra.mxu0 %v2816
        %3107 = vmatpush.bf16.msra.mxu0 %v2812
        %3108 = vmatpush.bf16.msra.mxu0 %v2808
        %3109 = vmatmul.bf16.gmra.mxu0 %v2250
        %v3110 = vpop.f32.mrf.mxu0
        %v3111 = vadd.f32 %v3097, %v3110
        %v3112 = vpop.f32.mrf.mxu0
        %v3113 = vadd.f32 %v3099, %v3112
        %3114 = vdwg.mxu0
        %3115 = vmatpush.bf16.msra.mxu0 %v2868
        %3116 = vmatpush.bf16.msra.mxu0 %v2864
        %3117 = vmatpush.bf16.msra.mxu0 %v2860
        %3118 = vmatpush.bf16.msra.mxu0 %v2856
        %3119 = vmatpush.bf16.msra.mxu0 %v2852
        %3120 = vmatpush.bf16.msra.mxu0 %v2848
        %3121 = vmatpush.bf16.msra.mxu0 %v2844
        %3122 = vmatpush.bf16.msra.mxu0 %v2840
        %3123 = vmatmul.bf16.gmra.mxu0 %v2251
        %v3124 = vpop.f32.mrf.mxu0
        %v3125 = vadd.f32 %v3111, %v3124
        %v3126 = vpop.f32.mrf.mxu0
        %v3127 = vadd.f32 %v3113, %v3126
        %3128 = vdwg.mxu0
        %3129 = vmatpush.bf16.msra.mxu0 %v2900
        %3130 = vmatpush.bf16.msra.mxu0 %v2896
        %3131 = vmatpush.bf16.msra.mxu0 %v2892
        %3132 = vmatpush.bf16.msra.mxu0 %v2888
        %3133 = vmatpush.bf16.msra.mxu0 %v2884
        %3134 = vmatpush.bf16.msra.mxu0 %v2880
        %3135 = vmatpush.bf16.msra.mxu0 %v2876
        %3136 = vmatpush.bf16.msra.mxu0 %v2872
        %3137 = vmatmul.bf16.gmra.mxu0 %v2252
        %v3138 = vpop.f32.mrf.mxu0
        %v3139 = vadd.f32 %v3125, %v3138
        %v3140 = vpop.f32.mrf.mxu0
        %v3141 = vadd.f32 %v3127, %v3140
        %3142 = vdwg.mxu0
        %3143 = vmatpush.bf16.msra.mxu0 %v2805
        %3144 = vmatpush.bf16.msra.mxu0 %v2801
        %3145 = vmatpush.bf16.msra.mxu0 %v2797
        %3146 = vmatpush.bf16.msra.mxu0 %v2793
        %3147 = vmatpush.bf16.msra.mxu0 %v2789
        %3148 = vmatpush.bf16.msra.mxu0 %v2785
        %3149 = vmatpush.bf16.msra.mxu0 %v2781
        %3150 = vmatpush.bf16.msra.mxu0 %v2777
        %3151 = vmatmul.bf16.gmra.mxu0 %v2249
        %v3152 = vpop.f32.mrf.mxu0
        %v3153 = vadd.f32 %v2385, %v3152
        %v3154 = vpop.f32.mrf.mxu0
        %v3155 = vadd.f32 %v2385, %v3154
        %3156 = vdwg.mxu0
        %3157 = vmatpush.bf16.msra.mxu0 %v2837
        %3158 = vmatpush.bf16.msra.mxu0 %v2833
        %3159 = vmatpush.bf16.msra.mxu0 %v2829
        %3160 = vmatpush.bf16.msra.mxu0 %v2825
        %3161 = vmatpush.bf16.msra.mxu0 %v2821
        %3162 = vmatpush.bf16.msra.mxu0 %v2817
        %3163 = vmatpush.bf16.msra.mxu0 %v2813
        %3164 = vmatpush.bf16.msra.mxu0 %v2809
        %3165 = vmatmul.bf16.gmra.mxu0 %v2250
        %v3166 = vpop.f32.mrf.mxu0
        %v3167 = vadd.f32 %v3153, %v3166
        %v3168 = vpop.f32.mrf.mxu0
        %v3169 = vadd.f32 %v3155, %v3168
        %3170 = vdwg.mxu0
        %3171 = vmatpush.bf16.msra.mxu0 %v2869
        %3172 = vmatpush.bf16.msra.mxu0 %v2865
        %3173 = vmatpush.bf16.msra.mxu0 %v2861
        %3174 = vmatpush.bf16.msra.mxu0 %v2857
        %3175 = vmatpush.bf16.msra.mxu0 %v2853
        %3176 = vmatpush.bf16.msra.mxu0 %v2849
        %3177 = vmatpush.bf16.msra.mxu0 %v2845
        %3178 = vmatpush.bf16.msra.mxu0 %v2841
        %3179 = vmatmul.bf16.gmra.mxu0 %v2251
        %v3180 = vpop.f32.mrf.mxu0
        %v3181 = vadd.f32 %v3167, %v3180
        %v3182 = vpop.f32.mrf.mxu0
        %v3183 = vadd.f32 %v3169, %v3182
        %3184 = vdwg.mxu0
        %3185 = vmatpush.bf16.msra.mxu0 %v2901
        %3186 = vmatpush.bf16.msra.mxu0 %v2897
        %3187 = vmatpush.bf16.msra.mxu0 %v2893
        %3188 = vmatpush.bf16.msra.mxu0 %v2889
        %3189 = vmatpush.bf16.msra.mxu0 %v2885
        %3190 = vmatpush.bf16.msra.mxu0 %v2881
        %3191 = vmatpush.bf16.msra.mxu0 %v2877
        %3192 = vmatpush.bf16.msra.mxu0 %v2873
        %3193 = vmatmul.bf16.gmra.mxu0 %v2252
        %v3194 = vpop.f32.mrf.mxu0
        %v3195 = vadd.f32 %v3181, %v3194
        %v3196 = vpop.f32.mrf.mxu0
        %v3197 = vadd.f32 %v3183, %v3196
        %3198 = vdwg.mxu0
        %3199 = vmatpush.bf16.msra.mxu0 %v2806
        %3200 = vmatpush.bf16.msra.mxu0 %v2802
        %3201 = vmatpush.bf16.msra.mxu0 %v2798
        %3202 = vmatpush.bf16.msra.mxu0 %v2794
        %3203 = vmatpush.bf16.msra.mxu0 %v2790
        %3204 = vmatpush.bf16.msra.mxu0 %v2786
        %3205 = vmatpush.bf16.msra.mxu0 %v2782
        %3206 = vmatpush.bf16.msra.mxu0 %v2778
        %3207 = vmatmul.bf16.gmra.mxu0 %v2249
        %v3208 = vpop.f32.mrf.mxu0
        %v3209 = vadd.f32 %v2386, %v3208
        %v3210 = vpop.f32.mrf.mxu0
        %v3211 = vadd.f32 %v2386, %v3210
        %3212 = vdwg.mxu0
        %3213 = vmatpush.bf16.msra.mxu0 %v2838
        %3214 = vmatpush.bf16.msra.mxu0 %v2834
        %3215 = vmatpush.bf16.msra.mxu0 %v2830
        %3216 = vmatpush.bf16.msra.mxu0 %v2826
        %3217 = vmatpush.bf16.msra.mxu0 %v2822
        %3218 = vmatpush.bf16.msra.mxu0 %v2818
        %3219 = vmatpush.bf16.msra.mxu0 %v2814
        %3220 = vmatpush.bf16.msra.mxu0 %v2810
        %3221 = vmatmul.bf16.gmra.mxu0 %v2250
        %v3222 = vpop.f32.mrf.mxu0
        %v3223 = vadd.f32 %v3209, %v3222
        %v3224 = vpop.f32.mrf.mxu0
        %v3225 = vadd.f32 %v3211, %v3224
        %3226 = vdwg.mxu0
        %3227 = vmatpush.bf16.msra.mxu0 %v2870
        %3228 = vmatpush.bf16.msra.mxu0 %v2866
        %3229 = vmatpush.bf16.msra.mxu0 %v2862
        %3230 = vmatpush.bf16.msra.mxu0 %v2858
        %3231 = vmatpush.bf16.msra.mxu0 %v2854
        %3232 = vmatpush.bf16.msra.mxu0 %v2850
        %3233 = vmatpush.bf16.msra.mxu0 %v2846
        %3234 = vmatpush.bf16.msra.mxu0 %v2842
        %3235 = vmatmul.bf16.gmra.mxu0 %v2251
        %v3236 = vpop.f32.mrf.mxu0
        %v3237 = vadd.f32 %v3223, %v3236
        %v3238 = vpop.f32.mrf.mxu0
        %v3239 = vadd.f32 %v3225, %v3238
        %3240 = vdwg.mxu0
        %3241 = vmatpush.bf16.msra.mxu0 %v2902
        %3242 = vmatpush.bf16.msra.mxu0 %v2898
        %3243 = vmatpush.bf16.msra.mxu0 %v2894
        %3244 = vmatpush.bf16.msra.mxu0 %v2890
        %3245 = vmatpush.bf16.msra.mxu0 %v2886
        %3246 = vmatpush.bf16.msra.mxu0 %v2882
        %3247 = vmatpush.bf16.msra.mxu0 %v2878
        %3248 = vmatpush.bf16.msra.mxu0 %v2874
        %3249 = vmatmul.bf16.gmra.mxu0 %v2252
        %v3250 = vpop.f32.mrf.mxu0
        %v3251 = vadd.f32 %v3237, %v3250
        %v3252 = vpop.f32.mrf.mxu0
        %v3253 = vadd.f32 %v3239, %v3252
        %3254 = vdwg.mxu0
        %v3255 = vmax.f32 %v3083, 0.0
        %v3256 = vmax.f32 %v3139, 0.0
        %v3257 = vmax.f32 %v3195, 0.0
        %v3258 = vmax.f32 %v3251, 0.0
        %v3259 = vmax.f32 %v3085, 0.0
        %v3260 = vmax.f32 %v3141, 0.0
        %v3261 = vmax.f32 %v3197, 0.0
        %v3262 = vmax.f32 %v3253, 0.0
        %v3263 = vpack.c.bf16 %v3259, %v3255
        %v3264 = vpack.c.bf16 %v3260, %v3256
        %v3265 = vpack.c.bf16 %v3261, %v3257
        %v3266 = vpack.c.bf16 %v3262, %v3258
        %v3267 = vld [vmem:[#allocation11] sm:$0xff]
        %v3268 = vld [vmem:[#allocation11 + $0x8] sm:$0xff]
        %v3269 = vld [vmem:[#allocation11 + $0x10] sm:$0xff]
        %v3270 = vld [vmem:[#allocation11 + $0x18] sm:$0xff]
        %v3271 = vld [vmem:[#allocation11 + $0x20] sm:$0xff]
        %v3272 = vld [vmem:[#allocation11 + $0x28] sm:$0xff]
        %v3273 = vld [vmem:[#allocation11 + $0x30] sm:$0xff]
        %v3274 = vld [vmem:[#allocation11 + $0x38] sm:$0xff]
        %v3275 = vld [vmem:[#allocation11 + $0x40] sm:$0xff]
        %v3276 = vld [vmem:[#allocation11 + $0x48] sm:$0xff]
        %v3277 = vld [vmem:[#allocation11 + $0x50] sm:$0xff]
        %v3278 = vld [vmem:[#allocation11 + $0x58] sm:$0xff]
        %v3279 = vld [vmem:[#allocation11 + $0x60] sm:$0xff]
        %v3280 = vld [vmem:[#allocation11 + $0x68] sm:$0xff]
        %v3281 = vld [vmem:[#allocation11 + $0x70] sm:$0xff]
        %v3282 = vld [vmem:[#allocation11 + $0x78] sm:$0xff]
        %v3283 = vld [vmem:[#allocation11 + $0x80] sm:$0xff]
        %v3284 = vld [vmem:[#allocation11 + $0x88] sm:$0xff]
        %v3285 = vld [vmem:[#allocation11 + $0x90] sm:$0xff]
        %v3286 = vld [vmem:[#allocation11 + $0x98] sm:$0xff]
        %v3287 = vld [vmem:[#allocation11 + $0xa0] sm:$0xff]
        %v3288 = vld [vmem:[#allocation11 + $0xa8] sm:$0xff]
        %v3289 = vld [vmem:[#allocation11 + $0xb0] sm:$0xff]
        %v3290 = vld [vmem:[#allocation11 + $0xb8] sm:$0xff]
        %v3291 = vld [vmem:[#allocation11 + $0xc0] sm:$0xff]
        %v3292 = vld [vmem:[#allocation11 + $0xc8] sm:$0xff]
        %v3293 = vld [vmem:[#allocation11 + $0xd0] sm:$0xff]
        %v3294 = vld [vmem:[#allocation11 + $0xd8] sm:$0xff]
        %v3295 = vld [vmem:[#allocation11 + $0xe0] sm:$0xff]
        %v3296 = vld [vmem:[#allocation11 + $0xe8] sm:$0xff]
        %v3297 = vld [vmem:[#allocation11 + $0xf0] sm:$0xff]
        %v3298 = vld [vmem:[#allocation11 + $0xf8] sm:$0xff]
        %v3299 = vld [vmem:[#allocation11 + $0x100] sm:$0xff]
        %v3300 = vld [vmem:[#allocation11 + $0x108] sm:$0xff]
        %v3301 = vld [vmem:[#allocation11 + $0x110] sm:$0xff]
        %v3302 = vld [vmem:[#allocation11 + $0x118] sm:$0xff]
        %v3303 = vld [vmem:[#allocation11 + $0x120] sm:$0xff]
        %v3304 = vld [vmem:[#allocation11 + $0x128] sm:$0xff]
        %v3305 = vld [vmem:[#allocation11 + $0x130] sm:$0xff]
        %v3306 = vld [vmem:[#allocation11 + $0x138] sm:$0xff]
        %v3307 = vld [vmem:[#allocation11 + $0x140] sm:$0xff]
        %v3308 = vld [vmem:[#allocation11 + $0x148] sm:$0xff]
        %v3309 = vld [vmem:[#allocation11 + $0x150] sm:$0xff]
        %v3310 = vld [vmem:[#allocation11 + $0x158] sm:$0xff]
        %v3311 = vld [vmem:[#allocation11 + $0x160] sm:$0xff]
        %v3312 = vld [vmem:[#allocation11 + $0x168] sm:$0xff]
        %v3313 = vld [vmem:[#allocation11 + $0x170] sm:$0xff]
        %v3314 = vld [vmem:[#allocation11 + $0x178] sm:$0xff]
        %v3315 = vld [vmem:[#allocation11 + $0x180] sm:$0xff]
        %v3316 = vld [vmem:[#allocation11 + $0x188] sm:$0xff]
        %v3317 = vld [vmem:[#allocation11 + $0x190] sm:$0xff]
        %v3318 = vld [vmem:[#allocation11 + $0x198] sm:$0xff]
        %v3319 = vld [vmem:[#allocation11 + $0x1a0] sm:$0xff]
        %v3320 = vld [vmem:[#allocation11 + $0x1a8] sm:$0xff]
        %v3321 = vld [vmem:[#allocation11 + $0x1b0] sm:$0xff]
        %v3322 = vld [vmem:[#allocation11 + $0x1b8] sm:$0xff]
        %v3323 = vld [vmem:[#allocation11 + $0x1c0] sm:$0xff]
        %v3324 = vld [vmem:[#allocation11 + $0x1c8] sm:$0xff]
        %v3325 = vld [vmem:[#allocation11 + $0x1d0] sm:$0xff]
        %v3326 = vld [vmem:[#allocation11 + $0x1d8] sm:$0xff]
        %v3327 = vld [vmem:[#allocation11 + $0x1e0] sm:$0xff]
        %v3328 = vld [vmem:[#allocation11 + $0x1e8] sm:$0xff]
        %v3329 = vld [vmem:[#allocation11 + $0x1f0] sm:$0xff]
        %v3330 = vld [vmem:[#allocation11 + $0x1f8] sm:$0xff]
        %v3331 = vld [vmem:[#allocation11 + $0x200] sm:$0xff]
        %v3332 = vld [vmem:[#allocation11 + $0x208] sm:$0xff]
        %v3333 = vld [vmem:[#allocation11 + $0x210] sm:$0xff]
        %v3334 = vld [vmem:[#allocation11 + $0x218] sm:$0xff]
        %v3335 = vld [vmem:[#allocation11 + $0x220] sm:$0xff]
        %v3336 = vld [vmem:[#allocation11 + $0x228] sm:$0xff]
        %v3337 = vld [vmem:[#allocation11 + $0x230] sm:$0xff]
        %v3338 = vld [vmem:[#allocation11 + $0x238] sm:$0xff]
        %v3339 = vld [vmem:[#allocation11 + $0x240] sm:$0xff]
        %v3340 = vld [vmem:[#allocation11 + $0x248] sm:$0xff]
        %v3341 = vld [vmem:[#allocation11 + $0x250] sm:$0xff]
        %v3342 = vld [vmem:[#allocation11 + $0x258] sm:$0xff]
        %v3343 = vld [vmem:[#allocation11 + $0x260] sm:$0xff]
        %v3344 = vld [vmem:[#allocation11 + $0x268] sm:$0xff]
        %v3345 = vld [vmem:[#allocation11 + $0x270] sm:$0xff]
        %v3346 = vld [vmem:[#allocation11 + $0x278] sm:$0xff]
        %v3347 = vld [vmem:[#allocation11 + $0x280] sm:$0xff]
        %v3348 = vld [vmem:[#allocation11 + $0x288] sm:$0xff]
        %v3349 = vld [vmem:[#allocation11 + $0x290] sm:$0xff]
        %v3350 = vld [vmem:[#allocation11 + $0x298] sm:$0xff]
        %v3351 = vld [vmem:[#allocation11 + $0x2a0] sm:$0xff]
        %v3352 = vld [vmem:[#allocation11 + $0x2a8] sm:$0xff]
        %v3353 = vld [vmem:[#allocation11 + $0x2b0] sm:$0xff]
        %v3354 = vld [vmem:[#allocation11 + $0x2b8] sm:$0xff]
        %v3355 = vld [vmem:[#allocation11 + $0x2c0] sm:$0xff]
        %v3356 = vld [vmem:[#allocation11 + $0x2c8] sm:$0xff]
        %v3357 = vld [vmem:[#allocation11 + $0x2d0] sm:$0xff]
        %v3358 = vld [vmem:[#allocation11 + $0x2d8] sm:$0xff]
        %v3359 = vld [vmem:[#allocation11 + $0x2e0] sm:$0xff]
        %v3360 = vld [vmem:[#allocation11 + $0x2e8] sm:$0xff]
        %v3361 = vld [vmem:[#allocation11 + $0x2f0] sm:$0xff]
        %v3362 = vld [vmem:[#allocation11 + $0x2f8] sm:$0xff]
        %v3363 = vld [vmem:[#allocation11 + $0x300] sm:$0xff]
        %v3364 = vld [vmem:[#allocation11 + $0x308] sm:$0xff]
        %v3365 = vld [vmem:[#allocation11 + $0x310] sm:$0xff]
        %v3366 = vld [vmem:[#allocation11 + $0x318] sm:$0xff]
        %v3367 = vld [vmem:[#allocation11 + $0x320] sm:$0xff]
        %v3368 = vld [vmem:[#allocation11 + $0x328] sm:$0xff]
        %v3369 = vld [vmem:[#allocation11 + $0x330] sm:$0xff]
        %v3370 = vld [vmem:[#allocation11 + $0x338] sm:$0xff]
        %v3371 = vld [vmem:[#allocation11 + $0x340] sm:$0xff]
        %v3372 = vld [vmem:[#allocation11 + $0x348] sm:$0xff]
        %v3373 = vld [vmem:[#allocation11 + $0x350] sm:$0xff]
        %v3374 = vld [vmem:[#allocation11 + $0x358] sm:$0xff]
        %v3375 = vld [vmem:[#allocation11 + $0x360] sm:$0xff]
        %v3376 = vld [vmem:[#allocation11 + $0x368] sm:$0xff]
        %v3377 = vld [vmem:[#allocation11 + $0x370] sm:$0xff]
        %v3378 = vld [vmem:[#allocation11 + $0x378] sm:$0xff]
        %v3379 = vld [vmem:[#allocation11 + $0x380] sm:$0xff]
        %v3380 = vld [vmem:[#allocation11 + $0x388] sm:$0xff]
        %v3381 = vld [vmem:[#allocation11 + $0x390] sm:$0xff]
        %v3382 = vld [vmem:[#allocation11 + $0x398] sm:$0xff]
        %v3383 = vld [vmem:[#allocation11 + $0x3a0] sm:$0xff]
        %v3384 = vld [vmem:[#allocation11 + $0x3a8] sm:$0xff]
        %v3385 = vld [vmem:[#allocation11 + $0x3b0] sm:$0xff]
        %v3386 = vld [vmem:[#allocation11 + $0x3b8] sm:$0xff]
        %v3387 = vld [vmem:[#allocation11 + $0x3c0] sm:$0xff]
        %v3388 = vld [vmem:[#allocation11 + $0x3c8] sm:$0xff]
        %v3389 = vld [vmem:[#allocation11 + $0x3d0] sm:$0xff]
        %v3390 = vld [vmem:[#allocation11 + $0x3d8] sm:$0xff]
        %v3391 = vld [vmem:[#allocation11 + $0x3e0] sm:$0xff]
        %v3392 = vld [vmem:[#allocation11 + $0x3e8] sm:$0xff]
        %v3393 = vld [vmem:[#allocation11 + $0x3f0] sm:$0xff]
        %v3394 = vld [vmem:[#allocation11 + $0x3f8] sm:$0xff]
        %v3395 = vld [vmem:[%s6] sm:$0xf]
        %v3397 = vperm.slane %v3395, 0
        %v3398 = vperm.slane %v3395, 1
        %v3399 = vperm.slane %v3395, 2
        %v3400 = vperm.slane %v3395, 3
        %v3533 = vunpack.c.l.b16 %v3267
        %v3534 = vunpack.c.h.b16 %v3267
        %v3535 = vunpack.c.l.b16 %v3268
        %v3536 = vunpack.c.h.b16 %v3268
        %v3537 = vunpack.c.l.b16 %v3269
        %v3538 = vunpack.c.h.b16 %v3269
        %v3539 = vunpack.c.l.b16 %v3270
        %v3540 = vunpack.c.h.b16 %v3270
        %v3541 = vunpack.c.l.b16 %v3271
        %v3542 = vunpack.c.h.b16 %v3271
        %v3543 = vunpack.c.l.b16 %v3272
        %v3544 = vunpack.c.h.b16 %v3272
        %v3545 = vunpack.c.l.b16 %v3273
        %v3546 = vunpack.c.h.b16 %v3273
        %v3547 = vunpack.c.l.b16 %v3274
        %v3548 = vunpack.c.h.b16 %v3274
        %v3549 = vunpack.c.l.b16 %v3275
        %v3550 = vunpack.c.h.b16 %v3275
        %v3551 = vunpack.c.l.b16 %v3276
        %v3552 = vunpack.c.h.b16 %v3276
        %v3553 = vunpack.c.l.b16 %v3277
        %v3554 = vunpack.c.h.b16 %v3277
        %v3555 = vunpack.c.l.b16 %v3278
        %v3556 = vunpack.c.h.b16 %v3278
        %v3557 = vunpack.c.l.b16 %v3279
        %v3558 = vunpack.c.h.b16 %v3279
        %v3559 = vunpack.c.l.b16 %v3280
        %v3560 = vunpack.c.h.b16 %v3280
        %v3561 = vunpack.c.l.b16 %v3281
        %v3562 = vunpack.c.h.b16 %v3281
        %v3563 = vunpack.c.l.b16 %v3282
        %v3564 = vunpack.c.h.b16 %v3282
        %v3565 = vunpack.c.l.b16 %v3283
        %v3566 = vunpack.c.h.b16 %v3283
        %v3567 = vunpack.c.l.b16 %v3284
        %v3568 = vunpack.c.h.b16 %v3284
        %v3569 = vunpack.c.l.b16 %v3285
        %v3570 = vunpack.c.h.b16 %v3285
        %v3571 = vunpack.c.l.b16 %v3286
        %v3572 = vunpack.c.h.b16 %v3286
        %v3573 = vunpack.c.l.b16 %v3287
        %v3574 = vunpack.c.h.b16 %v3287
        %v3575 = vunpack.c.l.b16 %v3288
        %v3576 = vunpack.c.h.b16 %v3288
        %v3577 = vunpack.c.l.b16 %v3289
        %v3578 = vunpack.c.h.b16 %v3289
        %v3579 = vunpack.c.l.b16 %v3290
        %v3580 = vunpack.c.h.b16 %v3290
        %v3581 = vunpack.c.l.b16 %v3291
        %v3582 = vunpack.c.h.b16 %v3291
        %v3583 = vunpack.c.l.b16 %v3292
        %v3584 = vunpack.c.h.b16 %v3292
        %v3585 = vunpack.c.l.b16 %v3293
        %v3586 = vunpack.c.h.b16 %v3293
        %v3587 = vunpack.c.l.b16 %v3294
        %v3588 = vunpack.c.h.b16 %v3294
        %v3589 = vunpack.c.l.b16 %v3295
        %v3590 = vunpack.c.h.b16 %v3295
        %v3591 = vunpack.c.l.b16 %v3296
        %v3592 = vunpack.c.h.b16 %v3296
        %v3593 = vunpack.c.l.b16 %v3297
        %v3594 = vunpack.c.h.b16 %v3297
        %v3595 = vunpack.c.l.b16 %v3298
        %v3596 = vunpack.c.h.b16 %v3298
        %v3597 = vunpack.c.l.b16 %v3299
        %v3598 = vunpack.c.h.b16 %v3299
        %v3599 = vunpack.c.l.b16 %v3300
        %v3600 = vunpack.c.h.b16 %v3300
        %v3601 = vunpack.c.l.b16 %v3301
        %v3602 = vunpack.c.h.b16 %v3301
        %v3603 = vunpack.c.l.b16 %v3302
        %v3604 = vunpack.c.h.b16 %v3302
        %v3605 = vunpack.c.l.b16 %v3303
        %v3606 = vunpack.c.h.b16 %v3303
        %v3607 = vunpack.c.l.b16 %v3304
        %v3608 = vunpack.c.h.b16 %v3304
        %v3609 = vunpack.c.l.b16 %v3305
        %v3610 = vunpack.c.h.b16 %v3305
        %v3611 = vunpack.c.l.b16 %v3306
        %v3612 = vunpack.c.h.b16 %v3306
        %v3613 = vunpack.c.l.b16 %v3307
        %v3614 = vunpack.c.h.b16 %v3307
        %v3615 = vunpack.c.l.b16 %v3308
        %v3616 = vunpack.c.h.b16 %v3308
        %v3617 = vunpack.c.l.b16 %v3309
        %v3618 = vunpack.c.h.b16 %v3309
        %v3619 = vunpack.c.l.b16 %v3310
        %v3620 = vunpack.c.h.b16 %v3310
        %v3621 = vunpack.c.l.b16 %v3311
        %v3622 = vunpack.c.h.b16 %v3311
        %v3623 = vunpack.c.l.b16 %v3312
        %v3624 = vunpack.c.h.b16 %v3312
        %v3625 = vunpack.c.l.b16 %v3313
        %v3626 = vunpack.c.h.b16 %v3313
        %v3627 = vunpack.c.l.b16 %v3314
        %v3628 = vunpack.c.h.b16 %v3314
        %v3629 = vunpack.c.l.b16 %v3315
        %v3630 = vunpack.c.h.b16 %v3315
        %v3631 = vunpack.c.l.b16 %v3316
        %v3632 = vunpack.c.h.b16 %v3316
        %v3633 = vunpack.c.l.b16 %v3317
        %v3634 = vunpack.c.h.b16 %v3317
        %v3635 = vunpack.c.l.b16 %v3318
        %v3636 = vunpack.c.h.b16 %v3318
        %v3637 = vunpack.c.l.b16 %v3319
        %v3638 = vunpack.c.h.b16 %v3319
        %v3639 = vunpack.c.l.b16 %v3320
        %v3640 = vunpack.c.h.b16 %v3320
        %v3641 = vunpack.c.l.b16 %v3321
        %v3642 = vunpack.c.h.b16 %v3321
        %v3643 = vunpack.c.l.b16 %v3322
        %v3644 = vunpack.c.h.b16 %v3322
        %v3645 = vunpack.c.l.b16 %v3323
        %v3646 = vunpack.c.h.b16 %v3323
        %v3647 = vunpack.c.l.b16 %v3324
        %v3648 = vunpack.c.h.b16 %v3324
        %v3649 = vunpack.c.l.b16 %v3325
        %v3650 = vunpack.c.h.b16 %v3325
        %v3651 = vunpack.c.l.b16 %v3326
        %v3652 = vunpack.c.h.b16 %v3326
        %v3653 = vunpack.c.l.b16 %v3327
        %v3654 = vunpack.c.h.b16 %v3327
        %v3655 = vunpack.c.l.b16 %v3328
        %v3656 = vunpack.c.h.b16 %v3328
        %v3657 = vunpack.c.l.b16 %v3329
        %v3658 = vunpack.c.h.b16 %v3329
        %v3659 = vunpack.c.l.b16 %v3330
        %v3660 = vunpack.c.h.b16 %v3330
        %v3661 = vunpack.c.l.b16 %v3331
        %v3662 = vunpack.c.h.b16 %v3331
        %v3663 = vunpack.c.l.b16 %v3332
        %v3664 = vunpack.c.h.b16 %v3332
        %v3665 = vunpack.c.l.b16 %v3333
        %v3666 = vunpack.c.h.b16 %v3333
        %v3667 = vunpack.c.l.b16 %v3334
        %v3668 = vunpack.c.h.b16 %v3334
        %v3669 = vunpack.c.l.b16 %v3335
        %v3670 = vunpack.c.h.b16 %v3335
        %v3671 = vunpack.c.l.b16 %v3336
        %v3672 = vunpack.c.h.b16 %v3336
        %v3673 = vunpack.c.l.b16 %v3337
        %v3674 = vunpack.c.h.b16 %v3337
        %v3675 = vunpack.c.l.b16 %v3338
        %v3676 = vunpack.c.h.b16 %v3338
        %v3677 = vunpack.c.l.b16 %v3339
        %v3678 = vunpack.c.h.b16 %v3339
        %v3679 = vunpack.c.l.b16 %v3340
        %v3680 = vunpack.c.h.b16 %v3340
        %v3681 = vunpack.c.l.b16 %v3341
        %v3682 = vunpack.c.h.b16 %v3341
        %v3683 = vunpack.c.l.b16 %v3342
        %v3684 = vunpack.c.h.b16 %v3342
        %v3685 = vunpack.c.l.b16 %v3343
        %v3686 = vunpack.c.h.b16 %v3343
        %v3687 = vunpack.c.l.b16 %v3344
        %v3688 = vunpack.c.h.b16 %v3344
        %v3689 = vunpack.c.l.b16 %v3345
        %v3690 = vunpack.c.h.b16 %v3345
        %v3691 = vunpack.c.l.b16 %v3346
        %v3692 = vunpack.c.h.b16 %v3346
        %v3693 = vunpack.c.l.b16 %v3347
        %v3694 = vunpack.c.h.b16 %v3347
        %v3695 = vunpack.c.l.b16 %v3348
        %v3696 = vunpack.c.h.b16 %v3348
        %v3697 = vunpack.c.l.b16 %v3349
        %v3698 = vunpack.c.h.b16 %v3349
        %v3699 = vunpack.c.l.b16 %v3350
        %v3700 = vunpack.c.h.b16 %v3350
        %v3701 = vunpack.c.l.b16 %v3351
        %v3702 = vunpack.c.h.b16 %v3351
        %v3703 = vunpack.c.l.b16 %v3352
        %v3704 = vunpack.c.h.b16 %v3352
        %v3705 = vunpack.c.l.b16 %v3353
        %v3706 = vunpack.c.h.b16 %v3353
        %v3707 = vunpack.c.l.b16 %v3354
        %v3708 = vunpack.c.h.b16 %v3354
        %v3709 = vunpack.c.l.b16 %v3355
        %v3710 = vunpack.c.h.b16 %v3355
        %v3711 = vunpack.c.l.b16 %v3356
        %v3712 = vunpack.c.h.b16 %v3356
        %v3713 = vunpack.c.l.b16 %v3357
        %v3714 = vunpack.c.h.b16 %v3357
        %v3715 = vunpack.c.l.b16 %v3358
        %v3716 = vunpack.c.h.b16 %v3358
        %v3717 = vunpack.c.l.b16 %v3359
        %v3718 = vunpack.c.h.b16 %v3359
        %v3719 = vunpack.c.l.b16 %v3360
        %v3720 = vunpack.c.h.b16 %v3360
        %v3721 = vunpack.c.l.b16 %v3361
        %v3722 = vunpack.c.h.b16 %v3361
        %v3723 = vunpack.c.l.b16 %v3362
        %v3724 = vunpack.c.h.b16 %v3362
        %v3725 = vunpack.c.l.b16 %v3363
        %v3726 = vunpack.c.h.b16 %v3363
        %v3727 = vunpack.c.l.b16 %v3364
        %v3728 = vunpack.c.h.b16 %v3364
        %v3729 = vunpack.c.l.b16 %v3365
        %v3730 = vunpack.c.h.b16 %v3365
        %v3731 = vunpack.c.l.b16 %v3366
        %v3732 = vunpack.c.h.b16 %v3366
        %v3733 = vunpack.c.l.b16 %v3367
        %v3734 = vunpack.c.h.b16 %v3367
        %v3735 = vunpack.c.l.b16 %v3368
        %v3736 = vunpack.c.h.b16 %v3368
        %v3737 = vunpack.c.l.b16 %v3369
        %v3738 = vunpack.c.h.b16 %v3369
        %v3739 = vunpack.c.l.b16 %v3370
        %v3740 = vunpack.c.h.b16 %v3370
        %v3741 = vunpack.c.l.b16 %v3371
        %v3742 = vunpack.c.h.b16 %v3371
        %v3743 = vunpack.c.l.b16 %v3372
        %v3744 = vunpack.c.h.b16 %v3372
        %v3745 = vunpack.c.l.b16 %v3373
        %v3746 = vunpack.c.h.b16 %v3373
        %v3747 = vunpack.c.l.b16 %v3374
        %v3748 = vunpack.c.h.b16 %v3374
        %v3749 = vunpack.c.l.b16 %v3375
        %v3750 = vunpack.c.h.b16 %v3375
        %v3751 = vunpack.c.l.b16 %v3376
        %v3752 = vunpack.c.h.b16 %v3376
        %v3753 = vunpack.c.l.b16 %v3377
        %v3754 = vunpack.c.h.b16 %v3377
        %v3755 = vunpack.c.l.b16 %v3378
        %v3756 = vunpack.c.h.b16 %v3378
        %v3757 = vunpack.c.l.b16 %v3379
        %v3758 = vunpack.c.h.b16 %v3379
        %v3759 = vunpack.c.l.b16 %v3380
        %v3760 = vunpack.c.h.b16 %v3380
        %v3761 = vunpack.c.l.b16 %v3381
        %v3762 = vunpack.c.h.b16 %v3381
        %v3763 = vunpack.c.l.b16 %v3382
        %v3764 = vunpack.c.h.b16 %v3382
        %v3765 = vunpack.c.l.b16 %v3383
        %v3766 = vunpack.c.h.b16 %v3383
        %v3767 = vunpack.c.l.b16 %v3384
        %v3768 = vunpack.c.h.b16 %v3384
        %v3769 = vunpack.c.l.b16 %v3385
        %v3770 = vunpack.c.h.b16 %v3385
        %v3771 = vunpack.c.l.b16 %v3386
        %v3772 = vunpack.c.h.b16 %v3386
        %v3773 = vunpack.c.l.b16 %v3387
        %v3774 = vunpack.c.h.b16 %v3387
        %v3775 = vunpack.c.l.b16 %v3388
        %v3776 = vunpack.c.h.b16 %v3388
        %v3777 = vunpack.c.l.b16 %v3389
        %v3778 = vunpack.c.h.b16 %v3389
        %v3779 = vunpack.c.l.b16 %v3390
        %v3780 = vunpack.c.h.b16 %v3390
        %v3781 = vunpack.c.l.b16 %v3391
        %v3782 = vunpack.c.h.b16 %v3391
        %v3783 = vunpack.c.l.b16 %v3392
        %v3784 = vunpack.c.h.b16 %v3392
        %v3785 = vunpack.c.l.b16 %v3393
        %v3786 = vunpack.c.h.b16 %v3393
        %v3787 = vunpack.c.l.b16 %v3394
        %v3788 = vunpack.c.h.b16 %v3394
        %v3789 = vpack.c.b16 %v3537, %v3533
        %v3790 = vpack.c.b16 %v3538, %v3534
        %v3791 = vpack.c.b16 %v3539, %v3535
        %v3792 = vpack.c.b16 %v3540, %v3536
        %v3793 = vpack.c.b16 %v3545, %v3541
        %v3794 = vpack.c.b16 %v3546, %v3542
        %v3795 = vpack.c.b16 %v3547, %v3543
        %v3796 = vpack.c.b16 %v3548, %v3544
        %v3797 = vpack.c.b16 %v3553, %v3549
        %v3798 = vpack.c.b16 %v3554, %v3550
        %v3799 = vpack.c.b16 %v3555, %v3551
        %v3800 = vpack.c.b16 %v3556, %v3552
        %v3801 = vpack.c.b16 %v3561, %v3557
        %v3802 = vpack.c.b16 %v3562, %v3558
        %v3803 = vpack.c.b16 %v3563, %v3559
        %v3804 = vpack.c.b16 %v3564, %v3560
        %v3805 = vpack.c.b16 %v3569, %v3565
        %v3806 = vpack.c.b16 %v3570, %v3566
        %v3807 = vpack.c.b16 %v3571, %v3567
        %v3808 = vpack.c.b16 %v3572, %v3568
        %v3809 = vpack.c.b16 %v3577, %v3573
        %v3810 = vpack.c.b16 %v3578, %v3574
        %v3811 = vpack.c.b16 %v3579, %v3575
        %v3812 = vpack.c.b16 %v3580, %v3576
        %v3813 = vpack.c.b16 %v3585, %v3581
        %v3814 = vpack.c.b16 %v3586, %v3582
        %v3815 = vpack.c.b16 %v3587, %v3583
        %v3816 = vpack.c.b16 %v3588, %v3584
        %v3817 = vpack.c.b16 %v3593, %v3589
        %v3818 = vpack.c.b16 %v3594, %v3590
        %v3819 = vpack.c.b16 %v3595, %v3591
        %v3820 = vpack.c.b16 %v3596, %v3592
        %v3821 = vpack.c.b16 %v3601, %v3597
        %v3822 = vpack.c.b16 %v3602, %v3598
        %v3823 = vpack.c.b16 %v3603, %v3599
        %v3824 = vpack.c.b16 %v3604, %v3600
        %v3825 = vpack.c.b16 %v3609, %v3605
        %v3826 = vpack.c.b16 %v3610, %v3606
        %v3827 = vpack.c.b16 %v3611, %v3607
        %v3828 = vpack.c.b16 %v3612, %v3608
        %v3829 = vpack.c.b16 %v3617, %v3613
        %v3830 = vpack.c.b16 %v3618, %v3614
        %v3831 = vpack.c.b16 %v3619, %v3615
        %v3832 = vpack.c.b16 %v3620, %v3616
        %v3833 = vpack.c.b16 %v3625, %v3621
        %v3834 = vpack.c.b16 %v3626, %v3622
        %v3835 = vpack.c.b16 %v3627, %v3623
        %v3836 = vpack.c.b16 %v3628, %v3624
        %v3837 = vpack.c.b16 %v3633, %v3629
        %v3838 = vpack.c.b16 %v3634, %v3630
        %v3839 = vpack.c.b16 %v3635, %v3631
        %v3840 = vpack.c.b16 %v3636, %v3632
        %v3841 = vpack.c.b16 %v3641, %v3637
        %v3842 = vpack.c.b16 %v3642, %v3638
        %v3843 = vpack.c.b16 %v3643, %v3639
        %v3844 = vpack.c.b16 %v3644, %v3640
        %v3845 = vpack.c.b16 %v3649, %v3645
        %v3846 = vpack.c.b16 %v3650, %v3646
        %v3847 = vpack.c.b16 %v3651, %v3647
        %v3848 = vpack.c.b16 %v3652, %v3648
        %v3849 = vpack.c.b16 %v3657, %v3653
        %v3850 = vpack.c.b16 %v3658, %v3654
        %v3851 = vpack.c.b16 %v3659, %v3655
        %v3852 = vpack.c.b16 %v3660, %v3656
        %v3853 = vpack.c.b16 %v3665, %v3661
        %v3854 = vpack.c.b16 %v3666, %v3662
        %v3855 = vpack.c.b16 %v3667, %v3663
        %v3856 = vpack.c.b16 %v3668, %v3664
        %v3857 = vpack.c.b16 %v3673, %v3669
        %v3858 = vpack.c.b16 %v3674, %v3670
        %v3859 = vpack.c.b16 %v3675, %v3671
        %v3860 = vpack.c.b16 %v3676, %v3672
        %v3861 = vpack.c.b16 %v3681, %v3677
        %v3862 = vpack.c.b16 %v3682, %v3678
        %v3863 = vpack.c.b16 %v3683, %v3679
        %v3864 = vpack.c.b16 %v3684, %v3680
        %v3865 = vpack.c.b16 %v3689, %v3685
        %v3866 = vpack.c.b16 %v3690, %v3686
        %v3867 = vpack.c.b16 %v3691, %v3687
        %v3868 = vpack.c.b16 %v3692, %v3688
        %v3869 = vpack.c.b16 %v3697, %v3693
        %v3870 = vpack.c.b16 %v3698, %v3694
        %v3871 = vpack.c.b16 %v3699, %v3695
        %v3872 = vpack.c.b16 %v3700, %v3696
        %v3873 = vpack.c.b16 %v3705, %v3701
        %v3874 = vpack.c.b16 %v3706, %v3702
        %v3875 = vpack.c.b16 %v3707, %v3703
        %v3876 = vpack.c.b16 %v3708, %v3704
        %v3877 = vpack.c.b16 %v3713, %v3709
        %v3878 = vpack.c.b16 %v3714, %v3710
        %v3879 = vpack.c.b16 %v3715, %v3711
        %v3880 = vpack.c.b16 %v3716, %v3712
        %v3881 = vpack.c.b16 %v3721, %v3717
        %v3882 = vpack.c.b16 %v3722, %v3718
        %v3883 = vpack.c.b16 %v3723, %v3719
        %v3884 = vpack.c.b16 %v3724, %v3720
        %v3885 = vpack.c.b16 %v3729, %v3725
        %v3886 = vpack.c.b16 %v3730, %v3726
        %v3887 = vpack.c.b16 %v3731, %v3727
        %v3888 = vpack.c.b16 %v3732, %v3728
        %v3889 = vpack.c.b16 %v3737, %v3733
        %v3890 = vpack.c.b16 %v3738, %v3734
        %v3891 = vpack.c.b16 %v3739, %v3735
        %v3892 = vpack.c.b16 %v3740, %v3736
        %v3893 = vpack.c.b16 %v3745, %v3741
        %v3894 = vpack.c.b16 %v3746, %v3742
        %v3895 = vpack.c.b16 %v3747, %v3743
        %v3896 = vpack.c.b16 %v3748, %v3744
        %v3897 = vpack.c.b16 %v3753, %v3749
        %v3898 = vpack.c.b16 %v3754, %v3750
        %v3899 = vpack.c.b16 %v3755, %v3751
        %v3900 = vpack.c.b16 %v3756, %v3752
        %v3901 = vpack.c.b16 %v3761, %v3757
        %v3902 = vpack.c.b16 %v3762, %v3758
        %v3903 = vpack.c.b16 %v3763, %v3759
        %v3904 = vpack.c.b16 %v3764, %v3760
        %v3905 = vpack.c.b16 %v3769, %v3765
        %v3906 = vpack.c.b16 %v3770, %v3766
        %v3907 = vpack.c.b16 %v3771, %v3767
        %v3908 = vpack.c.b16 %v3772, %v3768
        %v3909 = vpack.c.b16 %v3777, %v3773
        %v3910 = vpack.c.b16 %v3778, %v3774
        %v3911 = vpack.c.b16 %v3779, %v3775
        %v3912 = vpack.c.b16 %v3780, %v3776
        %v3913 = vpack.c.b16 %v3785, %v3781
        %v3914 = vpack.c.b16 %v3786, %v3782
        %v3915 = vpack.c.b16 %v3787, %v3783
        %v3916 = vpack.c.b16 %v3788, %v3784
        %4045 = vmatpush.bf16.msra.mxu0 %v3817
        %4046 = vmatpush.bf16.msra.mxu0 %v3813
        %4047 = vmatpush.bf16.msra.mxu0 %v3809
        %4048 = vmatpush.bf16.msra.mxu0 %v3805
        %4049 = vmatpush.bf16.msra.mxu0 %v3801
        %4050 = vmatpush.bf16.msra.mxu0 %v3797
        %4051 = vmatpush.bf16.msra.mxu0 %v3793
        %4052 = vmatpush.bf16.msra.mxu0 %v3789
        %4053 = vmatmul.bf16.gmra.mxu0 %v3263
        %v4054 = vpop.f32.mrf.mxu0
        %v4055 = vadd.f32 %v3397, %v4054
        %v4056 = vpop.f32.mrf.mxu0
        %v4057 = vadd.f32 %v3397, %v4056
        %4058 = vdwg.mxu0
        %4059 = vmatpush.bf16.msra.mxu0 %v3849
        %4060 = vmatpush.bf16.msra.mxu0 %v3845
        %4061 = vmatpush.bf16.msra.mxu0 %v3841
        %4062 = vmatpush.bf16.msra.mxu0 %v3837
        %4063 = vmatpush.bf16.msra.mxu0 %v3833
        %4064 = vmatpush.bf16.msra.mxu0 %v3829
        %4065 = vmatpush.bf16.msra.mxu0 %v3825
        %4066 = vmatpush.bf16.msra.mxu0 %v3821
        %4067 = vmatmul.bf16.gmra.mxu0 %v3264
        %v4068 = vpop.f32.mrf.mxu0
        %v4069 = vadd.f32 %v4055, %v4068
        %v4070 = vpop.f32.mrf.mxu0
        %v4071 = vadd.f32 %v4057, %v4070
        %4072 = vdwg.mxu0
        %4073 = vmatpush.bf16.msra.mxu0 %v3881
        %4074 = vmatpush.bf16.msra.mxu0 %v3877
        %4075 = vmatpush.bf16.msra.mxu0 %v3873
        %4076 = vmatpush.bf16.msra.mxu0 %v3869
        %4077 = vmatpush.bf16.msra.mxu0 %v3865
        %4078 = vmatpush.bf16.msra.mxu0 %v3861
        %4079 = vmatpush.bf16.msra.mxu0 %v3857
        %4080 = vmatpush.bf16.msra.mxu0 %v3853
        %4081 = vmatmul.bf16.gmra.mxu0 %v3265
        %v4082 = vpop.f32.mrf.mxu0
        %v4083 = vadd.f32 %v4069, %v4082
        %v4084 = vpop.f32.mrf.mxu0
        %v4085 = vadd.f32 %v4071, %v4084
        %4086 = vdwg.mxu0
        %4087 = vmatpush.bf16.msra.mxu0 %v3913
        %4088 = vmatpush.bf16.msra.mxu0 %v3909
        %4089 = vmatpush.bf16.msra.mxu0 %v3905
        %4090 = vmatpush.bf16.msra.mxu0 %v3901
        %4091 = vmatpush.bf16.msra.mxu0 %v3897
        %4092 = vmatpush.bf16.msra.mxu0 %v3893
        %4093 = vmatpush.bf16.msra.mxu0 %v3889
        %4094 = vmatpush.bf16.msra.mxu0 %v3885
        %4095 = vmatmul.bf16.gmra.mxu0 %v3266
        %v4096 = vpop.f32.mrf.mxu0
        %v4097 = vadd.f32 %v4083, %v4096
        %v4098 = vpop.f32.mrf.mxu0
        %v4099 = vadd.f32 %v4085, %v4098
        %4100 = vdwg.mxu0
        %4101 = vmatpush.bf16.msra.mxu0 %v3818
        %4102 = vmatpush.bf16.msra.mxu0 %v3814
        %4103 = vmatpush.bf16.msra.mxu0 %v3810
        %4104 = vmatpush.bf16.msra.mxu0 %v3806
        %4105 = vmatpush.bf16.msra.mxu0 %v3802
        %4106 = vmatpush.bf16.msra.mxu0 %v3798
        %4107 = vmatpush.bf16.msra.mxu0 %v3794
        %4108 = vmatpush.bf16.msra.mxu0 %v3790
        %4109 = vmatmul.bf16.gmra.mxu0 %v3263
        %v4110 = vpop.f32.mrf.mxu0
        %v4111 = vadd.f32 %v3398, %v4110
        %v4112 = vpop.f32.mrf.mxu0
        %v4113 = vadd.f32 %v3398, %v4112
        %4114 = vdwg.mxu0
        %4115 = vmatpush.bf16.msra.mxu0 %v3850
        %4116 = vmatpush.bf16.msra.mxu0 %v3846
        %4117 = vmatpush.bf16.msra.mxu0 %v3842
        %4118 = vmatpush.bf16.msra.mxu0 %v3838
        %4119 = vmatpush.bf16.msra.mxu0 %v3834
        %4120 = vmatpush.bf16.msra.mxu0 %v3830
        %4121 = vmatpush.bf16.msra.mxu0 %v3826
        %4122 = vmatpush.bf16.msra.mxu0 %v3822
        %4123 = vmatmul.bf16.gmra.mxu0 %v3264
        %v4124 = vpop.f32.mrf.mxu0
        %v4125 = vadd.f32 %v4111, %v4124
        %v4126 = vpop.f32.mrf.mxu0
        %v4127 = vadd.f32 %v4113, %v4126
        %4128 = vdwg.mxu0
        %4129 = vmatpush.bf16.msra.mxu0 %v3882
        %4130 = vmatpush.bf16.msra.mxu0 %v3878
        %4131 = vmatpush.bf16.msra.mxu0 %v3874
        %4132 = vmatpush.bf16.msra.mxu0 %v3870
        %4133 = vmatpush.bf16.msra.mxu0 %v3866
        %4134 = vmatpush.bf16.msra.mxu0 %v3862
        %4135 = vmatpush.bf16.msra.mxu0 %v3858
        %4136 = vmatpush.bf16.msra.mxu0 %v3854
        %4137 = vmatmul.bf16.gmra.mxu0 %v3265
        %v4138 = vpop.f32.mrf.mxu0
        %v4139 = vadd.f32 %v4125, %v4138
        %v4140 = vpop.f32.mrf.mxu0
        %v4141 = vadd.f32 %v4127, %v4140
        %4142 = vdwg.mxu0
        %4143 = vmatpush.bf16.msra.mxu0 %v3914
        %4144 = vmatpush.bf16.msra.mxu0 %v3910
        %4145 = vmatpush.bf16.msra.mxu0 %v3906
        %4146 = vmatpush.bf16.msra.mxu0 %v3902
        %4147 = vmatpush.bf16.msra.mxu0 %v3898
        %4148 = vmatpush.bf16.msra.mxu0 %v3894
        %4149 = vmatpush.bf16.msra.mxu0 %v3890
        %4150 = vmatpush.bf16.msra.mxu0 %v3886
        %4151 = vmatmul.bf16.gmra.mxu0 %v3266
        %v4152 = vpop.f32.mrf.mxu0
        %v4153 = vadd.f32 %v4139, %v4152
        %v4154 = vpop.f32.mrf.mxu0
        %v4155 = vadd.f32 %v4141, %v4154
        %4156 = vdwg.mxu0
        %4157 = vmatpush.bf16.msra.mxu0 %v3819
        %4158 = vmatpush.bf16.msra.mxu0 %v3815
        %4159 = vmatpush.bf16.msra.mxu0 %v3811
        %4160 = vmatpush.bf16.msra.mxu0 %v3807
        %4161 = vmatpush.bf16.msra.mxu0 %v3803
        %4162 = vmatpush.bf16.msra.mxu0 %v3799
        %4163 = vmatpush.bf16.msra.mxu0 %v3795
        %4164 = vmatpush.bf16.msra.mxu0 %v3791
        %4165 = vmatmul.bf16.gmra.mxu0 %v3263
        %v4166 = vpop.f32.mrf.mxu0
        %v4167 = vadd.f32 %v3399, %v4166
        %v4168 = vpop.f32.mrf.mxu0
        %v4169 = vadd.f32 %v3399, %v4168
        %4170 = vdwg.mxu0
        %4171 = vmatpush.bf16.msra.mxu0 %v3851
        %4172 = vmatpush.bf16.msra.mxu0 %v3847
        %4173 = vmatpush.bf16.msra.mxu0 %v3843
        %4174 = vmatpush.bf16.msra.mxu0 %v3839
        %4175 = vmatpush.bf16.msra.mxu0 %v3835
        %4176 = vmatpush.bf16.msra.mxu0 %v3831
        %4177 = vmatpush.bf16.msra.mxu0 %v3827
        %4178 = vmatpush.bf16.msra.mxu0 %v3823
        %4179 = vmatmul.bf16.gmra.mxu0 %v3264
        %v4180 = vpop.f32.mrf.mxu0
        %v4181 = vadd.f32 %v4167, %v4180
        %v4182 = vpop.f32.mrf.mxu0
        %v4183 = vadd.f32 %v4169, %v4182
        %4184 = vdwg.mxu0
        %4185 = vmatpush.bf16.msra.mxu0 %v3883
        %4186 = vmatpush.bf16.msra.mxu0 %v3879
        %4187 = vmatpush.bf16.msra.mxu0 %v3875
        %4188 = vmatpush.bf16.msra.mxu0 %v3871
        %4189 = vmatpush.bf16.msra.mxu0 %v3867
        %4190 = vmatpush.bf16.msra.mxu0 %v3863
        %4191 = vmatpush.bf16.msra.mxu0 %v3859
        %4192 = vmatpush.bf16.msra.mxu0 %v3855
        %4193 = vmatmul.bf16.gmra.mxu0 %v3265
        %v4194 = vpop.f32.mrf.mxu0
        %v4195 = vadd.f32 %v4181, %v4194
        %v4196 = vpop.f32.mrf.mxu0
        %v4197 = vadd.f32 %v4183, %v4196
        %4198 = vdwg.mxu0
        %4199 = vmatpush.bf16.msra.mxu0 %v3915
        %4200 = vmatpush.bf16.msra.mxu0 %v3911
        %4201 = vmatpush.bf16.msra.mxu0 %v3907
        %4202 = vmatpush.bf16.msra.mxu0 %v3903
        %4203 = vmatpush.bf16.msra.mxu0 %v3899
        %4204 = vmatpush.bf16.msra.mxu0 %v3895
        %4205 = vmatpush.bf16.msra.mxu0 %v3891
        %4206 = vmatpush.bf16.msra.mxu0 %v3887
        %4207 = vmatmul.bf16.gmra.mxu0 %v3266
        %v4208 = vpop.f32.mrf.mxu0
        %v4209 = vadd.f32 %v4195, %v4208
        %v4210 = vpop.f32.mrf.mxu0
        %v4211 = vadd.f32 %v4197, %v4210
        %4212 = vdwg.mxu0
        %4213 = vmatpush.bf16.msra.mxu0 %v3820
        %4214 = vmatpush.bf16.msra.mxu0 %v3816
        %4215 = vmatpush.bf16.msra.mxu0 %v3812
        %4216 = vmatpush.bf16.msra.mxu0 %v3808
        %4217 = vmatpush.bf16.msra.mxu0 %v3804
        %4218 = vmatpush.bf16.msra.mxu0 %v3800
        %4219 = vmatpush.bf16.msra.mxu0 %v3796
        %4220 = vmatpush.bf16.msra.mxu0 %v3792
        %4221 = vmatmul.bf16.gmra.mxu0 %v3263
        %v4222 = vpop.f32.mrf.mxu0
        %v4223 = vadd.f32 %v3400, %v4222
        %v4224 = vpop.f32.mrf.mxu0
        %v4225 = vadd.f32 %v3400, %v4224
        %4226 = vdwg.mxu0
        %4227 = vmatpush.bf16.msra.mxu0 %v3852
        %4228 = vmatpush.bf16.msra.mxu0 %v3848
        %4229 = vmatpush.bf16.msra.mxu0 %v3844
        %4230 = vmatpush.bf16.msra.mxu0 %v3840
        %4231 = vmatpush.bf16.msra.mxu0 %v3836
        %4232 = vmatpush.bf16.msra.mxu0 %v3832
        %4233 = vmatpush.bf16.msra.mxu0 %v3828
        %4234 = vmatpush.bf16.msra.mxu0 %v3824
        %4235 = vmatmul.bf16.gmra.mxu0 %v3264
        %v4236 = vpop.f32.mrf.mxu0
        %v4237 = vadd.f32 %v4223, %v4236
        %v4238 = vpop.f32.mrf.mxu0
        %v4239 = vadd.f32 %v4225, %v4238
        %4240 = vdwg.mxu0
        %4241 = vmatpush.bf16.msra.mxu0 %v3884
        %4242 = vmatpush.bf16.msra.mxu0 %v3880
        %4243 = vmatpush.bf16.msra.mxu0 %v3876
        %4244 = vmatpush.bf16.msra.mxu0 %v3872
        %4245 = vmatpush.bf16.msra.mxu0 %v3868
        %4246 = vmatpush.bf16.msra.mxu0 %v3864
        %4247 = vmatpush.bf16.msra.mxu0 %v3860
        %4248 = vmatpush.bf16.msra.mxu0 %v3856
        %4249 = vmatmul.bf16.gmra.mxu0 %v3265
        %v4250 = vpop.f32.mrf.mxu0
        %v4251 = vadd.f32 %v4237, %v4250
        %v4252 = vpop.f32.mrf.mxu0
        %v4253 = vadd.f32 %v4239, %v4252
        %4254 = vdwg.mxu0
        %4255 = vmatpush.bf16.msra.mxu0 %v3916
        %4256 = vmatpush.bf16.msra.mxu0 %v3912
        %4257 = vmatpush.bf16.msra.mxu0 %v3908
        %4258 = vmatpush.bf16.msra.mxu0 %v3904
        %4259 = vmatpush.bf16.msra.mxu0 %v3900
        %4260 = vmatpush.bf16.msra.mxu0 %v3896
        %4261 = vmatpush.bf16.msra.mxu0 %v3892
        %4262 = vmatpush.bf16.msra.mxu0 %v3888
        %4263 = vmatmul.bf16.gmra.mxu0 %v3266
        %v4264 = vpop.f32.mrf.mxu0
        %v4265 = vadd.f32 %v4251, %v4264
        %v4266 = vpop.f32.mrf.mxu0
        %v4267 = vadd.f32 %v4253, %v4266
        %4268 = vdwg.mxu0
        %v4269 = vmax.f32 %v4097, 0.0
        %v4270 = vmax.f32 %v4153, 0.0
        %v4271 = vmax.f32 %v4209, 0.0
        %v4272 = vmax.f32 %v4265, 0.0
        %v4273 = vmax.f32 %v4099, 0.0
        %v4274 = vmax.f32 %v4155, 0.0
        %v4275 = vmax.f32 %v4211, 0.0
        %v4276 = vmax.f32 %v4267, 0.0
        %v4277 = vpack.c.bf16 %v4273, %v4269
        %v4278 = vpack.c.bf16 %v4274, %v4270
        %v4279 = vpack.c.bf16 %v4275, %v4271
        %v4280 = vpack.c.bf16 %v4276, %v4272
        %v4281 = vld [vmem:[#allocation13] sm:$0xf]
        %v4282 = vld [vmem:[#allocation13 + $0x4] sm:$0xf]
        %v4283 = vld [vmem:[#allocation13 + $0x8] sm:$0xf]
        %v4284 = vld [vmem:[#allocation13 + $0xc] sm:$0xf]
        %v4285 = vld [vmem:[#allocation13 + $0x10] sm:$0xf]
        %v4286 = vld [vmem:[#allocation13 + $0x14] sm:$0xf]
        %v4287 = vld [vmem:[#allocation13 + $0x18] sm:$0xf]
        %v4288 = vld [vmem:[#allocation13 + $0x1c] sm:$0xf]
        %v4289 = vld [vmem:[#allocation13 + $0x20] sm:$0xf]
        %v4290 = vld [vmem:[#allocation13 + $0x24] sm:$0xf]
        %v4291 = vld [vmem:[#allocation13 + $0x28] sm:$0xf]
        %v4292 = vld [vmem:[#allocation13 + $0x2c] sm:$0xf]
        %v4293 = vld [vmem:[#allocation13 + $0x30] sm:$0xf]
        %v4294 = vld [vmem:[#allocation13 + $0x34] sm:$0xf]
        %v4295 = vld [vmem:[#allocation13 + $0x38] sm:$0xf]
        %v4296 = vld [vmem:[#allocation13 + $0x3c] sm:$0xf]
        %v4297 = vld [vmem:[#allocation13 + $0x40] sm:$0xf]
        %v4298 = vld [vmem:[#allocation13 + $0x44] sm:$0xf]
        %v4299 = vld [vmem:[#allocation13 + $0x48] sm:$0xf]
        %v4300 = vld [vmem:[#allocation13 + $0x4c] sm:$0xf]
        %v4301 = vld [vmem:[#allocation13 + $0x50] sm:$0xf]
        %v4302 = vld [vmem:[#allocation13 + $0x54] sm:$0xf]
        %v4303 = vld [vmem:[#allocation13 + $0x58] sm:$0xf]
        %v4304 = vld [vmem:[#allocation13 + $0x5c] sm:$0xf]
        %v4305 = vld [vmem:[#allocation13 + $0x60] sm:$0xf]
        %v4306 = vld [vmem:[#allocation13 + $0x64] sm:$0xf]
        %v4307 = vld [vmem:[#allocation13 + $0x68] sm:$0xf]
        %v4308 = vld [vmem:[#allocation13 + $0x6c] sm:$0xf]
        %v4309 = vld [vmem:[#allocation13 + $0x70] sm:$0xf]
        %v4310 = vld [vmem:[#allocation13 + $0x74] sm:$0xf]
        %v4311 = vld [vmem:[#allocation13 + $0x78] sm:$0xf]
        %v4312 = vld [vmem:[#allocation13 + $0x7c] sm:$0xf]
        %v4313 = vld [vmem:[#allocation13 + $0x80] sm:$0xf]
        %v4314 = vld [vmem:[#allocation13 + $0x84] sm:$0xf]
        %v4315 = vld [vmem:[#allocation13 + $0x88] sm:$0xf]
        %v4316 = vld [vmem:[#allocation13 + $0x8c] sm:$0xf]
        %v4317 = vld [vmem:[#allocation13 + $0x90] sm:$0xf]
        %v4318 = vld [vmem:[#allocation13 + $0x94] sm:$0xf]
        %v4319 = vld [vmem:[#allocation13 + $0x98] sm:$0xf]
        %v4320 = vld [vmem:[#allocation13 + $0x9c] sm:$0xf]
        %v4321 = vld [vmem:[#allocation13 + $0xa0] sm:$0xf]
        %v4322 = vld [vmem:[#allocation13 + $0xa4] sm:$0xf]
        %v4323 = vld [vmem:[#allocation13 + $0xa8] sm:$0xf]
        %v4324 = vld [vmem:[#allocation13 + $0xac] sm:$0xf]
        %v4325 = vld [vmem:[#allocation13 + $0xb0] sm:$0xf]
        %v4326 = vld [vmem:[#allocation13 + $0xb4] sm:$0xf]
        %v4327 = vld [vmem:[#allocation13 + $0xb8] sm:$0xf]
        %v4328 = vld [vmem:[#allocation13 + $0xbc] sm:$0xf]
        %v4329 = vld [vmem:[#allocation13 + $0xc0] sm:$0xf]
        %v4330 = vld [vmem:[#allocation13 + $0xc4] sm:$0xf]
        %v4331 = vld [vmem:[#allocation13 + $0xc8] sm:$0xf]
        %v4332 = vld [vmem:[#allocation13 + $0xcc] sm:$0xf]
        %v4333 = vld [vmem:[#allocation13 + $0xd0] sm:$0xf]
        %v4334 = vld [vmem:[#allocation13 + $0xd4] sm:$0xf]
        %v4335 = vld [vmem:[#allocation13 + $0xd8] sm:$0xf]
        %v4336 = vld [vmem:[#allocation13 + $0xdc] sm:$0xf]
        %v4337 = vld [vmem:[#allocation13 + $0xe0] sm:$0xf]
        %v4338 = vld [vmem:[#allocation13 + $0xe4] sm:$0xf]
        %v4339 = vld [vmem:[#allocation13 + $0xe8] sm:$0xf]
        %v4340 = vld [vmem:[#allocation13 + $0xec] sm:$0xf]
        %v4341 = vld [vmem:[#allocation13 + $0xf0] sm:$0xf]
        %v4342 = vld [vmem:[#allocation13 + $0xf4] sm:$0xf]
        %v4343 = vld [vmem:[#allocation13 + $0xf8] sm:$0xf]
        %v4344 = vld [vmem:[#allocation13 + $0xfc] sm:$0xf]
        %v4345 = vld [vmem:[%s8] sm:$0x1]
        %v4347 = vperm.slane %v4345, 0
        %v4413 = vunpack.c.l.b16 %v4281
        %v4414 = vunpack.c.l.b16 %v4282
        %v4415 = vunpack.c.l.b16 %v4283
        %v4416 = vunpack.c.l.b16 %v4284
        %v4417 = vunpack.c.l.b16 %v4285
        %v4418 = vunpack.c.l.b16 %v4286
        %v4419 = vunpack.c.l.b16 %v4287
        %v4420 = vunpack.c.l.b16 %v4288
        %v4421 = vunpack.c.l.b16 %v4289
        %v4422 = vunpack.c.l.b16 %v4290
        %v4423 = vunpack.c.l.b16 %v4291
        %v4424 = vunpack.c.l.b16 %v4292
        %v4425 = vunpack.c.l.b16 %v4293
        %v4426 = vunpack.c.l.b16 %v4294
        %v4427 = vunpack.c.l.b16 %v4295
        %v4428 = vunpack.c.l.b16 %v4296
        %v4429 = vunpack.c.l.b16 %v4297
        %v4430 = vunpack.c.l.b16 %v4298
        %v4431 = vunpack.c.l.b16 %v4299
        %v4432 = vunpack.c.l.b16 %v4300
        %v4433 = vunpack.c.l.b16 %v4301
        %v4434 = vunpack.c.l.b16 %v4302
        %v4435 = vunpack.c.l.b16 %v4303
        %v4436 = vunpack.c.l.b16 %v4304
        %v4437 = vunpack.c.l.b16 %v4305
        %v4438 = vunpack.c.l.b16 %v4306
        %v4439 = vunpack.c.l.b16 %v4307
        %v4440 = vunpack.c.l.b16 %v4308
        %v4441 = vunpack.c.l.b16 %v4309
        %v4442 = vunpack.c.l.b16 %v4310
        %v4443 = vunpack.c.l.b16 %v4311
        %v4444 = vunpack.c.l.b16 %v4312
        %v4445 = vunpack.c.l.b16 %v4313
        %v4446 = vunpack.c.l.b16 %v4314
        %v4447 = vunpack.c.l.b16 %v4315
        %v4448 = vunpack.c.l.b16 %v4316
        %v4449 = vunpack.c.l.b16 %v4317
        %v4450 = vunpack.c.l.b16 %v4318
        %v4451 = vunpack.c.l.b16 %v4319
        %v4452 = vunpack.c.l.b16 %v4320
        %v4453 = vunpack.c.l.b16 %v4321
        %v4454 = vunpack.c.l.b16 %v4322
        %v4455 = vunpack.c.l.b16 %v4323
        %v4456 = vunpack.c.l.b16 %v4324
        %v4457 = vunpack.c.l.b16 %v4325
        %v4458 = vunpack.c.l.b16 %v4326
        %v4459 = vunpack.c.l.b16 %v4327
        %v4460 = vunpack.c.l.b16 %v4328
        %v4461 = vunpack.c.l.b16 %v4329
        %v4462 = vunpack.c.l.b16 %v4330
        %v4463 = vunpack.c.l.b16 %v4331
        %v4464 = vunpack.c.l.b16 %v4332
        %v4465 = vunpack.c.l.b16 %v4333
        %v4466 = vunpack.c.l.b16 %v4334
        %v4467 = vunpack.c.l.b16 %v4335
        %v4468 = vunpack.c.l.b16 %v4336
        %v4469 = vunpack.c.l.b16 %v4337
        %v4470 = vunpack.c.l.b16 %v4338
        %v4471 = vunpack.c.l.b16 %v4339
        %v4472 = vunpack.c.l.b16 %v4340
        %v4473 = vunpack.c.l.b16 %v4341
        %v4474 = vunpack.c.l.b16 %v4342
        %v4475 = vunpack.c.l.b16 %v4343
        %v4476 = vunpack.c.l.b16 %v4344
        %v4477 = vpack.c.b16 %v4414, %v4413
        %v4478 = vpack.c.b16 %v4416, %v4415
        %v4479 = vpack.c.b16 %v4418, %v4417
        %v4480 = vpack.c.b16 %v4420, %v4419
        %v4481 = vpack.c.b16 %v4422, %v4421
        %v4482 = vpack.c.b16 %v4424, %v4423
        %v4483 = vpack.c.b16 %v4426, %v4425
        %v4484 = vpack.c.b16 %v4428, %v4427
        %v4485 = vpack.c.b16 %v4430, %v4429
        %v4486 = vpack.c.b16 %v4432, %v4431
        %v4487 = vpack.c.b16 %v4434, %v4433
        %v4488 = vpack.c.b16 %v4436, %v4435
        %v4489 = vpack.c.b16 %v4438, %v4437
        %v4490 = vpack.c.b16 %v4440, %v4439
        %v4491 = vpack.c.b16 %v4442, %v4441
        %v4492 = vpack.c.b16 %v4444, %v4443
        %v4493 = vpack.c.b16 %v4446, %v4445
        %v4494 = vpack.c.b16 %v4448, %v4447
        %v4495 = vpack.c.b16 %v4450, %v4449
        %v4496 = vpack.c.b16 %v4452, %v4451
        %v4497 = vpack.c.b16 %v4454, %v4453
        %v4498 = vpack.c.b16 %v4456, %v4455
        %v4499 = vpack.c.b16 %v4458, %v4457
        %v4500 = vpack.c.b16 %v4460, %v4459
        %v4501 = vpack.c.b16 %v4462, %v4461
        %v4502 = vpack.c.b16 %v4464, %v4463
        %v4503 = vpack.c.b16 %v4466, %v4465
        %v4504 = vpack.c.b16 %v4468, %v4467
        %v4505 = vpack.c.b16 %v4470, %v4469
        %v4506 = vpack.c.b16 %v4472, %v4471
        %v4507 = vpack.c.b16 %v4474, %v4473
        %v4508 = vpack.c.b16 %v4476, %v4475
        %4541 = vmatpush.bf16.msra.mxu0 %v4484
        %4542 = vmatpush.bf16.msra.mxu0 %v4483
        %4543 = vmatpush.bf16.msra.mxu0 %v4482
        %4544 = vmatpush.bf16.msra.mxu0 %v4481
        %4545 = vmatpush.bf16.msra.mxu0 %v4480
        %4546 = vmatpush.bf16.msra.mxu0 %v4479
        %4547 = vmatpush.bf16.msra.mxu0 %v4478
        %4548 = vmatpush.bf16.msra.mxu0 %v4477
        %4549 = vmatmul.bf16.gmra.mxu0 %v4277
        %v4550 = vpop.f32.mrf.mxu0
        %v4551 = vadd.f32 %v4347, %v4550
        %v4552 = vpop.f32.mrf.mxu0
        %v4553 = vadd.f32 %v4347, %v4552
        %4554 = vdwg.mxu0
        %4555 = vmatpush.bf16.msra.mxu0 %v4492
        %4556 = vmatpush.bf16.msra.mxu0 %v4491
        %4557 = vmatpush.bf16.msra.mxu0 %v4490
        %4558 = vmatpush.bf16.msra.mxu0 %v4489
        %4559 = vmatpush.bf16.msra.mxu0 %v4488
        %4560 = vmatpush.bf16.msra.mxu0 %v4487
        %4561 = vmatpush.bf16.msra.mxu0 %v4486
        %4562 = vmatpush.bf16.msra.mxu0 %v4485
        %4563 = vmatmul.bf16.gmra.mxu0 %v4278
        %v4564 = vpop.f32.mrf.mxu0
        %v4565 = vadd.f32 %v4551, %v4564
        %v4566 = vpop.f32.mrf.mxu0
        %v4567 = vadd.f32 %v4553, %v4566
        %4568 = vdwg.mxu0
        %4569 = vmatpush.bf16.msra.mxu0 %v4500
        %4570 = vmatpush.bf16.msra.mxu0 %v4499
        %4571 = vmatpush.bf16.msra.mxu0 %v4498
        %4572 = vmatpush.bf16.msra.mxu0 %v4497
        %4573 = vmatpush.bf16.msra.mxu0 %v4496
        %4574 = vmatpush.bf16.msra.mxu0 %v4495
        %4575 = vmatpush.bf16.msra.mxu0 %v4494
        %4576 = vmatpush.bf16.msra.mxu0 %v4493
        %4577 = vmatmul.bf16.gmra.mxu0 %v4279
        %v4578 = vpop.f32.mrf.mxu0
        %v4579 = vadd.f32 %v4565, %v4578
        %v4580 = vpop.f32.mrf.mxu0
        %v4581 = vadd.f32 %v4567, %v4580
        %4582 = vdwg.mxu0
        %4583 = vmatpush.bf16.msra.mxu0 %v4508
        %4584 = vmatpush.bf16.msra.mxu0 %v4507
        %4585 = vmatpush.bf16.msra.mxu0 %v4506
        %4586 = vmatpush.bf16.msra.mxu0 %v4505
        %4587 = vmatpush.bf16.msra.mxu0 %v4504
        %4588 = vmatpush.bf16.msra.mxu0 %v4503
        %4589 = vmatpush.bf16.msra.mxu0 %v4502
        %4590 = vmatpush.bf16.msra.mxu0 %v4501
        %4591 = vmatmul.bf16.gmra.mxu0 %v4280
        %v4592 = vpop.f32.mrf.mxu0
        %v4593 = vadd.f32 %v4579, %v4592
        %v4594 = vpop.f32.mrf.mxu0
        %v4595 = vadd.f32 %v4581, %v4594
        %4596 = vdwg.mxu0
        %4597 = vst [vmem:[%s448] sm:$0xff] %v4593
        %4598 = vst [vmem:[%s448 + $0x8] sm:$0xff] %v4595
        %s4599 = sand.u32 %s231, 1
        %s4600 = scalar_lea.sflag [#allocation4], %s4599
        %s4601 = sand.u32 %s231, 1
        %s4602 = smul.addr %s4601, 16
        %s4603 = scalar_lea.vmem [#allocation14], %s4602
        // Predicated region
        $region85: #{tpu_custom_call.1} parent=55 // pred_check
          %p4604 = pneg %p241
        $region86: #{tpu_custom_call.1} parent=55 // pred_check_branch
          %4606 = sbr.rel (%p4604) target = $region88
        $region87: #{tpu_custom_call.1} parent=55 // pred_region
          %s4607 = smul.u32 2, %s29
          %4609 = vsyncadd %s4600, 0
          %s4610 = smul.addr %s4607, 8
          %s4611 = scalar_lea.hbm %s9, %s4610
          %s4612 = sshll.u32 %s4603, 4
          %s4613 = int_to_ptr.vmem [resolvable:$true] %s4612
          %s4614 = sshll.u32 %s4611, 4
          %s4615 = int_to_ptr.hbm [resolvable:$true] %s4614
          %4620 = dma.vmem_to_hbm [thread:$0]  %s4613, 256, %s4615, %s4600, 128, 128, 8
        $region88: #{tpu_custom_call.1} parent=55 // pred_fallthru
          _
      $region56: #{tpu_custom_call.1} parent=5 // pred_fallthru
        _
      %p4621 = scmp.le.s32.totalorder 2, %s24
      // Predicated region
      $region89: #{tpu_custom_call.1} parent=5 // pred_check
        %p4622 = pneg %p4621
      $region90: #{tpu_custom_call.1} parent=5 // pred_check_branch
        %4624 = sbr.rel (%p4622) target = $region92
      $region91: #{tpu_custom_call.1} parent=5 // pred_region
        %s4625 = ssub.s32 %s24, 2
        // Predicated region
        $region93: #{tpu_custom_call.1} parent=91 // pred_check
          %p4626 = pneg %p247
        $region94: #{tpu_custom_call.1} parent=91 // pred_check_branch
          %4628 = sbr.rel (%p4626) target = $region96
        $region95: #{tpu_custom_call.1} parent=91 // pred_region
          %s4629 = sand.u32 %s232, 1
          %s4630 = scalar_lea.sflag [#allocation4], %s4629
          %s4631 = sand.u32 %s232, 1
          %s4632 = smul.addr %s4631, 16
          %s4633 = scalar_lea.vmem [#allocation14], %s4632
          %4635 = dma.done %s4630, 256
        $region96: #{tpu_custom_call.1} parent=91 // pred_fallthru
          _
      $region92: #{tpu_custom_call.1} parent=5 // pred_fallthru
        _
    $region6: #{tpu_custom_call.1} parent=1 // loop_footer
      %s28 = sadd.s32 1, %s24
    $region7: #{tpu_custom_call.1} parent=1 // loop_footer_branch
      %23 = sbr.rel target = $region3
    $region8: #{tpu_custom_call.1} parent=1 // loop_exit
      _
    %4636 = vsyncpa [#allocation3], 1
    %s4637 = scalar_lea.sflag [#allocation3], 1
    %4638 = vsyncpa %s4637, 1
    %4639 = vsyncpa [#allocation6], 1
    %4640 = vsyncpa [#allocation9], 1
    %4641 = vsyncpa [#allocation12], 1
    %4642 = vsyncpa [#allocation4], 1
    %s4643 = scalar_lea.sflag [#allocation4], 1
    %4644 = vsyncpa %s4643, 1

</llo_original>
